<compile_context>
chip_gen: v6e
topology: v6e:2x2x1
jax: 0.10.0
libtpu: 0.0.40
codegen_flags: <defaults>
</compile_context>

<pallas_src>
import jax
import jax.numpy as jnp
from jax.experimental import pallas as pl
from jax.experimental.pallas import tpu as pltpu

LANE = 128
LEAKY_SLOPE = 0.01          # PyTorch nn.LeakyReLU default
LATENT = 16
NTAPS = 52                  # packed per-tap (IC, OC) matrices, see prepare_params()
NBIAS = 16                  # packed bias rows

# tap-table offsets inside the packed (NTAPS, 128, 128) weight tensor
T_C1, T_C2, T_C3, T_MULV, T_FC, T_T1, T_T2, T_T3 = 0, 9, 18, 22, 26, 30, 34, 43
# bias-table rows inside the packed (NBIAS, 128) bias tensor
B_C1, B_C2, B_C3, B_MULV, B_FC, B_T1, B_T2, B_T3 = 0, 1, 2, 3, 4, 8, 9, 10


# ----------------------------------------------------------------------------
# One-time parameter packing (hoisted out of the hot path)
# ----------------------------------------------------------------------------
def _conv_taps(w_oihw):
    """(OC, IC, k, k) -> (k*k, 128, 128) per-tap matrices T[kh*k+kw, ic, oc]."""
    OC, IC, k, _ = w_oihw.shape
    t = jnp.transpose(w_oihw.astype(jnp.float32), (2, 3, 1, 0)).reshape(k * k, IC, OC)
    out = jnp.zeros((k * k, LANE, LANE), jnp.float32)
    return out.at[:, :IC, :OC].set(t)


def _ct_to_conv(w_ct):
    """PyTorch ConvTranspose2d weight (IC, OC, k, k) -> equivalent Conv2d (OC, IC, k, k)."""
    return jnp.flip(w_ct, axis=(2, 3)).transpose(1, 0, 2, 3)


def _mulv_taps(mu_w, lv_w):
    """Linear(40->16) mu/logvar fused as ONE k=2 conv over the (10,2,2) bottleneck:
    output lanes 0:16 = mu, lanes 16:32 = logvar."""
    def taps(w):                                            # (16,40) -> (4, 10, 16)
        w4 = w.astype(jnp.float32).reshape(LATENT, 10, 2, 2)        # [oc, ic, h, w]
        return jnp.transpose(w4, (2, 3, 1, 0)).reshape(4, 10, LATENT)
    out = jnp.zeros((4, LANE, LANE), jnp.float32)
    out = out.at[:, :10, :LATENT].set(taps(mu_w))
    out = out.at[:, :10, LATENT:2 * LATENT].set(taps(lv_w))
    return out


def _fc_taps(fc_w):
    """fc weight (40,16) -> (4,128,128): per decoder spatial site s=h*2+w,
    W[s, l, c] = fc_w[c*4 + s, l].  Rows are duplicated over lanes 16:32 so that
    z = [mu | sigma*noise | 0] multiplies to (mu + sigma*noise) @ W without any
    lane shuffle."""
    w4 = fc_w.astype(jnp.float32).reshape(10, 2, 2, LATENT)        # [c, h, w, l]
    w4 = jnp.transpose(w4, (1, 2, 3, 0)).reshape(4, LATENT, 10)    # [s, l, c]
    out = jnp.zeros((4, LANE, LANE), jnp.float32)
    out = out.at[:, :LATENT, :10].set(w4)
    out = out.at[:, LATENT:2 * LATENT, :10].set(w4)
    return out


def prepare_params(p):
    taps = jnp.concatenate([
        _conv_taps(p["e_conv1_w"]),                 # T_C1  : 9
        _conv_taps(p["e_conv2_w"]),                 # T_C2  : 9
        _conv_taps(p["e_conv3_w"]),                 # T_C3  : 4
        _mulv_taps(p["mu_w"], p["lv_w"]),           # T_MULV: 4
        _fc_taps(p["fc_w"]),                        # T_FC  : 4
        _conv_taps(_ct_to_conv(p["d_ct1_w"])),      # T_T1  : 4
        _conv_taps(_ct_to_conv(p["d_ct2_w"])),      # T_T2  : 9
        _conv_taps(_ct_to_conv(p["d_ct3_w"])),      # T_T3  : 9
    ], axis=0).astype(jnp.bfloat16)                 # (52, 128, 128) bf16

    fcb = jnp.transpose(p["fc_b"].astype(jnp.float32).reshape(10, 2, 2),
                        (1, 2, 0)).reshape(4, 10)
    b = jnp.zeros((NBIAS, LANE), jnp.float32)
    b = b.at[B_C1, :15].set(p["e_conv1_b"].astype(jnp.float32))
    b = b.at[B_C2, :20].set(p["e_conv2_b"].astype(jnp.float32))
    b = b.at[B_C3, :10].set(p["e_conv3_b"].astype(jnp.float32))
    b = b.at[B_MULV, :LATENT].set(p["mu_b"].astype(jnp.float32))
    b = b.at[B_MULV, LATENT:2 * LATENT].set(p["lv_b"].astype(jnp.float32))
    b = b.at[B_FC:B_FC + 4, :10].set(fcb)
    b = b.at[B_T1, :20].set(p["d_ct1_b"].astype(jnp.float32))
    b = b.at[B_T2, :15].set(p["d_ct2_b"].astype(jnp.float32))
    b = b.at[B_T3, :4].set(p["d_ct3_b"].astype(jnp.float32))
    return {"taps": taps, "biases": b}


# ----------------------------------------------------------------------------
# Fused VAE kernel (one grid step == one sample)
# ----------------------------------------------------------------------------
def _vae_kernel(x_ref, noise_ref, w_ref, b_ref, out_ref,
                c1full, a1, a2, c3full, dil1, ct1o, dil2, ct2o, dil3):
    f32, bf16 = jnp.float32, jnp.bfloat16

    def leaky(v):
        return jnp.where(v >= 0.0, v, LEAKY_SLOPE * v)

    def bias(r):
        return b_ref[r:r + 1, :]

    def conv_acc(src, pitch, n_rows, k, tap0, brow):
        """Stride-1 VALID conv as a sum of k*k shifted-slab matmuls, accumulated in
        vregs (the caller does a single store).  Output row r = window top-left at
        source row r (same row pitch as the source).  Rows whose window wraps the
        source row edge hold finite garbage and are never read downstream."""
        acc = jnp.broadcast_to(bias(brow), (n_rows, LANE))
        t = tap0
        for kh in range(k):
            for kw in range(k):
                off = kh * pitch + kw
                acc = acc + jnp.dot(src[off:off + n_rows, :].astype(bf16),
                                    w_ref[t], preferred_element_type=f32)
                t += 1
        return acc

    # ---------------- encoder ----------------
    # conv1 (4->15, k=3, s=2): stride-1 shifted-slab conv over the pitch-16 input,
    # then one strided read per output row to subsample the stride-2 grid.
    c1full[...] = leaky(conv_acc(x_ref, 16, 208, 3, T_C1, B_C1))
    for oh in range(7):
        a1[oh * 7:(oh + 1) * 7, :] = c1full[pl.ds(oh * 32, 7, 2), :]     # 7x7, pitch 7

    # conv2 (15->20, k=3, s=1): 7x7 -> 5x5, kept at pitch 7 (reads only a1 rows 0:49).
    a2[0:33, :] = leaky(conv_acc(a1, 7, 33, 3, T_C2, B_C2))

    # conv3 (20->10, k=2, s=2): stride-1 slab at pitch 7; the 4 valid outputs of the
    # 2x2 bottleneck live at rows {0, 2, 14, 16}.
    c3full[...] = leaky(conv_acc(a2, 7, 24, 2, T_C3, B_C3))

    # mu / logvar Linear(40->16), fused into ONE k=2 conv over the bottleneck:
    # row 0 of the M=8 slab has mu in lanes 0:16 and logvar in lanes 16:32.
    mlacc = jnp.broadcast_to(bias(B_MULV), (8, LANE))
    for s, r in enumerate((0, 2, 14, 16)):
        mlacc = mlacc + jnp.dot(c3full[r:r + 8, :].astype(bf16),
                                w_ref[T_MULV + s], preferred_element_type=f32)
    ml = mlacc[0:1, :]

    # Reparameterization + KLD (reference uses sigma = logvar.exp(), not exp(0.5*logvar)).
    lane = jax.lax.broadcasted_iota(jnp.int32, (1, LANE), 1)
    e = jnp.exp(ml)                                   # exp(mu) | exp(logvar) | 1 ...
    mu_part = jnp.where(lane < LATENT, ml, 0.0)       # mu in lanes 0:16, 0 elsewhere
    sn = e * noise_ref[...]                           # noise sits in lanes 16:32 -> sigma*noise
    z = mu_part + sn                                  # [mu | sigma*noise | 0]
    term = jnp.where(lane < LATENT, -ml * ml,
                     jnp.where(lane < 2 * LATENT, 1.0 + ml - e, 0.0))
    kld = -0.5 * jnp.sum(term, axis=1, keepdims=True)                 # (1, 1)

    # ---------------- decoder ----------------
    # fc(z) -> LeakyReLU -> view(1,10,2,2), written straight into the zero-dilated,
    # padded 5x5 (pitch 5) input of the first conv-transpose.  fc weights are
    # duplicated over the mu / sigma*noise lane blocks of z (see _fc_taps).
    dil1[...] = jnp.zeros(dil1.shape, f32)
    zb = jnp.broadcast_to(z, (8, LANE)).astype(bf16)
    for s, row in enumerate((6, 8, 16, 18)):
        r = jnp.dot(zb, w_ref[T_FC + s], preferred_element_type=f32)[0:1, :]
        dil1[row:row + 1, :] = leaky(r + bias(B_FC + s))

    # ConvTranspose2d(10->20, k=2, s=2) == stride-1 conv over dil1 -> 4x4 at pitch 5.
    ct1o[...] = leaky(conv_acc(dil1, 5, 24, 2, T_T1, B_T1))

    # ConvTranspose2d(20->15, k=3, s=1): pad 2 -> 8x8 (pitch 8), conv -> 6x6 at pitch 8.
    dil2[...] = jnp.zeros(dil2.shape, f32)
    for ih in range(4):
        dil2[(2 + ih) * 8 + 2:(2 + ih) * 8 + 6, :] = ct1o[ih * 5:ih * 5 + 4, :]
    ct2o[...] = leaky(conv_acc(dil2, 8, 48, 3, T_T2, B_T2))

    # ConvTranspose2d(15->4, k=3, s=2): dilate by 2 + pad 2 -> 15x15 (pitch 15);
    # one strided store per source row instead of 36 single-row copies.
    dil3[...] = jnp.zeros(dil3.shape, f32)
    for ih in range(6):
        dil3[pl.ds((2 + 2 * ih) * 15 + 2, 6, 2), :] = ct2o[ih * 8:ih * 8 + 6, :]

    # Final conv -> 13x13x4 at pitch 15 (no activation after the last layer).
    out_ref[0:195, :] = conv_acc(dil3, 15, 195, 3, T_T3, B_T3)

    # Stash the scalar KLD in otherwise-unused output rows (host reads [b, 195, 0]);
    # this also leaves no unwritten rows in the output block.
    out_ref[195:200, :] = jnp.broadcast_to(kld, (5, LANE))


# ----------------------------------------------------------------------------
# Host wrapper
# ----------------------------------------------------------------------------
def vae_forward(prep, x, noise):
    B = x.shape[0]
    # NCHW -> (rows = spatial sites at pitch 16, lanes = channels), lane-padded to 128.
    xr = jnp.transpose(x.astype(jnp.float32), (0, 2, 3, 1)).reshape(B, 256, 4)
    x_pad = jnp.zeros((B, 256, LANE), jnp.float32).at[:, :, :4].set(xr)
    # Noise lives in lanes 16:32 so z = [mu | sigma*noise] needs no lane shuffle.
    n_pad = jnp.zeros((B, 1, LANE), jnp.float32).at[:, 0, LATENT:2 * LATENT].set(
        noise.astype(jnp.float32))

    out = pl.pallas_call(
        _vae_kernel,
        out_shape=jax.ShapeDtypeStruct((B, 200, LANE), jnp.float32),
        grid=(B,),
        in_specs=[
            pl.BlockSpec((None, 256, LANE), lambda b: (b, 0, 0)),
            pl.BlockSpec((None, 1, LANE), lambda b: (b, 0, 0)),
            pl.BlockSpec((NTAPS, LANE, LANE), lambda b: (0, 0, 0)),   # weights stay resident
            pl.BlockSpec((NBIAS, LANE), lambda b: (0, 0)),
        ],
        out_specs=pl.BlockSpec((None, 200, LANE), lambda b: (b, 0, 0)),
        scratch_shapes=[
            pltpu.VMEM((208, LANE), jnp.float32),   # c1full: stride-1 conv1, pitch 16
            pltpu.VMEM((56, LANE), jnp.float32),    # a1    : conv1 out 7x7, pitch 7
            pltpu.VMEM((40, LANE), jnp.float32),    # a2    : conv2 out 5x5, pitch 7
            pltpu.VMEM((24, LANE), jnp.float32),    # c3full: conv3 out, pitch 7
            pltpu.VMEM((32, LANE), jnp.float32),    # dil1  : 5x5 dilated+padded
            pltpu.VMEM((24, LANE), jnp.float32),    # ct1o  : 4x4, pitch 5
            pltpu.VMEM((72, LANE), jnp.float32),    # dil2  : 8x8 padded
            pltpu.VMEM((48, LANE), jnp.float32),    # ct2o  : 6x6, pitch 8
            pltpu.VMEM((232, LANE), jnp.float32),   # dil3  : 15x15 dilated+padded
        ],
        compiler_params=pltpu.CompilerParams(
            dimension_semantics=("parallel",),      # batch axis -> both TCs on v7x
            vmem_limit_bytes=32 * 1024 * 1024,
        ),
    )(x_pad, n_pad, prep["taps"], prep["biases"])

    # Single reshape/transpose at the very end: (pitch-15 rows, lanes) -> NCHW.
    recon = out[:, :195, :4].reshape(B, 13, 15, 4)[:, :, :13, :]
    recon = jnp.transpose(recon, (0, 3, 1, 2))
    kld = out[:, 195, 0]
    return recon, kld


# ----------------------------------------------------------------------------
# Parameters (PyTorch-layout weights) and pure-JAX reference for validation
# ----------------------------------------------------------------------------
def init_params(key):
    ks = jax.random.split(key, 18)
    s = 0.1
    n = jax.random.normal
    return {
        "e_conv1_w": s * n(ks[0], (15, 4, 3, 3), jnp.float32),
        "e_conv1_b": s * n(ks[1], (15,), jnp.float32),
        "e_conv2_w": s * n(ks[2], (20, 15, 3, 3), jnp.float32),
        "e_conv2_b": s * n(ks[3], (20,), jnp.float32),
        "e_conv3_w": s * n(ks[4], (10, 20, 2, 2), jnp.float32),
        "e_conv3_b": s * n(ks[5], (10,), jnp.float32),
        "mu_w": s * n(ks[6], (LATENT, 40), jnp.float32),   # PyTorch Linear: (out, in)
        "mu_b": s * n(ks[7], (LATENT,), jnp.float32),
        "lv_w": s * n(ks[8], (LATENT, 40), jnp.float32),
        "lv_b": s * n(ks[9], (LATENT,), jnp.float32),
        "fc_w": s * n(ks[10], (40, LATENT), jnp.float32),
        "fc_b": s * n(ks[11], (40,), jnp.float32),
        # ConvTranspose2d weights are (in, out, kh, kw) like PyTorch
        "d_ct1_w": s * n(ks[12], (10, 20, 2, 2), jnp.float32),
        "d_ct1_b": s * n(ks[13], (20,), jnp.float32),
        "d_ct2_w": s * n(ks[14], (20, 15, 3, 3), jnp.float32),
        "d_ct2_b": s * n(ks[15], (15,), jnp.float32),
        "d_ct3_w": s * n(ks[16], (15, 4, 3, 3), jnp.float32),
        "d_ct3_b": s * n(ks[17], (4,), jnp.float32),
    }


def _ref_forward(params, x, noise):
    """Pure-JAX (lax.conv) reference of the PyTorch module for numerical checking."""
    dn = ("NCHW", "OIHW", "NCHW")

    def leaky(v):
        return jnp.where(v >= 0.0, v, LEAKY_SLOPE * v)

    def conv(h, w, b, s):
        y = jax.lax.conv_general_dilated(h, w, (s, s), "VALID", dimension_numbers=dn)
        return y + b.reshape(1, -1, 1, 1)

    def convt(h, w, b, s):
        k = w.shape[2]
        wc = jnp.flip(w, axis=(2, 3)).transpose(1, 0, 2, 3)
        y = jax.lax.conv_general_dilated(h, wc, (1, 1),
                                         [(k - 1, k - 1), (k - 1, k - 1)],
                                         lhs_dilation=(s, s), dimension_numbers=dn)
        return y + b.reshape(1, -1, 1, 1)

    h = leaky(conv(x, params["e_conv1_w"], params["e_conv1_b"], 2))
    h = leaky(conv(h, params["e_conv2_w"], params["e_conv2_b"], 1))
    h = leaky(conv(h, params["e_conv3_w"], params["e_conv3_b"], 2))
    flat = h.reshape(1, -1)
    mu = flat @ params["mu_w"].T + params["mu_b"]
    lv = flat @ params["lv_w"].T + params["lv_b"]
    sigma = jnp.exp(lv)
    kld = -0.5 * jnp.sum(1.0 + lv - mu * mu - sigma)
    z = mu + sigma * noise[None, :]
    d = leaky(z @ params["fc_w"].T + params["fc_b"]).reshape(1, 10, 2, 2)
    d = leaky(convt(d, params["d_ct1_w"], params["d_ct1_b"], 2))
    d = leaky(convt(d, params["d_ct2_w"], params["d_ct2_b"], 1))
    d = convt(d, params["d_ct3_w"], params["d_ct3_b"], 2)
    return d, kld


if __name__ == "__main__":
    root = jax.random.PRNGKey(0)
    kp, kx, kn = jax.random.split(root, 3)
    params = init_params(kp)
    prep = prepare_params(params)       # one-time weight packing (outside the hot path)

    B = 2
    x = jax.random.normal(kx, (B, 4, 16, 16), jnp.float32)
    # TODO(synk): the reference draws torch.randn inside Encoder.forward; here the noise is
    # an explicit per-sample input so the kernel stays deterministic and testable.
    noise = jax.random.normal(kn, (B, LATENT), jnp.float32)

    fwd = jax.jit(vae_forward)
    recon, kld = fwd(prep, x, noise)
    recon = jax.block_until_ready(recon)
    kld = jax.block_until_ready(kld)

    assert recon.shape == (B, 4, 13, 13), recon.shape
    assert recon.dtype == jnp.float32
    assert bool(jnp.all(jnp.isfinite(recon))) and bool(jnp.all(jnp.isfinite(kld)))

    for b in range(B):
        ref_out, ref_kld = _ref_forward(params, x[b:b + 1], noise[b])
        err = float(jnp.max(jnp.abs(recon[b:b + 1] - ref_out)))
        assert bool(jnp.allclose(recon[b:b + 1], ref_out, atol=5e-2, rtol=5e-2)), err
        assert bool(jnp.allclose(kld[b], ref_kld, atol=5e-2, rtol=5e-2)), \
            (float(kld[b]), float(ref_kld))

    print("KERNEL_OK")
</pallas_src>

<mosaic_0001>
module attributes {stable_mosaic.version = 11 : i64} {
  func.func @_vae_kernel(%arg0: i32, %arg1: memref<1x256x128xf32, #tpu.memory_space<vmem>>, %arg2: memref<1x1x128xf32, #tpu.memory_space<vmem>>, %arg3: memref<52x128x128xbf16, #tpu.memory_space<vmem>>, %arg4: memref<16x128xf32, #tpu.memory_space<vmem>>, %arg5: memref<1x200x128xf32, #tpu.memory_space<vmem>>, %arg6: memref<208x128xf32, #tpu.memory_space<vmem>>, %arg7: memref<56x128xf32, #tpu.memory_space<vmem>>, %arg8: memref<40x128xf32, #tpu.memory_space<vmem>>, %arg9: memref<24x128xf32, #tpu.memory_space<vmem>>, %arg10: memref<32x128xf32, #tpu.memory_space<vmem>>, %arg11: memref<24x128xf32, #tpu.memory_space<vmem>>, %arg12: memref<72x128xf32, #tpu.memory_space<vmem>>, %arg13: memref<48x128xf32, #tpu.memory_space<vmem>>, %arg14: memref<232x128xf32, #tpu.memory_space<vmem>>) attributes {dimension_semantics = [#tpu.dimension_semantics<parallel>], iteration_bounds = array<i64: 2>, scalar_prefetch = 0 : i64, scratch_operands = 9 : i64, tpu.core_type = #tpu.core_type<tc>, window_params = [{transform_indices = @transform_0, window_bounds = array<i64: 1, 256, 128>}, {transform_indices = @transform_1, window_bounds = array<i64: 1, 1, 128>}, {pipeline_mode = #tpu.pipeline_mode<synchronous>, transform_indices = @transform_2, window_bounds = array<i64: 52, 128, 128>}, {pipeline_mode = #tpu.pipeline_mode<synchronous>, transform_indices = @transform_3, window_bounds = array<i64: 16, 128>}, {transform_indices = @transform_4, window_bounds = array<i64: 1, 200, 128>}]} {
    %c0 = arith.constant 0 : index
    %c0_0 = arith.constant 0 : index
    %0 = vector.load %arg4[%c0, %c0_0] : memref<16x128xf32, #tpu.memory_space<vmem>>, vector<1x128xf32>
    %1 = vector.shape_cast %0 : vector<1x128xf32> to vector<1x128xf32>
    %2 = vector.broadcast %1 : vector<1x128xf32> to vector<208x128xf32>
    %c0_1 = arith.constant 0 : index
    %c0_2 = arith.constant 0 : index
    %c0_3 = arith.constant 0 : index
    %3 = vector.load %arg1[%c0_1, %c0_2, %c0_3] : memref<1x256x128xf32, #tpu.memory_space<vmem>>, vector<1x208x128xf32>
    %4 = vector.shape_cast %3 : vector<1x208x128xf32> to vector<208x128xf32>
    %5 = arith.truncf %4 : vector<208x128xf32> to vector<208x128xbf16>
    %c0_4 = arith.constant 0 : index
    %c0_5 = arith.constant 0 : index
    %c0_6 = arith.constant 0 : index
    %6 = vector.load %arg3[%c0_4, %c0_5, %c0_6] : memref<52x128x128xbf16, #tpu.memory_space<vmem>>, vector<1x128x128xbf16>
    %7 = vector.shape_cast %6 : vector<1x128x128xbf16> to vector<128x128xbf16>
    %cst = arith.constant dense<0.000000e+00> : vector<208x128xf32>
    %8 = tpu.matmul %5, %7, %cst {dimension_numbers = #tpu.dot_dimension_numbers<[1], [0], [0], [1], [0, 0, 1, 1], [], []>} : vector<208x128xbf16>, vector<128x128xbf16>, vector<208x128xf32> -> vector<208x128xf32>
    %9 = arith.addf %2, %8 : vector<208x128xf32>
    %c0_7 = arith.constant 0 : index
    %c1 = arith.constant 1 : index
    %c0_8 = arith.constant 0 : index
    %10 = vector.load %arg1[%c0_7, %c1, %c0_8] : memref<1x256x128xf32, #tpu.memory_space<vmem>>, vector<1x208x128xf32>
    %11 = vector.shape_cast %10 : vector<1x208x128xf32> to vector<208x128xf32>
    %12 = arith.truncf %11 : vector<208x128xf32> to vector<208x128xbf16>
    %c1_9 = arith.constant 1 : index
    %c0_10 = arith.constant 0 : index
    %c0_11 = arith.constant 0 : index
    %13 = vector.load %arg3[%c1_9, %c0_10, %c0_11] : memref<52x128x128xbf16, #tpu.memory_space<vmem>>, vector<1x128x128xbf16>
    %14 = vector.shape_cast %13 : vector<1x128x128xbf16> to vector<128x128xbf16>
    %cst_12 = arith.constant dense<0.000000e+00> : vector<208x128xf32>
    %15 = tpu.matmul %12, %14, %cst_12 {dimension_numbers = #tpu.dot_dimension_numbers<[1], [0], [0], [1], [0, 0, 1, 1], [], []>} : vector<208x128xbf16>, vector<128x128xbf16>, vector<208x128xf32> -> vector<208x128xf32>
    %16 = arith.addf %9, %15 : vector<208x128xf32>
    %c0_13 = arith.constant 0 : index
    %c2 = arith.constant 2 : index
    %c0_14 = arith.constant 0 : index
    %17 = vector.load %arg1[%c0_13, %c2, %c0_14] : memref<1x256x128xf32, #tpu.memory_space<vmem>>, vector<1x208x128xf32>
    %18 = vector.shape_cast %17 : vector<1x208x128xf32> to vector<208x128xf32>
    %19 = arith.truncf %18 : vector<208x128xf32> to vector<208x128xbf16>
    %c2_15 = arith.constant 2 : index
    %c0_16 = arith.constant 0 : index
    %c0_17 = arith.constant 0 : index
    %20 = vector.load %arg3[%c2_15, %c0_16, %c0_17] : memref<52x128x128xbf16, #tpu.memory_space<vmem>>, vector<1x128x128xbf16>
    %21 = vector.shape_cast %20 : vector<1x128x128xbf16> to vector<128x128xbf16>
    %cst_18 = arith.constant dense<0.000000e+00> : vector<208x128xf32>
    %22 = tpu.matmul %19, %21, %cst_18 {dimension_numbers = #tpu.dot_dimension_numbers<[1], [0], [0], [1], [0, 0, 1, 1], [], []>} : vector<208x128xbf16>, vector<128x128xbf16>, vector<208x128xf32> -> vector<208x128xf32>
    %23 = arith.addf %16, %22 : vector<208x128xf32>
    %c0_19 = arith.constant 0 : index
    %c16 = arith.constant 16 : index
    %c0_20 = arith.constant 0 : index
    %24 = vector.load %arg1[%c0_19, %c16, %c0_20] : memref<1x256x128xf32, #tpu.memory_space<vmem>>, vector<1x208x128xf32>
    %25 = vector.shape_cast %24 : vector<1x208x128xf32> to vector<208x128xf32>
    %26 = arith.truncf %25 : vector<208x128xf32> to vector<208x128xbf16>
    %c3 = arith.constant 3 : index
    %c0_21 = arith.constant 0 : index
    %c0_22 = arith.constant 0 : index
    %27 = vector.load %arg3[%c3, %c0_21, %c0_22] : memref<52x128x128xbf16, #tpu.memory_space<vmem>>, vector<1x128x128xbf16>
    %28 = vector.shape_cast %27 : vector<1x128x128xbf16> to vector<128x128xbf16>
    %cst_23 = arith.constant dense<0.000000e+00> : vector<208x128xf32>
    %29 = tpu.matmul %26, %28, %cst_23 {dimension_numbers = #tpu.dot_dimension_numbers<[1], [0], [0], [1], [0, 0, 1, 1], [], []>} : vector<208x128xbf16>, vector<128x128xbf16>, vector<208x128xf32> -> vector<208x128xf32>
    %30 = arith.addf %23, %29 : vector<208x128xf32>
    %c0_24 = arith.constant 0 : index
    %c17 = arith.constant 17 : index
    %c0_25 = arith.constant 0 : index
    %31 = vector.load %arg1[%c0_24, %c17, %c0_25] : memref<1x256x128xf32, #tpu.memory_space<vmem>>, vector<1x208x128xf32>
    %32 = vector.shape_cast %31 : vector<1x208x128xf32> to vector<208x128xf32>
    %33 = arith.truncf %32 : vector<208x128xf32> to vector<208x128xbf16>
    %c4 = arith.constant 4 : index
    %c0_26 = arith.constant 0 : index
    %c0_27 = arith.constant 0 : index
    %34 = vector.load %arg3[%c4, %c0_26, %c0_27] : memref<52x128x128xbf16, #tpu.memory_space<vmem>>, vector<1x128x128xbf16>
    %35 = vector.shape_cast %34 : vector<1x128x128xbf16> to vector<128x128xbf16>
    %cst_28 = arith.constant dense<0.000000e+00> : vector<208x128xf32>
    %36 = tpu.matmul %33, %35, %cst_28 {dimension_numbers = #tpu.dot_dimension_numbers<[1], [0], [0], [1], [0, 0, 1, 1], [], []>} : vector<208x128xbf16>, vector<128x128xbf16>, vector<208x128xf32> -> vector<208x128xf32>
    %37 = arith.addf %30, %36 : vector<208x128xf32>
    %c0_29 = arith.constant 0 : index
    %c18 = arith.constant 18 : index
    %c0_30 = arith.constant 0 : index
    %38 = vector.load %arg1[%c0_29, %c18, %c0_30] : memref<1x256x128xf32, #tpu.memory_space<vmem>>, vector<1x208x128xf32>
    %39 = vector.shape_cast %38 : vector<1x208x128xf32> to vector<208x128xf32>
    %40 = arith.truncf %39 : vector<208x128xf32> to vector<208x128xbf16>
    %c5 = arith.constant 5 : index
    %c0_31 = arith.constant 0 : index
    %c0_32 = arith.constant 0 : index
    %41 = vector.load %arg3[%c5, %c0_31, %c0_32] : memref<52x128x128xbf16, #tpu.memory_space<vmem>>, vector<1x128x128xbf16>
    %42 = vector.shape_cast %41 : vector<1x128x128xbf16> to vector<128x128xbf16>
    %cst_33 = arith.constant dense<0.000000e+00> : vector<208x128xf32>
    %43 = tpu.matmul %40, %42, %cst_33 {dimension_numbers = #tpu.dot_dimension_numbers<[1], [0], [0], [1], [0, 0, 1, 1], [], []>} : vector<208x128xbf16>, vector<128x128xbf16>, vector<208x128xf32> -> vector<208x128xf32>
    %44 = arith.addf %37, %43 : vector<208x128xf32>
    %c0_34 = arith.constant 0 : index
    %c32 = arith.constant 32 : index
    %c0_35 = arith.constant 0 : index
    %45 = vector.load %arg1[%c0_34, %c32, %c0_35] : memref<1x256x128xf32, #tpu.memory_space<vmem>>, vector<1x208x128xf32>
    %46 = vector.shape_cast %45 : vector<1x208x128xf32> to vector<208x128xf32>
    %47 = arith.truncf %46 : vector<208x128xf32> to vector<208x128xbf16>
    %c6 = arith.constant 6 : index
    %c0_36 = arith.constant 0 : index
    %c0_37 = arith.constant 0 : index
    %48 = vector.load %arg3[%c6, %c0_36, %c0_37] : memref<52x128x128xbf16, #tpu.memory_space<vmem>>, vector<1x128x128xbf16>
    %49 = vector.shape_cast %48 : vector<1x128x128xbf16> to vector<128x128xbf16>
    %cst_38 = arith.constant dense<0.000000e+00> : vector<208x128xf32>
    %50 = tpu.matmul %47, %49, %cst_38 {dimension_numbers = #tpu.dot_dimension_numbers<[1], [0], [0], [1], [0, 0, 1, 1], [], []>} : vector<208x128xbf16>, vector<128x128xbf16>, vector<208x128xf32> -> vector<208x128xf32>
    %51 = arith.addf %44, %50 : vector<208x128xf32>
    %c0_39 = arith.constant 0 : index
    %c33 = arith.constant 33 : index
    %c0_40 = arith.constant 0 : index
    %52 = vector.load %arg1[%c0_39, %c33, %c0_40] : memref<1x256x128xf32, #tpu.memory_space<vmem>>, vector<1x208x128xf32>
    %53 = vector.shape_cast %52 : vector<1x208x128xf32> to vector<208x128xf32>
    %54 = arith.truncf %53 : vector<208x128xf32> to vector<208x128xbf16>
    %c7 = arith.constant 7 : index
    %c0_41 = arith.constant 0 : index
    %c0_42 = arith.constant 0 : index
    %55 = vector.load %arg3[%c7, %c0_41, %c0_42] : memref<52x128x128xbf16, #tpu.memory_space<vmem>>, vector<1x128x128xbf16>
    %56 = vector.shape_cast %55 : vector<1x128x128xbf16> to vector<128x128xbf16>
    %cst_43 = arith.constant dense<0.000000e+00> : vector<208x128xf32>
    %57 = tpu.matmul %54, %56, %cst_43 {dimension_numbers = #tpu.dot_dimension_numbers<[1], [0], [0], [1], [0, 0, 1, 1], [], []>} : vector<208x128xbf16>, vector<128x128xbf16>, vector<208x128xf32> -> vector<208x128xf32>
    %58 = arith.addf %51, %57 : vector<208x128xf32>
    %c0_44 = arith.constant 0 : index
    %c34 = arith.constant 34 : index
    %c0_45 = arith.constant 0 : index
    %59 = vector.load %arg1[%c0_44, %c34, %c0_45] : memref<1x256x128xf32, #tpu.memory_space<vmem>>, vector<1x208x128xf32>
    %60 = vector.shape_cast %59 : vector<1x208x128xf32> to vector<208x128xf32>
    %61 = arith.truncf %60 : vector<208x128xf32> to vector<208x128xbf16>
    %c8 = arith.constant 8 : index
    %c0_46 = arith.constant 0 : index
    %c0_47 = arith.constant 0 : index
    %62 = vector.load %arg3[%c8, %c0_46, %c0_47] : memref<52x128x128xbf16, #tpu.memory_space<vmem>>, vector<1x128x128xbf16>
    %63 = vector.shape_cast %62 : vector<1x128x128xbf16> to vector<128x128xbf16>
    %cst_48 = arith.constant dense<0.000000e+00> : vector<208x128xf32>
    %64 = tpu.matmul %61, %63, %cst_48 {dimension_numbers = #tpu.dot_dimension_numbers<[1], [0], [0], [1], [0, 0, 1, 1], [], []>} : vector<208x128xbf16>, vector<128x128xbf16>, vector<208x128xf32> -> vector<208x128xf32>
    %65 = arith.addf %58, %64 : vector<208x128xf32>
    %cst_49 = arith.constant 0.000000e+00 : f32
    %66 = vector.broadcast %cst_49 : f32 to vector<208x128xf32>
    %67 = arith.cmpf oge, %65, %66 : vector<208x128xf32>
    %cst_50 = arith.constant 0.00999999977 : f32
    %68 = vector.broadcast %cst_50 : f32 to vector<208x128xf32>
    %69 = arith.mulf %68, %65 : vector<208x128xf32>
    %70 = arith.select %67, %65, %69 : vector<208x128xi1>, vector<208x128xf32>
    %c0_51 = arith.constant 0 : index
    %c0_52 = arith.constant 0 : index
    %71 = vector.load %arg6[%c0_51, %c0_52] : memref<208x128xf32, #tpu.memory_space<vmem>>, vector<208x128xf32>
    tpu.vector_store %arg6[%c0_51, %c0_52], %70 {strides = array<i32>} : memref<208x128xf32, #tpu.memory_space<vmem>>, vector<208x128xf32>,
    %c0_53 = arith.constant 0 : index
    %c0_54 = arith.constant 0 : index
    %72 = tpu.strided_load %arg6[%c0_53, %c0_54] {strides = array<i32: 2, 1>} : memref<208x128xf32, #tpu.memory_space<vmem>>, vector<7x128xf32>
    %c0_55 = arith.constant 0 : index
    %c0_56 = arith.constant 0 : index
    %73 = vector.load %arg7[%c0_55, %c0_56] : memref<56x128xf32, #tpu.memory_space<vmem>>, vector<7x128xf32>
    tpu.vector_store %arg7[%c0_55, %c0_56], %72 {strides = array<i32>} : memref<56x128xf32, #tpu.memory_space<vmem>>, vector<7x128xf32>,
    %c32_57 = arith.constant 32 : index
    %c0_58 = arith.constant 0 : index
    %74 = tpu.strided_load %arg6[%c32_57, %c0_58] {strides = array<i32: 2, 1>} : memref<208x128xf32, #tpu.memory_space<vmem>>, vector<7x128xf32>
    %c7_59 = arith.constant 7 : index
    %c0_60 = arith.constant 0 : index
    %75 = vector.load %arg7[%c7_59, %c0_60] : memref<56x128xf32, #tpu.memory_space<vmem>>, vector<7x128xf32>
    tpu.vector_store %arg7[%c7_59, %c0_60], %74 {strides = array<i32>} : memref<56x128xf32, #tpu.memory_space<vmem>>, vector<7x128xf32>,
    %c64 = arith.constant 64 : index
    %c0_61 = arith.constant 0 : index
    %76 = tpu.strided_load %arg6[%c64, %c0_61] {strides = array<i32: 2, 1>} : memref<208x128xf32, #tpu.memory_space<vmem>>, vector<7x128xf32>
    %c14 = arith.constant 14 : index
    %c0_62 = arith.constant 0 : index
    %77 = vector.load %arg7[%c14, %c0_62] : memref<56x128xf32, #tpu.memory_space<vmem>>, vector<7x128xf32>
    tpu.vector_store %arg7[%c14, %c0_62], %76 {strides = array<i32>} : memref<56x128xf32, #tpu.memory_space<vmem>>, vector<7x128xf32>,
    %c96 = arith.constant 96 : index
    %c0_63 = arith.constant 0 : index
    %78 = tpu.strided_load %arg6[%c96, %c0_63] {strides = array<i32: 2, 1>} : memref<208x128xf32, #tpu.memory_space<vmem>>, vector<7x128xf32>
    %c21 = arith.constant 21 : index
    %c0_64 = arith.constant 0 : index
    %79 = vector.load %arg7[%c21, %c0_64] : memref<56x128xf32, #tpu.memory_space<vmem>>, vector<7x128xf32>
    tpu.vector_store %arg7[%c21, %c0_64], %78 {strides = array<i32>} : memref<56x128xf32, #tpu.memory_space<vmem>>, vector<7x128xf32>,
    %c128 = arith.constant 128 : index
    %c0_65 = arith.constant 0 : index
    %80 = tpu.strided_load %arg6[%c128, %c0_65] {strides = array<i32: 2, 1>} : memref<208x128xf32, #tpu.memory_space<vmem>>, vector<7x128xf32>
    %c28 = arith.constant 28 : index
    %c0_66 = arith.constant 0 : index
    %81 = vector.load %arg7[%c28, %c0_66] : memref<56x128xf32, #tpu.memory_space<vmem>>, vector<7x128xf32>
    tpu.vector_store %arg7[%c28, %c0_66], %80 {strides = array<i32>} : memref<56x128xf32, #tpu.memory_space<vmem>>, vector<7x128xf32>,
    %c160 = arith.constant 160 : index
    %c0_67 = arith.constant 0 : index
    %82 = tpu.strided_load %arg6[%c160, %c0_67] {strides = array<i32: 2, 1>} : memref<208x128xf32, #tpu.memory_space<vmem>>, vector<7x128xf32>
    %c35 = arith.constant 35 : index
    %c0_68 = arith.constant 0 : index
    %83 = vector.load %arg7[%c35, %c0_68] : memref<56x128xf32, #tpu.memory_space<vmem>>, vector<7x128xf32>
    tpu.vector_store %arg7[%c35, %c0_68], %82 {strides = array<i32>} : memref<56x128xf32, #tpu.memory_space<vmem>>, vector<7x128xf32>,
    %c192 = arith.constant 192 : index
    %c0_69 = arith.constant 0 : index
    %84 = tpu.strided_load %arg6[%c192, %c0_69] {strides = array<i32: 2, 1>} : memref<208x128xf32, #tpu.memory_space<vmem>>, vector<7x128xf32>
    %c42 = arith.constant 42 : index
    %c0_70 = arith.constant 0 : index
    %85 = vector.load %arg7[%c42, %c0_70] : memref<56x128xf32, #tpu.memory_space<vmem>>, vector<7x128xf32>
    tpu.vector_store %arg7[%c42, %c0_70], %84 {strides = array<i32>} : memref<56x128xf32, #tpu.memory_space<vmem>>, vector<7x128xf32>,
    %c1_71 = arith.constant 1 : index
    %c0_72 = arith.constant 0 : index
    %86 = vector.load %arg4[%c1_71, %c0_72] : memref<16x128xf32, #tpu.memory_space<vmem>>, vector<1x128xf32>
    %87 = vector.shape_cast %86 : vector<1x128xf32> to vector<1x128xf32>
    %88 = vector.broadcast %87 : vector<1x128xf32> to vector<33x128xf32>
    %c0_73 = arith.constant 0 : index
    %c0_74 = arith.constant 0 : index
    %89 = vector.load %arg7[%c0_73, %c0_74] : memref<56x128xf32, #tpu.memory_space<vmem>>, vector<33x128xf32>
    %90 = arith.truncf %89 : vector<33x128xf32> to vector<33x128xbf16>
    %c9 = arith.constant 9 : index
    %c0_75 = arith.constant 0 : index
    %c0_76 = arith.constant 0 : index
    %91 = vector.load %arg3[%c9, %c0_75, %c0_76] : memref<52x128x128xbf16, #tpu.memory_space<vmem>>, vector<1x128x128xbf16>
    %92 = vector.shape_cast %91 : vector<1x128x128xbf16> to vector<128x128xbf16>
    %cst_77 = arith.constant dense<0.000000e+00> : vector<33x128xf32>
    %93 = tpu.matmul %90, %92, %cst_77 {dimension_numbers = #tpu.dot_dimension_numbers<[1], [0], [0], [1], [0, 0, 1, 1], [], []>} : vector<33x128xbf16>, vector<128x128xbf16>, vector<33x128xf32> -> vector<33x128xf32>
    %94 = arith.addf %88, %93 : vector<33x128xf32>
    %c1_78 = arith.constant 1 : index
    %c0_79 = arith.constant 0 : index
    %95 = vector.load %arg7[%c1_78, %c0_79] : memref<56x128xf32, #tpu.memory_space<vmem>>, vector<33x128xf32>
    %96 = arith.truncf %95 : vector<33x128xf32> to vector<33x128xbf16>
    %c10 = arith.constant 10 : index
    %c0_80 = arith.constant 0 : index
    %c0_81 = arith.constant 0 : index
    %97 = vector.load %arg3[%c10, %c0_80, %c0_81] : memref<52x128x128xbf16, #tpu.memory_space<vmem>>, vector<1x128x128xbf16>
    %98 = vector.shape_cast %97 : vector<1x128x128xbf16> to vector<128x128xbf16>
    %cst_82 = arith.constant dense<0.000000e+00> : vector<33x128xf32>
    %99 = tpu.matmul %96, %98, %cst_82 {dimension_numbers = #tpu.dot_dimension_numbers<[1], [0], [0], [1], [0, 0, 1, 1], [], []>} : vector<33x128xbf16>, vector<128x128xbf16>, vector<33x128xf32> -> vector<33x128xf32>
    %100 = arith.addf %94, %99 : vector<33x128xf32>
    %c2_83 = arith.constant 2 : index
    %c0_84 = arith.constant 0 : index
    %101 = vector.load %arg7[%c2_83, %c0_84] : memref<56x128xf32, #tpu.memory_space<vmem>>, vector<33x128xf32>
    %102 = arith.truncf %101 : vector<33x128xf32> to vector<33x128xbf16>
    %c11 = arith.constant 11 : index
    %c0_85 = arith.constant 0 : index
    %c0_86 = arith.constant 0 : index
    %103 = vector.load %arg3[%c11, %c0_85, %c0_86] : memref<52x128x128xbf16, #tpu.memory_space<vmem>>, vector<1x128x128xbf16>
    %104 = vector.shape_cast %103 : vector<1x128x128xbf16> to vector<128x128xbf16>
    %cst_87 = arith.constant dense<0.000000e+00> : vector<33x128xf32>
    %105 = tpu.matmul %102, %104, %cst_87 {dimension_numbers = #tpu.dot_dimension_numbers<[1], [0], [0], [1], [0, 0, 1, 1], [], []>} : vector<33x128xbf16>, vector<128x128xbf16>, vector<33x128xf32> -> vector<33x128xf32>
    %106 = arith.addf %100, %105 : vector<33x128xf32>
    %c7_88 = arith.constant 7 : index
    %c0_89 = arith.constant 0 : index
    %107 = vector.load %arg7[%c7_88, %c0_89] : memref<56x128xf32, #tpu.memory_space<vmem>>, vector<33x128xf32>
    %108 = arith.truncf %107 : vector<33x128xf32> to vector<33x128xbf16>
    %c12 = arith.constant 12 : index
    %c0_90 = arith.constant 0 : index
    %c0_91 = arith.constant 0 : index
    %109 = vector.load %arg3[%c12, %c0_90, %c0_91] : memref<52x128x128xbf16, #tpu.memory_space<vmem>>, vector<1x128x128xbf16>
    %110 = vector.shape_cast %109 : vector<1x128x128xbf16> to vector<128x128xbf16>
    %cst_92 = arith.constant dense<0.000000e+00> : vector<33x128xf32>
    %111 = tpu.matmul %108, %110, %cst_92 {dimension_numbers = #tpu.dot_dimension_numbers<[1], [0], [0], [1], [0, 0, 1, 1], [], []>} : vector<33x128xbf16>, vector<128x128xbf16>, vector<33x128xf32> -> vector<33x128xf32>
    %112 = arith.addf %106, %111 : vector<33x128xf32>
    %c8_93 = arith.constant 8 : index
    %c0_94 = arith.constant 0 : index
    %113 = vector.load %arg7[%c8_93, %c0_94] : memref<56x128xf32, #tpu.memory_space<vmem>>, vector<33x128xf32>
    %114 = arith.truncf %113 : vector<33x128xf32> to vector<33x128xbf16>
    %c13 = arith.constant 13 : index
    %c0_95 = arith.constant 0 : index
    %c0_96 = arith.constant 0 : index
    %115 = vector.load %arg3[%c13, %c0_95, %c0_96] : memref<52x128x128xbf16, #tpu.memory_space<vmem>>, vector<1x128x128xbf16>
    %116 = vector.shape_cast %115 : vector<1x128x128xbf16> to vector<128x128xbf16>
    %cst_97 = arith.constant dense<0.000000e+00> : vector<33x128xf32>
    %117 = tpu.matmul %114, %116, %cst_97 {dimension_numbers = #tpu.dot_dimension_numbers<[1], [0], [0], [1], [0, 0, 1, 1], [], []>} : vector<33x128xbf16>, vector<128x128xbf16>, vector<33x128xf32> -> vector<33x128xf32>
    %118 = arith.addf %112, %117 : vector<33x128xf32>
    %c9_98 = arith.constant 9 : index
    %c0_99 = arith.constant 0 : index
    %119 = vector.load %arg7[%c9_98, %c0_99] : memref<56x128xf32, #tpu.memory_space<vmem>>, vector<33x128xf32>
    %120 = arith.truncf %119 : vector<33x128xf32> to vector<33x128xbf16>
    %c14_100 = arith.constant 14 : index
    %c0_101 = arith.constant 0 : index
    %c0_102 = arith.constant 0 : index
    %121 = vector.load %arg3[%c14_100, %c0_101, %c0_102] : memref<52x128x128xbf16, #tpu.memory_space<vmem>>, vector<1x128x128xbf16>
    %122 = vector.shape_cast %121 : vector<1x128x128xbf16> to vector<128x128xbf16>
    %cst_103 = arith.constant dense<0.000000e+00> : vector<33x128xf32>
    %123 = tpu.matmul %120, %122, %cst_103 {dimension_numbers = #tpu.dot_dimension_numbers<[1], [0], [0], [1], [0, 0, 1, 1], [], []>} : vector<33x128xbf16>, vector<128x128xbf16>, vector<33x128xf32> -> vector<33x128xf32>
    %124 = arith.addf %118, %123 : vector<33x128xf32>
    %c14_104 = arith.constant 14 : index
    %c0_105 = arith.constant 0 : index
    %125 = vector.load %arg7[%c14_104, %c0_105] : memref<56x128xf32, #tpu.memory_space<vmem>>, vector<33x128xf32>
    %126 = arith.truncf %125 : vector<33x128xf32> to vector<33x128xbf16>
    %c15 = arith.constant 15 : index
    %c0_106 = arith.constant 0 : index
    %c0_107 = arith.constant 0 : index
    %127 = vector.load %arg3[%c15, %c0_106, %c0_107] : memref<52x128x128xbf16, #tpu.memory_space<vmem>>, vector<1x128x128xbf16>
    %128 = vector.shape_cast %127 : vector<1x128x128xbf16> to vector<128x128xbf16>
    %cst_108 = arith.constant dense<0.000000e+00> : vector<33x128xf32>
    %129 = tpu.matmul %126, %128, %cst_108 {dimension_numbers = #tpu.dot_dimension_numbers<[1], [0], [0], [1], [0, 0, 1, 1], [], []>} : vector<33x128xbf16>, vector<128x128xbf16>, vector<33x128xf32> -> vector<33x128xf32>
    %130 = arith.addf %124, %129 : vector<33x128xf32>
    %c15_109 = arith.constant 15 : index
    %c0_110 = arith.constant 0 : index
    %131 = vector.load %arg7[%c15_109, %c0_110] : memref<56x128xf32, #tpu.memory_space<vmem>>, vector<33x128xf32>
    %132 = arith.truncf %131 : vector<33x128xf32> to vector<33x128xbf16>
    %c16_111 = arith.constant 16 : index
    %c0_112 = arith.constant 0 : index
    %c0_113 = arith.constant 0 : index
    %133 = vector.load %arg3[%c16_111, %c0_112, %c0_113] : memref<52x128x128xbf16, #tpu.memory_space<vmem>>, vector<1x128x128xbf16>
    %134 = vector.shape_cast %133 : vector<1x128x128xbf16> to vector<128x128xbf16>
    %cst_114 = arith.constant dense<0.000000e+00> : vector<33x128xf32>
    %135 = tpu.matmul %132, %134, %cst_114 {dimension_numbers = #tpu.dot_dimension_numbers<[1], [0], [0], [1], [0, 0, 1, 1], [], []>} : vector<33x128xbf16>, vector<128x128xbf16>, vector<33x128xf32> -> vector<33x128xf32>
    %136 = arith.addf %130, %135 : vector<33x128xf32>
    %c16_115 = arith.constant 16 : index
    %c0_116 = arith.constant 0 : index
    %137 = vector.load %arg7[%c16_115, %c0_116] : memref<56x128xf32, #tpu.memory_space<vmem>>, vector<33x128xf32>
    %138 = arith.truncf %137 : vector<33x128xf32> to vector<33x128xbf16>
    %c17_117 = arith.constant 17 : index
    %c0_118 = arith.constant 0 : index
    %c0_119 = arith.constant 0 : index
    %139 = vector.load %arg3[%c17_117, %c0_118, %c0_119] : memref<52x128x128xbf16, #tpu.memory_space<vmem>>, vector<1x128x128xbf16>
    %140 = vector.shape_cast %139 : vector<1x128x128xbf16> to vector<128x128xbf16>
    %cst_120 = arith.constant dense<0.000000e+00> : vector<33x128xf32>
    %141 = tpu.matmul %138, %140, %cst_120 {dimension_numbers = #tpu.dot_dimension_numbers<[1], [0], [0], [1], [0, 0, 1, 1], [], []>} : vector<33x128xbf16>, vector<128x128xbf16>, vector<33x128xf32> -> vector<33x128xf32>
    %142 = arith.addf %136, %141 : vector<33x128xf32>
    %cst_121 = arith.constant 0.000000e+00 : f32
    %143 = vector.broadcast %cst_121 : f32 to vector<33x128xf32>
    %144 = arith.cmpf oge, %142, %143 : vector<33x128xf32>
    %cst_122 = arith.constant 0.00999999977 : f32
    %145 = vector.broadcast %cst_122 : f32 to vector<33x128xf32>
    %146 = arith.mulf %145, %142 : vector<33x128xf32>
    %147 = arith.select %144, %142, %146 : vector<33x128xi1>, vector<33x128xf32>
    %c0_123 = arith.constant 0 : index
    %c0_124 = arith.constant 0 : index
    %148 = vector.load %arg8[%c0_123, %c0_124] : memref<40x128xf32, #tpu.memory_space<vmem>>, vector<33x128xf32>
    tpu.vector_store %arg8[%c0_123, %c0_124], %147 {strides = array<i32>} : memref<40x128xf32, #tpu.memory_space<vmem>>, vector<33x128xf32>,
    %c2_125 = arith.constant 2 : index
    %c0_126 = arith.constant 0 : index
    %149 = vector.load %arg4[%c2_125, %c0_126] : memref<16x128xf32, #tpu.memory_space<vmem>>, vector<1x128xf32>
    %150 = vector.shape_cast %149 : vector<1x128xf32> to vector<1x128xf32>
    %151 = vector.broadcast %150 : vector<1x128xf32> to vector<24x128xf32>
    %c0_127 = arith.constant 0 : index
    %c0_128 = arith.constant 0 : index
    %152 = vector.load %arg8[%c0_127, %c0_128] : memref<40x128xf32, #tpu.memory_space<vmem>>, vector<24x128xf32>
    %153 = arith.truncf %152 : vector<24x128xf32> to vector<24x128xbf16>
    %c18_129 = arith.constant 18 : index
    %c0_130 = arith.constant 0 : index
    %c0_131 = arith.constant 0 : index
    %154 = vector.load %arg3[%c18_129, %c0_130, %c0_131] : memref<52x128x128xbf16, #tpu.memory_space<vmem>>, vector<1x128x128xbf16>
    %155 = vector.shape_cast %154 : vector<1x128x128xbf16> to vector<128x128xbf16>
    %cst_132 = arith.constant dense<0.000000e+00> : vector<24x128xf32>
    %156 = tpu.matmul %153, %155, %cst_132 {dimension_numbers = #tpu.dot_dimension_numbers<[1], [0], [0], [1], [0, 0, 1, 1], [], []>} : vector<24x128xbf16>, vector<128x128xbf16>, vector<24x128xf32> -> vector<24x128xf32>
    %157 = arith.addf %151, %156 : vector<24x128xf32>
    %c1_133 = arith.constant 1 : index
    %c0_134 = arith.constant 0 : index
    %158 = vector.load %arg8[%c1_133, %c0_134] : memref<40x128xf32, #tpu.memory_space<vmem>>, vector<24x128xf32>
    %159 = arith.truncf %158 : vector<24x128xf32> to vector<24x128xbf16>
    %c19 = arith.constant 19 : index
    %c0_135 = arith.constant 0 : index
    %c0_136 = arith.constant 0 : index
    %160 = vector.load %arg3[%c19, %c0_135, %c0_136] : memref<52x128x128xbf16, #tpu.memory_space<vmem>>, vector<1x128x128xbf16>
    %161 = vector.shape_cast %160 : vector<1x128x128xbf16> to vector<128x128xbf16>
    %cst_137 = arith.constant dense<0.000000e+00> : vector<24x128xf32>
    %162 = tpu.matmul %159, %161, %cst_137 {dimension_numbers = #tpu.dot_dimension_numbers<[1], [0], [0], [1], [0, 0, 1, 1], [], []>} : vector<24x128xbf16>, vector<128x128xbf16>, vector<24x128xf32> -> vector<24x128xf32>
    %163 = arith.addf %157, %162 : vector<24x128xf32>
    %c7_138 = arith.constant 7 : index
    %c0_139 = arith.constant 0 : index
    %164 = vector.load %arg8[%c7_138, %c0_139] : memref<40x128xf32, #tpu.memory_space<vmem>>, vector<24x128xf32>
    %165 = arith.truncf %164 : vector<24x128xf32> to vector<24x128xbf16>
    %c20 = arith.constant 20 : index
    %c0_140 = arith.constant 0 : index
    %c0_141 = arith.constant 0 : index
    %166 = vector.load %arg3[%c20, %c0_140, %c0_141] : memref<52x128x128xbf16, #tpu.memory_space<vmem>>, vector<1x128x128xbf16>
    %167 = vector.shape_cast %166 : vector<1x128x128xbf16> to vector<128x128xbf16>
    %cst_142 = arith.constant dense<0.000000e+00> : vector<24x128xf32>
    %168 = tpu.matmul %165, %167, %cst_142 {dimension_numbers = #tpu.dot_dimension_numbers<[1], [0], [0], [1], [0, 0, 1, 1], [], []>} : vector<24x128xbf16>, vector<128x128xbf16>, vector<24x128xf32> -> vector<24x128xf32>
    %169 = arith.addf %163, %168 : vector<24x128xf32>
    %c8_143 = arith.constant 8 : index
    %c0_144 = arith.constant 0 : index
    %170 = vector.load %arg8[%c8_143, %c0_144] : memref<40x128xf32, #tpu.memory_space<vmem>>, vector<24x128xf32>
    %171 = arith.truncf %170 : vector<24x128xf32> to vector<24x128xbf16>
    %c21_145 = arith.constant 21 : index
    %c0_146 = arith.constant 0 : index
    %c0_147 = arith.constant 0 : index
    %172 = vector.load %arg3[%c21_145, %c0_146, %c0_147] : memref<52x128x128xbf16, #tpu.memory_space<vmem>>, vector<1x128x128xbf16>
    %173 = vector.shape_cast %172 : vector<1x128x128xbf16> to vector<128x128xbf16>
    %cst_148 = arith.constant dense<0.000000e+00> : vector<24x128xf32>
    %174 = tpu.matmul %171, %173, %cst_148 {dimension_numbers = #tpu.dot_dimension_numbers<[1], [0], [0], [1], [0, 0, 1, 1], [], []>} : vector<24x128xbf16>, vector<128x128xbf16>, vector<24x128xf32> -> vector<24x128xf32>
    %175 = arith.addf %169, %174 : vector<24x128xf32>
    %cst_149 = arith.constant 0.000000e+00 : f32
    %176 = vector.broadcast %cst_149 : f32 to vector<24x128xf32>
    %177 = arith.cmpf oge, %175, %176 : vector<24x128xf32>
    %cst_150 = arith.constant 0.00999999977 : f32
    %178 = vector.broadcast %cst_150 : f32 to vector<24x128xf32>
    %179 = arith.mulf %178, %175 : vector<24x128xf32>
    %180 = arith.select %177, %175, %179 : vector<24x128xi1>, vector<24x128xf32>
    %c0_151 = arith.constant 0 : index
    %c0_152 = arith.constant 0 : index
    %181 = vector.load %arg9[%c0_151, %c0_152] : memref<24x128xf32, #tpu.memory_space<vmem>>, vector<24x128xf32>
    tpu.vector_store %arg9[%c0_151, %c0_152], %180 {strides = array<i32>} : memref<24x128xf32, #tpu.memory_space<vmem>>, vector<24x128xf32>,
    %c3_153 = arith.constant 3 : index
    %c0_154 = arith.constant 0 : index
    %182 = vector.load %arg4[%c3_153, %c0_154] : memref<16x128xf32, #tpu.memory_space<vmem>>, vector<1x128xf32>
    %183 = vector.shape_cast %182 : vector<1x128xf32> to vector<1x128xf32>
    %184 = vector.broadcast %183 : vector<1x128xf32> to vector<8x128xf32>
    %c0_155 = arith.constant 0 : index
    %c0_156 = arith.constant 0 : index
    %185 = vector.load %arg9[%c0_155, %c0_156] : memref<24x128xf32, #tpu.memory_space<vmem>>, vector<8x128xf32>
    %186 = arith.truncf %185 : vector<8x128xf32> to vector<8x128xbf16>
    %c22 = arith.constant 22 : index
    %c0_157 = arith.constant 0 : index
    %c0_158 = arith.constant 0 : index
    %187 = vector.load %arg3[%c22, %c0_157, %c0_158] : memref<52x128x128xbf16, #tpu.memory_space<vmem>>, vector<1x128x128xbf16>
    %188 = vector.shape_cast %187 : vector<1x128x128xbf16> to vector<128x128xbf16>
    %cst_159 = arith.constant dense<0.000000e+00> : vector<8x128xf32>
    %189 = tpu.matmul %186, %188, %cst_159 {dimension_numbers = #tpu.dot_dimension_numbers<[1], [0], [0], [1], [0, 0, 1, 1], [], []>} : vector<8x128xbf16>, vector<128x128xbf16>, vector<8x128xf32> -> vector<8x128xf32>
    %190 = arith.addf %184, %189 : vector<8x128xf32>
    %c2_160 = arith.constant 2 : index
    %c0_161 = arith.constant 0 : index
    %191 = vector.load %arg9[%c2_160, %c0_161] : memref<24x128xf32, #tpu.memory_space<vmem>>, vector<8x128xf32>
    %192 = arith.truncf %191 : vector<8x128xf32> to vector<8x128xbf16>
    %c23 = arith.constant 23 : index
    %c0_162 = arith.constant 0 : index
    %c0_163 = arith.constant 0 : index
    %193 = vector.load %arg3[%c23, %c0_162, %c0_163] : memref<52x128x128xbf16, #tpu.memory_space<vmem>>, vector<1x128x128xbf16>
    %194 = vector.shape_cast %193 : vector<1x128x128xbf16> to vector<128x128xbf16>
    %cst_164 = arith.constant dense<0.000000e+00> : vector<8x128xf32>
    %195 = tpu.matmul %192, %194, %cst_164 {dimension_numbers = #tpu.dot_dimension_numbers<[1], [0], [0], [1], [0, 0, 1, 1], [], []>} : vector<8x128xbf16>, vector<128x128xbf16>, vector<8x128xf32> -> vector<8x128xf32>
    %196 = arith.addf %190, %195 : vector<8x128xf32>
    %c14_165 = arith.constant 14 : index
    %c0_166 = arith.constant 0 : index
    %197 = vector.load %arg9[%c14_165, %c0_166] : memref<24x128xf32, #tpu.memory_space<vmem>>, vector<8x128xf32>
    %198 = arith.truncf %197 : vector<8x128xf32> to vector<8x128xbf16>
    %c24 = arith.constant 24 : index
    %c0_167 = arith.constant 0 : index
    %c0_168 = arith.constant 0 : index
    %199 = vector.load %arg3[%c24, %c0_167, %c0_168] : memref<52x128x128xbf16, #tpu.memory_space<vmem>>, vector<1x128x128xbf16>
    %200 = vector.shape_cast %199 : vector<1x128x128xbf16> to vector<128x128xbf16>
    %cst_169 = arith.constant dense<0.000000e+00> : vector<8x128xf32>
    %201 = tpu.matmul %198, %200, %cst_169 {dimension_numbers = #tpu.dot_dimension_numbers<[1], [0], [0], [1], [0, 0, 1, 1], [], []>} : vector<8x128xbf16>, vector<128x128xbf16>, vector<8x128xf32> -> vector<8x128xf32>
    %202 = arith.addf %196, %201 : vector<8x128xf32>
    %c16_170 = arith.constant 16 : index
    %c0_171 = arith.constant 0 : index
    %203 = vector.load %arg9[%c16_170, %c0_171] : memref<24x128xf32, #tpu.memory_space<vmem>>, vector<8x128xf32>
    %204 = arith.truncf %203 : vector<8x128xf32> to vector<8x128xbf16>
    %c25 = arith.constant 25 : index
    %c0_172 = arith.constant 0 : index
    %c0_173 = arith.constant 0 : index
    %205 = vector.load %arg3[%c25, %c0_172, %c0_173] : memref<52x128x128xbf16, #tpu.memory_space<vmem>>, vector<1x128x128xbf16>
    %206 = vector.shape_cast %205 : vector<1x128x128xbf16> to vector<128x128xbf16>
    %cst_174 = arith.constant dense<0.000000e+00> : vector<8x128xf32>
    %207 = tpu.matmul %204, %206, %cst_174 {dimension_numbers = #tpu.dot_dimension_numbers<[1], [0], [0], [1], [0, 0, 1, 1], [], []>} : vector<8x128xbf16>, vector<128x128xbf16>, vector<8x128xf32> -> vector<8x128xf32>
    %208 = arith.addf %202, %207 : vector<8x128xf32>
    %209 = vector.extract_strided_slice %208 {offsets = [0, 0], sizes = [1, 128], strides = [1, 1]} : vector<8x128xf32> to vector<1x128xf32>
    %210 = tpu.iota {dimensions = array<i32: 1>} : vector<1x128xi32>
    %211 = math.exp %209 : vector<1x128xf32>
    %c16_i32 = arith.constant 16 : i32
    %212 = vector.broadcast %c16_i32 : i32 to vector<1x128xi32>
    %213 = arith.cmpi slt, %210, %212 : vector<1x128xi32>
    %cst_175 = arith.constant 0.000000e+00 : f32
    %214 = vector.broadcast %cst_175 : f32 to vector<1x128xf32>
    %215 = arith.select %213, %209, %214 : vector<1x128xi1>, vector<1x128xf32>
    %c0_176 = arith.constant 0 : index
    %c0_177 = arith.constant 0 : index
    %c0_178 = arith.constant 0 : index
    %216 = vector.load %arg2[%c0_176, %c0_177, %c0_178] : memref<1x1x128xf32, #tpu.memory_space<vmem>>, vector<1x1x128xf32>
    %217 = vector.shape_cast %216 : vector<1x1x128xf32> to vector<1x128xf32>
    %218 = arith.mulf %211, %217 : vector<1x128xf32>
    %219 = arith.addf %215, %218 : vector<1x128xf32>
    %c16_i32_179 = arith.constant 16 : i32
    %220 = vector.broadcast %c16_i32_179 : i32 to vector<1x128xi32>
    %221 = arith.cmpi slt, %210, %220 : vector<1x128xi32>
    %cst_180 = arith.constant 0.000000e+00 : f32
    %222 = vector.broadcast %cst_180 : f32 to vector<1x128xf32>
    %223 = arith.subf %222, %209 : vector<1x128xf32>
    %224 = arith.mulf %223, %209 : vector<1x128xf32>
    %c32_i32 = arith.constant 32 : i32
    %225 = vector.broadcast %c32_i32 : i32 to vector<1x128xi32>
    %226 = arith.cmpi slt, %210, %225 : vector<1x128xi32>
    %cst_181 = arith.constant 1.000000e+00 : f32
    %227 = vector.broadcast %cst_181 : f32 to vector<1x128xf32>
    %228 = arith.addf %227, %209 : vector<1x128xf32>
    %229 = arith.subf %228, %211 : vector<1x128xf32>
    %cst_182 = arith.constant 0.000000e+00 : f32
    %230 = vector.broadcast %cst_182 : f32 to vector<1x128xf32>
    %231 = arith.select %226, %229, %230 : vector<1x128xi1>, vector<1x128xf32>
    %232 = arith.select %221, %224, %231 : vector<1x128xi1>, vector<1x128xf32>
    %cst_183 = arith.constant dense<0.000000e+00> : vector<1xf32>
    %233 = vector.multi_reduction <add>, %232, %cst_183 [1] : vector<1x128xf32> to vector<1xf32>
    %234 = vector.shape_cast %233 : vector<1xf32> to vector<1x1xf32>
    %cst_184 = arith.constant -5.000000e-01 : f32
    %235 = vector.broadcast %cst_184 : f32 to vector<1x1xf32>
    %236 = arith.mulf %235, %234 : vector<1x1xf32>
    %cst_185 = arith.constant 0.000000e+00 : f32
    %237 = vector.broadcast %cst_185 : f32 to vector<32x128xf32>
    %c0_186 = arith.constant 0 : index
    %c0_187 = arith.constant 0 : index
    %238 = vector.load %arg10[%c0_186, %c0_187] : memref<32x128xf32, #tpu.memory_space<vmem>>, vector<32x128xf32>
    tpu.vector_store %arg10[%c0_186, %c0_187], %237 {strides = array<i32>} : memref<32x128xf32, #tpu.memory_space<vmem>>, vector<32x128xf32>,
    %239 = vector.shape_cast %219 : vector<1x128xf32> to vector<1x128xf32>
    %240 = vector.broadcast %239 : vector<1x128xf32> to vector<8x128xf32>
    %241 = arith.truncf %240 : vector<8x128xf32> to vector<8x128xbf16>
    %c26 = arith.constant 26 : index
    %c0_188 = arith.constant 0 : index
    %c0_189 = arith.constant 0 : index
    %242 = vector.load %arg3[%c26, %c0_188, %c0_189] : memref<52x128x128xbf16, #tpu.memory_space<vmem>>, vector<1x128x128xbf16>
    %243 = vector.shape_cast %242 : vector<1x128x128xbf16> to vector<128x128xbf16>
    %cst_190 = arith.constant dense<0.000000e+00> : vector<8x128xf32>
    %244 = tpu.matmul %241, %243, %cst_190 {dimension_numbers = #tpu.dot_dimension_numbers<[1], [0], [0], [1], [0, 0, 1, 1], [], []>} : vector<8x128xbf16>, vector<128x128xbf16>, vector<8x128xf32> -> vector<8x128xf32>
    %245 = vector.extract_strided_slice %244 {offsets = [0, 0], sizes = [1, 128], strides = [1, 1]} : vector<8x128xf32> to vector<1x128xf32>
    %c4_191 = arith.constant 4 : index
    %c0_192 = arith.constant 0 : index
    %246 = vector.load %arg4[%c4_191, %c0_192] : memref<16x128xf32, #tpu.memory_space<vmem>>, vector<1x128xf32>
    %247 = arith.addf %245, %246 : vector<1x128xf32>
    %cst_193 = arith.constant 0.000000e+00 : f32
    %248 = vector.broadcast %cst_193 : f32 to vector<1x128xf32>
    %249 = arith.cmpf oge, %247, %248 : vector<1x128xf32>
    %cst_194 = arith.constant 0.00999999977 : f32
    %250 = vector.broadcast %cst_194 : f32 to vector<1x128xf32>
    %251 = arith.mulf %250, %247 : vector<1x128xf32>
    %252 = arith.select %249, %247, %251 : vector<1x128xi1>, vector<1x128xf32>
    %c6_195 = arith.constant 6 : index
    %c0_196 = arith.constant 0 : index
    %253 = vector.load %arg10[%c6_195, %c0_196] : memref<32x128xf32, #tpu.memory_space<vmem>>, vector<1x128xf32>
    tpu.vector_store %arg10[%c6_195, %c0_196], %252 {strides = array<i32>} : memref<32x128xf32, #tpu.memory_space<vmem>>, vector<1x128xf32>,
    %c27 = arith.constant 27 : index
    %c0_197 = arith.constant 0 : index
    %c0_198 = arith.constant 0 : index
    %254 = vector.load %arg3[%c27, %c0_197, %c0_198] : memref<52x128x128xbf16, #tpu.memory_space<vmem>>, vector<1x128x128xbf16>
    %255 = vector.shape_cast %254 : vector<1x128x128xbf16> to vector<128x128xbf16>
    %cst_199 = arith.constant dense<0.000000e+00> : vector<8x128xf32>
    %256 = tpu.matmul %241, %255, %cst_199 {dimension_numbers = #tpu.dot_dimension_numbers<[1], [0], [0], [1], [0, 0, 1, 1], [], []>} : vector<8x128xbf16>, vector<128x128xbf16>, vector<8x128xf32> -> vector<8x128xf32>
    %257 = vector.extract_strided_slice %256 {offsets = [0, 0], sizes = [1, 128], strides = [1, 1]} : vector<8x128xf32> to vector<1x128xf32>
    %c5_200 = arith.constant 5 : index
    %c0_201 = arith.constant 0 : index
    %258 = vector.load %arg4[%c5_200, %c0_201] : memref<16x128xf32, #tpu.memory_space<vmem>>, vector<1x128xf32>
    %259 = arith.addf %257, %258 : vector<1x128xf32>
    %cst_202 = arith.constant 0.000000e+00 : f32
    %260 = vector.broadcast %cst_202 : f32 to vector<1x128xf32>
    %261 = arith.cmpf oge, %259, %260 : vector<1x128xf32>
    %cst_203 = arith.constant 0.00999999977 : f32
    %262 = vector.broadcast %cst_203 : f32 to vector<1x128xf32>
    %263 = arith.mulf %262, %259 : vector<1x128xf32>
    %264 = arith.select %261, %259, %263 : vector<1x128xi1>, vector<1x128xf32>
    %c8_204 = arith.constant 8 : index
    %c0_205 = arith.constant 0 : index
    %265 = vector.load %arg10[%c8_204, %c0_205] : memref<32x128xf32, #tpu.memory_space<vmem>>, vector<1x128xf32>
    tpu.vector_store %arg10[%c8_204, %c0_205], %264 {strides = array<i32>} : memref<32x128xf32, #tpu.memory_space<vmem>>, vector<1x128xf32>,
    %c28_206 = arith.constant 28 : index
    %c0_207 = arith.constant 0 : index
    %c0_208 = arith.constant 0 : index
    %266 = vector.load %arg3[%c28_206, %c0_207, %c0_208] : memref<52x128x128xbf16, #tpu.memory_space<vmem>>, vector<1x128x128xbf16>
    %267 = vector.shape_cast %266 : vector<1x128x128xbf16> to vector<128x128xbf16>
    %cst_209 = arith.constant dense<0.000000e+00> : vector<8x128xf32>
    %268 = tpu.matmul %241, %267, %cst_209 {dimension_numbers = #tpu.dot_dimension_numbers<[1], [0], [0], [1], [0, 0, 1, 1], [], []>} : vector<8x128xbf16>, vector<128x128xbf16>, vector<8x128xf32> -> vector<8x128xf32>
    %269 = vector.extract_strided_slice %268 {offsets = [0, 0], sizes = [1, 128], strides = [1, 1]} : vector<8x128xf32> to vector<1x128xf32>
    %c6_210 = arith.constant 6 : index
    %c0_211 = arith.constant 0 : index
    %270 = vector.load %arg4[%c6_210, %c0_211] : memref<16x128xf32, #tpu.memory_space<vmem>>, vector<1x128xf32>
    %271 = arith.addf %269, %270 : vector<1x128xf32>
    %cst_212 = arith.constant 0.000000e+00 : f32
    %272 = vector.broadcast %cst_212 : f32 to vector<1x128xf32>
    %273 = arith.cmpf oge, %271, %272 : vector<1x128xf32>
    %cst_213 = arith.constant 0.00999999977 : f32
    %274 = vector.broadcast %cst_213 : f32 to vector<1x128xf32>
    %275 = arith.mulf %274, %271 : vector<1x128xf32>
    %276 = arith.select %273, %271, %275 : vector<1x128xi1>, vector<1x128xf32>
    %c16_214 = arith.constant 16 : index
    %c0_215 = arith.constant 0 : index
    %277 = vector.load %arg10[%c16_214, %c0_215] : memref<32x128xf32, #tpu.memory_space<vmem>>, vector<1x128xf32>
    tpu.vector_store %arg10[%c16_214, %c0_215], %276 {strides = array<i32>} : memref<32x128xf32, #tpu.memory_space<vmem>>, vector<1x128xf32>,
    %c29 = arith.constant 29 : index
    %c0_216 = arith.constant 0 : index
    %c0_217 = arith.constant 0 : index
    %278 = vector.load %arg3[%c29, %c0_216, %c0_217] : memref<52x128x128xbf16, #tpu.memory_space<vmem>>, vector<1x128x128xbf16>
    %279 = vector.shape_cast %278 : vector<1x128x128xbf16> to vector<128x128xbf16>
    %cst_218 = arith.constant dense<0.000000e+00> : vector<8x128xf32>
    %280 = tpu.matmul %241, %279, %cst_218 {dimension_numbers = #tpu.dot_dimension_numbers<[1], [0], [0], [1], [0, 0, 1, 1], [], []>} : vector<8x128xbf16>, vector<128x128xbf16>, vector<8x128xf32> -> vector<8x128xf32>
    %281 = vector.extract_strided_slice %280 {offsets = [0, 0], sizes = [1, 128], strides = [1, 1]} : vector<8x128xf32> to vector<1x128xf32>
    %c7_219 = arith.constant 7 : index
    %c0_220 = arith.constant 0 : index
    %282 = vector.load %arg4[%c7_219, %c0_220] : memref<16x128xf32, #tpu.memory_space<vmem>>, vector<1x128xf32>
    %283 = arith.addf %281, %282 : vector<1x128xf32>
    %cst_221 = arith.constant 0.000000e+00 : f32
    %284 = vector.broadcast %cst_221 : f32 to vector<1x128xf32>
    %285 = arith.cmpf oge, %283, %284 : vector<1x128xf32>
    %cst_222 = arith.constant 0.00999999977 : f32
    %286 = vector.broadcast %cst_222 : f32 to vector<1x128xf32>
    %287 = arith.mulf %286, %283 : vector<1x128xf32>
    %288 = arith.select %285, %283, %287 : vector<1x128xi1>, vector<1x128xf32>
    %c18_223 = arith.constant 18 : index
    %c0_224 = arith.constant 0 : index
    %289 = vector.load %arg10[%c18_223, %c0_224] : memref<32x128xf32, #tpu.memory_space<vmem>>, vector<1x128xf32>
    tpu.vector_store %arg10[%c18_223, %c0_224], %288 {strides = array<i32>} : memref<32x128xf32, #tpu.memory_space<vmem>>, vector<1x128xf32>,
    %c8_225 = arith.constant 8 : index
    %c0_226 = arith.constant 0 : index
    %290 = vector.load %arg4[%c8_225, %c0_226] : memref<16x128xf32, #tpu.memory_space<vmem>>, vector<1x128xf32>
    %291 = vector.shape_cast %290 : vector<1x128xf32> to vector<1x128xf32>
    %292 = vector.broadcast %291 : vector<1x128xf32> to vector<24x128xf32>
    %c0_227 = arith.constant 0 : index
    %c0_228 = arith.constant 0 : index
    %293 = vector.load %arg10[%c0_227, %c0_228] : memref<32x128xf32, #tpu.memory_space<vmem>>, vector<24x128xf32>
    %294 = arith.truncf %293 : vector<24x128xf32> to vector<24x128xbf16>
    %c30 = arith.constant 30 : index
    %c0_229 = arith.constant 0 : index
    %c0_230 = arith.constant 0 : index
    %295 = vector.load %arg3[%c30, %c0_229, %c0_230] : memref<52x128x128xbf16, #tpu.memory_space<vmem>>, vector<1x128x128xbf16>
    %296 = vector.shape_cast %295 : vector<1x128x128xbf16> to vector<128x128xbf16>
    %cst_231 = arith.constant dense<0.000000e+00> : vector<24x128xf32>
    %297 = tpu.matmul %294, %296, %cst_231 {dimension_numbers = #tpu.dot_dimension_numbers<[1], [0], [0], [1], [0, 0, 1, 1], [], []>} : vector<24x128xbf16>, vector<128x128xbf16>, vector<24x128xf32> -> vector<24x128xf32>
    %298 = arith.addf %292, %297 : vector<24x128xf32>
    %c1_232 = arith.constant 1 : index
    %c0_233 = arith.constant 0 : index
    %299 = vector.load %arg10[%c1_232, %c0_233] : memref<32x128xf32, #tpu.memory_space<vmem>>, vector<24x128xf32>
    %300 = arith.truncf %299 : vector<24x128xf32> to vector<24x128xbf16>
    %c31 = arith.constant 31 : index
    %c0_234 = arith.constant 0 : index
    %c0_235 = arith.constant 0 : index
    %301 = vector.load %arg3[%c31, %c0_234, %c0_235] : memref<52x128x128xbf16, #tpu.memory_space<vmem>>, vector<1x128x128xbf16>
    %302 = vector.shape_cast %301 : vector<1x128x128xbf16> to vector<128x128xbf16>
    %cst_236 = arith.constant dense<0.000000e+00> : vector<24x128xf32>
    %303 = tpu.matmul %300, %302, %cst_236 {dimension_numbers = #tpu.dot_dimension_numbers<[1], [0], [0], [1], [0, 0, 1, 1], [], []>} : vector<24x128xbf16>, vector<128x128xbf16>, vector<24x128xf32> -> vector<24x128xf32>
    %304 = arith.addf %298, %303 : vector<24x128xf32>
    %c5_237 = arith.constant 5 : index
    %c0_238 = arith.constant 0 : index
    %305 = vector.load %arg10[%c5_237, %c0_238] : memref<32x128xf32, #tpu.memory_space<vmem>>, vector<24x128xf32>
    %306 = arith.truncf %305 : vector<24x128xf32> to vector<24x128xbf16>
    %c32_239 = arith.constant 32 : index
    %c0_240 = arith.constant 0 : index
    %c0_241 = arith.constant 0 : index
    %307 = vector.load %arg3[%c32_239, %c0_240, %c0_241] : memref<52x128x128xbf16, #tpu.memory_space<vmem>>, vector<1x128x128xbf16>
    %308 = vector.shape_cast %307 : vector<1x128x128xbf16> to vector<128x128xbf16>
    %cst_242 = arith.constant dense<0.000000e+00> : vector<24x128xf32>
    %309 = tpu.matmul %306, %308, %cst_242 {dimension_numbers = #tpu.dot_dimension_numbers<[1], [0], [0], [1], [0, 0, 1, 1], [], []>} : vector<24x128xbf16>, vector<128x128xbf16>, vector<24x128xf32> -> vector<24x128xf32>
    %310 = arith.addf %304, %309 : vector<24x128xf32>
    %c6_243 = arith.constant 6 : index
    %c0_244 = arith.constant 0 : index
    %311 = vector.load %arg10[%c6_243, %c0_244] : memref<32x128xf32, #tpu.memory_space<vmem>>, vector<24x128xf32>
    %312 = arith.truncf %311 : vector<24x128xf32> to vector<24x128xbf16>
    %c33_245 = arith.constant 33 : index
    %c0_246 = arith.constant 0 : index
    %c0_247 = arith.constant 0 : index
    %313 = vector.load %arg3[%c33_245, %c0_246, %c0_247] : memref<52x128x128xbf16, #tpu.memory_space<vmem>>, vector<1x128x128xbf16>
    %314 = vector.shape_cast %313 : vector<1x128x128xbf16> to vector<128x128xbf16>
    %cst_248 = arith.constant dense<0.000000e+00> : vector<24x128xf32>
    %315 = tpu.matmul %312, %314, %cst_248 {dimension_numbers = #tpu.dot_dimension_numbers<[1], [0], [0], [1], [0, 0, 1, 1], [], []>} : vector<24x128xbf16>, vector<128x128xbf16>, vector<24x128xf32> -> vector<24x128xf32>
    %316 = arith.addf %310, %315 : vector<24x128xf32>
    %cst_249 = arith.constant 0.000000e+00 : f32
    %317 = vector.broadcast %cst_249 : f32 to vector<24x128xf32>
    %318 = arith.cmpf oge, %316, %317 : vector<24x128xf32>
    %cst_250 = arith.constant 0.00999999977 : f32
    %319 = vector.broadcast %cst_250 : f32 to vector<24x128xf32>
    %320 = arith.mulf %319, %316 : vector<24x128xf32>
    %321 = arith.select %318, %316, %320 : vector<24x128xi1>, vector<24x128xf32>
    %c0_251 = arith.constant 0 : index
    %c0_252 = arith.constant 0 : index
    %322 = vector.load %arg11[%c0_251, %c0_252] : memref<24x128xf32, #tpu.memory_space<vmem>>, vector<24x128xf32>
    tpu.vector_store %arg11[%c0_251, %c0_252], %321 {strides = array<i32>} : memref<24x128xf32, #tpu.memory_space<vmem>>, vector<24x128xf32>,
    %cst_253 = arith.constant 0.000000e+00 : f32
    %323 = vector.broadcast %cst_253 : f32 to vector<72x128xf32>
    %c0_254 = arith.constant 0 : index
    %c0_255 = arith.constant 0 : index
    %324 = vector.load %arg12[%c0_254, %c0_255] : memref<72x128xf32, #tpu.memory_space<vmem>>, vector<72x128xf32>
    tpu.vector_store %arg12[%c0_254, %c0_255], %323 {strides = array<i32>} : memref<72x128xf32, #tpu.memory_space<vmem>>, vector<72x128xf32>,
    %c0_256 = arith.constant 0 : index
    %c0_257 = arith.constant 0 : index
    %325 = vector.load %arg11[%c0_256, %c0_257] : memref<24x128xf32, #tpu.memory_space<vmem>>, vector<4x128xf32>
    %c18_258 = arith.constant 18 : index
    %c0_259 = arith.constant 0 : index
    %326 = vector.load %arg12[%c18_258, %c0_259] : memref<72x128xf32, #tpu.memory_space<vmem>>, vector<4x128xf32>
    tpu.vector_store %arg12[%c18_258, %c0_259], %325 {strides = array<i32>} : memref<72x128xf32, #tpu.memory_space<vmem>>, vector<4x128xf32>,
    %c5_260 = arith.constant 5 : index
    %c0_261 = arith.constant 0 : index
    %327 = vector.load %arg11[%c5_260, %c0_261] : memref<24x128xf32, #tpu.memory_space<vmem>>, vector<4x128xf32>
    %c26_262 = arith.constant 26 : index
    %c0_263 = arith.constant 0 : index
    %328 = vector.load %arg12[%c26_262, %c0_263] : memref<72x128xf32, #tpu.memory_space<vmem>>, vector<4x128xf32>
    tpu.vector_store %arg12[%c26_262, %c0_263], %327 {strides = array<i32>} : memref<72x128xf32, #tpu.memory_space<vmem>>, vector<4x128xf32>,
    %c10_264 = arith.constant 10 : index
    %c0_265 = arith.constant 0 : index
    %329 = vector.load %arg11[%c10_264, %c0_265] : memref<24x128xf32, #tpu.memory_space<vmem>>, vector<4x128xf32>
    %c34_266 = arith.constant 34 : index
    %c0_267 = arith.constant 0 : index
    %330 = vector.load %arg12[%c34_266, %c0_267] : memref<72x128xf32, #tpu.memory_space<vmem>>, vector<4x128xf32>
    tpu.vector_store %arg12[%c34_266, %c0_267], %329 {strides = array<i32>} : memref<72x128xf32, #tpu.memory_space<vmem>>, vector<4x128xf32>,
    %c15_268 = arith.constant 15 : index
    %c0_269 = arith.constant 0 : index
    %331 = vector.load %arg11[%c15_268, %c0_269] : memref<24x128xf32, #tpu.memory_space<vmem>>, vector<4x128xf32>
    %c42_270 = arith.constant 42 : index
    %c0_271 = arith.constant 0 : index
    %332 = vector.load %arg12[%c42_270, %c0_271] : memref<72x128xf32, #tpu.memory_space<vmem>>, vector<4x128xf32>
    tpu.vector_store %arg12[%c42_270, %c0_271], %331 {strides = array<i32>} : memref<72x128xf32, #tpu.memory_space<vmem>>, vector<4x128xf32>,
    %c9_272 = arith.constant 9 : index
    %c0_273 = arith.constant 0 : index
    %333 = vector.load %arg4[%c9_272, %c0_273] : memref<16x128xf32, #tpu.memory_space<vmem>>, vector<1x128xf32>
    %334 = vector.shape_cast %333 : vector<1x128xf32> to vector<1x128xf32>
    %335 = vector.broadcast %334 : vector<1x128xf32> to vector<48x128xf32>
    %c0_274 = arith.constant 0 : index
    %c0_275 = arith.constant 0 : index
    %336 = vector.load %arg12[%c0_274, %c0_275] : memref<72x128xf32, #tpu.memory_space<vmem>>, vector<48x128xf32>
    %337 = arith.truncf %336 : vector<48x128xf32> to vector<48x128xbf16>
    %c34_276 = arith.constant 34 : index
    %c0_277 = arith.constant 0 : index
    %c0_278 = arith.constant 0 : index
    %338 = vector.load %arg3[%c34_276, %c0_277, %c0_278] : memref<52x128x128xbf16, #tpu.memory_space<vmem>>, vector<1x128x128xbf16>
    %339 = vector.shape_cast %338 : vector<1x128x128xbf16> to vector<128x128xbf16>
    %cst_279 = arith.constant dense<0.000000e+00> : vector<48x128xf32>
    %340 = tpu.matmul %337, %339, %cst_279 {dimension_numbers = #tpu.dot_dimension_numbers<[1], [0], [0], [1], [0, 0, 1, 1], [], []>} : vector<48x128xbf16>, vector<128x128xbf16>, vector<48x128xf32> -> vector<48x128xf32>
    %341 = arith.addf %335, %340 : vector<48x128xf32>
    %c1_280 = arith.constant 1 : index
    %c0_281 = arith.constant 0 : index
    %342 = vector.load %arg12[%c1_280, %c0_281] : memref<72x128xf32, #tpu.memory_space<vmem>>, vector<48x128xf32>
    %343 = arith.truncf %342 : vector<48x128xf32> to vector<48x128xbf16>
    %c35_282 = arith.constant 35 : index
    %c0_283 = arith.constant 0 : index
    %c0_284 = arith.constant 0 : index
    %344 = vector.load %arg3[%c35_282, %c0_283, %c0_284] : memref<52x128x128xbf16, #tpu.memory_space<vmem>>, vector<1x128x128xbf16>
    %345 = vector.shape_cast %344 : vector<1x128x128xbf16> to vector<128x128xbf16>
    %cst_285 = arith.constant dense<0.000000e+00> : vector<48x128xf32>
    %346 = tpu.matmul %343, %345, %cst_285 {dimension_numbers = #tpu.dot_dimension_numbers<[1], [0], [0], [1], [0, 0, 1, 1], [], []>} : vector<48x128xbf16>, vector<128x128xbf16>, vector<48x128xf32> -> vector<48x128xf32>
    %347 = arith.addf %341, %346 : vector<48x128xf32>
    %c2_286 = arith.constant 2 : index
    %c0_287 = arith.constant 0 : index
    %348 = vector.load %arg12[%c2_286, %c0_287] : memref<72x128xf32, #tpu.memory_space<vmem>>, vector<48x128xf32>
    %349 = arith.truncf %348 : vector<48x128xf32> to vector<48x128xbf16>
    %c36 = arith.constant 36 : index
    %c0_288 = arith.constant 0 : index
    %c0_289 = arith.constant 0 : index
    %350 = vector.load %arg3[%c36, %c0_288, %c0_289] : memref<52x128x128xbf16, #tpu.memory_space<vmem>>, vector<1x128x128xbf16>
    %351 = vector.shape_cast %350 : vector<1x128x128xbf16> to vector<128x128xbf16>
    %cst_290 = arith.constant dense<0.000000e+00> : vector<48x128xf32>
    %352 = tpu.matmul %349, %351, %cst_290 {dimension_numbers = #tpu.dot_dimension_numbers<[1], [0], [0], [1], [0, 0, 1, 1], [], []>} : vector<48x128xbf16>, vector<128x128xbf16>, vector<48x128xf32> -> vector<48x128xf32>
    %353 = arith.addf %347, %352 : vector<48x128xf32>
    %c8_291 = arith.constant 8 : index
    %c0_292 = arith.constant 0 : index
    %354 = vector.load %arg12[%c8_291, %c0_292] : memref<72x128xf32, #tpu.memory_space<vmem>>, vector<48x128xf32>
    %355 = arith.truncf %354 : vector<48x128xf32> to vector<48x128xbf16>
    %c37 = arith.constant 37 : index
    %c0_293 = arith.constant 0 : index
    %c0_294 = arith.constant 0 : index
    %356 = vector.load %arg3[%c37, %c0_293, %c0_294] : memref<52x128x128xbf16, #tpu.memory_space<vmem>>, vector<1x128x128xbf16>
    %357 = vector.shape_cast %356 : vector<1x128x128xbf16> to vector<128x128xbf16>
    %cst_295 = arith.constant dense<0.000000e+00> : vector<48x128xf32>
    %358 = tpu.matmul %355, %357, %cst_295 {dimension_numbers = #tpu.dot_dimension_numbers<[1], [0], [0], [1], [0, 0, 1, 1], [], []>} : vector<48x128xbf16>, vector<128x128xbf16>, vector<48x128xf32> -> vector<48x128xf32>
    %359 = arith.addf %353, %358 : vector<48x128xf32>
    %c9_296 = arith.constant 9 : index
    %c0_297 = arith.constant 0 : index
    %360 = vector.load %arg12[%c9_296, %c0_297] : memref<72x128xf32, #tpu.memory_space<vmem>>, vector<48x128xf32>
    %361 = arith.truncf %360 : vector<48x128xf32> to vector<48x128xbf16>
    %c38 = arith.constant 38 : index
    %c0_298 = arith.constant 0 : index
    %c0_299 = arith.constant 0 : index
    %362 = vector.load %arg3[%c38, %c0_298, %c0_299] : memref<52x128x128xbf16, #tpu.memory_space<vmem>>, vector<1x128x128xbf16>
    %363 = vector.shape_cast %362 : vector<1x128x128xbf16> to vector<128x128xbf16>
    %cst_300 = arith.constant dense<0.000000e+00> : vector<48x128xf32>
    %364 = tpu.matmul %361, %363, %cst_300 {dimension_numbers = #tpu.dot_dimension_numbers<[1], [0], [0], [1], [0, 0, 1, 1], [], []>} : vector<48x128xbf16>, vector<128x128xbf16>, vector<48x128xf32> -> vector<48x128xf32>
    %365 = arith.addf %359, %364 : vector<48x128xf32>
    %c10_301 = arith.constant 10 : index
    %c0_302 = arith.constant 0 : index
    %366 = vector.load %arg12[%c10_301, %c0_302] : memref<72x128xf32, #tpu.memory_space<vmem>>, vector<48x128xf32>
    %367 = arith.truncf %366 : vector<48x128xf32> to vector<48x128xbf16>
    %c39 = arith.constant 39 : index
    %c0_303 = arith.constant 0 : index
    %c0_304 = arith.constant 0 : index
    %368 = vector.load %arg3[%c39, %c0_303, %c0_304] : memref<52x128x128xbf16, #tpu.memory_space<vmem>>, vector<1x128x128xbf16>
    %369 = vector.shape_cast %368 : vector<1x128x128xbf16> to vector<128x128xbf16>
    %cst_305 = arith.constant dense<0.000000e+00> : vector<48x128xf32>
    %370 = tpu.matmul %367, %369, %cst_305 {dimension_numbers = #tpu.dot_dimension_numbers<[1], [0], [0], [1], [0, 0, 1, 1], [], []>} : vector<48x128xbf16>, vector<128x128xbf16>, vector<48x128xf32> -> vector<48x128xf32>
    %371 = arith.addf %365, %370 : vector<48x128xf32>
    %c16_306 = arith.constant 16 : index
    %c0_307 = arith.constant 0 : index
    %372 = vector.load %arg12[%c16_306, %c0_307] : memref<72x128xf32, #tpu.memory_space<vmem>>, vector<48x128xf32>
    %373 = arith.truncf %372 : vector<48x128xf32> to vector<48x128xbf16>
    %c40 = arith.constant 40 : index
    %c0_308 = arith.constant 0 : index
    %c0_309 = arith.constant 0 : index
    %374 = vector.load %arg3[%c40, %c0_308, %c0_309] : memref<52x128x128xbf16, #tpu.memory_space<vmem>>, vector<1x128x128xbf16>
    %375 = vector.shape_cast %374 : vector<1x128x128xbf16> to vector<128x128xbf16>
    %cst_310 = arith.constant dense<0.000000e+00> : vector<48x128xf32>
    %376 = tpu.matmul %373, %375, %cst_310 {dimension_numbers = #tpu.dot_dimension_numbers<[1], [0], [0], [1], [0, 0, 1, 1], [], []>} : vector<48x128xbf16>, vector<128x128xbf16>, vector<48x128xf32> -> vector<48x128xf32>
    %377 = arith.addf %371, %376 : vector<48x128xf32>
    %c17_311 = arith.constant 17 : index
    %c0_312 = arith.constant 0 : index
    %378 = vector.load %arg12[%c17_311, %c0_312] : memref<72x128xf32, #tpu.memory_space<vmem>>, vector<48x128xf32>
    %379 = arith.truncf %378 : vector<48x128xf32> to vector<48x128xbf16>
    %c41 = arith.constant 41 : index
    %c0_313 = arith.constant 0 : index
    %c0_314 = arith.constant 0 : index
    %380 = vector.load %arg3[%c41, %c0_313, %c0_314] : memref<52x128x128xbf16, #tpu.memory_space<vmem>>, vector<1x128x128xbf16>
    %381 = vector.shape_cast %380 : vector<1x128x128xbf16> to vector<128x128xbf16>
    %cst_315 = arith.constant dense<0.000000e+00> : vector<48x128xf32>
    %382 = tpu.matmul %379, %381, %cst_315 {dimension_numbers = #tpu.dot_dimension_numbers<[1], [0], [0], [1], [0, 0, 1, 1], [], []>} : vector<48x128xbf16>, vector<128x128xbf16>, vector<48x128xf32> -> vector<48x128xf32>
    %383 = arith.addf %377, %382 : vector<48x128xf32>
    %c18_316 = arith.constant 18 : index
    %c0_317 = arith.constant 0 : index
    %384 = vector.load %arg12[%c18_316, %c0_317] : memref<72x128xf32, #tpu.memory_space<vmem>>, vector<48x128xf32>
    %385 = arith.truncf %384 : vector<48x128xf32> to vector<48x128xbf16>
    %c42_318 = arith.constant 42 : index
    %c0_319 = arith.constant 0 : index
    %c0_320 = arith.constant 0 : index
    %386 = vector.load %arg3[%c42_318, %c0_319, %c0_320] : memref<52x128x128xbf16, #tpu.memory_space<vmem>>, vector<1x128x128xbf16>
    %387 = vector.shape_cast %386 : vector<1x128x128xbf16> to vector<128x128xbf16>
    %cst_321 = arith.constant dense<0.000000e+00> : vector<48x128xf32>
    %388 = tpu.matmul %385, %387, %cst_321 {dimension_numbers = #tpu.dot_dimension_numbers<[1], [0], [0], [1], [0, 0, 1, 1], [], []>} : vector<48x128xbf16>, vector<128x128xbf16>, vector<48x128xf32> -> vector<48x128xf32>
    %389 = arith.addf %383, %388 : vector<48x128xf32>
    %cst_322 = arith.constant 0.000000e+00 : f32
    %390 = vector.broadcast %cst_322 : f32 to vector<48x128xf32>
    %391 = arith.cmpf oge, %389, %390 : vector<48x128xf32>
    %cst_323 = arith.constant 0.00999999977 : f32
    %392 = vector.broadcast %cst_323 : f32 to vector<48x128xf32>
    %393 = arith.mulf %392, %389 : vector<48x128xf32>
    %394 = arith.select %391, %389, %393 : vector<48x128xi1>, vector<48x128xf32>
    %c0_324 = arith.constant 0 : index
    %c0_325 = arith.constant 0 : index
    %395 = vector.load %arg13[%c0_324, %c0_325] : memref<48x128xf32, #tpu.memory_space<vmem>>, vector<48x128xf32>
    tpu.vector_store %arg13[%c0_324, %c0_325], %394 {strides = array<i32>} : memref<48x128xf32, #tpu.memory_space<vmem>>, vector<48x128xf32>,
    %cst_326 = arith.constant 0.000000e+00 : f32
    %396 = vector.broadcast %cst_326 : f32 to vector<232x128xf32>
    %c0_327 = arith.constant 0 : index
    %c0_328 = arith.constant 0 : index
    %397 = vector.load %arg14[%c0_327, %c0_328] : memref<232x128xf32, #tpu.memory_space<vmem>>, vector<232x128xf32>
    tpu.vector_store %arg14[%c0_327, %c0_328], %396 {strides = array<i32>} : memref<232x128xf32, #tpu.memory_space<vmem>>, vector<232x128xf32>,
    %c0_329 = arith.constant 0 : index
    %c0_330 = arith.constant 0 : index
    %398 = vector.load %arg13[%c0_329, %c0_330] : memref<48x128xf32, #tpu.memory_space<vmem>>, vector<6x128xf32>
    %c32_331 = arith.constant 32 : index
    %c0_332 = arith.constant 0 : index
    %399 = tpu.strided_load %arg14[%c32_331, %c0_332] {strides = array<i32: 2, 1>} : memref<232x128xf32, #tpu.memory_space<vmem>>, vector<6x128xf32>
    tpu.strided_store %arg14[%c32_331, %c0_332], %398 {strides = array<i32: 2, 1>} : memref<232x128xf32, #tpu.memory_space<vmem>>, vector<6x128xf32>
    %c8_333 = arith.constant 8 : index
    %c0_334 = arith.constant 0 : index
    %400 = vector.load %arg13[%c8_333, %c0_334] : memref<48x128xf32, #tpu.memory_space<vmem>>, vector<6x128xf32>
    %c62 = arith.constant 62 : index
    %c0_335 = arith.constant 0 : index
    %401 = tpu.strided_load %arg14[%c62, %c0_335] {strides = array<i32: 2, 1>} : memref<232x128xf32, #tpu.memory_space<vmem>>, vector<6x128xf32>
    tpu.strided_store %arg14[%c62, %c0_335], %400 {strides = array<i32: 2, 1>} : memref<232x128xf32, #tpu.memory_space<vmem>>, vector<6x128xf32>
    %c16_336 = arith.constant 16 : index
    %c0_337 = arith.constant 0 : index
    %402 = vector.load %arg13[%c16_336, %c0_337] : memref<48x128xf32, #tpu.memory_space<vmem>>, vector<6x128xf32>
    %c92 = arith.constant 92 : index
    %c0_338 = arith.constant 0 : index
    %403 = tpu.strided_load %arg14[%c92, %c0_338] {strides = array<i32: 2, 1>} : memref<232x128xf32, #tpu.memory_space<vmem>>, vector<6x128xf32>
    tpu.strided_store %arg14[%c92, %c0_338], %402 {strides = array<i32: 2, 1>} : memref<232x128xf32, #tpu.memory_space<vmem>>, vector<6x128xf32>
    %c24_339 = arith.constant 24 : index
    %c0_340 = arith.constant 0 : index
    %404 = vector.load %arg13[%c24_339, %c0_340] : memref<48x128xf32, #tpu.memory_space<vmem>>, vector<6x128xf32>
    %c122 = arith.constant 122 : index
    %c0_341 = arith.constant 0 : index
    %405 = tpu.strided_load %arg14[%c122, %c0_341] {strides = array<i32: 2, 1>} : memref<232x128xf32, #tpu.memory_space<vmem>>, vector<6x128xf32>
    tpu.strided_store %arg14[%c122, %c0_341], %404 {strides = array<i32: 2, 1>} : memref<232x128xf32, #tpu.memory_space<vmem>>, vector<6x128xf32>
    %c32_342 = arith.constant 32 : index
    %c0_343 = arith.constant 0 : index
    %406 = vector.load %arg13[%c32_342, %c0_343] : memref<48x128xf32, #tpu.memory_space<vmem>>, vector<6x128xf32>
    %c152 = arith.constant 152 : index
    %c0_344 = arith.constant 0 : index
    %407 = tpu.strided_load %arg14[%c152, %c0_344] {strides = array<i32: 2, 1>} : memref<232x128xf32, #tpu.memory_space<vmem>>, vector<6x128xf32>
    tpu.strided_store %arg14[%c152, %c0_344], %406 {strides = array<i32: 2, 1>} : memref<232x128xf32, #tpu.memory_space<vmem>>, vector<6x128xf32>
    %c40_345 = arith.constant 40 : index
    %c0_346 = arith.constant 0 : index
    %408 = vector.load %arg13[%c40_345, %c0_346] : memref<48x128xf32, #tpu.memory_space<vmem>>, vector<6x128xf32>
    %c182 = arith.constant 182 : index
    %c0_347 = arith.constant 0 : index
    %409 = tpu.strided_load %arg14[%c182, %c0_347] {strides = array<i32: 2, 1>} : memref<232x128xf32, #tpu.memory_space<vmem>>, vector<6x128xf32>
    tpu.strided_store %arg14[%c182, %c0_347], %408 {strides = array<i32: 2, 1>} : memref<232x128xf32, #tpu.memory_space<vmem>>, vector<6x128xf32>
    %c10_348 = arith.constant 10 : index
    %c0_349 = arith.constant 0 : index
    %410 = vector.load %arg4[%c10_348, %c0_349] : memref<16x128xf32, #tpu.memory_space<vmem>>, vector<1x128xf32>
    %411 = vector.shape_cast %410 : vector<1x128xf32> to vector<1x128xf32>
    %412 = vector.broadcast %411 : vector<1x128xf32> to vector<195x128xf32>
    %c0_350 = arith.constant 0 : index
    %c0_351 = arith.constant 0 : index
    %413 = vector.load %arg14[%c0_350, %c0_351] : memref<232x128xf32, #tpu.memory_space<vmem>>, vector<195x128xf32>
    %414 = arith.truncf %413 : vector<195x128xf32> to vector<195x128xbf16>
    %c43 = arith.constant 43 : index
    %c0_352 = arith.constant 0 : index
    %c0_353 = arith.constant 0 : index
    %415 = vector.load %arg3[%c43, %c0_352, %c0_353] : memref<52x128x128xbf16, #tpu.memory_space<vmem>>, vector<1x128x128xbf16>
    %416 = vector.shape_cast %415 : vector<1x128x128xbf16> to vector<128x128xbf16>
    %cst_354 = arith.constant dense<0.000000e+00> : vector<195x128xf32>
    %417 = tpu.matmul %414, %416, %cst_354 {dimension_numbers = #tpu.dot_dimension_numbers<[1], [0], [0], [1], [0, 0, 1, 1], [], []>} : vector<195x128xbf16>, vector<128x128xbf16>, vector<195x128xf32> -> vector<195x128xf32>
    %418 = arith.addf %412, %417 : vector<195x128xf32>
    %c1_355 = arith.constant 1 : index
    %c0_356 = arith.constant 0 : index
    %419 = vector.load %arg14[%c1_355, %c0_356] : memref<232x128xf32, #tpu.memory_space<vmem>>, vector<195x128xf32>
    %420 = arith.truncf %419 : vector<195x128xf32> to vector<195x128xbf16>
    %c44 = arith.constant 44 : index
    %c0_357 = arith.constant 0 : index
    %c0_358 = arith.constant 0 : index
    %421 = vector.load %arg3[%c44, %c0_357, %c0_358] : memref<52x128x128xbf16, #tpu.memory_space<vmem>>, vector<1x128x128xbf16>
    %422 = vector.shape_cast %421 : vector<1x128x128xbf16> to vector<128x128xbf16>
    %cst_359 = arith.constant dense<0.000000e+00> : vector<195x128xf32>
    %423 = tpu.matmul %420, %422, %cst_359 {dimension_numbers = #tpu.dot_dimension_numbers<[1], [0], [0], [1], [0, 0, 1, 1], [], []>} : vector<195x128xbf16>, vector<128x128xbf16>, vector<195x128xf32> -> vector<195x128xf32>
    %424 = arith.addf %418, %423 : vector<195x128xf32>
    %c2_360 = arith.constant 2 : index
    %c0_361 = arith.constant 0 : index
    %425 = vector.load %arg14[%c2_360, %c0_361] : memref<232x128xf32, #tpu.memory_space<vmem>>, vector<195x128xf32>
    %426 = arith.truncf %425 : vector<195x128xf32> to vector<195x128xbf16>
    %c45 = arith.constant 45 : index
    %c0_362 = arith.constant 0 : index
    %c0_363 = arith.constant 0 : index
    %427 = vector.load %arg3[%c45, %c0_362, %c0_363] : memref<52x128x128xbf16, #tpu.memory_space<vmem>>, vector<1x128x128xbf16>
    %428 = vector.shape_cast %427 : vector<1x128x128xbf16> to vector<128x128xbf16>
    %cst_364 = arith.constant dense<0.000000e+00> : vector<195x128xf32>
    %429 = tpu.matmul %426, %428, %cst_364 {dimension_numbers = #tpu.dot_dimension_numbers<[1], [0], [0], [1], [0, 0, 1, 1], [], []>} : vector<195x128xbf16>, vector<128x128xbf16>, vector<195x128xf32> -> vector<195x128xf32>
    %430 = arith.addf %424, %429 : vector<195x128xf32>
    %c15_365 = arith.constant 15 : index
    %c0_366 = arith.constant 0 : index
    %431 = vector.load %arg14[%c15_365, %c0_366] : memref<232x128xf32, #tpu.memory_space<vmem>>, vector<195x128xf32>
    %432 = arith.truncf %431 : vector<195x128xf32> to vector<195x128xbf16>
    %c46 = arith.constant 46 : index
    %c0_367 = arith.constant 0 : index
    %c0_368 = arith.constant 0 : index
    %433 = vector.load %arg3[%c46, %c0_367, %c0_368] : memref<52x128x128xbf16, #tpu.memory_space<vmem>>, vector<1x128x128xbf16>
    %434 = vector.shape_cast %433 : vector<1x128x128xbf16> to vector<128x128xbf16>
    %cst_369 = arith.constant dense<0.000000e+00> : vector<195x128xf32>
    %435 = tpu.matmul %432, %434, %cst_369 {dimension_numbers = #tpu.dot_dimension_numbers<[1], [0], [0], [1], [0, 0, 1, 1], [], []>} : vector<195x128xbf16>, vector<128x128xbf16>, vector<195x128xf32> -> vector<195x128xf32>
    %436 = arith.addf %430, %435 : vector<195x128xf32>
    %c16_370 = arith.constant 16 : index
    %c0_371 = arith.constant 0 : index
    %437 = vector.load %arg14[%c16_370, %c0_371] : memref<232x128xf32, #tpu.memory_space<vmem>>, vector<195x128xf32>
    %438 = arith.truncf %437 : vector<195x128xf32> to vector<195x128xbf16>
    %c47 = arith.constant 47 : index
    %c0_372 = arith.constant 0 : index
    %c0_373 = arith.constant 0 : index
    %439 = vector.load %arg3[%c47, %c0_372, %c0_373] : memref<52x128x128xbf16, #tpu.memory_space<vmem>>, vector<1x128x128xbf16>
    %440 = vector.shape_cast %439 : vector<1x128x128xbf16> to vector<128x128xbf16>
    %cst_374 = arith.constant dense<0.000000e+00> : vector<195x128xf32>
    %441 = tpu.matmul %438, %440, %cst_374 {dimension_numbers = #tpu.dot_dimension_numbers<[1], [0], [0], [1], [0, 0, 1, 1], [], []>} : vector<195x128xbf16>, vector<128x128xbf16>, vector<195x128xf32> -> vector<195x128xf32>
    %442 = arith.addf %436, %441 : vector<195x128xf32>
    %c17_375 = arith.constant 17 : index
    %c0_376 = arith.constant 0 : index
    %443 = vector.load %arg14[%c17_375, %c0_376] : memref<232x128xf32, #tpu.memory_space<vmem>>, vector<195x128xf32>
    %444 = arith.truncf %443 : vector<195x128xf32> to vector<195x128xbf16>
    %c48 = arith.constant 48 : index
    %c0_377 = arith.constant 0 : index
    %c0_378 = arith.constant 0 : index
    %445 = vector.load %arg3[%c48, %c0_377, %c0_378] : memref<52x128x128xbf16, #tpu.memory_space<vmem>>, vector<1x128x128xbf16>
    %446 = vector.shape_cast %445 : vector<1x128x128xbf16> to vector<128x128xbf16>
    %cst_379 = arith.constant dense<0.000000e+00> : vector<195x128xf32>
    %447 = tpu.matmul %444, %446, %cst_379 {dimension_numbers = #tpu.dot_dimension_numbers<[1], [0], [0], [1], [0, 0, 1, 1], [], []>} : vector<195x128xbf16>, vector<128x128xbf16>, vector<195x128xf32> -> vector<195x128xf32>
    %448 = arith.addf %442, %447 : vector<195x128xf32>
    %c30_380 = arith.constant 30 : index
    %c0_381 = arith.constant 0 : index
    %449 = vector.load %arg14[%c30_380, %c0_381] : memref<232x128xf32, #tpu.memory_space<vmem>>, vector<195x128xf32>
    %450 = arith.truncf %449 : vector<195x128xf32> to vector<195x128xbf16>
    %c49 = arith.constant 49 : index
    %c0_382 = arith.constant 0 : index
    %c0_383 = arith.constant 0 : index
    %451 = vector.load %arg3[%c49, %c0_382, %c0_383] : memref<52x128x128xbf16, #tpu.memory_space<vmem>>, vector<1x128x128xbf16>
    %452 = vector.shape_cast %451 : vector<1x128x128xbf16> to vector<128x128xbf16>
    %cst_384 = arith.constant dense<0.000000e+00> : vector<195x128xf32>
    %453 = tpu.matmul %450, %452, %cst_384 {dimension_numbers = #tpu.dot_dimension_numbers<[1], [0], [0], [1], [0, 0, 1, 1], [], []>} : vector<195x128xbf16>, vector<128x128xbf16>, vector<195x128xf32> -> vector<195x128xf32>
    %454 = arith.addf %448, %453 : vector<195x128xf32>
    %c31_385 = arith.constant 31 : index
    %c0_386 = arith.constant 0 : index
    %455 = vector.load %arg14[%c31_385, %c0_386] : memref<232x128xf32, #tpu.memory_space<vmem>>, vector<195x128xf32>
    %456 = arith.truncf %455 : vector<195x128xf32> to vector<195x128xbf16>
    %c50 = arith.constant 50 : index
    %c0_387 = arith.constant 0 : index
    %c0_388 = arith.constant 0 : index
    %457 = vector.load %arg3[%c50, %c0_387, %c0_388] : memref<52x128x128xbf16, #tpu.memory_space<vmem>>, vector<1x128x128xbf16>
    %458 = vector.shape_cast %457 : vector<1x128x128xbf16> to vector<128x128xbf16>
    %cst_389 = arith.constant dense<0.000000e+00> : vector<195x128xf32>
    %459 = tpu.matmul %456, %458, %cst_389 {dimension_numbers = #tpu.dot_dimension_numbers<[1], [0], [0], [1], [0, 0, 1, 1], [], []>} : vector<195x128xbf16>, vector<128x128xbf16>, vector<195x128xf32> -> vector<195x128xf32>
    %460 = arith.addf %454, %459 : vector<195x128xf32>
    %c32_390 = arith.constant 32 : index
    %c0_391 = arith.constant 0 : index
    %461 = vector.load %arg14[%c32_390, %c0_391] : memref<232x128xf32, #tpu.memory_space<vmem>>, vector<195x128xf32>
    %462 = arith.truncf %461 : vector<195x128xf32> to vector<195x128xbf16>
    %c51 = arith.constant 51 : index
    %c0_392 = arith.constant 0 : index
    %c0_393 = arith.constant 0 : index
    %463 = vector.load %arg3[%c51, %c0_392, %c0_393] : memref<52x128x128xbf16, #tpu.memory_space<vmem>>, vector<1x128x128xbf16>
    %464 = vector.shape_cast %463 : vector<1x128x128xbf16> to vector<128x128xbf16>
    %cst_394 = arith.constant dense<0.000000e+00> : vector<195x128xf32>
    %465 = tpu.matmul %462, %464, %cst_394 {dimension_numbers = #tpu.dot_dimension_numbers<[1], [0], [0], [1], [0, 0, 1, 1], [], []>} : vector<195x128xbf16>, vector<128x128xbf16>, vector<195x128xf32> -> vector<195x128xf32>
    %466 = arith.addf %460, %465 : vector<195x128xf32>
    %c0_395 = arith.constant 0 : index
    %c0_396 = arith.constant 0 : index
    %c0_397 = arith.constant 0 : index
    %467 = vector.load %arg5[%c0_395, %c0_396, %c0_397] : memref<1x200x128xf32, #tpu.memory_space<vmem>>, vector<1x195x128xf32>
    %468 = vector.shape_cast %467 : vector<1x195x128xf32> to vector<195x128xf32>
    %469 = vector.shape_cast %466 : vector<195x128xf32> to vector<1x195x128xf32>
    tpu.vector_store %arg5[%c0_395, %c0_396, %c0_397], %469 {strides = array<i32>} : memref<1x200x128xf32, #tpu.memory_space<vmem>>, vector<1x195x128xf32>,
    %470 = vector.shape_cast %236 : vector<1x1xf32> to vector<1x1xf32>
    %471 = vector.broadcast %470 : vector<1x1xf32> to vector<5x128xf32>
    %c0_398 = arith.constant 0 : index
    %c195 = arith.constant 195 : index
    %c0_399 = arith.constant 0 : index
    %472 = vector.load %arg5[%c0_398, %c195, %c0_399] : memref<1x200x128xf32, #tpu.memory_space<vmem>>, vector<1x5x128xf32>
    %473 = vector.shape_cast %472 : vector<1x5x128xf32> to vector<5x128xf32>
    %474 = vector.shape_cast %471 : vector<5x128xf32> to vector<1x5x128xf32>
    tpu.vector_store %arg5[%c0_398, %c195, %c0_399], %474 {strides = array<i32>} : memref<1x200x128xf32, #tpu.memory_space<vmem>>, vector<1x5x128xf32>,
    return
  }
  func.func @transform_0(%arg0: i32) -> (i32, i32, i32) {
    %c0_i32 = arith.constant 0 : i32
    %c0_i32_0 = arith.constant 0 : i32
    %c0_i32_1 = arith.constant 0 : i32
    return %arg0, %c0_i32, %c0_i32_0 : i32, i32, i32
  }
  func.func @transform_1(%arg0: i32) -> (i32, i32, i32) {
    %c0_i32 = arith.constant 0 : i32
    %c0_i32_0 = arith.constant 0 : i32
    %c0_i32_1 = arith.constant 0 : i32
    return %arg0, %c0_i32, %c0_i32_0 : i32, i32, i32
  }
  func.func @transform_2(%arg0: i32) -> (i32, i32, i32) {
    %c0_i32 = arith.constant 0 : i32
    %c0_i32_0 = arith.constant 0 : i32
    %c0_i32_1 = arith.constant 0 : i32
    %c0_i32_2 = arith.constant 0 : i32
    return %c0_i32, %c0_i32_0, %c0_i32_1 : i32, i32, i32
  }
  func.func @transform_3(%arg0: i32) -> (i32, i32) {
    %c0_i32 = arith.constant 0 : i32
    %c0_i32_0 = arith.constant 0 : i32
    %c0_i32_1 = arith.constant 0 : i32
    return %c0_i32, %c0_i32_0 : i32, i32
  }
  func.func @transform_4(%arg0: i32) -> (i32, i32, i32) {
    %c0_i32 = arith.constant 0 : i32
    %c0_i32_0 = arith.constant 0 : i32
    %c0_i32_1 = arith.constant 0 : i32
    return %arg0, %c0_i32, %c0_i32_0 : i32, i32, i32
  }
}

</mosaic_0001>

<llo_original>
// kernel: vae_forward.1
$region0: #{vae_forward.1}
  #allocation0 [shape = 'u32[]', space=smem, size = 0x4, offset = 0x4, fixed_abs, tag = 'smem constant byte address 0x4 - core index']
  #allocation1 [shape = 'u32[144,128]{1,0:T(1,128)}', space=vmem, size = 0x12000, scoped, tag = 'internal scratch']
  #allocation2 [shape = 'f32[208,128]{1,0:T(8,128)}', space=vmem, size = 0x1a000, scoped, tag = 'scratch operand']
  #allocation3 [shape = 'f32[56,128]{1,0:T(8,128)}', space=vmem, size = 0x7000, scoped, tag = 'scratch operand']
  #allocation4 [shape = 'f32[40,128]{1,0:T(8,128)}', space=vmem, size = 0x5000, scoped, tag = 'scratch operand']
  #allocation5 [shape = 'f32[24,128]{1,0:T(8,128)}', space=vmem, size = 0x3000, scoped, tag = 'scratch operand']
  #allocation6 [shape = 'f32[32,128]{1,0:T(8,128)}', space=vmem, size = 0x4000, scoped, tag = 'scratch operand']
  #allocation7 [shape = 'f32[24,128]{1,0:T(8,128)}', space=vmem, size = 0x3000, scoped, tag = 'scratch operand']
  #allocation8 [shape = 'f32[72,128]{1,0:T(8,128)}', space=vmem, size = 0x9000, scoped, tag = 'scratch operand']
  #allocation9 [shape = 'f32[48,128]{1,0:T(8,128)}', space=vmem, size = 0x6000, scoped, tag = 'scratch operand']
  #allocation10 [shape = 'f32[232,128]{1,0:T(8,128)}', space=vmem, size = 0x1d000, scoped, tag = 'scratch operand']
  %s0 = inlined_call_operand.vmem [shape: f32[2,256,128], index: 0, kind: input, shape index: {}]
  %s1 = inlined_call_operand.vmem [shape: f32[2,1,128], index: 1, kind: input, shape index: {}]
  %s2 = inlined_call_operand.hbm [shape: bf16[52,128,128], index: 2, kind: input, shape index: {}]
  %s3 = inlined_call_operand.hbm [shape: f32[16,128], index: 3, kind: input, shape index: {}]
  %s4 = inlined_call_operand.vmem [shape: f32[2,200,128], index: 4, kind: output, shape index: {}]
  %s5 = sld [smem:[#allocation0]]
  $region57: #{vae_forward.1} parent=0
    _
  %s7 = ssub.s32 1, %s5
  %s8 = scalar_select 0, %s7, %s5
  $region1: #{vae_forward.1} parent=0
    #allocation11 [shape = 'u8[1703936]{0}', space=vmem, size = 0x1a0000, scoped, tag = 'input window, operand 2, single buffered']
    #allocation12 [shape = 's32[2]{0}', space=sflag, size = 0x8, scoped, tag = 'scoped memory for vae_forward.1']
    #allocation13 [shape = 'u8[8192]{0}', space=vmem, size = 0x2000, scoped, tag = 'input window, operand 3, single buffered']
    #allocation14 [shape = 's32[1]{0}', space=sflag, size = 0x4, scoped, tag = 'scoped memory for vae_forward.1']
    %9 = vsyncpa [#allocation12], 0
    %10 = vsyncpa [#allocation14], 0
    loop: start=0, step=1, limit=4
    $region2: #{vae_forward.1} parent=1 // loop_pre_header
      _
    $region3: #{vae_forward.1} parent=1 // loop_header
      %s12 = sphi 0, %s16
      %p13 = scmp.ge.s32.totalorder %s12, 4
      %s22 = sphi 0, %s24
      %s25 = sphi 0, %s22
      %s26 = sphi 0, %s25
      %s42 = sphi 0, %s26
      %s48 = sphi 0, %s50
      %s51 = sphi 0, %s48
      %s52 = sphi 0, %s51
      %s68 = sphi 0, %s52
      %s72 = sphi 0, %s72
      %s74 = sphi 0, %s72
      %s75 = sphi 0, %s74
      %s89 = sphi 0, %s75
      %s93 = sphi 0, %s93
      %s95 = sphi 0, %s93
      %s96 = sphi 0, %s95
      %s110 = sphi 0, %s96
      %s116 = sphi 0, %s118
      %s119 = sphi 0, %s116
      %s120 = sphi 0, %s119
      %s136 = sphi 0, %s120
    $region4: #{vae_forward.1} parent=1 // loop_header_branch
      %15 = sbr.rel (%p13) target = $region8
    $region5: #{vae_forward.1} parent=1 // loop_body
      %s17 = ssub.s32 %s12, 1
      %s18 = ssub.s32 %s12, 2
      %s19 = sadd.s32 %s12, 1
      %s20 = ssub.s32 %s12, %s19
      %p21 = scmp.eq.s32.totalorder %s20, 0
      %s23 = sadd.s32 %s22, 1
      %s24 = scalar_select %p21, %s22, %s23
      %p27 = pneg %p21
      %p28 = scmp.eq.s32.totalorder %s12, 1
      %p29 = por %p27, %p28
      %p30 = scmp.ne.s32.totalorder %s22, %s25
      %p31 = scmp.eq.s32.totalorder %s12, 0
      %p32 = por %p30, %p31
      %p33 = scmp.ne.s32.totalorder %s22, %s25
      %p34 = scmp.eq.s32.totalorder %s17, 1
      %p35 = por %p33, %p34
      %p36 = scmp.ne.s32.totalorder %s25, %s26
      %p37 = scmp.eq.s32.totalorder %s17, 0
      %p38 = por %p36, %p37
      %p39 = scmp.ne.s32.totalorder %s25, %s26
      %p40 = scmp.eq.s32.totalorder %s18, 1
      %p41 = por %p39, %p40
      %p43 = scmp.ne.s32.totalorder %s26, %s42
      %p44 = scmp.eq.s32.totalorder %s18, 0
      %p45 = por %p43, %p44
      %s46 = ssub.s32 %s12, %s19
      %p47 = scmp.eq.s32.totalorder %s46, 0
      %s49 = sadd.s32 %s48, 1
      %s50 = scalar_select %p47, %s48, %s49
      %p53 = pneg %p47
      %p54 = scmp.eq.s32.totalorder %s12, 1
      %p55 = por %p53, %p54
      %p56 = scmp.ne.s32.totalorder %s48, %s51
      %p57 = scmp.eq.s32.totalorder %s12, 0
      %p58 = por %p56, %p57
      %p59 = scmp.ne.s32.totalorder %s48, %s51
      %p60 = scmp.eq.s32.totalorder %s17, 1
      %p61 = por %p59, %p60
      %p62 = scmp.ne.s32.totalorder %s51, %s52
      %p63 = scmp.eq.s32.totalorder %s17, 0
      %p64 = por %p62, %p63
      %p65 = scmp.ne.s32.totalorder %s51, %s52
      %p66 = scmp.eq.s32.totalorder %s18, 1
      %p67 = por %p65, %p66
      %p69 = scmp.ne.s32.totalorder %s52, %s68
      %p70 = scmp.eq.s32.totalorder %s18, 0
      %p71 = por %p69, %p70
      %s73 = sadd.s32 %s72, 1
      %p76 = scmp.eq.s32.totalorder %s12, 1
      %p77 = scmp.ne.s32.totalorder %s72, %s74
      %p78 = scmp.eq.s32.totalorder %s12, 0
      %p79 = por %p77, %p78
      %p80 = scmp.ne.s32.totalorder %s72, %s74
      %p81 = scmp.eq.s32.totalorder %s17, 1
      %p82 = por %p80, %p81
      %p83 = scmp.ne.s32.totalorder %s74, %s75
      %p84 = scmp.eq.s32.totalorder %s17, 0
      %p85 = por %p83, %p84
      %p86 = scmp.ne.s32.totalorder %s74, %s75
      %p87 = scmp.eq.s32.totalorder %s18, 1
      %p88 = por %p86, %p87
      %p90 = scmp.ne.s32.totalorder %s75, %s89
      %p91 = scmp.eq.s32.totalorder %s18, 0
      %p92 = por %p90, %p91
      %s94 = sadd.s32 %s93, 1
      %p97 = scmp.eq.s32.totalorder %s12, 1
      %p98 = scmp.ne.s32.totalorder %s93, %s95
      %p99 = scmp.eq.s32.totalorder %s12, 0
      %p100 = por %p98, %p99
      %p101 = scmp.ne.s32.totalorder %s93, %s95
      %p102 = scmp.eq.s32.totalorder %s17, 1
      %p103 = por %p101, %p102
      %p104 = scmp.ne.s32.totalorder %s95, %s96
      %p105 = scmp.eq.s32.totalorder %s17, 0
      %p106 = por %p104, %p105
      %p107 = scmp.ne.s32.totalorder %s95, %s96
      %p108 = scmp.eq.s32.totalorder %s18, 1
      %p109 = por %p107, %p108
      %p111 = scmp.ne.s32.totalorder %s96, %s110
      %p112 = scmp.eq.s32.totalorder %s18, 0
      %p113 = por %p111, %p112
      %s114 = ssub.s32 %s12, %s19
      %p115 = scmp.eq.s32.totalorder %s114, 0
      %s117 = sadd.s32 %s116, 1
      %s118 = scalar_select %p115, %s116, %s117
      %p121 = pneg %p115
      %p122 = scmp.eq.s32.totalorder %s12, 1
      %p123 = por %p121, %p122
      %p124 = scmp.ne.s32.totalorder %s116, %s119
      %p125 = scmp.eq.s32.totalorder %s12, 0
      %p126 = por %p124, %p125
      %p127 = scmp.ne.s32.totalorder %s116, %s119
      %p128 = scmp.eq.s32.totalorder %s17, 1
      %p129 = por %p127, %p128
      %p130 = scmp.ne.s32.totalorder %s119, %s120
      %p131 = scmp.eq.s32.totalorder %s17, 0
      %p132 = por %p130, %p131
      %p133 = scmp.ne.s32.totalorder %s119, %s120
      %p134 = scmp.eq.s32.totalorder %s18, 1
      %p135 = por %p133, %p134
      %p137 = scmp.ne.s32.totalorder %s120, %s136
      %p138 = scmp.eq.s32.totalorder %s18, 0
      %p139 = por %p137, %p138
      %p140 = scmp.le.s32.totalorder 1, %s12
      %p141 = scmp.lt.s32.totalorder %s12, 3
      %p142 = pnand %p140, %p141
      %p143 = pneg %p142
      // Predicated region
      $region9: #{vae_forward.1} parent=5 // pred_check
        _
      $region10: #{vae_forward.1} parent=5 // pred_check_branch
        %145 = sbr.rel (%p142) target = $region12
      $region11: #{vae_forward.1} parent=5 // pred_region
        %s146 = ssub.s32 %s12, 1
        // Predicated region
        $region13: #{vae_forward.1} parent=11 // pred_check
          %p147 = pneg %p85
        $region14: #{vae_forward.1} parent=11 // pred_check_branch
          %149 = sbr.rel (%p147) target = $region16
        $region15: #{vae_forward.1} parent=11 // pred_region
          %s151 = ssub.s32 53248, 53248
          %152 = vsyncadd [#allocation12], %s151
          %s153 = sshll.u32 [#allocation11], 4
          %s154 = int_to_ptr.vmem [resolvable:$true] %s153
          %159 = dma.hbm_to_vmem [thread:$0]  %s2, 53248, %s154, [#allocation12], 64, 64, 4
        $region16: #{vae_forward.1} parent=11 // pred_fallthru
          _
        // Predicated region
        $region17: #{vae_forward.1} parent=11 // pred_check
          %p160 = pneg %p106
        $region18: #{vae_forward.1} parent=11 // pred_check_branch
          %162 = sbr.rel (%p160) target = $region20
        $region19: #{vae_forward.1} parent=11 // pred_region
          %s164 = ssub.s32 256, 256
          %165 = vsyncadd [#allocation14], %s164
          %s166 = sshll.u32 [#allocation13], 4
          %s167 = int_to_ptr.vmem [resolvable:$true] %s166
          %172 = dma.hbm_to_vmem [thread:$0]  %s3, 256, %s167, [#allocation14], 128, 128, 8
        $region20: #{vae_forward.1} parent=11 // pred_fallthru
          _
      $region12: #{vae_forward.1} parent=5 // pred_fallthru
        _
      %p173 = scmp.lt.s32.totalorder %s12, 2
      // Predicated region
      $region21: #{vae_forward.1} parent=5 // pred_check
        %p174 = pneg %p173
      $region22: #{vae_forward.1} parent=5 // pred_check_branch
        %176 = sbr.rel (%p174) target = $region24
      $region23: #{vae_forward.1} parent=5 // pred_region
        // Predicated region
        $region25: #{vae_forward.1} parent=23 // pred_check
          %p177 = pneg %p32
        $region26: #{vae_forward.1} parent=23 // pred_check_branch
          %179 = sbr.rel (%p177) target = $region28
        $region27: #{vae_forward.1} parent=23 // pred_region
          %p180 = scmp.lt.s32.totalorder %s12, 1
          %s181 = scalar_select %p180, %s12, 1
          %s182 = smul.addr %s181, 32
          %s183 = smul.addr %s182, 8
          %s184 = scalar_lea.vmem %s0, %s183
        $region28: #{vae_forward.1} parent=23 // pred_fallthru
          _
        // Predicated region
        $region29: #{vae_forward.1} parent=23 // pred_check
          %p185 = pneg %p58
        $region30: #{vae_forward.1} parent=23 // pred_check_branch
          %187 = sbr.rel (%p185) target = $region32
        $region31: #{vae_forward.1} parent=23 // pred_region
          %p188 = scmp.lt.s32.totalorder %s12, 1
          %s189 = scalar_select %p188, %s12, 1
          %s190 = scalar_lea.vmem %s1, %s189
        $region32: #{vae_forward.1} parent=23 // pred_fallthru
          _
      $region24: #{vae_forward.1} parent=5 // pred_fallthru
        _
      %p191 = scmp.le.s32.totalorder 1, %s12
      %p192 = scmp.lt.s32.totalorder %s12, 3
      %p193 = pnand %p191, %p192
      %p194 = pneg %p193
      // Predicated region
      $region33: #{vae_forward.1} parent=5 // pred_check
        _
      $region34: #{vae_forward.1} parent=5 // pred_check_branch
        %196 = sbr.rel (%p193) target = $region36
      $region35: #{vae_forward.1} parent=5 // pred_region
        %s197 = ssub.s32 %s12, 1
        // Predicated region
        $region37: #{vae_forward.1} parent=35 // pred_check
          %p198 = pneg %p85
        $region38: #{vae_forward.1} parent=35 // pred_check_branch
          %200 = sbr.rel (%p198) target = $region40
        $region39: #{vae_forward.1} parent=35 // pred_region
          %201 = dma.done [#allocation12], 53248
        $region40: #{vae_forward.1} parent=35 // pred_fallthru
          _
        // Predicated region
        $region41: #{vae_forward.1} parent=35 // pred_check
          %p202 = pneg %p106
        $region42: #{vae_forward.1} parent=35 // pred_check_branch
          %204 = sbr.rel (%p202) target = $region44
        $region43: #{vae_forward.1} parent=35 // pred_region
          %205 = dma.done [#allocation14], 256
        $region44: #{vae_forward.1} parent=35 // pred_fallthru
          _
        %p206 = scmp.lt.s32.totalorder %s17, 1
        %s207 = scalar_select %p206, %s17, 1
        %s208 = smul.addr %s207, 32
        %s209 = smul.addr %s208, 8
        %s210 = scalar_lea.vmem %s0, %s209
        %p211 = pneg %p38
        %p212 = pneg %p35
        %p213 = scmp.lt.s32.totalorder %s17, 1
        %s214 = scalar_select %p213, %s17, 1
        %s215 = scalar_lea.vmem %s1, %s214
        %p216 = pneg %p64
        %p217 = pneg %p61
        %p218 = pneg %p85
        %p219 = pneg %p82
        %p220 = pneg %p106
        %p221 = pneg %p103
        %p222 = pneg %p132
        %p223 = pneg %p129
        %p224 = scmp.lt.s32.totalorder %s17, 1
        %s225 = scalar_select %p224, %s17, 1
        %s226 = smul.addr %s225, 25
        %s227 = smul.addr %s226, 8
        %s228 = scalar_lea.vmem %s4, %s227
        %p229 = scmp.lt.s32.totalorder %s17, 1
        %s230 = scalar_select %p229, %s17, 1
        %s231 = smul.addr %s230, 32
        %s232 = smul.addr %s231, 8
        %s233 = scalar_lea.vmem %s0, %s232
        %p234 = scmp.lt.s32.totalorder %s17, 1
        %s235 = scalar_select %p234, %s17, 1
        %s236 = scalar_lea.vmem %s1, %s235
        %p237 = scmp.lt.s32.totalorder %s17, 1
        %s238 = scalar_select %p237, %s17, 1
        %s239 = smul.addr %s238, 25
        %s240 = smul.addr %s239, 8
        %s241 = scalar_lea.vmem %s4, %s240
        %v243 = vld [vmem:[#allocation13] sm:$0x1]
        %v244 = vlaneseq
        %v245 = vshrl.u32 %v244, 7
        %v246 = vsub.s32 0, %v245
        %v247 = vrot.slane %v243, %v246
        %v248 = vld [vmem:[%s233] sm:$0xff]
        %v249 = vld [vmem:[%s233 + $0x8] sm:$0xff]
        %v250 = vld [vmem:[%s233 + $0x10] sm:$0xff]
        %v251 = vld [vmem:[%s233 + $0x18] sm:$0xff]
        %v252 = vld [vmem:[%s233 + $0x20] sm:$0xff]
        %v253 = vld [vmem:[%s233 + $0x28] sm:$0xff]
        %v254 = vld [vmem:[%s233 + $0x30] sm:$0xff]
        %v255 = vld [vmem:[%s233 + $0x38] sm:$0xff]
        %v256 = vld [vmem:[%s233 + $0x40] sm:$0xff]
        %v257 = vld [vmem:[%s233 + $0x48] sm:$0xff]
        %v258 = vld [vmem:[%s233 + $0x50] sm:$0xff]
        %v259 = vld [vmem:[%s233 + $0x58] sm:$0xff]
        %v260 = vld [vmem:[%s233 + $0x60] sm:$0xff]
        %v261 = vld [vmem:[%s233 + $0x68] sm:$0xff]
        %v262 = vld [vmem:[%s233 + $0x70] sm:$0xff]
        %v263 = vld [vmem:[%s233 + $0x78] sm:$0xff]
        %v264 = vld [vmem:[%s233 + $0x80] sm:$0xff]
        %v265 = vld [vmem:[%s233 + $0x88] sm:$0xff]
        %v266 = vld [vmem:[%s233 + $0x90] sm:$0xff]
        %v267 = vld [vmem:[%s233 + $0x98] sm:$0xff]
        %v268 = vld [vmem:[%s233 + $0xa0] sm:$0xff]
        %v269 = vld [vmem:[%s233 + $0xa8] sm:$0xff]
        %v270 = vld [vmem:[%s233 + $0xb0] sm:$0xff]
        %v271 = vld [vmem:[%s233 + $0xb8] sm:$0xff]
        %v272 = vld [vmem:[%s233 + $0xc0] sm:$0xff]
        %v273 = vld [vmem:[%s233 + $0xc8] sm:$0xff]
        %v274 = vpack.c.bf16 %v249, %v248
        %v275 = vpack.c.bf16 %v251, %v250
        %v276 = vpack.c.bf16 %v253, %v252
        %v277 = vpack.c.bf16 %v255, %v254
        %v278 = vpack.c.bf16 %v257, %v256
        %v279 = vpack.c.bf16 %v259, %v258
        %v280 = vpack.c.bf16 %v261, %v260
        %v281 = vpack.c.bf16 %v263, %v262
        %v282 = vpack.c.bf16 %v265, %v264
        %v283 = vpack.c.bf16 %v267, %v266
        %v284 = vpack.c.bf16 %v269, %v268
        %v285 = vpack.c.bf16 %v271, %v270
        %v286 = vpack.c.bf16 %v273, %v272
        %v287 = vld [vmem:[#allocation11] sm:$0xf]
        %v288 = vld [vmem:[#allocation11 + $0x4] sm:$0xf]
        %v289 = vld [vmem:[#allocation11 + $0x8] sm:$0xf]
        %v290 = vld [vmem:[#allocation11 + $0xc] sm:$0xf]
        %v291 = vld [vmem:[#allocation11 + $0x10] sm:$0xf]
        %v292 = vld [vmem:[#allocation11 + $0x14] sm:$0xf]
        %v293 = vld [vmem:[#allocation11 + $0x18] sm:$0xf]
        %v294 = vld [vmem:[#allocation11 + $0x1c] sm:$0xf]
        %v295 = vld [vmem:[#allocation11 + $0x20] sm:$0xf]
        %v296 = vld [vmem:[#allocation11 + $0x24] sm:$0xf]
        %v297 = vld [vmem:[#allocation11 + $0x28] sm:$0xf]
        %v298 = vld [vmem:[#allocation11 + $0x2c] sm:$0xf]
        %v299 = vld [vmem:[#allocation11 + $0x30] sm:$0xf]
        %v300 = vld [vmem:[#allocation11 + $0x34] sm:$0xf]
        %v301 = vld [vmem:[#allocation11 + $0x38] sm:$0xf]
        %v302 = vld [vmem:[#allocation11 + $0x3c] sm:$0xf]
        %v319 = vunpack.c.l.b16 %v287
        %v320 = vunpack.c.l.b16 %v288
        %v321 = vunpack.c.l.b16 %v289
        %v322 = vunpack.c.l.b16 %v290
        %v323 = vunpack.c.l.b16 %v291
        %v324 = vunpack.c.l.b16 %v292
        %v325 = vunpack.c.l.b16 %v293
        %v326 = vunpack.c.l.b16 %v294
        %v327 = vunpack.c.l.b16 %v295
        %v328 = vunpack.c.l.b16 %v296
        %v329 = vunpack.c.l.b16 %v297
        %v330 = vunpack.c.l.b16 %v298
        %v331 = vunpack.c.l.b16 %v299
        %v332 = vunpack.c.l.b16 %v300
        %v333 = vunpack.c.l.b16 %v301
        %v334 = vunpack.c.l.b16 %v302
        %v335 = vpack.c.b16 %v320, %v319
        %v336 = vpack.c.b16 %v322, %v321
        %v337 = vpack.c.b16 %v324, %v323
        %v338 = vpack.c.b16 %v326, %v325
        %v339 = vpack.c.b16 %v328, %v327
        %v340 = vpack.c.b16 %v330, %v329
        %v341 = vpack.c.b16 %v332, %v331
        %v342 = vpack.c.b16 %v334, %v333
        %351 = vmatprep.subr.bf16.mxu0 0
        %352 = vmatpush1.bf16.msra.mxu0 %v342
        %353 = vmatprep.subr.bf16.mxu0 0
        %354 = vmatpush1.bf16.msra.mxu0 %v341
        %355 = vmatprep.subr.bf16.mxu0 0
        %356 = vmatpush1.bf16.msra.mxu0 %v340
        %357 = vmatprep.subr.bf16.mxu0 0
        %358 = vmatpush1.bf16.msra.mxu0 %v339
        %359 = vmatprep.subr.bf16.mxu0 0
        %360 = vmatpush1.bf16.msra.mxu0 %v338
        %361 = vmatprep.subr.bf16.mxu0 0
        %362 = vmatpush1.bf16.msra.mxu0 %v337
        %363 = vmatprep.subr.bf16.mxu0 0
        %364 = vmatpush1.bf16.msra.mxu0 %v336
        %365 = vmatprep.subr.bf16.mxu0 0
        %366 = vmatpush1.bf16.msra.mxu0 %v335
        %367 = vmatprep.subr.bf16.mxu0 0
        %368 = vmatpush2.bf16.msra.mxu0 0
        %369 = vmatprep.subr.bf16.mxu0 0
        %370 = vmatpush2.bf16.msra.mxu0 0
        %371 = vmatprep.subr.bf16.mxu0 0
        %372 = vmatpush2.bf16.msra.mxu0 0
        %373 = vmatprep.subr.bf16.mxu0 0
        %374 = vmatpush2.bf16.msra.mxu0 0
        %375 = vmatprep.subr.bf16.mxu0 0
        %376 = vmatpush2.bf16.msra.mxu0 0
        %377 = vmatprep.subr.bf16.mxu0 0
        %378 = vmatpush2.bf16.msra.mxu0 0
        %379 = vmatprep.subr.bf16.mxu0 0
        %380 = vmatpush2.bf16.msra.mxu0 0
        %381 = vmatprep.subr.bf16.mxu0 0
        %382 = vmatpush2.bf16.msra.mxu0 0
        %383 = vmatprep.mubr.bf16.mxu0 0
        %384 = vmatmul.mubr.bf16.gmra.mxu0 %v274
        %v385 = vpop.f32.mrf.mxu0
        %v386 = vadd.f32 0.0, %v385
        %v387 = vpop.f32.mrf.mxu0
        %v388 = vpop.f32.mrf.mxu0
        %v389 = vadd.f32 0.0, %v388
        %v390 = vpop.f32.mrf.mxu0
        %391 = vmatprep.mubr.bf16.mxu0 0
        %392 = vmatmul.mubr.bf16.gmra.mxu0 %v275
        %v393 = vpop.f32.mrf.mxu0
        %v394 = vadd.f32 0.0, %v393
        %v395 = vpop.f32.mrf.mxu0
        %v396 = vpop.f32.mrf.mxu0
        %v397 = vadd.f32 0.0, %v396
        %v398 = vpop.f32.mrf.mxu0
        %399 = vmatprep.mubr.bf16.mxu0 0
        %400 = vmatmul.mubr.bf16.gmra.mxu0 %v276
        %v401 = vpop.f32.mrf.mxu0
        %v402 = vadd.f32 0.0, %v401
        %v403 = vpop.f32.mrf.mxu0
        %v404 = vpop.f32.mrf.mxu0
        %v405 = vadd.f32 0.0, %v404
        %v406 = vpop.f32.mrf.mxu0
        %407 = vmatprep.mubr.bf16.mxu0 0
        %408 = vmatmul.mubr.bf16.gmra.mxu0 %v277
        %v409 = vpop.f32.mrf.mxu0
        %v410 = vadd.f32 0.0, %v409
        %v411 = vpop.f32.mrf.mxu0
        %v412 = vpop.f32.mrf.mxu0
        %v413 = vadd.f32 0.0, %v412
        %v414 = vpop.f32.mrf.mxu0
        %415 = vmatprep.mubr.bf16.mxu0 0
        %416 = vmatmul.mubr.bf16.gmra.mxu0 %v278
        %v417 = vpop.f32.mrf.mxu0
        %v418 = vadd.f32 0.0, %v417
        %v419 = vpop.f32.mrf.mxu0
        %v420 = vpop.f32.mrf.mxu0
        %v421 = vadd.f32 0.0, %v420
        %v422 = vpop.f32.mrf.mxu0
        %423 = vmatprep.mubr.bf16.mxu0 0
        %424 = vmatmul.mubr.bf16.gmra.mxu0 %v279
        %v425 = vpop.f32.mrf.mxu0
        %v426 = vadd.f32 0.0, %v425
        %v427 = vpop.f32.mrf.mxu0
        %v428 = vpop.f32.mrf.mxu0
        %v429 = vadd.f32 0.0, %v428
        %v430 = vpop.f32.mrf.mxu0
        %431 = vmatprep.mubr.bf16.mxu0 0
        %432 = vmatmul.mubr.bf16.gmra.mxu0 %v280
        %v433 = vpop.f32.mrf.mxu0
        %v434 = vadd.f32 0.0, %v433
        %v435 = vpop.f32.mrf.mxu0
        %v436 = vpop.f32.mrf.mxu0
        %v437 = vadd.f32 0.0, %v436
        %v438 = vpop.f32.mrf.mxu0
        %439 = vmatprep.mubr.bf16.mxu0 0
        %440 = vmatmul.mubr.bf16.gmra.mxu0 %v281
        %v441 = vpop.f32.mrf.mxu0
        %v442 = vadd.f32 0.0, %v441
        %v443 = vpop.f32.mrf.mxu0
        %v444 = vpop.f32.mrf.mxu0
        %v445 = vadd.f32 0.0, %v444
        %v446 = vpop.f32.mrf.mxu0
        %447 = vmatprep.mubr.bf16.mxu0 0
        %448 = vmatmul.mubr.bf16.gmra.mxu0 %v282
        %v449 = vpop.f32.mrf.mxu0
        %v450 = vadd.f32 0.0, %v449
        %v451 = vpop.f32.mrf.mxu0
        %v452 = vpop.f32.mrf.mxu0
        %v453 = vadd.f32 0.0, %v452
        %v454 = vpop.f32.mrf.mxu0
        %455 = vmatprep.mubr.bf16.mxu0 0
        %456 = vmatmul.mubr.bf16.gmra.mxu0 %v283
        %v457 = vpop.f32.mrf.mxu0
        %v458 = vadd.f32 0.0, %v457
        %v459 = vpop.f32.mrf.mxu0
        %v460 = vpop.f32.mrf.mxu0
        %v461 = vadd.f32 0.0, %v460
        %v462 = vpop.f32.mrf.mxu0
        %463 = vmatprep.mubr.bf16.mxu0 0
        %464 = vmatmul.mubr.bf16.gmra.mxu0 %v284
        %v465 = vpop.f32.mrf.mxu0
        %v466 = vadd.f32 0.0, %v465
        %v467 = vpop.f32.mrf.mxu0
        %v468 = vpop.f32.mrf.mxu0
        %v469 = vadd.f32 0.0, %v468
        %v470 = vpop.f32.mrf.mxu0
        %471 = vmatprep.mubr.bf16.mxu0 0
        %472 = vmatmul.mubr.bf16.gmra.mxu0 %v285
        %v473 = vpop.f32.mrf.mxu0
        %v474 = vadd.f32 0.0, %v473
        %v475 = vpop.f32.mrf.mxu0
        %v476 = vpop.f32.mrf.mxu0
        %v477 = vadd.f32 0.0, %v476
        %v478 = vpop.f32.mrf.mxu0
        %479 = vmatprep.mubr.bf16.mxu0 0
        %480 = vmatmul.mubr.bf16.gmra.mxu0 %v286
        %v481 = vpop.f32.mrf.mxu0
        %v482 = vadd.f32 0.0, %v481
        %v483 = vpop.f32.mrf.mxu0
        %v484 = vpop.f32.mrf.mxu0
        %v485 = vadd.f32 0.0, %v484
        %v486 = vpop.f32.mrf.mxu0
        %487 = vdwg.mxu0
        %v488 = vadd.f32 %v247, %v386
        %v489 = vadd.f32 %v247, %v389
        %v490 = vadd.f32 %v247, %v394
        %v491 = vadd.f32 %v247, %v397
        %v492 = vadd.f32 %v247, %v402
        %v493 = vadd.f32 %v247, %v405
        %v494 = vadd.f32 %v247, %v410
        %v495 = vadd.f32 %v247, %v413
        %v496 = vadd.f32 %v247, %v418
        %v497 = vadd.f32 %v247, %v421
        %v498 = vadd.f32 %v247, %v426
        %v499 = vadd.f32 %v247, %v429
        %v500 = vadd.f32 %v247, %v434
        %v501 = vadd.f32 %v247, %v437
        %v502 = vadd.f32 %v247, %v442
        %v503 = vadd.f32 %v247, %v445
        %v504 = vadd.f32 %v247, %v450
        %v505 = vadd.f32 %v247, %v453
        %v506 = vadd.f32 %v247, %v458
        %v507 = vadd.f32 %v247, %v461
        %v508 = vadd.f32 %v247, %v466
        %v509 = vadd.f32 %v247, %v469
        %v510 = vadd.f32 %v247, %v474
        %v511 = vadd.f32 %v247, %v477
        %v512 = vadd.f32 %v247, %v482
        %v513 = vadd.f32 %v247, %v485
        %v514 = vld [vmem:[%s233 + $0x1] sm:$0xff]
        %v515 = vld [vmem:[%s233 + $0x9] sm:$0xff]
        %v516 = vld [vmem:[%s233 + $0x11] sm:$0xff]
        %v517 = vld [vmem:[%s233 + $0x19] sm:$0xff]
        %v518 = vld [vmem:[%s233 + $0x21] sm:$0xff]
        %v519 = vld [vmem:[%s233 + $0x29] sm:$0xff]
        %v520 = vld [vmem:[%s233 + $0x31] sm:$0xff]
        %v521 = vld [vmem:[%s233 + $0x39] sm:$0xff]
        %v522 = vld [vmem:[%s233 + $0x41] sm:$0xff]
        %v523 = vld [vmem:[%s233 + $0x49] sm:$0xff]
        %v524 = vld [vmem:[%s233 + $0x51] sm:$0xff]
        %v525 = vld [vmem:[%s233 + $0x59] sm:$0xff]
        %v526 = vld [vmem:[%s233 + $0x61] sm:$0xff]
        %v527 = vld [vmem:[%s233 + $0x69] sm:$0xff]
        %v528 = vld [vmem:[%s233 + $0x71] sm:$0xff]
        %v529 = vld [vmem:[%s233 + $0x79] sm:$0xff]
        %v530 = vld [vmem:[%s233 + $0x81] sm:$0xff]
        %v531 = vld [vmem:[%s233 + $0x89] sm:$0xff]
        %v532 = vld [vmem:[%s233 + $0x91] sm:$0xff]
        %v533 = vld [vmem:[%s233 + $0x99] sm:$0xff]
        %v534 = vld [vmem:[%s233 + $0xa1] sm:$0xff]
        %v535 = vld [vmem:[%s233 + $0xa9] sm:$0xff]
        %v536 = vld [vmem:[%s233 + $0xb1] sm:$0xff]
        %v537 = vld [vmem:[%s233 + $0xb9] sm:$0xff]
        %v538 = vld [vmem:[%s233 + $0xc1] sm:$0xff]
        %v539 = vld [vmem:[%s233 + $0xc9] sm:$0xff]
        %v540 = vpack.c.bf16 %v515, %v514
        %v541 = vpack.c.bf16 %v517, %v516
        %v542 = vpack.c.bf16 %v519, %v518
        %v543 = vpack.c.bf16 %v521, %v520
        %v544 = vpack.c.bf16 %v523, %v522
        %v545 = vpack.c.bf16 %v525, %v524
        %v546 = vpack.c.bf16 %v527, %v526
        %v547 = vpack.c.bf16 %v529, %v528
        %v548 = vpack.c.bf16 %v531, %v530
        %v549 = vpack.c.bf16 %v533, %v532
        %v550 = vpack.c.bf16 %v535, %v534
        %v551 = vpack.c.bf16 %v537, %v536
        %v552 = vpack.c.bf16 %v539, %v538
        %s553 = scalar_lea.vmem [#allocation11], 64
        %v554 = vld [vmem:[%s553] sm:$0xf]
        %v555 = vld [vmem:[%s553 + $0x4] sm:$0xf]
        %v556 = vld [vmem:[%s553 + $0x8] sm:$0xf]
        %v557 = vld [vmem:[%s553 + $0xc] sm:$0xf]
        %v558 = vld [vmem:[%s553 + $0x10] sm:$0xf]
        %v559 = vld [vmem:[%s553 + $0x14] sm:$0xf]
        %v560 = vld [vmem:[%s553 + $0x18] sm:$0xf]
        %v561 = vld [vmem:[%s553 + $0x1c] sm:$0xf]
        %v562 = vld [vmem:[%s553 + $0x20] sm:$0xf]
        %v563 = vld [vmem:[%s553 + $0x24] sm:$0xf]
        %v564 = vld [vmem:[%s553 + $0x28] sm:$0xf]
        %v565 = vld [vmem:[%s553 + $0x2c] sm:$0xf]
        %v566 = vld [vmem:[%s553 + $0x30] sm:$0xf]
        %v567 = vld [vmem:[%s553 + $0x34] sm:$0xf]
        %v568 = vld [vmem:[%s553 + $0x38] sm:$0xf]
        %v569 = vld [vmem:[%s553 + $0x3c] sm:$0xf]
        %v586 = vunpack.c.l.b16 %v554
        %v587 = vunpack.c.l.b16 %v555
        %v588 = vunpack.c.l.b16 %v556
        %v589 = vunpack.c.l.b16 %v557
        %v590 = vunpack.c.l.b16 %v558
        %v591 = vunpack.c.l.b16 %v559
        %v592 = vunpack.c.l.b16 %v560
        %v593 = vunpack.c.l.b16 %v561
        %v594 = vunpack.c.l.b16 %v562
        %v595 = vunpack.c.l.b16 %v563
        %v596 = vunpack.c.l.b16 %v564
        %v597 = vunpack.c.l.b16 %v565
        %v598 = vunpack.c.l.b16 %v566
        %v599 = vunpack.c.l.b16 %v567
        %v600 = vunpack.c.l.b16 %v568
        %v601 = vunpack.c.l.b16 %v569
        %v602 = vpack.c.b16 %v587, %v586
        %v603 = vpack.c.b16 %v589, %v588
        %v604 = vpack.c.b16 %v591, %v590
        %v605 = vpack.c.b16 %v593, %v592
        %v606 = vpack.c.b16 %v595, %v594
        %v607 = vpack.c.b16 %v597, %v596
        %v608 = vpack.c.b16 %v599, %v598
        %v609 = vpack.c.b16 %v601, %v600
        %618 = vmatprep.subr.bf16.mxu0 0
        %619 = vmatpush1.bf16.msra.mxu0 %v609
        %620 = vmatprep.subr.bf16.mxu0 0
        %621 = vmatpush1.bf16.msra.mxu0 %v608
        %622 = vmatprep.subr.bf16.mxu0 0
        %623 = vmatpush1.bf16.msra.mxu0 %v607
        %624 = vmatprep.subr.bf16.mxu0 0
        %625 = vmatpush1.bf16.msra.mxu0 %v606
        %626 = vmatprep.subr.bf16.mxu0 0
        %627 = vmatpush1.bf16.msra.mxu0 %v605
        %628 = vmatprep.subr.bf16.mxu0 0
        %629 = vmatpush1.bf16.msra.mxu0 %v604
        %630 = vmatprep.subr.bf16.mxu0 0
        %631 = vmatpush1.bf16.msra.mxu0 %v603
        %632 = vmatprep.subr.bf16.mxu0 0
        %633 = vmatpush1.bf16.msra.mxu0 %v602
        %634 = vmatprep.subr.bf16.mxu0 0
        %635 = vmatpush2.bf16.msra.mxu0 0
        %636 = vmatprep.subr.bf16.mxu0 0
        %637 = vmatpush2.bf16.msra.mxu0 0
        %638 = vmatprep.subr.bf16.mxu0 0
        %639 = vmatpush2.bf16.msra.mxu0 0
        %640 = vmatprep.subr.bf16.mxu0 0
        %641 = vmatpush2.bf16.msra.mxu0 0
        %642 = vmatprep.subr.bf16.mxu0 0
        %643 = vmatpush2.bf16.msra.mxu0 0
        %644 = vmatprep.subr.bf16.mxu0 0
        %645 = vmatpush2.bf16.msra.mxu0 0
        %646 = vmatprep.subr.bf16.mxu0 0
        %647 = vmatpush2.bf16.msra.mxu0 0
        %648 = vmatprep.subr.bf16.mxu0 0
        %649 = vmatpush2.bf16.msra.mxu0 0
        %650 = vmatprep.mubr.bf16.mxu0 0
        %651 = vmatmul.mubr.bf16.gmra.mxu0 %v540
        %v652 = vpop.f32.mrf.mxu0
        %v653 = vadd.f32 0.0, %v652
        %v654 = vpop.f32.mrf.mxu0
        %v655 = vpop.f32.mrf.mxu0
        %v656 = vadd.f32 0.0, %v655
        %v657 = vpop.f32.mrf.mxu0
        %658 = vmatprep.mubr.bf16.mxu0 0
        %659 = vmatmul.mubr.bf16.gmra.mxu0 %v541
        %v660 = vpop.f32.mrf.mxu0
        %v661 = vadd.f32 0.0, %v660
        %v662 = vpop.f32.mrf.mxu0
        %v663 = vpop.f32.mrf.mxu0
        %v664 = vadd.f32 0.0, %v663
        %v665 = vpop.f32.mrf.mxu0
        %666 = vmatprep.mubr.bf16.mxu0 0
        %667 = vmatmul.mubr.bf16.gmra.mxu0 %v542
        %v668 = vpop.f32.mrf.mxu0
        %v669 = vadd.f32 0.0, %v668
        %v670 = vpop.f32.mrf.mxu0
        %v671 = vpop.f32.mrf.mxu0
        %v672 = vadd.f32 0.0, %v671
        %v673 = vpop.f32.mrf.mxu0
        %674 = vmatprep.mubr.bf16.mxu0 0
        %675 = vmatmul.mubr.bf16.gmra.mxu0 %v543
        %v676 = vpop.f32.mrf.mxu0
        %v677 = vadd.f32 0.0, %v676
        %v678 = vpop.f32.mrf.mxu0
        %v679 = vpop.f32.mrf.mxu0
        %v680 = vadd.f32 0.0, %v679
        %v681 = vpop.f32.mrf.mxu0
        %682 = vmatprep.mubr.bf16.mxu0 0
        %683 = vmatmul.mubr.bf16.gmra.mxu0 %v544
        %v684 = vpop.f32.mrf.mxu0
        %v685 = vadd.f32 0.0, %v684
        %v686 = vpop.f32.mrf.mxu0
        %v687 = vpop.f32.mrf.mxu0
        %v688 = vadd.f32 0.0, %v687
        %v689 = vpop.f32.mrf.mxu0
        %690 = vmatprep.mubr.bf16.mxu0 0
        %691 = vmatmul.mubr.bf16.gmra.mxu0 %v545
        %v692 = vpop.f32.mrf.mxu0
        %v693 = vadd.f32 0.0, %v692
        %v694 = vpop.f32.mrf.mxu0
        %v695 = vpop.f32.mrf.mxu0
        %v696 = vadd.f32 0.0, %v695
        %v697 = vpop.f32.mrf.mxu0
        %698 = vmatprep.mubr.bf16.mxu0 0
        %699 = vmatmul.mubr.bf16.gmra.mxu0 %v546
        %v700 = vpop.f32.mrf.mxu0
        %v701 = vadd.f32 0.0, %v700
        %v702 = vpop.f32.mrf.mxu0
        %v703 = vpop.f32.mrf.mxu0
        %v704 = vadd.f32 0.0, %v703
        %v705 = vpop.f32.mrf.mxu0
        %706 = vmatprep.mubr.bf16.mxu0 0
        %707 = vmatmul.mubr.bf16.gmra.mxu0 %v547
        %v708 = vpop.f32.mrf.mxu0
        %v709 = vadd.f32 0.0, %v708
        %v710 = vpop.f32.mrf.mxu0
        %v711 = vpop.f32.mrf.mxu0
        %v712 = vadd.f32 0.0, %v711
        %v713 = vpop.f32.mrf.mxu0
        %714 = vmatprep.mubr.bf16.mxu0 0
        %715 = vmatmul.mubr.bf16.gmra.mxu0 %v548
        %v716 = vpop.f32.mrf.mxu0
        %v717 = vadd.f32 0.0, %v716
        %v718 = vpop.f32.mrf.mxu0
        %v719 = vpop.f32.mrf.mxu0
        %v720 = vadd.f32 0.0, %v719
        %v721 = vpop.f32.mrf.mxu0
        %722 = vmatprep.mubr.bf16.mxu0 0
        %723 = vmatmul.mubr.bf16.gmra.mxu0 %v549
        %v724 = vpop.f32.mrf.mxu0
        %v725 = vadd.f32 0.0, %v724
        %v726 = vpop.f32.mrf.mxu0
        %v727 = vpop.f32.mrf.mxu0
        %v728 = vadd.f32 0.0, %v727
        %v729 = vpop.f32.mrf.mxu0
        %730 = vmatprep.mubr.bf16.mxu0 0
        %731 = vmatmul.mubr.bf16.gmra.mxu0 %v550
        %v732 = vpop.f32.mrf.mxu0
        %v733 = vadd.f32 0.0, %v732
        %v734 = vpop.f32.mrf.mxu0
        %v735 = vpop.f32.mrf.mxu0
        %v736 = vadd.f32 0.0, %v735
        %v737 = vpop.f32.mrf.mxu0
        %738 = vmatprep.mubr.bf16.mxu0 0
        %739 = vmatmul.mubr.bf16.gmra.mxu0 %v551
        %v740 = vpop.f32.mrf.mxu0
        %v741 = vadd.f32 0.0, %v740
        %v742 = vpop.f32.mrf.mxu0
        %v743 = vpop.f32.mrf.mxu0
        %v744 = vadd.f32 0.0, %v743
        %v745 = vpop.f32.mrf.mxu0
        %746 = vmatprep.mubr.bf16.mxu0 0
        %747 = vmatmul.mubr.bf16.gmra.mxu0 %v552
        %v748 = vpop.f32.mrf.mxu0
        %v749 = vadd.f32 0.0, %v748
        %v750 = vpop.f32.mrf.mxu0
        %v751 = vpop.f32.mrf.mxu0
        %v752 = vadd.f32 0.0, %v751
        %v753 = vpop.f32.mrf.mxu0
        %754 = vdwg.mxu0
        %v755 = vadd.f32 %v488, %v653
        %v756 = vadd.f32 %v489, %v656
        %v757 = vadd.f32 %v490, %v661
        %v758 = vadd.f32 %v491, %v664
        %v759 = vadd.f32 %v492, %v669
        %v760 = vadd.f32 %v493, %v672
        %v761 = vadd.f32 %v494, %v677
        %v762 = vadd.f32 %v495, %v680
        %v763 = vadd.f32 %v496, %v685
        %v764 = vadd.f32 %v497, %v688
        %v765 = vadd.f32 %v498, %v693
        %v766 = vadd.f32 %v499, %v696
        %v767 = vadd.f32 %v500, %v701
        %v768 = vadd.f32 %v501, %v704
        %v769 = vadd.f32 %v502, %v709
        %v770 = vadd.f32 %v503, %v712
        %v771 = vadd.f32 %v504, %v717
        %v772 = vadd.f32 %v505, %v720
        %v773 = vadd.f32 %v506, %v725
        %v774 = vadd.f32 %v507, %v728
        %v775 = vadd.f32 %v508, %v733
        %v776 = vadd.f32 %v509, %v736
        %v777 = vadd.f32 %v510, %v741
        %v778 = vadd.f32 %v511, %v744
        %v779 = vadd.f32 %v512, %v749
        %v780 = vadd.f32 %v513, %v752
        %v781 = vld [vmem:[%s233 + $0x2] sm:$0xff]
        %v782 = vld [vmem:[%s233 + $0xa] sm:$0xff]
        %v783 = vld [vmem:[%s233 + $0x12] sm:$0xff]
        %v784 = vld [vmem:[%s233 + $0x1a] sm:$0xff]
        %v785 = vld [vmem:[%s233 + $0x22] sm:$0xff]
        %v786 = vld [vmem:[%s233 + $0x2a] sm:$0xff]
        %v787 = vld [vmem:[%s233 + $0x32] sm:$0xff]
        %v788 = vld [vmem:[%s233 + $0x3a] sm:$0xff]
        %v789 = vld [vmem:[%s233 + $0x42] sm:$0xff]
        %v790 = vld [vmem:[%s233 + $0x4a] sm:$0xff]
        %v791 = vld [vmem:[%s233 + $0x52] sm:$0xff]
        %v792 = vld [vmem:[%s233 + $0x5a] sm:$0xff]
        %v793 = vld [vmem:[%s233 + $0x62] sm:$0xff]
        %v794 = vld [vmem:[%s233 + $0x6a] sm:$0xff]
        %v795 = vld [vmem:[%s233 + $0x72] sm:$0xff]
        %v796 = vld [vmem:[%s233 + $0x7a] sm:$0xff]
        %v797 = vld [vmem:[%s233 + $0x82] sm:$0xff]
        %v798 = vld [vmem:[%s233 + $0x8a] sm:$0xff]
        %v799 = vld [vmem:[%s233 + $0x92] sm:$0xff]
        %v800 = vld [vmem:[%s233 + $0x9a] sm:$0xff]
        %v801 = vld [vmem:[%s233 + $0xa2] sm:$0xff]
        %v802 = vld [vmem:[%s233 + $0xaa] sm:$0xff]
        %v803 = vld [vmem:[%s233 + $0xb2] sm:$0xff]
        %v804 = vld [vmem:[%s233 + $0xba] sm:$0xff]
        %v805 = vld [vmem:[%s233 + $0xc2] sm:$0xff]
        %v806 = vld [vmem:[%s233 + $0xca] sm:$0xff]
        %v807 = vpack.c.bf16 %v782, %v781
        %v808 = vpack.c.bf16 %v784, %v783
        %v809 = vpack.c.bf16 %v786, %v785
        %v810 = vpack.c.bf16 %v788, %v787
        %v811 = vpack.c.bf16 %v790, %v789
        %v812 = vpack.c.bf16 %v792, %v791
        %v813 = vpack.c.bf16 %v794, %v793
        %v814 = vpack.c.bf16 %v796, %v795
        %v815 = vpack.c.bf16 %v798, %v797
        %v816 = vpack.c.bf16 %v800, %v799
        %v817 = vpack.c.bf16 %v802, %v801
        %v818 = vpack.c.bf16 %v804, %v803
        %v819 = vpack.c.bf16 %v806, %v805
        %s820 = scalar_lea.vmem [#allocation11], 128
        %v821 = vld [vmem:[%s820] sm:$0xf]
        %v822 = vld [vmem:[%s820 + $0x4] sm:$0xf]
        %v823 = vld [vmem:[%s820 + $0x8] sm:$0xf]
        %v824 = vld [vmem:[%s820 + $0xc] sm:$0xf]
        %v825 = vld [vmem:[%s820 + $0x10] sm:$0xf]
        %v826 = vld [vmem:[%s820 + $0x14] sm:$0xf]
        %v827 = vld [vmem:[%s820 + $0x18] sm:$0xf]
        %v828 = vld [vmem:[%s820 + $0x1c] sm:$0xf]
        %v829 = vld [vmem:[%s820 + $0x20] sm:$0xf]
        %v830 = vld [vmem:[%s820 + $0x24] sm:$0xf]
        %v831 = vld [vmem:[%s820 + $0x28] sm:$0xf]
        %v832 = vld [vmem:[%s820 + $0x2c] sm:$0xf]
        %v833 = vld [vmem:[%s820 + $0x30] sm:$0xf]
        %v834 = vld [vmem:[%s820 + $0x34] sm:$0xf]
        %v835 = vld [vmem:[%s820 + $0x38] sm:$0xf]
        %v836 = vld [vmem:[%s820 + $0x3c] sm:$0xf]
        %v853 = vunpack.c.l.b16 %v821
        %v854 = vunpack.c.l.b16 %v822
        %v855 = vunpack.c.l.b16 %v823
        %v856 = vunpack.c.l.b16 %v824
        %v857 = vunpack.c.l.b16 %v825
        %v858 = vunpack.c.l.b16 %v826
        %v859 = vunpack.c.l.b16 %v827
        %v860 = vunpack.c.l.b16 %v828
        %v861 = vunpack.c.l.b16 %v829
        %v862 = vunpack.c.l.b16 %v830
        %v863 = vunpack.c.l.b16 %v831
        %v864 = vunpack.c.l.b16 %v832
        %v865 = vunpack.c.l.b16 %v833
        %v866 = vunpack.c.l.b16 %v834
        %v867 = vunpack.c.l.b16 %v835
        %v868 = vunpack.c.l.b16 %v836
        %v869 = vpack.c.b16 %v854, %v853
        %v870 = vpack.c.b16 %v856, %v855
        %v871 = vpack.c.b16 %v858, %v857
        %v872 = vpack.c.b16 %v860, %v859
        %v873 = vpack.c.b16 %v862, %v861
        %v874 = vpack.c.b16 %v864, %v863
        %v875 = vpack.c.b16 %v866, %v865
        %v876 = vpack.c.b16 %v868, %v867
        %885 = vmatprep.subr.bf16.mxu0 0
        %886 = vmatpush1.bf16.msra.mxu0 %v876
        %887 = vmatprep.subr.bf16.mxu0 0
        %888 = vmatpush1.bf16.msra.mxu0 %v875
        %889 = vmatprep.subr.bf16.mxu0 0
        %890 = vmatpush1.bf16.msra.mxu0 %v874
        %891 = vmatprep.subr.bf16.mxu0 0
        %892 = vmatpush1.bf16.msra.mxu0 %v873
        %893 = vmatprep.subr.bf16.mxu0 0
        %894 = vmatpush1.bf16.msra.mxu0 %v872
        %895 = vmatprep.subr.bf16.mxu0 0
        %896 = vmatpush1.bf16.msra.mxu0 %v871
        %897 = vmatprep.subr.bf16.mxu0 0
        %898 = vmatpush1.bf16.msra.mxu0 %v870
        %899 = vmatprep.subr.bf16.mxu0 0
        %900 = vmatpush1.bf16.msra.mxu0 %v869
        %901 = vmatprep.subr.bf16.mxu0 0
        %902 = vmatpush2.bf16.msra.mxu0 0
        %903 = vmatprep.subr.bf16.mxu0 0
        %904 = vmatpush2.bf16.msra.mxu0 0
        %905 = vmatprep.subr.bf16.mxu0 0
        %906 = vmatpush2.bf16.msra.mxu0 0
        %907 = vmatprep.subr.bf16.mxu0 0
        %908 = vmatpush2.bf16.msra.mxu0 0
        %909 = vmatprep.subr.bf16.mxu0 0
        %910 = vmatpush2.bf16.msra.mxu0 0
        %911 = vmatprep.subr.bf16.mxu0 0
        %912 = vmatpush2.bf16.msra.mxu0 0
        %913 = vmatprep.subr.bf16.mxu0 0
        %914 = vmatpush2.bf16.msra.mxu0 0
        %915 = vmatprep.subr.bf16.mxu0 0
        %916 = vmatpush2.bf16.msra.mxu0 0
        %917 = vmatprep.mubr.bf16.mxu0 0
        %918 = vmatmul.mubr.bf16.gmra.mxu0 %v807
        %v919 = vpop.f32.mrf.mxu0
        %v920 = vadd.f32 0.0, %v919
        %v921 = vpop.f32.mrf.mxu0
        %v922 = vpop.f32.mrf.mxu0
        %v923 = vadd.f32 0.0, %v922
        %v924 = vpop.f32.mrf.mxu0
        %925 = vmatprep.mubr.bf16.mxu0 0
        %926 = vmatmul.mubr.bf16.gmra.mxu0 %v808
        %v927 = vpop.f32.mrf.mxu0
        %v928 = vadd.f32 0.0, %v927
        %v929 = vpop.f32.mrf.mxu0
        %v930 = vpop.f32.mrf.mxu0
        %v931 = vadd.f32 0.0, %v930
        %v932 = vpop.f32.mrf.mxu0
        %933 = vmatprep.mubr.bf16.mxu0 0
        %934 = vmatmul.mubr.bf16.gmra.mxu0 %v809
        %v935 = vpop.f32.mrf.mxu0
        %v936 = vadd.f32 0.0, %v935
        %v937 = vpop.f32.mrf.mxu0
        %v938 = vpop.f32.mrf.mxu0
        %v939 = vadd.f32 0.0, %v938
        %v940 = vpop.f32.mrf.mxu0
        %941 = vmatprep.mubr.bf16.mxu0 0
        %942 = vmatmul.mubr.bf16.gmra.mxu0 %v810
        %v943 = vpop.f32.mrf.mxu0
        %v944 = vadd.f32 0.0, %v943
        %v945 = vpop.f32.mrf.mxu0
        %v946 = vpop.f32.mrf.mxu0
        %v947 = vadd.f32 0.0, %v946
        %v948 = vpop.f32.mrf.mxu0
        %949 = vmatprep.mubr.bf16.mxu0 0
        %950 = vmatmul.mubr.bf16.gmra.mxu0 %v811
        %v951 = vpop.f32.mrf.mxu0
        %v952 = vadd.f32 0.0, %v951
        %v953 = vpop.f32.mrf.mxu0
        %v954 = vpop.f32.mrf.mxu0
        %v955 = vadd.f32 0.0, %v954
        %v956 = vpop.f32.mrf.mxu0
        %957 = vmatprep.mubr.bf16.mxu0 0
        %958 = vmatmul.mubr.bf16.gmra.mxu0 %v812
        %v959 = vpop.f32.mrf.mxu0
        %v960 = vadd.f32 0.0, %v959
        %v961 = vpop.f32.mrf.mxu0
        %v962 = vpop.f32.mrf.mxu0
        %v963 = vadd.f32 0.0, %v962
        %v964 = vpop.f32.mrf.mxu0
        %965 = vmatprep.mubr.bf16.mxu0 0
        %966 = vmatmul.mubr.bf16.gmra.mxu0 %v813
        %v967 = vpop.f32.mrf.mxu0
        %v968 = vadd.f32 0.0, %v967
        %v969 = vpop.f32.mrf.mxu0
        %v970 = vpop.f32.mrf.mxu0
        %v971 = vadd.f32 0.0, %v970
        %v972 = vpop.f32.mrf.mxu0
        %973 = vmatprep.mubr.bf16.mxu0 0
        %974 = vmatmul.mubr.bf16.gmra.mxu0 %v814
        %v975 = vpop.f32.mrf.mxu0
        %v976 = vadd.f32 0.0, %v975
        %v977 = vpop.f32.mrf.mxu0
        %v978 = vpop.f32.mrf.mxu0
        %v979 = vadd.f32 0.0, %v978
        %v980 = vpop.f32.mrf.mxu0
        %981 = vmatprep.mubr.bf16.mxu0 0
        %982 = vmatmul.mubr.bf16.gmra.mxu0 %v815
        %v983 = vpop.f32.mrf.mxu0
        %v984 = vadd.f32 0.0, %v983
        %v985 = vpop.f32.mrf.mxu0
        %v986 = vpop.f32.mrf.mxu0
        %v987 = vadd.f32 0.0, %v986
        %v988 = vpop.f32.mrf.mxu0
        %989 = vmatprep.mubr.bf16.mxu0 0
        %990 = vmatmul.mubr.bf16.gmra.mxu0 %v816
        %v991 = vpop.f32.mrf.mxu0
        %v992 = vadd.f32 0.0, %v991
        %v993 = vpop.f32.mrf.mxu0
        %v994 = vpop.f32.mrf.mxu0
        %v995 = vadd.f32 0.0, %v994
        %v996 = vpop.f32.mrf.mxu0
        %997 = vmatprep.mubr.bf16.mxu0 0
        %998 = vmatmul.mubr.bf16.gmra.mxu0 %v817
        %v999 = vpop.f32.mrf.mxu0
        %v1000 = vadd.f32 0.0, %v999
        %v1001 = vpop.f32.mrf.mxu0
        %v1002 = vpop.f32.mrf.mxu0
        %v1003 = vadd.f32 0.0, %v1002
        %v1004 = vpop.f32.mrf.mxu0
        %1005 = vmatprep.mubr.bf16.mxu0 0
        %1006 = vmatmul.mubr.bf16.gmra.mxu0 %v818
        %v1007 = vpop.f32.mrf.mxu0
        %v1008 = vadd.f32 0.0, %v1007
        %v1009 = vpop.f32.mrf.mxu0
        %v1010 = vpop.f32.mrf.mxu0
        %v1011 = vadd.f32 0.0, %v1010
        %v1012 = vpop.f32.mrf.mxu0
        %1013 = vmatprep.mubr.bf16.mxu0 0
        %1014 = vmatmul.mubr.bf16.gmra.mxu0 %v819
        %v1015 = vpop.f32.mrf.mxu0
        %v1016 = vadd.f32 0.0, %v1015
        %v1017 = vpop.f32.mrf.mxu0
        %v1018 = vpop.f32.mrf.mxu0
        %v1019 = vadd.f32 0.0, %v1018
        %v1020 = vpop.f32.mrf.mxu0
        %1021 = vdwg.mxu0
        %v1022 = vadd.f32 %v755, %v920
        %v1023 = vadd.f32 %v756, %v923
        %v1024 = vadd.f32 %v757, %v928
        %v1025 = vadd.f32 %v758, %v931
        %v1026 = vadd.f32 %v759, %v936
        %v1027 = vadd.f32 %v760, %v939
        %v1028 = vadd.f32 %v761, %v944
        %v1029 = vadd.f32 %v762, %v947
        %v1030 = vadd.f32 %v763, %v952
        %v1031 = vadd.f32 %v764, %v955
        %v1032 = vadd.f32 %v765, %v960
        %v1033 = vadd.f32 %v766, %v963
        %v1034 = vadd.f32 %v767, %v968
        %v1035 = vadd.f32 %v768, %v971
        %v1036 = vadd.f32 %v769, %v976
        %v1037 = vadd.f32 %v770, %v979
        %v1038 = vadd.f32 %v771, %v984
        %v1039 = vadd.f32 %v772, %v987
        %v1040 = vadd.f32 %v773, %v992
        %v1041 = vadd.f32 %v774, %v995
        %v1042 = vadd.f32 %v775, %v1000
        %v1043 = vadd.f32 %v776, %v1003
        %v1044 = vadd.f32 %v777, %v1008
        %v1045 = vadd.f32 %v778, %v1011
        %v1046 = vadd.f32 %v779, %v1016
        %v1047 = vadd.f32 %v780, %v1019
        %v1048 = vld [vmem:[%s233 + $0x10] sm:$0xff]
        %v1049 = vld [vmem:[%s233 + $0x18] sm:$0xff]
        %v1050 = vld [vmem:[%s233 + $0x20] sm:$0xff]
        %v1051 = vld [vmem:[%s233 + $0x28] sm:$0xff]
        %v1052 = vld [vmem:[%s233 + $0x30] sm:$0xff]
        %v1053 = vld [vmem:[%s233 + $0x38] sm:$0xff]
        %v1054 = vld [vmem:[%s233 + $0x40] sm:$0xff]
        %v1055 = vld [vmem:[%s233 + $0x48] sm:$0xff]
        %v1056 = vld [vmem:[%s233 + $0x50] sm:$0xff]
        %v1057 = vld [vmem:[%s233 + $0x58] sm:$0xff]
        %v1058 = vld [vmem:[%s233 + $0x60] sm:$0xff]
        %v1059 = vld [vmem:[%s233 + $0x68] sm:$0xff]
        %v1060 = vld [vmem:[%s233 + $0x70] sm:$0xff]
        %v1061 = vld [vmem:[%s233 + $0x78] sm:$0xff]
        %v1062 = vld [vmem:[%s233 + $0x80] sm:$0xff]
        %v1063 = vld [vmem:[%s233 + $0x88] sm:$0xff]
        %v1064 = vld [vmem:[%s233 + $0x90] sm:$0xff]
        %v1065 = vld [vmem:[%s233 + $0x98] sm:$0xff]
        %v1066 = vld [vmem:[%s233 + $0xa0] sm:$0xff]
        %v1067 = vld [vmem:[%s233 + $0xa8] sm:$0xff]
        %v1068 = vld [vmem:[%s233 + $0xb0] sm:$0xff]
        %v1069 = vld [vmem:[%s233 + $0xb8] sm:$0xff]
        %v1070 = vld [vmem:[%s233 + $0xc0] sm:$0xff]
        %v1071 = vld [vmem:[%s233 + $0xc8] sm:$0xff]
        %v1072 = vld [vmem:[%s233 + $0xd0] sm:$0xff]
        %v1073 = vld [vmem:[%s233 + $0xd8] sm:$0xff]
        %v1074 = vpack.c.bf16 %v1049, %v1048
        %v1075 = vpack.c.bf16 %v1051, %v1050
        %v1076 = vpack.c.bf16 %v1053, %v1052
        %v1077 = vpack.c.bf16 %v1055, %v1054
        %v1078 = vpack.c.bf16 %v1057, %v1056
        %v1079 = vpack.c.bf16 %v1059, %v1058
        %v1080 = vpack.c.bf16 %v1061, %v1060
        %v1081 = vpack.c.bf16 %v1063, %v1062
        %v1082 = vpack.c.bf16 %v1065, %v1064
        %v1083 = vpack.c.bf16 %v1067, %v1066
        %v1084 = vpack.c.bf16 %v1069, %v1068
        %v1085 = vpack.c.bf16 %v1071, %v1070
        %v1086 = vpack.c.bf16 %v1073, %v1072
        %s1087 = scalar_lea.vmem [#allocation11], 192
        %v1088 = vld [vmem:[%s1087] sm:$0xf]
        %v1089 = vld [vmem:[%s1087 + $0x4] sm:$0xf]
        %v1090 = vld [vmem:[%s1087 + $0x8] sm:$0xf]
        %v1091 = vld [vmem:[%s1087 + $0xc] sm:$0xf]
        %v1092 = vld [vmem:[%s1087 + $0x10] sm:$0xf]
        %v1093 = vld [vmem:[%s1087 + $0x14] sm:$0xf]
        %v1094 = vld [vmem:[%s1087 + $0x18] sm:$0xf]
        %v1095 = vld [vmem:[%s1087 + $0x1c] sm:$0xf]
        %v1096 = vld [vmem:[%s1087 + $0x20] sm:$0xf]
        %v1097 = vld [vmem:[%s1087 + $0x24] sm:$0xf]
        %v1098 = vld [vmem:[%s1087 + $0x28] sm:$0xf]
        %v1099 = vld [vmem:[%s1087 + $0x2c] sm:$0xf]
        %v1100 = vld [vmem:[%s1087 + $0x30] sm:$0xf]
        %v1101 = vld [vmem:[%s1087 + $0x34] sm:$0xf]
        %v1102 = vld [vmem:[%s1087 + $0x38] sm:$0xf]
        %v1103 = vld [vmem:[%s1087 + $0x3c] sm:$0xf]
        %v1120 = vunpack.c.l.b16 %v1088
        %v1121 = vunpack.c.l.b16 %v1089
        %v1122 = vunpack.c.l.b16 %v1090
        %v1123 = vunpack.c.l.b16 %v1091
        %v1124 = vunpack.c.l.b16 %v1092
        %v1125 = vunpack.c.l.b16 %v1093
        %v1126 = vunpack.c.l.b16 %v1094
        %v1127 = vunpack.c.l.b16 %v1095
        %v1128 = vunpack.c.l.b16 %v1096
        %v1129 = vunpack.c.l.b16 %v1097
        %v1130 = vunpack.c.l.b16 %v1098
        %v1131 = vunpack.c.l.b16 %v1099
        %v1132 = vunpack.c.l.b16 %v1100
        %v1133 = vunpack.c.l.b16 %v1101
        %v1134 = vunpack.c.l.b16 %v1102
        %v1135 = vunpack.c.l.b16 %v1103
        %v1136 = vpack.c.b16 %v1121, %v1120
        %v1137 = vpack.c.b16 %v1123, %v1122
        %v1138 = vpack.c.b16 %v1125, %v1124
        %v1139 = vpack.c.b16 %v1127, %v1126
        %v1140 = vpack.c.b16 %v1129, %v1128
        %v1141 = vpack.c.b16 %v1131, %v1130
        %v1142 = vpack.c.b16 %v1133, %v1132
        %v1143 = vpack.c.b16 %v1135, %v1134
        %1152 = vmatprep.subr.bf16.mxu0 0
        %1153 = vmatpush1.bf16.msra.mxu0 %v1143
        %1154 = vmatprep.subr.bf16.mxu0 0
        %1155 = vmatpush1.bf16.msra.mxu0 %v1142
        %1156 = vmatprep.subr.bf16.mxu0 0
        %1157 = vmatpush1.bf16.msra.mxu0 %v1141
        %1158 = vmatprep.subr.bf16.mxu0 0
        %1159 = vmatpush1.bf16.msra.mxu0 %v1140
        %1160 = vmatprep.subr.bf16.mxu0 0
        %1161 = vmatpush1.bf16.msra.mxu0 %v1139
        %1162 = vmatprep.subr.bf16.mxu0 0
        %1163 = vmatpush1.bf16.msra.mxu0 %v1138
        %1164 = vmatprep.subr.bf16.mxu0 0
        %1165 = vmatpush1.bf16.msra.mxu0 %v1137
        %1166 = vmatprep.subr.bf16.mxu0 0
        %1167 = vmatpush1.bf16.msra.mxu0 %v1136
        %1168 = vmatprep.subr.bf16.mxu0 0
        %1169 = vmatpush2.bf16.msra.mxu0 0
        %1170 = vmatprep.subr.bf16.mxu0 0
        %1171 = vmatpush2.bf16.msra.mxu0 0
        %1172 = vmatprep.subr.bf16.mxu0 0
        %1173 = vmatpush2.bf16.msra.mxu0 0
        %1174 = vmatprep.subr.bf16.mxu0 0
        %1175 = vmatpush2.bf16.msra.mxu0 0
        %1176 = vmatprep.subr.bf16.mxu0 0
        %1177 = vmatpush2.bf16.msra.mxu0 0
        %1178 = vmatprep.subr.bf16.mxu0 0
        %1179 = vmatpush2.bf16.msra.mxu0 0
        %1180 = vmatprep.subr.bf16.mxu0 0
        %1181 = vmatpush2.bf16.msra.mxu0 0
        %1182 = vmatprep.subr.bf16.mxu0 0
        %1183 = vmatpush2.bf16.msra.mxu0 0
        %1184 = vmatprep.mubr.bf16.mxu0 0
        %1185 = vmatmul.mubr.bf16.gmra.mxu0 %v1074
        %v1186 = vpop.f32.mrf.mxu0
        %v1187 = vadd.f32 0.0, %v1186
        %v1188 = vpop.f32.mrf.mxu0
        %v1189 = vpop.f32.mrf.mxu0
        %v1190 = vadd.f32 0.0, %v1189
        %v1191 = vpop.f32.mrf.mxu0
        %1192 = vmatprep.mubr.bf16.mxu0 0
        %1193 = vmatmul.mubr.bf16.gmra.mxu0 %v1075
        %v1194 = vpop.f32.mrf.mxu0
        %v1195 = vadd.f32 0.0, %v1194
        %v1196 = vpop.f32.mrf.mxu0
        %v1197 = vpop.f32.mrf.mxu0
        %v1198 = vadd.f32 0.0, %v1197
        %v1199 = vpop.f32.mrf.mxu0
        %1200 = vmatprep.mubr.bf16.mxu0 0
        %1201 = vmatmul.mubr.bf16.gmra.mxu0 %v1076
        %v1202 = vpop.f32.mrf.mxu0
        %v1203 = vadd.f32 0.0, %v1202
        %v1204 = vpop.f32.mrf.mxu0
        %v1205 = vpop.f32.mrf.mxu0
        %v1206 = vadd.f32 0.0, %v1205
        %v1207 = vpop.f32.mrf.mxu0
        %1208 = vmatprep.mubr.bf16.mxu0 0
        %1209 = vmatmul.mubr.bf16.gmra.mxu0 %v1077
        %v1210 = vpop.f32.mrf.mxu0
        %v1211 = vadd.f32 0.0, %v1210
        %v1212 = vpop.f32.mrf.mxu0
        %v1213 = vpop.f32.mrf.mxu0
        %v1214 = vadd.f32 0.0, %v1213
        %v1215 = vpop.f32.mrf.mxu0
        %1216 = vmatprep.mubr.bf16.mxu0 0
        %1217 = vmatmul.mubr.bf16.gmra.mxu0 %v1078
        %v1218 = vpop.f32.mrf.mxu0
        %v1219 = vadd.f32 0.0, %v1218
        %v1220 = vpop.f32.mrf.mxu0
        %v1221 = vpop.f32.mrf.mxu0
        %v1222 = vadd.f32 0.0, %v1221
        %v1223 = vpop.f32.mrf.mxu0
        %1224 = vmatprep.mubr.bf16.mxu0 0
        %1225 = vmatmul.mubr.bf16.gmra.mxu0 %v1079
        %v1226 = vpop.f32.mrf.mxu0
        %v1227 = vadd.f32 0.0, %v1226
        %v1228 = vpop.f32.mrf.mxu0
        %v1229 = vpop.f32.mrf.mxu0
        %v1230 = vadd.f32 0.0, %v1229
        %v1231 = vpop.f32.mrf.mxu0
        %1232 = vmatprep.mubr.bf16.mxu0 0
        %1233 = vmatmul.mubr.bf16.gmra.mxu0 %v1080
        %v1234 = vpop.f32.mrf.mxu0
        %v1235 = vadd.f32 0.0, %v1234
        %v1236 = vpop.f32.mrf.mxu0
        %v1237 = vpop.f32.mrf.mxu0
        %v1238 = vadd.f32 0.0, %v1237
        %v1239 = vpop.f32.mrf.mxu0
        %1240 = vmatprep.mubr.bf16.mxu0 0
        %1241 = vmatmul.mubr.bf16.gmra.mxu0 %v1081
        %v1242 = vpop.f32.mrf.mxu0
        %v1243 = vadd.f32 0.0, %v1242
        %v1244 = vpop.f32.mrf.mxu0
        %v1245 = vpop.f32.mrf.mxu0
        %v1246 = vadd.f32 0.0, %v1245
        %v1247 = vpop.f32.mrf.mxu0
        %1248 = vmatprep.mubr.bf16.mxu0 0
        %1249 = vmatmul.mubr.bf16.gmra.mxu0 %v1082
        %v1250 = vpop.f32.mrf.mxu0
        %v1251 = vadd.f32 0.0, %v1250
        %v1252 = vpop.f32.mrf.mxu0
        %v1253 = vpop.f32.mrf.mxu0
        %v1254 = vadd.f32 0.0, %v1253
        %v1255 = vpop.f32.mrf.mxu0
        %1256 = vmatprep.mubr.bf16.mxu0 0
        %1257 = vmatmul.mubr.bf16.gmra.mxu0 %v1083
        %v1258 = vpop.f32.mrf.mxu0
        %v1259 = vadd.f32 0.0, %v1258
        %v1260 = vpop.f32.mrf.mxu0
        %v1261 = vpop.f32.mrf.mxu0
        %v1262 = vadd.f32 0.0, %v1261
        %v1263 = vpop.f32.mrf.mxu0
        %1264 = vmatprep.mubr.bf16.mxu0 0
        %1265 = vmatmul.mubr.bf16.gmra.mxu0 %v1084
        %v1266 = vpop.f32.mrf.mxu0
        %v1267 = vadd.f32 0.0, %v1266
        %v1268 = vpop.f32.mrf.mxu0
        %v1269 = vpop.f32.mrf.mxu0
        %v1270 = vadd.f32 0.0, %v1269
        %v1271 = vpop.f32.mrf.mxu0
        %1272 = vmatprep.mubr.bf16.mxu0 0
        %1273 = vmatmul.mubr.bf16.gmra.mxu0 %v1085
        %v1274 = vpop.f32.mrf.mxu0
        %v1275 = vadd.f32 0.0, %v1274
        %v1276 = vpop.f32.mrf.mxu0
        %v1277 = vpop.f32.mrf.mxu0
        %v1278 = vadd.f32 0.0, %v1277
        %v1279 = vpop.f32.mrf.mxu0
        %1280 = vmatprep.mubr.bf16.mxu0 0
        %1281 = vmatmul.mubr.bf16.gmra.mxu0 %v1086
        %v1282 = vpop.f32.mrf.mxu0
        %v1283 = vadd.f32 0.0, %v1282
        %v1284 = vpop.f32.mrf.mxu0
        %v1285 = vpop.f32.mrf.mxu0
        %v1286 = vadd.f32 0.0, %v1285
        %v1287 = vpop.f32.mrf.mxu0
        %1288 = vdwg.mxu0
        %v1289 = vadd.f32 %v1022, %v1187
        %v1290 = vadd.f32 %v1023, %v1190
        %v1291 = vadd.f32 %v1024, %v1195
        %v1292 = vadd.f32 %v1025, %v1198
        %v1293 = vadd.f32 %v1026, %v1203
        %v1294 = vadd.f32 %v1027, %v1206
        %v1295 = vadd.f32 %v1028, %v1211
        %v1296 = vadd.f32 %v1029, %v1214
        %v1297 = vadd.f32 %v1030, %v1219
        %v1298 = vadd.f32 %v1031, %v1222
        %v1299 = vadd.f32 %v1032, %v1227
        %v1300 = vadd.f32 %v1033, %v1230
        %v1301 = vadd.f32 %v1034, %v1235
        %v1302 = vadd.f32 %v1035, %v1238
        %v1303 = vadd.f32 %v1036, %v1243
        %v1304 = vadd.f32 %v1037, %v1246
        %v1305 = vadd.f32 %v1038, %v1251
        %v1306 = vadd.f32 %v1039, %v1254
        %v1307 = vadd.f32 %v1040, %v1259
        %v1308 = vadd.f32 %v1041, %v1262
        %v1309 = vadd.f32 %v1042, %v1267
        %v1310 = vadd.f32 %v1043, %v1270
        %v1311 = vadd.f32 %v1044, %v1275
        %v1312 = vadd.f32 %v1045, %v1278
        %v1313 = vadd.f32 %v1046, %v1283
        %v1314 = vadd.f32 %v1047, %v1286
        %v1315 = vld [vmem:[%s233 + $0x11] sm:$0xff]
        %v1316 = vld [vmem:[%s233 + $0x19] sm:$0xff]
        %v1317 = vld [vmem:[%s233 + $0x21] sm:$0xff]
        %v1318 = vld [vmem:[%s233 + $0x29] sm:$0xff]
        %v1319 = vld [vmem:[%s233 + $0x31] sm:$0xff]
        %v1320 = vld [vmem:[%s233 + $0x39] sm:$0xff]
        %v1321 = vld [vmem:[%s233 + $0x41] sm:$0xff]
        %v1322 = vld [vmem:[%s233 + $0x49] sm:$0xff]
        %v1323 = vld [vmem:[%s233 + $0x51] sm:$0xff]
        %v1324 = vld [vmem:[%s233 + $0x59] sm:$0xff]
        %v1325 = vld [vmem:[%s233 + $0x61] sm:$0xff]
        %v1326 = vld [vmem:[%s233 + $0x69] sm:$0xff]
        %v1327 = vld [vmem:[%s233 + $0x71] sm:$0xff]
        %v1328 = vld [vmem:[%s233 + $0x79] sm:$0xff]
        %v1329 = vld [vmem:[%s233 + $0x81] sm:$0xff]
        %v1330 = vld [vmem:[%s233 + $0x89] sm:$0xff]
        %v1331 = vld [vmem:[%s233 + $0x91] sm:$0xff]
        %v1332 = vld [vmem:[%s233 + $0x99] sm:$0xff]
        %v1333 = vld [vmem:[%s233 + $0xa1] sm:$0xff]
        %v1334 = vld [vmem:[%s233 + $0xa9] sm:$0xff]
        %v1335 = vld [vmem:[%s233 + $0xb1] sm:$0xff]
        %v1336 = vld [vmem:[%s233 + $0xb9] sm:$0xff]
        %v1337 = vld [vmem:[%s233 + $0xc1] sm:$0xff]
        %v1338 = vld [vmem:[%s233 + $0xc9] sm:$0xff]
        %v1339 = vld [vmem:[%s233 + $0xd1] sm:$0xff]
        %v1340 = vld [vmem:[%s233 + $0xd9] sm:$0xff]
        %v1341 = vpack.c.bf16 %v1316, %v1315
        %v1342 = vpack.c.bf16 %v1318, %v1317
        %v1343 = vpack.c.bf16 %v1320, %v1319
        %v1344 = vpack.c.bf16 %v1322, %v1321
        %v1345 = vpack.c.bf16 %v1324, %v1323
        %v1346 = vpack.c.bf16 %v1326, %v1325
        %v1347 = vpack.c.bf16 %v1328, %v1327
        %v1348 = vpack.c.bf16 %v1330, %v1329
        %v1349 = vpack.c.bf16 %v1332, %v1331
        %v1350 = vpack.c.bf16 %v1334, %v1333
        %v1351 = vpack.c.bf16 %v1336, %v1335
        %v1352 = vpack.c.bf16 %v1338, %v1337
        %v1353 = vpack.c.bf16 %v1340, %v1339
        %s1354 = scalar_lea.vmem [#allocation11], 256
        %v1355 = vld [vmem:[%s1354] sm:$0xf]
        %v1356 = vld [vmem:[%s1354 + $0x4] sm:$0xf]
        %v1357 = vld [vmem:[%s1354 + $0x8] sm:$0xf]
        %v1358 = vld [vmem:[%s1354 + $0xc] sm:$0xf]
        %v1359 = vld [vmem:[%s1354 + $0x10] sm:$0xf]
        %v1360 = vld [vmem:[%s1354 + $0x14] sm:$0xf]
        %v1361 = vld [vmem:[%s1354 + $0x18] sm:$0xf]
        %v1362 = vld [vmem:[%s1354 + $0x1c] sm:$0xf]
        %v1363 = vld [vmem:[%s1354 + $0x20] sm:$0xf]
        %v1364 = vld [vmem:[%s1354 + $0x24] sm:$0xf]
        %v1365 = vld [vmem:[%s1354 + $0x28] sm:$0xf]
        %v1366 = vld [vmem:[%s1354 + $0x2c] sm:$0xf]
        %v1367 = vld [vmem:[%s1354 + $0x30] sm:$0xf]
        %v1368 = vld [vmem:[%s1354 + $0x34] sm:$0xf]
        %v1369 = vld [vmem:[%s1354 + $0x38] sm:$0xf]
        %v1370 = vld [vmem:[%s1354 + $0x3c] sm:$0xf]
        %v1387 = vunpack.c.l.b16 %v1355
        %v1388 = vunpack.c.l.b16 %v1356
        %v1389 = vunpack.c.l.b16 %v1357
        %v1390 = vunpack.c.l.b16 %v1358
        %v1391 = vunpack.c.l.b16 %v1359
        %v1392 = vunpack.c.l.b16 %v1360
        %v1393 = vunpack.c.l.b16 %v1361
        %v1394 = vunpack.c.l.b16 %v1362
        %v1395 = vunpack.c.l.b16 %v1363
        %v1396 = vunpack.c.l.b16 %v1364
        %v1397 = vunpack.c.l.b16 %v1365
        %v1398 = vunpack.c.l.b16 %v1366
        %v1399 = vunpack.c.l.b16 %v1367
        %v1400 = vunpack.c.l.b16 %v1368
        %v1401 = vunpack.c.l.b16 %v1369
        %v1402 = vunpack.c.l.b16 %v1370
        %v1403 = vpack.c.b16 %v1388, %v1387
        %v1404 = vpack.c.b16 %v1390, %v1389
        %v1405 = vpack.c.b16 %v1392, %v1391
        %v1406 = vpack.c.b16 %v1394, %v1393
        %v1407 = vpack.c.b16 %v1396, %v1395
        %v1408 = vpack.c.b16 %v1398, %v1397
        %v1409 = vpack.c.b16 %v1400, %v1399
        %v1410 = vpack.c.b16 %v1402, %v1401
        %1419 = vmatprep.subr.bf16.mxu0 0
        %1420 = vmatpush1.bf16.msra.mxu0 %v1410
        %1421 = vmatprep.subr.bf16.mxu0 0
        %1422 = vmatpush1.bf16.msra.mxu0 %v1409
        %1423 = vmatprep.subr.bf16.mxu0 0
        %1424 = vmatpush1.bf16.msra.mxu0 %v1408
        %1425 = vmatprep.subr.bf16.mxu0 0
        %1426 = vmatpush1.bf16.msra.mxu0 %v1407
        %1427 = vmatprep.subr.bf16.mxu0 0
        %1428 = vmatpush1.bf16.msra.mxu0 %v1406
        %1429 = vmatprep.subr.bf16.mxu0 0
        %1430 = vmatpush1.bf16.msra.mxu0 %v1405
        %1431 = vmatprep.subr.bf16.mxu0 0
        %1432 = vmatpush1.bf16.msra.mxu0 %v1404
        %1433 = vmatprep.subr.bf16.mxu0 0
        %1434 = vmatpush1.bf16.msra.mxu0 %v1403
        %1435 = vmatprep.subr.bf16.mxu0 0
        %1436 = vmatpush2.bf16.msra.mxu0 0
        %1437 = vmatprep.subr.bf16.mxu0 0
        %1438 = vmatpush2.bf16.msra.mxu0 0
        %1439 = vmatprep.subr.bf16.mxu0 0
        %1440 = vmatpush2.bf16.msra.mxu0 0
        %1441 = vmatprep.subr.bf16.mxu0 0
        %1442 = vmatpush2.bf16.msra.mxu0 0
        %1443 = vmatprep.subr.bf16.mxu0 0
        %1444 = vmatpush2.bf16.msra.mxu0 0
        %1445 = vmatprep.subr.bf16.mxu0 0
        %1446 = vmatpush2.bf16.msra.mxu0 0
        %1447 = vmatprep.subr.bf16.mxu0 0
        %1448 = vmatpush2.bf16.msra.mxu0 0
        %1449 = vmatprep.subr.bf16.mxu0 0
        %1450 = vmatpush2.bf16.msra.mxu0 0
        %1451 = vmatprep.mubr.bf16.mxu0 0
        %1452 = vmatmul.mubr.bf16.gmra.mxu0 %v1341
        %v1453 = vpop.f32.mrf.mxu0
        %v1454 = vadd.f32 0.0, %v1453
        %v1455 = vpop.f32.mrf.mxu0
        %v1456 = vpop.f32.mrf.mxu0
        %v1457 = vadd.f32 0.0, %v1456
        %v1458 = vpop.f32.mrf.mxu0
        %1459 = vmatprep.mubr.bf16.mxu0 0
        %1460 = vmatmul.mubr.bf16.gmra.mxu0 %v1342
        %v1461 = vpop.f32.mrf.mxu0
        %v1462 = vadd.f32 0.0, %v1461
        %v1463 = vpop.f32.mrf.mxu0
        %v1464 = vpop.f32.mrf.mxu0
        %v1465 = vadd.f32 0.0, %v1464
        %v1466 = vpop.f32.mrf.mxu0
        %1467 = vmatprep.mubr.bf16.mxu0 0
        %1468 = vmatmul.mubr.bf16.gmra.mxu0 %v1343
        %v1469 = vpop.f32.mrf.mxu0
        %v1470 = vadd.f32 0.0, %v1469
        %v1471 = vpop.f32.mrf.mxu0
        %v1472 = vpop.f32.mrf.mxu0
        %v1473 = vadd.f32 0.0, %v1472
        %v1474 = vpop.f32.mrf.mxu0
        %1475 = vmatprep.mubr.bf16.mxu0 0
        %1476 = vmatmul.mubr.bf16.gmra.mxu0 %v1344
        %v1477 = vpop.f32.mrf.mxu0
        %v1478 = vadd.f32 0.0, %v1477
        %v1479 = vpop.f32.mrf.mxu0
        %v1480 = vpop.f32.mrf.mxu0
        %v1481 = vadd.f32 0.0, %v1480
        %v1482 = vpop.f32.mrf.mxu0
        %1483 = vmatprep.mubr.bf16.mxu0 0
        %1484 = vmatmul.mubr.bf16.gmra.mxu0 %v1345
        %v1485 = vpop.f32.mrf.mxu0
        %v1486 = vadd.f32 0.0, %v1485
        %v1487 = vpop.f32.mrf.mxu0
        %v1488 = vpop.f32.mrf.mxu0
        %v1489 = vadd.f32 0.0, %v1488
        %v1490 = vpop.f32.mrf.mxu0
        %1491 = vmatprep.mubr.bf16.mxu0 0
        %1492 = vmatmul.mubr.bf16.gmra.mxu0 %v1346
        %v1493 = vpop.f32.mrf.mxu0
        %v1494 = vadd.f32 0.0, %v1493
        %v1495 = vpop.f32.mrf.mxu0
        %v1496 = vpop.f32.mrf.mxu0
        %v1497 = vadd.f32 0.0, %v1496
        %v1498 = vpop.f32.mrf.mxu0
        %1499 = vmatprep.mubr.bf16.mxu0 0
        %1500 = vmatmul.mubr.bf16.gmra.mxu0 %v1347
        %v1501 = vpop.f32.mrf.mxu0
        %v1502 = vadd.f32 0.0, %v1501
        %v1503 = vpop.f32.mrf.mxu0
        %v1504 = vpop.f32.mrf.mxu0
        %v1505 = vadd.f32 0.0, %v1504
        %v1506 = vpop.f32.mrf.mxu0
        %1507 = vmatprep.mubr.bf16.mxu0 0
        %1508 = vmatmul.mubr.bf16.gmra.mxu0 %v1348
        %v1509 = vpop.f32.mrf.mxu0
        %v1510 = vadd.f32 0.0, %v1509
        %v1511 = vpop.f32.mrf.mxu0
        %v1512 = vpop.f32.mrf.mxu0
        %v1513 = vadd.f32 0.0, %v1512
        %v1514 = vpop.f32.mrf.mxu0
        %1515 = vmatprep.mubr.bf16.mxu0 0
        %1516 = vmatmul.mubr.bf16.gmra.mxu0 %v1349
        %v1517 = vpop.f32.mrf.mxu0
        %v1518 = vadd.f32 0.0, %v1517
        %v1519 = vpop.f32.mrf.mxu0
        %v1520 = vpop.f32.mrf.mxu0
        %v1521 = vadd.f32 0.0, %v1520
        %v1522 = vpop.f32.mrf.mxu0
        %1523 = vmatprep.mubr.bf16.mxu0 0
        %1524 = vmatmul.mubr.bf16.gmra.mxu0 %v1350
        %v1525 = vpop.f32.mrf.mxu0
        %v1526 = vadd.f32 0.0, %v1525
        %v1527 = vpop.f32.mrf.mxu0
        %v1528 = vpop.f32.mrf.mxu0
        %v1529 = vadd.f32 0.0, %v1528
        %v1530 = vpop.f32.mrf.mxu0
        %1531 = vmatprep.mubr.bf16.mxu0 0
        %1532 = vmatmul.mubr.bf16.gmra.mxu0 %v1351
        %v1533 = vpop.f32.mrf.mxu0
        %v1534 = vadd.f32 0.0, %v1533
        %v1535 = vpop.f32.mrf.mxu0
        %v1536 = vpop.f32.mrf.mxu0
        %v1537 = vadd.f32 0.0, %v1536
        %v1538 = vpop.f32.mrf.mxu0
        %1539 = vmatprep.mubr.bf16.mxu0 0
        %1540 = vmatmul.mubr.bf16.gmra.mxu0 %v1352
        %v1541 = vpop.f32.mrf.mxu0
        %v1542 = vadd.f32 0.0, %v1541
        %v1543 = vpop.f32.mrf.mxu0
        %v1544 = vpop.f32.mrf.mxu0
        %v1545 = vadd.f32 0.0, %v1544
        %v1546 = vpop.f32.mrf.mxu0
        %1547 = vmatprep.mubr.bf16.mxu0 0
        %1548 = vmatmul.mubr.bf16.gmra.mxu0 %v1353
        %v1549 = vpop.f32.mrf.mxu0
        %v1550 = vadd.f32 0.0, %v1549
        %v1551 = vpop.f32.mrf.mxu0
        %v1552 = vpop.f32.mrf.mxu0
        %v1553 = vadd.f32 0.0, %v1552
        %v1554 = vpop.f32.mrf.mxu0
        %1555 = vdwg.mxu0
        %v1556 = vadd.f32 %v1289, %v1454
        %v1557 = vadd.f32 %v1290, %v1457
        %v1558 = vadd.f32 %v1291, %v1462
        %v1559 = vadd.f32 %v1292, %v1465
        %v1560 = vadd.f32 %v1293, %v1470
        %v1561 = vadd.f32 %v1294, %v1473
        %v1562 = vadd.f32 %v1295, %v1478
        %v1563 = vadd.f32 %v1296, %v1481
        %v1564 = vadd.f32 %v1297, %v1486
        %v1565 = vadd.f32 %v1298, %v1489
        %v1566 = vadd.f32 %v1299, %v1494
        %v1567 = vadd.f32 %v1300, %v1497
        %v1568 = vadd.f32 %v1301, %v1502
        %v1569 = vadd.f32 %v1302, %v1505
        %v1570 = vadd.f32 %v1303, %v1510
        %v1571 = vadd.f32 %v1304, %v1513
        %v1572 = vadd.f32 %v1305, %v1518
        %v1573 = vadd.f32 %v1306, %v1521
        %v1574 = vadd.f32 %v1307, %v1526
        %v1575 = vadd.f32 %v1308, %v1529
        %v1576 = vadd.f32 %v1309, %v1534
        %v1577 = vadd.f32 %v1310, %v1537
        %v1578 = vadd.f32 %v1311, %v1542
        %v1579 = vadd.f32 %v1312, %v1545
        %v1580 = vadd.f32 %v1313, %v1550
        %v1581 = vadd.f32 %v1314, %v1553
        %v1582 = vld [vmem:[%s233 + $0x12] sm:$0xff]
        %v1583 = vld [vmem:[%s233 + $0x1a] sm:$0xff]
        %v1584 = vld [vmem:[%s233 + $0x22] sm:$0xff]
        %v1585 = vld [vmem:[%s233 + $0x2a] sm:$0xff]
        %v1586 = vld [vmem:[%s233 + $0x32] sm:$0xff]
        %v1587 = vld [vmem:[%s233 + $0x3a] sm:$0xff]
        %v1588 = vld [vmem:[%s233 + $0x42] sm:$0xff]
        %v1589 = vld [vmem:[%s233 + $0x4a] sm:$0xff]
        %v1590 = vld [vmem:[%s233 + $0x52] sm:$0xff]
        %v1591 = vld [vmem:[%s233 + $0x5a] sm:$0xff]
        %v1592 = vld [vmem:[%s233 + $0x62] sm:$0xff]
        %v1593 = vld [vmem:[%s233 + $0x6a] sm:$0xff]
        %v1594 = vld [vmem:[%s233 + $0x72] sm:$0xff]
        %v1595 = vld [vmem:[%s233 + $0x7a] sm:$0xff]
        %v1596 = vld [vmem:[%s233 + $0x82] sm:$0xff]
        %v1597 = vld [vmem:[%s233 + $0x8a] sm:$0xff]
        %v1598 = vld [vmem:[%s233 + $0x92] sm:$0xff]
        %v1599 = vld [vmem:[%s233 + $0x9a] sm:$0xff]
        %v1600 = vld [vmem:[%s233 + $0xa2] sm:$0xff]
        %v1601 = vld [vmem:[%s233 + $0xaa] sm:$0xff]
        %v1602 = vld [vmem:[%s233 + $0xb2] sm:$0xff]
        %v1603 = vld [vmem:[%s233 + $0xba] sm:$0xff]
        %v1604 = vld [vmem:[%s233 + $0xc2] sm:$0xff]
        %v1605 = vld [vmem:[%s233 + $0xca] sm:$0xff]
        %v1606 = vld [vmem:[%s233 + $0xd2] sm:$0xff]
        %v1607 = vld [vmem:[%s233 + $0xda] sm:$0xff]
        %v1608 = vpack.c.bf16 %v1583, %v1582
        %v1609 = vpack.c.bf16 %v1585, %v1584
        %v1610 = vpack.c.bf16 %v1587, %v1586
        %v1611 = vpack.c.bf16 %v1589, %v1588
        %v1612 = vpack.c.bf16 %v1591, %v1590
        %v1613 = vpack.c.bf16 %v1593, %v1592
        %v1614 = vpack.c.bf16 %v1595, %v1594
        %v1615 = vpack.c.bf16 %v1597, %v1596
        %v1616 = vpack.c.bf16 %v1599, %v1598
        %v1617 = vpack.c.bf16 %v1601, %v1600
        %v1618 = vpack.c.bf16 %v1603, %v1602
        %v1619 = vpack.c.bf16 %v1605, %v1604
        %v1620 = vpack.c.bf16 %v1607, %v1606
        %s1621 = scalar_lea.vmem [#allocation11], 320
        %v1622 = vld [vmem:[%s1621] sm:$0xf]
        %v1623 = vld [vmem:[%s1621 + $0x4] sm:$0xf]
        %v1624 = vld [vmem:[%s1621 + $0x8] sm:$0xf]
        %v1625 = vld [vmem:[%s1621 + $0xc] sm:$0xf]
        %v1626 = vld [vmem:[%s1621 + $0x10] sm:$0xf]
        %v1627 = vld [vmem:[%s1621 + $0x14] sm:$0xf]
        %v1628 = vld [vmem:[%s1621 + $0x18] sm:$0xf]
        %v1629 = vld [vmem:[%s1621 + $0x1c] sm:$0xf]
        %v1630 = vld [vmem:[%s1621 + $0x20] sm:$0xf]
        %v1631 = vld [vmem:[%s1621 + $0x24] sm:$0xf]
        %v1632 = vld [vmem:[%s1621 + $0x28] sm:$0xf]
        %v1633 = vld [vmem:[%s1621 + $0x2c] sm:$0xf]
        %v1634 = vld [vmem:[%s1621 + $0x30] sm:$0xf]
        %v1635 = vld [vmem:[%s1621 + $0x34] sm:$0xf]
        %v1636 = vld [vmem:[%s1621 + $0x38] sm:$0xf]
        %v1637 = vld [vmem:[%s1621 + $0x3c] sm:$0xf]
        %v1654 = vunpack.c.l.b16 %v1622
        %v1655 = vunpack.c.l.b16 %v1623
        %v1656 = vunpack.c.l.b16 %v1624
        %v1657 = vunpack.c.l.b16 %v1625
        %v1658 = vunpack.c.l.b16 %v1626
        %v1659 = vunpack.c.l.b16 %v1627
        %v1660 = vunpack.c.l.b16 %v1628
        %v1661 = vunpack.c.l.b16 %v1629
        %v1662 = vunpack.c.l.b16 %v1630
        %v1663 = vunpack.c.l.b16 %v1631
        %v1664 = vunpack.c.l.b16 %v1632
        %v1665 = vunpack.c.l.b16 %v1633
        %v1666 = vunpack.c.l.b16 %v1634
        %v1667 = vunpack.c.l.b16 %v1635
        %v1668 = vunpack.c.l.b16 %v1636
        %v1669 = vunpack.c.l.b16 %v1637
        %v1670 = vpack.c.b16 %v1655, %v1654
        %v1671 = vpack.c.b16 %v1657, %v1656
        %v1672 = vpack.c.b16 %v1659, %v1658
        %v1673 = vpack.c.b16 %v1661, %v1660
        %v1674 = vpack.c.b16 %v1663, %v1662
        %v1675 = vpack.c.b16 %v1665, %v1664
        %v1676 = vpack.c.b16 %v1667, %v1666
        %v1677 = vpack.c.b16 %v1669, %v1668
        %1686 = vmatprep.subr.bf16.mxu0 0
        %1687 = vmatpush1.bf16.msra.mxu0 %v1677
        %1688 = vmatprep.subr.bf16.mxu0 0
        %1689 = vmatpush1.bf16.msra.mxu0 %v1676
        %1690 = vmatprep.subr.bf16.mxu0 0
        %1691 = vmatpush1.bf16.msra.mxu0 %v1675
        %1692 = vmatprep.subr.bf16.mxu0 0
        %1693 = vmatpush1.bf16.msra.mxu0 %v1674
        %1694 = vmatprep.subr.bf16.mxu0 0
        %1695 = vmatpush1.bf16.msra.mxu0 %v1673
        %1696 = vmatprep.subr.bf16.mxu0 0
        %1697 = vmatpush1.bf16.msra.mxu0 %v1672
        %1698 = vmatprep.subr.bf16.mxu0 0
        %1699 = vmatpush1.bf16.msra.mxu0 %v1671
        %1700 = vmatprep.subr.bf16.mxu0 0
        %1701 = vmatpush1.bf16.msra.mxu0 %v1670
        %1702 = vmatprep.subr.bf16.mxu0 0
        %1703 = vmatpush2.bf16.msra.mxu0 0
        %1704 = vmatprep.subr.bf16.mxu0 0
        %1705 = vmatpush2.bf16.msra.mxu0 0
        %1706 = vmatprep.subr.bf16.mxu0 0
        %1707 = vmatpush2.bf16.msra.mxu0 0
        %1708 = vmatprep.subr.bf16.mxu0 0
        %1709 = vmatpush2.bf16.msra.mxu0 0
        %1710 = vmatprep.subr.bf16.mxu0 0
        %1711 = vmatpush2.bf16.msra.mxu0 0
        %1712 = vmatprep.subr.bf16.mxu0 0
        %1713 = vmatpush2.bf16.msra.mxu0 0
        %1714 = vmatprep.subr.bf16.mxu0 0
        %1715 = vmatpush2.bf16.msra.mxu0 0
        %1716 = vmatprep.subr.bf16.mxu0 0
        %1717 = vmatpush2.bf16.msra.mxu0 0
        %1718 = vmatprep.mubr.bf16.mxu0 0
        %1719 = vmatmul.mubr.bf16.gmra.mxu0 %v1608
        %v1720 = vpop.f32.mrf.mxu0
        %v1721 = vadd.f32 0.0, %v1720
        %v1722 = vpop.f32.mrf.mxu0
        %v1723 = vpop.f32.mrf.mxu0
        %v1724 = vadd.f32 0.0, %v1723
        %v1725 = vpop.f32.mrf.mxu0
        %1726 = vmatprep.mubr.bf16.mxu0 0
        %1727 = vmatmul.mubr.bf16.gmra.mxu0 %v1609
        %v1728 = vpop.f32.mrf.mxu0
        %v1729 = vadd.f32 0.0, %v1728
        %v1730 = vpop.f32.mrf.mxu0
        %v1731 = vpop.f32.mrf.mxu0
        %v1732 = vadd.f32 0.0, %v1731
        %v1733 = vpop.f32.mrf.mxu0
        %1734 = vmatprep.mubr.bf16.mxu0 0
        %1735 = vmatmul.mubr.bf16.gmra.mxu0 %v1610
        %v1736 = vpop.f32.mrf.mxu0
        %v1737 = vadd.f32 0.0, %v1736
        %v1738 = vpop.f32.mrf.mxu0
        %v1739 = vpop.f32.mrf.mxu0
        %v1740 = vadd.f32 0.0, %v1739
        %v1741 = vpop.f32.mrf.mxu0
        %1742 = vmatprep.mubr.bf16.mxu0 0
        %1743 = vmatmul.mubr.bf16.gmra.mxu0 %v1611
        %v1744 = vpop.f32.mrf.mxu0
        %v1745 = vadd.f32 0.0, %v1744
        %v1746 = vpop.f32.mrf.mxu0
        %v1747 = vpop.f32.mrf.mxu0
        %v1748 = vadd.f32 0.0, %v1747
        %v1749 = vpop.f32.mrf.mxu0
        %1750 = vmatprep.mubr.bf16.mxu0 0
        %1751 = vmatmul.mubr.bf16.gmra.mxu0 %v1612
        %v1752 = vpop.f32.mrf.mxu0
        %v1753 = vadd.f32 0.0, %v1752
        %v1754 = vpop.f32.mrf.mxu0
        %v1755 = vpop.f32.mrf.mxu0
        %v1756 = vadd.f32 0.0, %v1755
        %v1757 = vpop.f32.mrf.mxu0
        %1758 = vmatprep.mubr.bf16.mxu0 0
        %1759 = vmatmul.mubr.bf16.gmra.mxu0 %v1613
        %v1760 = vpop.f32.mrf.mxu0
        %v1761 = vadd.f32 0.0, %v1760
        %v1762 = vpop.f32.mrf.mxu0
        %v1763 = vpop.f32.mrf.mxu0
        %v1764 = vadd.f32 0.0, %v1763
        %v1765 = vpop.f32.mrf.mxu0
        %1766 = vmatprep.mubr.bf16.mxu0 0
        %1767 = vmatmul.mubr.bf16.gmra.mxu0 %v1614
        %v1768 = vpop.f32.mrf.mxu0
        %v1769 = vadd.f32 0.0, %v1768
        %v1770 = vpop.f32.mrf.mxu0
        %v1771 = vpop.f32.mrf.mxu0
        %v1772 = vadd.f32 0.0, %v1771
        %v1773 = vpop.f32.mrf.mxu0
        %1774 = vmatprep.mubr.bf16.mxu0 0
        %1775 = vmatmul.mubr.bf16.gmra.mxu0 %v1615
        %v1776 = vpop.f32.mrf.mxu0
        %v1777 = vadd.f32 0.0, %v1776
        %v1778 = vpop.f32.mrf.mxu0
        %v1779 = vpop.f32.mrf.mxu0
        %v1780 = vadd.f32 0.0, %v1779
        %v1781 = vpop.f32.mrf.mxu0
        %1782 = vmatprep.mubr.bf16.mxu0 0
        %1783 = vmatmul.mubr.bf16.gmra.mxu0 %v1616
        %v1784 = vpop.f32.mrf.mxu0
        %v1785 = vadd.f32 0.0, %v1784
        %v1786 = vpop.f32.mrf.mxu0
        %v1787 = vpop.f32.mrf.mxu0
        %v1788 = vadd.f32 0.0, %v1787
        %v1789 = vpop.f32.mrf.mxu0
        %1790 = vmatprep.mubr.bf16.mxu0 0
        %1791 = vmatmul.mubr.bf16.gmra.mxu0 %v1617
        %v1792 = vpop.f32.mrf.mxu0
        %v1793 = vadd.f32 0.0, %v1792
        %v1794 = vpop.f32.mrf.mxu0
        %v1795 = vpop.f32.mrf.mxu0
        %v1796 = vadd.f32 0.0, %v1795
        %v1797 = vpop.f32.mrf.mxu0
        %1798 = vmatprep.mubr.bf16.mxu0 0
        %1799 = vmatmul.mubr.bf16.gmra.mxu0 %v1618
        %v1800 = vpop.f32.mrf.mxu0
        %v1801 = vadd.f32 0.0, %v1800
        %v1802 = vpop.f32.mrf.mxu0
        %v1803 = vpop.f32.mrf.mxu0
        %v1804 = vadd.f32 0.0, %v1803
        %v1805 = vpop.f32.mrf.mxu0
        %1806 = vmatprep.mubr.bf16.mxu0 0
        %1807 = vmatmul.mubr.bf16.gmra.mxu0 %v1619
        %v1808 = vpop.f32.mrf.mxu0
        %v1809 = vadd.f32 0.0, %v1808
        %v1810 = vpop.f32.mrf.mxu0
        %v1811 = vpop.f32.mrf.mxu0
        %v1812 = vadd.f32 0.0, %v1811
        %v1813 = vpop.f32.mrf.mxu0
        %1814 = vmatprep.mubr.bf16.mxu0 0
        %1815 = vmatmul.mubr.bf16.gmra.mxu0 %v1620
        %v1816 = vpop.f32.mrf.mxu0
        %v1817 = vadd.f32 0.0, %v1816
        %v1818 = vpop.f32.mrf.mxu0
        %v1819 = vpop.f32.mrf.mxu0
        %v1820 = vadd.f32 0.0, %v1819
        %v1821 = vpop.f32.mrf.mxu0
        %1822 = vdwg.mxu0
        %v1823 = vadd.f32 %v1556, %v1721
        %v1824 = vadd.f32 %v1557, %v1724
        %v1825 = vadd.f32 %v1558, %v1729
        %v1826 = vadd.f32 %v1559, %v1732
        %v1827 = vadd.f32 %v1560, %v1737
        %v1828 = vadd.f32 %v1561, %v1740
        %v1829 = vadd.f32 %v1562, %v1745
        %v1830 = vadd.f32 %v1563, %v1748
        %v1831 = vadd.f32 %v1564, %v1753
        %v1832 = vadd.f32 %v1565, %v1756
        %v1833 = vadd.f32 %v1566, %v1761
        %v1834 = vadd.f32 %v1567, %v1764
        %v1835 = vadd.f32 %v1568, %v1769
        %v1836 = vadd.f32 %v1569, %v1772
        %v1837 = vadd.f32 %v1570, %v1777
        %v1838 = vadd.f32 %v1571, %v1780
        %v1839 = vadd.f32 %v1572, %v1785
        %v1840 = vadd.f32 %v1573, %v1788
        %v1841 = vadd.f32 %v1574, %v1793
        %v1842 = vadd.f32 %v1575, %v1796
        %v1843 = vadd.f32 %v1576, %v1801
        %v1844 = vadd.f32 %v1577, %v1804
        %v1845 = vadd.f32 %v1578, %v1809
        %v1846 = vadd.f32 %v1579, %v1812
        %v1847 = vadd.f32 %v1580, %v1817
        %v1848 = vadd.f32 %v1581, %v1820
        %v1849 = vld [vmem:[%s233 + $0x20] sm:$0xff]
        %v1850 = vld [vmem:[%s233 + $0x28] sm:$0xff]
        %v1851 = vld [vmem:[%s233 + $0x30] sm:$0xff]
        %v1852 = vld [vmem:[%s233 + $0x38] sm:$0xff]
        %v1853 = vld [vmem:[%s233 + $0x40] sm:$0xff]
        %v1854 = vld [vmem:[%s233 + $0x48] sm:$0xff]
        %v1855 = vld [vmem:[%s233 + $0x50] sm:$0xff]
        %v1856 = vld [vmem:[%s233 + $0x58] sm:$0xff]
        %v1857 = vld [vmem:[%s233 + $0x60] sm:$0xff]
        %v1858 = vld [vmem:[%s233 + $0x68] sm:$0xff]
        %v1859 = vld [vmem:[%s233 + $0x70] sm:$0xff]
        %v1860 = vld [vmem:[%s233 + $0x78] sm:$0xff]
        %v1861 = vld [vmem:[%s233 + $0x80] sm:$0xff]
        %v1862 = vld [vmem:[%s233 + $0x88] sm:$0xff]
        %v1863 = vld [vmem:[%s233 + $0x90] sm:$0xff]
        %v1864 = vld [vmem:[%s233 + $0x98] sm:$0xff]
        %v1865 = vld [vmem:[%s233 + $0xa0] sm:$0xff]
        %v1866 = vld [vmem:[%s233 + $0xa8] sm:$0xff]
        %v1867 = vld [vmem:[%s233 + $0xb0] sm:$0xff]
        %v1868 = vld [vmem:[%s233 + $0xb8] sm:$0xff]
        %v1869 = vld [vmem:[%s233 + $0xc0] sm:$0xff]
        %v1870 = vld [vmem:[%s233 + $0xc8] sm:$0xff]
        %v1871 = vld [vmem:[%s233 + $0xd0] sm:$0xff]
        %v1872 = vld [vmem:[%s233 + $0xd8] sm:$0xff]
        %v1873 = vld [vmem:[%s233 + $0xe0] sm:$0xff]
        %v1874 = vld [vmem:[%s233 + $0xe8] sm:$0xff]
        %v1875 = vpack.c.bf16 %v1850, %v1849
        %v1876 = vpack.c.bf16 %v1852, %v1851
        %v1877 = vpack.c.bf16 %v1854, %v1853
        %v1878 = vpack.c.bf16 %v1856, %v1855
        %v1879 = vpack.c.bf16 %v1858, %v1857
        %v1880 = vpack.c.bf16 %v1860, %v1859
        %v1881 = vpack.c.bf16 %v1862, %v1861
        %v1882 = vpack.c.bf16 %v1864, %v1863
        %v1883 = vpack.c.bf16 %v1866, %v1865
        %v1884 = vpack.c.bf16 %v1868, %v1867
        %v1885 = vpack.c.bf16 %v1870, %v1869
        %v1886 = vpack.c.bf16 %v1872, %v1871
        %v1887 = vpack.c.bf16 %v1874, %v1873
        %s1888 = scalar_lea.vmem [#allocation11], 384
        %v1889 = vld [vmem:[%s1888] sm:$0xf]
        %v1890 = vld [vmem:[%s1888 + $0x4] sm:$0xf]
        %v1891 = vld [vmem:[%s1888 + $0x8] sm:$0xf]
        %v1892 = vld [vmem:[%s1888 + $0xc] sm:$0xf]
        %v1893 = vld [vmem:[%s1888 + $0x10] sm:$0xf]
        %v1894 = vld [vmem:[%s1888 + $0x14] sm:$0xf]
        %v1895 = vld [vmem:[%s1888 + $0x18] sm:$0xf]
        %v1896 = vld [vmem:[%s1888 + $0x1c] sm:$0xf]
        %v1897 = vld [vmem:[%s1888 + $0x20] sm:$0xf]
        %v1898 = vld [vmem:[%s1888 + $0x24] sm:$0xf]
        %v1899 = vld [vmem:[%s1888 + $0x28] sm:$0xf]
        %v1900 = vld [vmem:[%s1888 + $0x2c] sm:$0xf]
        %v1901 = vld [vmem:[%s1888 + $0x30] sm:$0xf]
        %v1902 = vld [vmem:[%s1888 + $0x34] sm:$0xf]
        %v1903 = vld [vmem:[%s1888 + $0x38] sm:$0xf]
        %v1904 = vld [vmem:[%s1888 + $0x3c] sm:$0xf]
        %v1921 = vunpack.c.l.b16 %v1889
        %v1922 = vunpack.c.l.b16 %v1890
        %v1923 = vunpack.c.l.b16 %v1891
        %v1924 = vunpack.c.l.b16 %v1892
        %v1925 = vunpack.c.l.b16 %v1893
        %v1926 = vunpack.c.l.b16 %v1894
        %v1927 = vunpack.c.l.b16 %v1895
        %v1928 = vunpack.c.l.b16 %v1896
        %v1929 = vunpack.c.l.b16 %v1897
        %v1930 = vunpack.c.l.b16 %v1898
        %v1931 = vunpack.c.l.b16 %v1899
        %v1932 = vunpack.c.l.b16 %v1900
        %v1933 = vunpack.c.l.b16 %v1901
        %v1934 = vunpack.c.l.b16 %v1902
        %v1935 = vunpack.c.l.b16 %v1903
        %v1936 = vunpack.c.l.b16 %v1904
        %v1937 = vpack.c.b16 %v1922, %v1921
        %v1938 = vpack.c.b16 %v1924, %v1923
        %v1939 = vpack.c.b16 %v1926, %v1925
        %v1940 = vpack.c.b16 %v1928, %v1927
        %v1941 = vpack.c.b16 %v1930, %v1929
        %v1942 = vpack.c.b16 %v1932, %v1931
        %v1943 = vpack.c.b16 %v1934, %v1933
        %v1944 = vpack.c.b16 %v1936, %v1935
        %1953 = vmatprep.subr.bf16.mxu0 0
        %1954 = vmatpush1.bf16.msra.mxu0 %v1944
        %1955 = vmatprep.subr.bf16.mxu0 0
        %1956 = vmatpush1.bf16.msra.mxu0 %v1943
        %1957 = vmatprep.subr.bf16.mxu0 0
        %1958 = vmatpush1.bf16.msra.mxu0 %v1942
        %1959 = vmatprep.subr.bf16.mxu0 0
        %1960 = vmatpush1.bf16.msra.mxu0 %v1941
        %1961 = vmatprep.subr.bf16.mxu0 0
        %1962 = vmatpush1.bf16.msra.mxu0 %v1940
        %1963 = vmatprep.subr.bf16.mxu0 0
        %1964 = vmatpush1.bf16.msra.mxu0 %v1939
        %1965 = vmatprep.subr.bf16.mxu0 0
        %1966 = vmatpush1.bf16.msra.mxu0 %v1938
        %1967 = vmatprep.subr.bf16.mxu0 0
        %1968 = vmatpush1.bf16.msra.mxu0 %v1937
        %1969 = vmatprep.subr.bf16.mxu0 0
        %1970 = vmatpush2.bf16.msra.mxu0 0
        %1971 = vmatprep.subr.bf16.mxu0 0
        %1972 = vmatpush2.bf16.msra.mxu0 0
        %1973 = vmatprep.subr.bf16.mxu0 0
        %1974 = vmatpush2.bf16.msra.mxu0 0
        %1975 = vmatprep.subr.bf16.mxu0 0
        %1976 = vmatpush2.bf16.msra.mxu0 0
        %1977 = vmatprep.subr.bf16.mxu0 0
        %1978 = vmatpush2.bf16.msra.mxu0 0
        %1979 = vmatprep.subr.bf16.mxu0 0
        %1980 = vmatpush2.bf16.msra.mxu0 0
        %1981 = vmatprep.subr.bf16.mxu0 0
        %1982 = vmatpush2.bf16.msra.mxu0 0
        %1983 = vmatprep.subr.bf16.mxu0 0
        %1984 = vmatpush2.bf16.msra.mxu0 0
        %1985 = vmatprep.mubr.bf16.mxu0 0
        %1986 = vmatmul.mubr.bf16.gmra.mxu0 %v1875
        %v1987 = vpop.f32.mrf.mxu0
        %v1988 = vadd.f32 0.0, %v1987
        %v1989 = vpop.f32.mrf.mxu0
        %v1990 = vpop.f32.mrf.mxu0
        %v1991 = vadd.f32 0.0, %v1990
        %v1992 = vpop.f32.mrf.mxu0
        %1993 = vmatprep.mubr.bf16.mxu0 0
        %1994 = vmatmul.mubr.bf16.gmra.mxu0 %v1876
        %v1995 = vpop.f32.mrf.mxu0
        %v1996 = vadd.f32 0.0, %v1995
        %v1997 = vpop.f32.mrf.mxu0
        %v1998 = vpop.f32.mrf.mxu0
        %v1999 = vadd.f32 0.0, %v1998
        %v2000 = vpop.f32.mrf.mxu0
        %2001 = vmatprep.mubr.bf16.mxu0 0
        %2002 = vmatmul.mubr.bf16.gmra.mxu0 %v1877
        %v2003 = vpop.f32.mrf.mxu0
        %v2004 = vadd.f32 0.0, %v2003
        %v2005 = vpop.f32.mrf.mxu0
        %v2006 = vpop.f32.mrf.mxu0
        %v2007 = vadd.f32 0.0, %v2006
        %v2008 = vpop.f32.mrf.mxu0
        %2009 = vmatprep.mubr.bf16.mxu0 0
        %2010 = vmatmul.mubr.bf16.gmra.mxu0 %v1878
        %v2011 = vpop.f32.mrf.mxu0
        %v2012 = vadd.f32 0.0, %v2011
        %v2013 = vpop.f32.mrf.mxu0
        %v2014 = vpop.f32.mrf.mxu0
        %v2015 = vadd.f32 0.0, %v2014
        %v2016 = vpop.f32.mrf.mxu0
        %2017 = vmatprep.mubr.bf16.mxu0 0
        %2018 = vmatmul.mubr.bf16.gmra.mxu0 %v1879
        %v2019 = vpop.f32.mrf.mxu0
        %v2020 = vadd.f32 0.0, %v2019
        %v2021 = vpop.f32.mrf.mxu0
        %v2022 = vpop.f32.mrf.mxu0
        %v2023 = vadd.f32 0.0, %v2022
        %v2024 = vpop.f32.mrf.mxu0
        %2025 = vmatprep.mubr.bf16.mxu0 0
        %2026 = vmatmul.mubr.bf16.gmra.mxu0 %v1880
        %v2027 = vpop.f32.mrf.mxu0
        %v2028 = vadd.f32 0.0, %v2027
        %v2029 = vpop.f32.mrf.mxu0
        %v2030 = vpop.f32.mrf.mxu0
        %v2031 = vadd.f32 0.0, %v2030
        %v2032 = vpop.f32.mrf.mxu0
        %2033 = vmatprep.mubr.bf16.mxu0 0
        %2034 = vmatmul.mubr.bf16.gmra.mxu0 %v1881
        %v2035 = vpop.f32.mrf.mxu0
        %v2036 = vadd.f32 0.0, %v2035
        %v2037 = vpop.f32.mrf.mxu0
        %v2038 = vpop.f32.mrf.mxu0
        %v2039 = vadd.f32 0.0, %v2038
        %v2040 = vpop.f32.mrf.mxu0
        %2041 = vmatprep.mubr.bf16.mxu0 0
        %2042 = vmatmul.mubr.bf16.gmra.mxu0 %v1882
        %v2043 = vpop.f32.mrf.mxu0
        %v2044 = vadd.f32 0.0, %v2043
        %v2045 = vpop.f32.mrf.mxu0
        %v2046 = vpop.f32.mrf.mxu0
        %v2047 = vadd.f32 0.0, %v2046
        %v2048 = vpop.f32.mrf.mxu0
        %2049 = vmatprep.mubr.bf16.mxu0 0
        %2050 = vmatmul.mubr.bf16.gmra.mxu0 %v1883
        %v2051 = vpop.f32.mrf.mxu0
        %v2052 = vadd.f32 0.0, %v2051
        %v2053 = vpop.f32.mrf.mxu0
        %v2054 = vpop.f32.mrf.mxu0
        %v2055 = vadd.f32 0.0, %v2054
        %v2056 = vpop.f32.mrf.mxu0
        %2057 = vmatprep.mubr.bf16.mxu0 0
        %2058 = vmatmul.mubr.bf16.gmra.mxu0 %v1884
        %v2059 = vpop.f32.mrf.mxu0
        %v2060 = vadd.f32 0.0, %v2059
        %v2061 = vpop.f32.mrf.mxu0
        %v2062 = vpop.f32.mrf.mxu0
        %v2063 = vadd.f32 0.0, %v2062
        %v2064 = vpop.f32.mrf.mxu0
        %2065 = vmatprep.mubr.bf16.mxu0 0
        %2066 = vmatmul.mubr.bf16.gmra.mxu0 %v1885
        %v2067 = vpop.f32.mrf.mxu0
        %v2068 = vadd.f32 0.0, %v2067
        %v2069 = vpop.f32.mrf.mxu0
        %v2070 = vpop.f32.mrf.mxu0
        %v2071 = vadd.f32 0.0, %v2070
        %v2072 = vpop.f32.mrf.mxu0
        %2073 = vmatprep.mubr.bf16.mxu0 0
        %2074 = vmatmul.mubr.bf16.gmra.mxu0 %v1886
        %v2075 = vpop.f32.mrf.mxu0
        %v2076 = vadd.f32 0.0, %v2075
        %v2077 = vpop.f32.mrf.mxu0
        %v2078 = vpop.f32.mrf.mxu0
        %v2079 = vadd.f32 0.0, %v2078
        %v2080 = vpop.f32.mrf.mxu0
        %2081 = vmatprep.mubr.bf16.mxu0 0
        %2082 = vmatmul.mubr.bf16.gmra.mxu0 %v1887
        %v2083 = vpop.f32.mrf.mxu0
        %v2084 = vadd.f32 0.0, %v2083
        %v2085 = vpop.f32.mrf.mxu0
        %v2086 = vpop.f32.mrf.mxu0
        %v2087 = vadd.f32 0.0, %v2086
        %v2088 = vpop.f32.mrf.mxu0
        %2089 = vdwg.mxu0
        %v2090 = vadd.f32 %v1823, %v1988
        %v2091 = vadd.f32 %v1824, %v1991
        %v2092 = vadd.f32 %v1825, %v1996
        %v2093 = vadd.f32 %v1826, %v1999
        %v2094 = vadd.f32 %v1827, %v2004
        %v2095 = vadd.f32 %v1828, %v2007
        %v2096 = vadd.f32 %v1829, %v2012
        %v2097 = vadd.f32 %v1830, %v2015
        %v2098 = vadd.f32 %v1831, %v2020
        %v2099 = vadd.f32 %v1832, %v2023
        %v2100 = vadd.f32 %v1833, %v2028
        %v2101 = vadd.f32 %v1834, %v2031
        %v2102 = vadd.f32 %v1835, %v2036
        %v2103 = vadd.f32 %v1836, %v2039
        %v2104 = vadd.f32 %v1837, %v2044
        %v2105 = vadd.f32 %v1838, %v2047
        %v2106 = vadd.f32 %v1839, %v2052
        %v2107 = vadd.f32 %v1840, %v2055
        %v2108 = vadd.f32 %v1841, %v2060
        %v2109 = vadd.f32 %v1842, %v2063
        %v2110 = vadd.f32 %v1843, %v2068
        %v2111 = vadd.f32 %v1844, %v2071
        %v2112 = vadd.f32 %v1845, %v2076
        %v2113 = vadd.f32 %v1846, %v2079
        %v2114 = vadd.f32 %v1847, %v2084
        %v2115 = vadd.f32 %v1848, %v2087
        %v2116 = vld [vmem:[%s233 + $0x21] sm:$0xff]
        %v2117 = vld [vmem:[%s233 + $0x29] sm:$0xff]
        %v2118 = vld [vmem:[%s233 + $0x31] sm:$0xff]
        %v2119 = vld [vmem:[%s233 + $0x39] sm:$0xff]
        %v2120 = vld [vmem:[%s233 + $0x41] sm:$0xff]
        %v2121 = vld [vmem:[%s233 + $0x49] sm:$0xff]
        %v2122 = vld [vmem:[%s233 + $0x51] sm:$0xff]
        %v2123 = vld [vmem:[%s233 + $0x59] sm:$0xff]
        %v2124 = vld [vmem:[%s233 + $0x61] sm:$0xff]
        %v2125 = vld [vmem:[%s233 + $0x69] sm:$0xff]
        %v2126 = vld [vmem:[%s233 + $0x71] sm:$0xff]
        %v2127 = vld [vmem:[%s233 + $0x79] sm:$0xff]
        %v2128 = vld [vmem:[%s233 + $0x81] sm:$0xff]
        %v2129 = vld [vmem:[%s233 + $0x89] sm:$0xff]
        %v2130 = vld [vmem:[%s233 + $0x91] sm:$0xff]
        %v2131 = vld [vmem:[%s233 + $0x99] sm:$0xff]
        %v2132 = vld [vmem:[%s233 + $0xa1] sm:$0xff]
        %v2133 = vld [vmem:[%s233 + $0xa9] sm:$0xff]
        %v2134 = vld [vmem:[%s233 + $0xb1] sm:$0xff]
        %v2135 = vld [vmem:[%s233 + $0xb9] sm:$0xff]
        %v2136 = vld [vmem:[%s233 + $0xc1] sm:$0xff]
        %v2137 = vld [vmem:[%s233 + $0xc9] sm:$0xff]
        %v2138 = vld [vmem:[%s233 + $0xd1] sm:$0xff]
        %v2139 = vld [vmem:[%s233 + $0xd9] sm:$0xff]
        %v2140 = vld [vmem:[%s233 + $0xe1] sm:$0xff]
        %v2141 = vld [vmem:[%s233 + $0xe9] sm:$0xff]
        %v2142 = vpack.c.bf16 %v2117, %v2116
        %v2143 = vpack.c.bf16 %v2119, %v2118
        %v2144 = vpack.c.bf16 %v2121, %v2120
        %v2145 = vpack.c.bf16 %v2123, %v2122
        %v2146 = vpack.c.bf16 %v2125, %v2124
        %v2147 = vpack.c.bf16 %v2127, %v2126
        %v2148 = vpack.c.bf16 %v2129, %v2128
        %v2149 = vpack.c.bf16 %v2131, %v2130
        %v2150 = vpack.c.bf16 %v2133, %v2132
        %v2151 = vpack.c.bf16 %v2135, %v2134
        %v2152 = vpack.c.bf16 %v2137, %v2136
        %v2153 = vpack.c.bf16 %v2139, %v2138
        %v2154 = vpack.c.bf16 %v2141, %v2140
        %s2155 = scalar_lea.vmem [#allocation11], 448
        %v2156 = vld [vmem:[%s2155] sm:$0xf]
        %v2157 = vld [vmem:[%s2155 + $0x4] sm:$0xf]
        %v2158 = vld [vmem:[%s2155 + $0x8] sm:$0xf]
        %v2159 = vld [vmem:[%s2155 + $0xc] sm:$0xf]
        %v2160 = vld [vmem:[%s2155 + $0x10] sm:$0xf]
        %v2161 = vld [vmem:[%s2155 + $0x14] sm:$0xf]
        %v2162 = vld [vmem:[%s2155 + $0x18] sm:$0xf]
        %v2163 = vld [vmem:[%s2155 + $0x1c] sm:$0xf]
        %v2164 = vld [vmem:[%s2155 + $0x20] sm:$0xf]
        %v2165 = vld [vmem:[%s2155 + $0x24] sm:$0xf]
        %v2166 = vld [vmem:[%s2155 + $0x28] sm:$0xf]
        %v2167 = vld [vmem:[%s2155 + $0x2c] sm:$0xf]
        %v2168 = vld [vmem:[%s2155 + $0x30] sm:$0xf]
        %v2169 = vld [vmem:[%s2155 + $0x34] sm:$0xf]
        %v2170 = vld [vmem:[%s2155 + $0x38] sm:$0xf]
        %v2171 = vld [vmem:[%s2155 + $0x3c] sm:$0xf]
        %v2188 = vunpack.c.l.b16 %v2156
        %v2189 = vunpack.c.l.b16 %v2157
        %v2190 = vunpack.c.l.b16 %v2158
        %v2191 = vunpack.c.l.b16 %v2159
        %v2192 = vunpack.c.l.b16 %v2160
        %v2193 = vunpack.c.l.b16 %v2161
        %v2194 = vunpack.c.l.b16 %v2162
        %v2195 = vunpack.c.l.b16 %v2163
        %v2196 = vunpack.c.l.b16 %v2164
        %v2197 = vunpack.c.l.b16 %v2165
        %v2198 = vunpack.c.l.b16 %v2166
        %v2199 = vunpack.c.l.b16 %v2167
        %v2200 = vunpack.c.l.b16 %v2168
        %v2201 = vunpack.c.l.b16 %v2169
        %v2202 = vunpack.c.l.b16 %v2170
        %v2203 = vunpack.c.l.b16 %v2171
        %v2204 = vpack.c.b16 %v2189, %v2188
        %v2205 = vpack.c.b16 %v2191, %v2190
        %v2206 = vpack.c.b16 %v2193, %v2192
        %v2207 = vpack.c.b16 %v2195, %v2194
        %v2208 = vpack.c.b16 %v2197, %v2196
        %v2209 = vpack.c.b16 %v2199, %v2198
        %v2210 = vpack.c.b16 %v2201, %v2200
        %v2211 = vpack.c.b16 %v2203, %v2202
        %2220 = vmatprep.subr.bf16.mxu0 0
        %2221 = vmatpush1.bf16.msra.mxu0 %v2211
        %2222 = vmatprep.subr.bf16.mxu0 0
        %2223 = vmatpush1.bf16.msra.mxu0 %v2210
        %2224 = vmatprep.subr.bf16.mxu0 0
        %2225 = vmatpush1.bf16.msra.mxu0 %v2209
        %2226 = vmatprep.subr.bf16.mxu0 0
        %2227 = vmatpush1.bf16.msra.mxu0 %v2208
        %2228 = vmatprep.subr.bf16.mxu0 0
        %2229 = vmatpush1.bf16.msra.mxu0 %v2207
        %2230 = vmatprep.subr.bf16.mxu0 0
        %2231 = vmatpush1.bf16.msra.mxu0 %v2206
        %2232 = vmatprep.subr.bf16.mxu0 0
        %2233 = vmatpush1.bf16.msra.mxu0 %v2205
        %2234 = vmatprep.subr.bf16.mxu0 0
        %2235 = vmatpush1.bf16.msra.mxu0 %v2204
        %2236 = vmatprep.subr.bf16.mxu0 0
        %2237 = vmatpush2.bf16.msra.mxu0 0
        %2238 = vmatprep.subr.bf16.mxu0 0
        %2239 = vmatpush2.bf16.msra.mxu0 0
        %2240 = vmatprep.subr.bf16.mxu0 0
        %2241 = vmatpush2.bf16.msra.mxu0 0
        %2242 = vmatprep.subr.bf16.mxu0 0
        %2243 = vmatpush2.bf16.msra.mxu0 0
        %2244 = vmatprep.subr.bf16.mxu0 0
        %2245 = vmatpush2.bf16.msra.mxu0 0
        %2246 = vmatprep.subr.bf16.mxu0 0
        %2247 = vmatpush2.bf16.msra.mxu0 0
        %2248 = vmatprep.subr.bf16.mxu0 0
        %2249 = vmatpush2.bf16.msra.mxu0 0
        %2250 = vmatprep.subr.bf16.mxu0 0
        %2251 = vmatpush2.bf16.msra.mxu0 0
        %2252 = vmatprep.mubr.bf16.mxu0 0
        %2253 = vmatmul.mubr.bf16.gmra.mxu0 %v2142
        %v2254 = vpop.f32.mrf.mxu0
        %v2255 = vadd.f32 0.0, %v2254
        %v2256 = vpop.f32.mrf.mxu0
        %v2257 = vpop.f32.mrf.mxu0
        %v2258 = vadd.f32 0.0, %v2257
        %v2259 = vpop.f32.mrf.mxu0
        %2260 = vmatprep.mubr.bf16.mxu0 0
        %2261 = vmatmul.mubr.bf16.gmra.mxu0 %v2143
        %v2262 = vpop.f32.mrf.mxu0
        %v2263 = vadd.f32 0.0, %v2262
        %v2264 = vpop.f32.mrf.mxu0
        %v2265 = vpop.f32.mrf.mxu0
        %v2266 = vadd.f32 0.0, %v2265
        %v2267 = vpop.f32.mrf.mxu0
        %2268 = vmatprep.mubr.bf16.mxu0 0
        %2269 = vmatmul.mubr.bf16.gmra.mxu0 %v2144
        %v2270 = vpop.f32.mrf.mxu0
        %v2271 = vadd.f32 0.0, %v2270
        %v2272 = vpop.f32.mrf.mxu0
        %v2273 = vpop.f32.mrf.mxu0
        %v2274 = vadd.f32 0.0, %v2273
        %v2275 = vpop.f32.mrf.mxu0
        %2276 = vmatprep.mubr.bf16.mxu0 0
        %2277 = vmatmul.mubr.bf16.gmra.mxu0 %v2145
        %v2278 = vpop.f32.mrf.mxu0
        %v2279 = vadd.f32 0.0, %v2278
        %v2280 = vpop.f32.mrf.mxu0
        %v2281 = vpop.f32.mrf.mxu0
        %v2282 = vadd.f32 0.0, %v2281
        %v2283 = vpop.f32.mrf.mxu0
        %2284 = vmatprep.mubr.bf16.mxu0 0
        %2285 = vmatmul.mubr.bf16.gmra.mxu0 %v2146
        %v2286 = vpop.f32.mrf.mxu0
        %v2287 = vadd.f32 0.0, %v2286
        %v2288 = vpop.f32.mrf.mxu0
        %v2289 = vpop.f32.mrf.mxu0
        %v2290 = vadd.f32 0.0, %v2289
        %v2291 = vpop.f32.mrf.mxu0
        %2292 = vmatprep.mubr.bf16.mxu0 0
        %2293 = vmatmul.mubr.bf16.gmra.mxu0 %v2147
        %v2294 = vpop.f32.mrf.mxu0
        %v2295 = vadd.f32 0.0, %v2294
        %v2296 = vpop.f32.mrf.mxu0
        %v2297 = vpop.f32.mrf.mxu0
        %v2298 = vadd.f32 0.0, %v2297
        %v2299 = vpop.f32.mrf.mxu0
        %2300 = vmatprep.mubr.bf16.mxu0 0
        %2301 = vmatmul.mubr.bf16.gmra.mxu0 %v2148
        %v2302 = vpop.f32.mrf.mxu0
        %v2303 = vadd.f32 0.0, %v2302
        %v2304 = vpop.f32.mrf.mxu0
        %v2305 = vpop.f32.mrf.mxu0
        %v2306 = vadd.f32 0.0, %v2305
        %v2307 = vpop.f32.mrf.mxu0
        %2308 = vmatprep.mubr.bf16.mxu0 0
        %2309 = vmatmul.mubr.bf16.gmra.mxu0 %v2149
        %v2310 = vpop.f32.mrf.mxu0
        %v2311 = vadd.f32 0.0, %v2310
        %v2312 = vpop.f32.mrf.mxu0
        %v2313 = vpop.f32.mrf.mxu0
        %v2314 = vadd.f32 0.0, %v2313
        %v2315 = vpop.f32.mrf.mxu0
        %2316 = vmatprep.mubr.bf16.mxu0 0
        %2317 = vmatmul.mubr.bf16.gmra.mxu0 %v2150
        %v2318 = vpop.f32.mrf.mxu0
        %v2319 = vadd.f32 0.0, %v2318
        %v2320 = vpop.f32.mrf.mxu0
        %v2321 = vpop.f32.mrf.mxu0
        %v2322 = vadd.f32 0.0, %v2321
        %v2323 = vpop.f32.mrf.mxu0
        %2324 = vmatprep.mubr.bf16.mxu0 0
        %2325 = vmatmul.mubr.bf16.gmra.mxu0 %v2151
        %v2326 = vpop.f32.mrf.mxu0
        %v2327 = vadd.f32 0.0, %v2326
        %v2328 = vpop.f32.mrf.mxu0
        %v2329 = vpop.f32.mrf.mxu0
        %v2330 = vadd.f32 0.0, %v2329
        %v2331 = vpop.f32.mrf.mxu0
        %2332 = vmatprep.mubr.bf16.mxu0 0
        %2333 = vmatmul.mubr.bf16.gmra.mxu0 %v2152
        %v2334 = vpop.f32.mrf.mxu0
        %v2335 = vadd.f32 0.0, %v2334
        %v2336 = vpop.f32.mrf.mxu0
        %v2337 = vpop.f32.mrf.mxu0
        %v2338 = vadd.f32 0.0, %v2337
        %v2339 = vpop.f32.mrf.mxu0
        %2340 = vmatprep.mubr.bf16.mxu0 0
        %2341 = vmatmul.mubr.bf16.gmra.mxu0 %v2153
        %v2342 = vpop.f32.mrf.mxu0
        %v2343 = vadd.f32 0.0, %v2342
        %v2344 = vpop.f32.mrf.mxu0
        %v2345 = vpop.f32.mrf.mxu0
        %v2346 = vadd.f32 0.0, %v2345
        %v2347 = vpop.f32.mrf.mxu0
        %2348 = vmatprep.mubr.bf16.mxu0 0
        %2349 = vmatmul.mubr.bf16.gmra.mxu0 %v2154
        %v2350 = vpop.f32.mrf.mxu0
        %v2351 = vadd.f32 0.0, %v2350
        %v2352 = vpop.f32.mrf.mxu0
        %v2353 = vpop.f32.mrf.mxu0
        %v2354 = vadd.f32 0.0, %v2353
        %v2355 = vpop.f32.mrf.mxu0
        %2356 = vdwg.mxu0
        %v2357 = vadd.f32 %v2090, %v2255
        %v2358 = vadd.f32 %v2091, %v2258
        %v2359 = vadd.f32 %v2092, %v2263
        %v2360 = vadd.f32 %v2093, %v2266
        %v2361 = vadd.f32 %v2094, %v2271
        %v2362 = vadd.f32 %v2095, %v2274
        %v2363 = vadd.f32 %v2096, %v2279
        %v2364 = vadd.f32 %v2097, %v2282
        %v2365 = vadd.f32 %v2098, %v2287
        %v2366 = vadd.f32 %v2099, %v2290
        %v2367 = vadd.f32 %v2100, %v2295
        %v2368 = vadd.f32 %v2101, %v2298
        %v2369 = vadd.f32 %v2102, %v2303
        %v2370 = vadd.f32 %v2103, %v2306
        %v2371 = vadd.f32 %v2104, %v2311
        %v2372 = vadd.f32 %v2105, %v2314
        %v2373 = vadd.f32 %v2106, %v2319
        %v2374 = vadd.f32 %v2107, %v2322
        %v2375 = vadd.f32 %v2108, %v2327
        %v2376 = vadd.f32 %v2109, %v2330
        %v2377 = vadd.f32 %v2110, %v2335
        %v2378 = vadd.f32 %v2111, %v2338
        %v2379 = vadd.f32 %v2112, %v2343
        %v2380 = vadd.f32 %v2113, %v2346
        %v2381 = vadd.f32 %v2114, %v2351
        %v2382 = vadd.f32 %v2115, %v2354
        %v2383 = vld [vmem:[%s233 + $0x22] sm:$0xff]
        %v2384 = vld [vmem:[%s233 + $0x2a] sm:$0xff]
        %v2385 = vld [vmem:[%s233 + $0x32] sm:$0xff]
        %v2386 = vld [vmem:[%s233 + $0x3a] sm:$0xff]
        %v2387 = vld [vmem:[%s233 + $0x42] sm:$0xff]
        %v2388 = vld [vmem:[%s233 + $0x4a] sm:$0xff]
        %v2389 = vld [vmem:[%s233 + $0x52] sm:$0xff]
        %v2390 = vld [vmem:[%s233 + $0x5a] sm:$0xff]
        %v2391 = vld [vmem:[%s233 + $0x62] sm:$0xff]
        %v2392 = vld [vmem:[%s233 + $0x6a] sm:$0xff]
        %v2393 = vld [vmem:[%s233 + $0x72] sm:$0xff]
        %v2394 = vld [vmem:[%s233 + $0x7a] sm:$0xff]
        %v2395 = vld [vmem:[%s233 + $0x82] sm:$0xff]
        %v2396 = vld [vmem:[%s233 + $0x8a] sm:$0xff]
        %v2397 = vld [vmem:[%s233 + $0x92] sm:$0xff]
        %v2398 = vld [vmem:[%s233 + $0x9a] sm:$0xff]
        %v2399 = vld [vmem:[%s233 + $0xa2] sm:$0xff]
        %v2400 = vld [vmem:[%s233 + $0xaa] sm:$0xff]
        %v2401 = vld [vmem:[%s233 + $0xb2] sm:$0xff]
        %v2402 = vld [vmem:[%s233 + $0xba] sm:$0xff]
        %v2403 = vld [vmem:[%s233 + $0xc2] sm:$0xff]
        %v2404 = vld [vmem:[%s233 + $0xca] sm:$0xff]
        %v2405 = vld [vmem:[%s233 + $0xd2] sm:$0xff]
        %v2406 = vld [vmem:[%s233 + $0xda] sm:$0xff]
        %v2407 = vld [vmem:[%s233 + $0xe2] sm:$0xff]
        %v2408 = vld [vmem:[%s233 + $0xea] sm:$0xff]
        %v2409 = vpack.c.bf16 %v2384, %v2383
        %v2410 = vpack.c.bf16 %v2386, %v2385
        %v2411 = vpack.c.bf16 %v2388, %v2387
        %v2412 = vpack.c.bf16 %v2390, %v2389
        %v2413 = vpack.c.bf16 %v2392, %v2391
        %v2414 = vpack.c.bf16 %v2394, %v2393
        %v2415 = vpack.c.bf16 %v2396, %v2395
        %v2416 = vpack.c.bf16 %v2398, %v2397
        %v2417 = vpack.c.bf16 %v2400, %v2399
        %v2418 = vpack.c.bf16 %v2402, %v2401
        %v2419 = vpack.c.bf16 %v2404, %v2403
        %v2420 = vpack.c.bf16 %v2406, %v2405
        %v2421 = vpack.c.bf16 %v2408, %v2407
        %s2422 = scalar_lea.vmem [#allocation11], 512
        %v2423 = vld [vmem:[%s2422] sm:$0xf]
        %v2424 = vld [vmem:[%s2422 + $0x4] sm:$0xf]
        %v2425 = vld [vmem:[%s2422 + $0x8] sm:$0xf]
        %v2426 = vld [vmem:[%s2422 + $0xc] sm:$0xf]
        %v2427 = vld [vmem:[%s2422 + $0x10] sm:$0xf]
        %v2428 = vld [vmem:[%s2422 + $0x14] sm:$0xf]
        %v2429 = vld [vmem:[%s2422 + $0x18] sm:$0xf]
        %v2430 = vld [vmem:[%s2422 + $0x1c] sm:$0xf]
        %v2431 = vld [vmem:[%s2422 + $0x20] sm:$0xf]
        %v2432 = vld [vmem:[%s2422 + $0x24] sm:$0xf]
        %v2433 = vld [vmem:[%s2422 + $0x28] sm:$0xf]
        %v2434 = vld [vmem:[%s2422 + $0x2c] sm:$0xf]
        %v2435 = vld [vmem:[%s2422 + $0x30] sm:$0xf]
        %v2436 = vld [vmem:[%s2422 + $0x34] sm:$0xf]
        %v2437 = vld [vmem:[%s2422 + $0x38] sm:$0xf]
        %v2438 = vld [vmem:[%s2422 + $0x3c] sm:$0xf]
        %v2455 = vunpack.c.l.b16 %v2423
        %v2456 = vunpack.c.l.b16 %v2424
        %v2457 = vunpack.c.l.b16 %v2425
        %v2458 = vunpack.c.l.b16 %v2426
        %v2459 = vunpack.c.l.b16 %v2427
        %v2460 = vunpack.c.l.b16 %v2428
        %v2461 = vunpack.c.l.b16 %v2429
        %v2462 = vunpack.c.l.b16 %v2430
        %v2463 = vunpack.c.l.b16 %v2431
        %v2464 = vunpack.c.l.b16 %v2432
        %v2465 = vunpack.c.l.b16 %v2433
        %v2466 = vunpack.c.l.b16 %v2434
        %v2467 = vunpack.c.l.b16 %v2435
        %v2468 = vunpack.c.l.b16 %v2436
        %v2469 = vunpack.c.l.b16 %v2437
        %v2470 = vunpack.c.l.b16 %v2438
        %v2471 = vpack.c.b16 %v2456, %v2455
        %v2472 = vpack.c.b16 %v2458, %v2457
        %v2473 = vpack.c.b16 %v2460, %v2459
        %v2474 = vpack.c.b16 %v2462, %v2461
        %v2475 = vpack.c.b16 %v2464, %v2463
        %v2476 = vpack.c.b16 %v2466, %v2465
        %v2477 = vpack.c.b16 %v2468, %v2467
        %v2478 = vpack.c.b16 %v2470, %v2469
        %2487 = vmatprep.subr.bf16.mxu0 0
        %2488 = vmatpush1.bf16.msra.mxu0 %v2478
        %2489 = vmatprep.subr.bf16.mxu0 0
        %2490 = vmatpush1.bf16.msra.mxu0 %v2477
        %2491 = vmatprep.subr.bf16.mxu0 0
        %2492 = vmatpush1.bf16.msra.mxu0 %v2476
        %2493 = vmatprep.subr.bf16.mxu0 0
        %2494 = vmatpush1.bf16.msra.mxu0 %v2475
        %2495 = vmatprep.subr.bf16.mxu0 0
        %2496 = vmatpush1.bf16.msra.mxu0 %v2474
        %2497 = vmatprep.subr.bf16.mxu0 0
        %2498 = vmatpush1.bf16.msra.mxu0 %v2473
        %2499 = vmatprep.subr.bf16.mxu0 0
        %2500 = vmatpush1.bf16.msra.mxu0 %v2472
        %2501 = vmatprep.subr.bf16.mxu0 0
        %2502 = vmatpush1.bf16.msra.mxu0 %v2471
        %2503 = vmatprep.subr.bf16.mxu0 0
        %2504 = vmatpush2.bf16.msra.mxu0 0
        %2505 = vmatprep.subr.bf16.mxu0 0
        %2506 = vmatpush2.bf16.msra.mxu0 0
        %2507 = vmatprep.subr.bf16.mxu0 0
        %2508 = vmatpush2.bf16.msra.mxu0 0
        %2509 = vmatprep.subr.bf16.mxu0 0
        %2510 = vmatpush2.bf16.msra.mxu0 0
        %2511 = vmatprep.subr.bf16.mxu0 0
        %2512 = vmatpush2.bf16.msra.mxu0 0
        %2513 = vmatprep.subr.bf16.mxu0 0
        %2514 = vmatpush2.bf16.msra.mxu0 0
        %2515 = vmatprep.subr.bf16.mxu0 0
        %2516 = vmatpush2.bf16.msra.mxu0 0
        %2517 = vmatprep.subr.bf16.mxu0 0
        %2518 = vmatpush2.bf16.msra.mxu0 0
        %2519 = vmatprep.mubr.bf16.mxu0 0
        %2520 = vmatmul.mubr.bf16.gmra.mxu0 %v2409
        %v2521 = vpop.f32.mrf.mxu0
        %v2522 = vadd.f32 0.0, %v2521
        %v2523 = vpop.f32.mrf.mxu0
        %v2524 = vpop.f32.mrf.mxu0
        %v2525 = vadd.f32 0.0, %v2524
        %v2526 = vpop.f32.mrf.mxu0
        %2527 = vmatprep.mubr.bf16.mxu0 0
        %2528 = vmatmul.mubr.bf16.gmra.mxu0 %v2410
        %v2529 = vpop.f32.mrf.mxu0
        %v2530 = vadd.f32 0.0, %v2529
        %v2531 = vpop.f32.mrf.mxu0
        %v2532 = vpop.f32.mrf.mxu0
        %v2533 = vadd.f32 0.0, %v2532
        %v2534 = vpop.f32.mrf.mxu0
        %2535 = vmatprep.mubr.bf16.mxu0 0
        %2536 = vmatmul.mubr.bf16.gmra.mxu0 %v2411
        %v2537 = vpop.f32.mrf.mxu0
        %v2538 = vadd.f32 0.0, %v2537
        %v2539 = vpop.f32.mrf.mxu0
        %v2540 = vpop.f32.mrf.mxu0
        %v2541 = vadd.f32 0.0, %v2540
        %v2542 = vpop.f32.mrf.mxu0
        %2543 = vmatprep.mubr.bf16.mxu0 0
        %2544 = vmatmul.mubr.bf16.gmra.mxu0 %v2412
        %v2545 = vpop.f32.mrf.mxu0
        %v2546 = vadd.f32 0.0, %v2545
        %v2547 = vpop.f32.mrf.mxu0
        %v2548 = vpop.f32.mrf.mxu0
        %v2549 = vadd.f32 0.0, %v2548
        %v2550 = vpop.f32.mrf.mxu0
        %2551 = vmatprep.mubr.bf16.mxu0 0
        %2552 = vmatmul.mubr.bf16.gmra.mxu0 %v2413
        %v2553 = vpop.f32.mrf.mxu0
        %v2554 = vadd.f32 0.0, %v2553
        %v2555 = vpop.f32.mrf.mxu0
        %v2556 = vpop.f32.mrf.mxu0
        %v2557 = vadd.f32 0.0, %v2556
        %v2558 = vpop.f32.mrf.mxu0
        %2559 = vmatprep.mubr.bf16.mxu0 0
        %2560 = vmatmul.mubr.bf16.gmra.mxu0 %v2414
        %v2561 = vpop.f32.mrf.mxu0
        %v2562 = vadd.f32 0.0, %v2561
        %v2563 = vpop.f32.mrf.mxu0
        %v2564 = vpop.f32.mrf.mxu0
        %v2565 = vadd.f32 0.0, %v2564
        %v2566 = vpop.f32.mrf.mxu0
        %2567 = vmatprep.mubr.bf16.mxu0 0
        %2568 = vmatmul.mubr.bf16.gmra.mxu0 %v2415
        %v2569 = vpop.f32.mrf.mxu0
        %v2570 = vadd.f32 0.0, %v2569
        %v2571 = vpop.f32.mrf.mxu0
        %v2572 = vpop.f32.mrf.mxu0
        %v2573 = vadd.f32 0.0, %v2572
        %v2574 = vpop.f32.mrf.mxu0
        %2575 = vmatprep.mubr.bf16.mxu0 0
        %2576 = vmatmul.mubr.bf16.gmra.mxu0 %v2416
        %v2577 = vpop.f32.mrf.mxu0
        %v2578 = vadd.f32 0.0, %v2577
        %v2579 = vpop.f32.mrf.mxu0
        %v2580 = vpop.f32.mrf.mxu0
        %v2581 = vadd.f32 0.0, %v2580
        %v2582 = vpop.f32.mrf.mxu0
        %2583 = vmatprep.mubr.bf16.mxu0 0
        %2584 = vmatmul.mubr.bf16.gmra.mxu0 %v2417
        %v2585 = vpop.f32.mrf.mxu0
        %v2586 = vadd.f32 0.0, %v2585
        %v2587 = vpop.f32.mrf.mxu0
        %v2588 = vpop.f32.mrf.mxu0
        %v2589 = vadd.f32 0.0, %v2588
        %v2590 = vpop.f32.mrf.mxu0
        %2591 = vmatprep.mubr.bf16.mxu0 0
        %2592 = vmatmul.mubr.bf16.gmra.mxu0 %v2418
        %v2593 = vpop.f32.mrf.mxu0
        %v2594 = vadd.f32 0.0, %v2593
        %v2595 = vpop.f32.mrf.mxu0
        %v2596 = vpop.f32.mrf.mxu0
        %v2597 = vadd.f32 0.0, %v2596
        %v2598 = vpop.f32.mrf.mxu0
        %2599 = vmatprep.mubr.bf16.mxu0 0
        %2600 = vmatmul.mubr.bf16.gmra.mxu0 %v2419
        %v2601 = vpop.f32.mrf.mxu0
        %v2602 = vadd.f32 0.0, %v2601
        %v2603 = vpop.f32.mrf.mxu0
        %v2604 = vpop.f32.mrf.mxu0
        %v2605 = vadd.f32 0.0, %v2604
        %v2606 = vpop.f32.mrf.mxu0
        %2607 = vmatprep.mubr.bf16.mxu0 0
        %2608 = vmatmul.mubr.bf16.gmra.mxu0 %v2420
        %v2609 = vpop.f32.mrf.mxu0
        %v2610 = vadd.f32 0.0, %v2609
        %v2611 = vpop.f32.mrf.mxu0
        %v2612 = vpop.f32.mrf.mxu0
        %v2613 = vadd.f32 0.0, %v2612
        %v2614 = vpop.f32.mrf.mxu0
        %2615 = vmatprep.mubr.bf16.mxu0 0
        %2616 = vmatmul.mubr.bf16.gmra.mxu0 %v2421
        %v2617 = vpop.f32.mrf.mxu0
        %v2618 = vadd.f32 0.0, %v2617
        %v2619 = vpop.f32.mrf.mxu0
        %v2620 = vpop.f32.mrf.mxu0
        %v2621 = vadd.f32 0.0, %v2620
        %v2622 = vpop.f32.mrf.mxu0
        %2623 = vdwg.mxu0
        %v2624 = vadd.f32 %v2357, %v2522
        %v2625 = vadd.f32 %v2358, %v2525
        %v2626 = vadd.f32 %v2359, %v2530
        %v2627 = vadd.f32 %v2360, %v2533
        %v2628 = vadd.f32 %v2361, %v2538
        %v2629 = vadd.f32 %v2362, %v2541
        %v2630 = vadd.f32 %v2363, %v2546
        %v2631 = vadd.f32 %v2364, %v2549
        %v2632 = vadd.f32 %v2365, %v2554
        %v2633 = vadd.f32 %v2366, %v2557
        %v2634 = vadd.f32 %v2367, %v2562
        %v2635 = vadd.f32 %v2368, %v2565
        %v2636 = vadd.f32 %v2369, %v2570
        %v2637 = vadd.f32 %v2370, %v2573
        %v2638 = vadd.f32 %v2371, %v2578
        %v2639 = vadd.f32 %v2372, %v2581
        %v2640 = vadd.f32 %v2373, %v2586
        %v2641 = vadd.f32 %v2374, %v2589
        %v2642 = vadd.f32 %v2375, %v2594
        %v2643 = vadd.f32 %v2376, %v2597
        %v2644 = vadd.f32 %v2377, %v2602
        %v2645 = vadd.f32 %v2378, %v2605
        %v2646 = vadd.f32 %v2379, %v2610
        %v2647 = vadd.f32 %v2380, %v2613
        %v2648 = vadd.f32 %v2381, %v2618
        %v2649 = vadd.f32 %v2382, %v2621
        %vm2650 = vcmp.ge.f32.partialorder %v2624, 0.0
        %vm2651 = vcmp.ge.f32.partialorder %v2625, 0.0
        %vm2652 = vcmp.ge.f32.partialorder %v2626, 0.0
        %vm2653 = vcmp.ge.f32.partialorder %v2627, 0.0
        %vm2654 = vcmp.ge.f32.partialorder %v2628, 0.0
        %vm2655 = vcmp.ge.f32.partialorder %v2629, 0.0
        %vm2656 = vcmp.ge.f32.partialorder %v2630, 0.0
        %vm2657 = vcmp.ge.f32.partialorder %v2631, 0.0
        %vm2658 = vcmp.ge.f32.partialorder %v2632, 0.0
        %vm2659 = vcmp.ge.f32.partialorder %v2633, 0.0
        %vm2660 = vcmp.ge.f32.partialorder %v2634, 0.0
        %vm2661 = vcmp.ge.f32.partialorder %v2635, 0.0
        %vm2662 = vcmp.ge.f32.partialorder %v2636, 0.0
        %vm2663 = vcmp.ge.f32.partialorder %v2637, 0.0
        %vm2664 = vcmp.ge.f32.partialorder %v2638, 0.0
        %vm2665 = vcmp.ge.f32.partialorder %v2639, 0.0
        %vm2666 = vcmp.ge.f32.partialorder %v2640, 0.0
        %vm2667 = vcmp.ge.f32.partialorder %v2641, 0.0
        %vm2668 = vcmp.ge.f32.partialorder %v2642, 0.0
        %vm2669 = vcmp.ge.f32.partialorder %v2643, 0.0
        %vm2670 = vcmp.ge.f32.partialorder %v2644, 0.0
        %vm2671 = vcmp.ge.f32.partialorder %v2645, 0.0
        %vm2672 = vcmp.ge.f32.partialorder %v2646, 0.0
        %vm2673 = vcmp.ge.f32.partialorder %v2647, 0.0
        %vm2674 = vcmp.ge.f32.partialorder %v2648, 0.0
        %vm2675 = vcmp.ge.f32.partialorder %v2649, 0.0
        %v2676 = vmul.f32 %v2624, 0.01
        %v2677 = vmul.f32 %v2625, 0.01
        %v2678 = vmul.f32 %v2626, 0.01
        %v2679 = vmul.f32 %v2627, 0.01
        %v2680 = vmul.f32 %v2628, 0.01
        %v2681 = vmul.f32 %v2629, 0.01
        %v2682 = vmul.f32 %v2630, 0.01
        %v2683 = vmul.f32 %v2631, 0.01
        %v2684 = vmul.f32 %v2632, 0.01
        %v2685 = vmul.f32 %v2633, 0.01
        %v2686 = vmul.f32 %v2634, 0.01
        %v2687 = vmul.f32 %v2635, 0.01
        %v2688 = vmul.f32 %v2636, 0.01
        %v2689 = vmul.f32 %v2637, 0.01
        %v2690 = vmul.f32 %v2638, 0.01
        %v2691 = vmul.f32 %v2639, 0.01
        %v2692 = vmul.f32 %v2640, 0.01
        %v2693 = vmul.f32 %v2641, 0.01
        %v2694 = vmul.f32 %v2642, 0.01
        %v2695 = vmul.f32 %v2643, 0.01
        %v2696 = vmul.f32 %v2644, 0.01
        %v2697 = vmul.f32 %v2645, 0.01
        %v2698 = vmul.f32 %v2646, 0.01
        %v2699 = vmul.f32 %v2647, 0.01
        %v2700 = vmul.f32 %v2648, 0.01
        %v2701 = vmul.f32 %v2649, 0.01
        %v2702 = vsel %vm2650, %v2624, %v2676
        %v2703 = vsel %vm2651, %v2625, %v2677
        %v2704 = vsel %vm2652, %v2626, %v2678
        %v2705 = vsel %vm2653, %v2627, %v2679
        %v2706 = vsel %vm2654, %v2628, %v2680
        %v2707 = vsel %vm2655, %v2629, %v2681
        %v2708 = vsel %vm2656, %v2630, %v2682
        %v2709 = vsel %vm2657, %v2631, %v2683
        %v2710 = vsel %vm2658, %v2632, %v2684
        %v2711 = vsel %vm2659, %v2633, %v2685
        %v2712 = vsel %vm2660, %v2634, %v2686
        %v2713 = vsel %vm2661, %v2635, %v2687
        %v2714 = vsel %vm2662, %v2636, %v2688
        %v2715 = vsel %vm2663, %v2637, %v2689
        %v2716 = vsel %vm2664, %v2638, %v2690
        %v2717 = vsel %vm2665, %v2639, %v2691
        %v2718 = vsel %vm2666, %v2640, %v2692
        %v2719 = vsel %vm2667, %v2641, %v2693
        %v2720 = vsel %vm2668, %v2642, %v2694
        %v2721 = vsel %vm2669, %v2643, %v2695
        %v2722 = vsel %vm2670, %v2644, %v2696
        %v2723 = vsel %vm2671, %v2645, %v2697
        %v2724 = vsel %vm2672, %v2646, %v2698
        %v2725 = vsel %vm2673, %v2647, %v2699
        %v2726 = vsel %vm2674, %v2648, %v2700
        %v2727 = vsel %vm2675, %v2649, %v2701
        %2728 = vst [vmem:[#allocation2] sm:$0xff] %v2702
        %2729 = vst [vmem:[#allocation2 + $0x8] sm:$0xff] %v2703
        %2730 = vst [vmem:[#allocation2 + $0x10] sm:$0xff] %v2704
        %2731 = vst [vmem:[#allocation2 + $0x18] sm:$0xff] %v2705
        %2732 = vst [vmem:[#allocation2 + $0x20] sm:$0xff] %v2706
        %2733 = vst [vmem:[#allocation2 + $0x28] sm:$0xff] %v2707
        %2734 = vst [vmem:[#allocation2 + $0x30] sm:$0xff] %v2708
        %2735 = vst [vmem:[#allocation2 + $0x38] sm:$0xff] %v2709
        %2736 = vst [vmem:[#allocation2 + $0x40] sm:$0xff] %v2710
        %2737 = vst [vmem:[#allocation2 + $0x48] sm:$0xff] %v2711
        %2738 = vst [vmem:[#allocation2 + $0x50] sm:$0xff] %v2712
        %2739 = vst [vmem:[#allocation2 + $0x58] sm:$0xff] %v2713
        %2740 = vst [vmem:[#allocation2 + $0x60] sm:$0xff] %v2714
        %2741 = vst [vmem:[#allocation2 + $0x68] sm:$0xff] %v2715
        %2742 = vst [vmem:[#allocation2 + $0x70] sm:$0xff] %v2716
        %2743 = vst [vmem:[#allocation2 + $0x78] sm:$0xff] %v2717
        %2744 = vst [vmem:[#allocation2 + $0x80] sm:$0xff] %v2718
        %2745 = vst [vmem:[#allocation2 + $0x88] sm:$0xff] %v2719
        %2746 = vst [vmem:[#allocation2 + $0x90] sm:$0xff] %v2720
        %2747 = vst [vmem:[#allocation2 + $0x98] sm:$0xff] %v2721
        %2748 = vst [vmem:[#allocation2 + $0xa0] sm:$0xff] %v2722
        %2749 = vst [vmem:[#allocation2 + $0xa8] sm:$0xff] %v2723
        %2750 = vst [vmem:[#allocation2 + $0xb0] sm:$0xff] %v2724
        %2751 = vst [vmem:[#allocation2 + $0xb8] sm:$0xff] %v2725
        %2752 = vst [vmem:[#allocation2 + $0xc0] sm:$0xff] %v2726
        %2753 = vst [vmem:[#allocation2 + $0xc8] sm:$0xff] %v2727
        %v2754 = vld [vmem:[#allocation2] ss:$2 sm:$0x7f]
        %2755 = vst [vmem:[#allocation3] sm:$0x7f] %v2754
        %s2756 = scalar_lea.vmem [#allocation2], 32
        %v2757 = vld [vmem:[%s2756] ss:$2 sm:$0x7f]
        %2758 = vst [vmem:[#allocation3 + $0x7] sm:$0x7f] %v2757
        %s2759 = scalar_lea.vmem [#allocation2], 64
        %v2760 = vld [vmem:[%s2759] ss:$2 sm:$0x7f]
        %2761 = vst [vmem:[#allocation3 + $0xe] sm:$0x7f] %v2760
        %s2762 = scalar_lea.vmem [#allocation2], 96
        %v2763 = vld [vmem:[%s2762] ss:$2 sm:$0x7f]
        %2764 = vst [vmem:[#allocation3 + $0x15] sm:$0x7f] %v2763
        %s2765 = scalar_lea.vmem [#allocation2], 128
        %v2766 = vld [vmem:[%s2765] ss:$2 sm:$0x7f]
        %2767 = vst [vmem:[#allocation3 + $0x1c] sm:$0x7f] %v2766
        %s2768 = scalar_lea.vmem [#allocation2], 160
        %v2769 = vld [vmem:[%s2768] ss:$2 sm:$0x7f]
        %2770 = vst [vmem:[#allocation3 + $0x23] sm:$0x7f] %v2769
        %s2771 = scalar_lea.vmem [#allocation2], 192
        %v2772 = vld [vmem:[%s2771] ss:$2 sm:$0x7f]
        %2773 = vst [vmem:[#allocation3 + $0x2a] sm:$0x7f] %v2772
        %v2774 = vld [vmem:[#allocation13 + $0x1] sm:$0x1]
        %v2775 = vlaneseq
        %v2776 = vshrl.u32 %v2775, 7
        %v2777 = vsub.s32 0, %v2776
        %v2778 = vrot.slane %v2774, %v2777
        %v2779 = vld [vmem:[#allocation3] sm:$0xff]
        %v2780 = vld [vmem:[#allocation3 + $0x8] sm:$0xff]
        %v2781 = vld [vmem:[#allocation3 + $0x10] sm:$0xff]
        %v2782 = vld [vmem:[#allocation3 + $0x18] sm:$0xff]
        %v2783 = vld [vmem:[#allocation3 + $0x20] sm:$0x1]
        %v2784 = vpack.c.bf16 %v2780, %v2779
        %v2785 = vpack.c.bf16 %v2782, %v2781
        %v2786 = vpack.c.bf16 %v2783, %v2783
        %s2787 = scalar_lea.vmem [#allocation11], 576
        %v2788 = vld [vmem:[%s2787] sm:$0xf]
        %v2789 = vld [vmem:[%s2787 + $0x4] sm:$0xf]
        %v2790 = vld [vmem:[%s2787 + $0x8] sm:$0xf]
        %v2791 = vld [vmem:[%s2787 + $0xc] sm:$0xf]
        %v2792 = vld [vmem:[%s2787 + $0x10] sm:$0xf]
        %v2793 = vld [vmem:[%s2787 + $0x14] sm:$0xf]
        %v2794 = vld [vmem:[%s2787 + $0x18] sm:$0xf]
        %v2795 = vld [vmem:[%s2787 + $0x1c] sm:$0xf]
        %v2796 = vld [vmem:[%s2787 + $0x20] sm:$0xf]
        %v2797 = vld [vmem:[%s2787 + $0x24] sm:$0xf]
        %v2798 = vld [vmem:[%s2787 + $0x28] sm:$0xf]
        %v2799 = vld [vmem:[%s2787 + $0x2c] sm:$0xf]
        %v2800 = vld [vmem:[%s2787 + $0x30] sm:$0xf]
        %v2801 = vld [vmem:[%s2787 + $0x34] sm:$0xf]
        %v2802 = vld [vmem:[%s2787 + $0x38] sm:$0xf]
        %v2803 = vld [vmem:[%s2787 + $0x3c] sm:$0xf]
        %v2820 = vunpack.c.l.b16 %v2788
        %v2821 = vunpack.c.l.b16 %v2789
        %v2822 = vunpack.c.l.b16 %v2790
        %v2823 = vunpack.c.l.b16 %v2791
        %v2824 = vunpack.c.l.b16 %v2792
        %v2825 = vunpack.c.l.b16 %v2793
        %v2826 = vunpack.c.l.b16 %v2794
        %v2827 = vunpack.c.l.b16 %v2795
        %v2828 = vunpack.c.l.b16 %v2796
        %v2829 = vunpack.c.l.b16 %v2797
        %v2830 = vunpack.c.l.b16 %v2798
        %v2831 = vunpack.c.l.b16 %v2799
        %v2832 = vunpack.c.l.b16 %v2800
        %v2833 = vunpack.c.l.b16 %v2801
        %v2834 = vunpack.c.l.b16 %v2802
        %v2835 = vunpack.c.l.b16 %v2803
        %v2836 = vpack.c.b16 %v2821, %v2820
        %v2837 = vpack.c.b16 %v2823, %v2822
        %v2838 = vpack.c.b16 %v2825, %v2824
        %v2839 = vpack.c.b16 %v2827, %v2826
        %v2840 = vpack.c.b16 %v2829, %v2828
        %v2841 = vpack.c.b16 %v2831, %v2830
        %v2842 = vpack.c.b16 %v2833, %v2832
        %v2843 = vpack.c.b16 %v2835, %v2834
        %2852 = vmatprep.subr.bf16.mxu0 0
        %2853 = vmatpush1.bf16.msra.mxu0 %v2843
        %2854 = vmatprep.subr.bf16.mxu0 0
        %2855 = vmatpush1.bf16.msra.mxu0 %v2842
        %2856 = vmatprep.subr.bf16.mxu0 0
        %2857 = vmatpush1.bf16.msra.mxu0 %v2841
        %2858 = vmatprep.subr.bf16.mxu0 0
        %2859 = vmatpush1.bf16.msra.mxu0 %v2840
        %2860 = vmatprep.subr.bf16.mxu0 0
        %2861 = vmatpush1.bf16.msra.mxu0 %v2839
        %2862 = vmatprep.subr.bf16.mxu0 0
        %2863 = vmatpush1.bf16.msra.mxu0 %v2838
        %2864 = vmatprep.subr.bf16.mxu0 0
        %2865 = vmatpush1.bf16.msra.mxu0 %v2837
        %2866 = vmatprep.subr.bf16.mxu0 0
        %2867 = vmatpush1.bf16.msra.mxu0 %v2836
        %2868 = vmatprep.subr.bf16.mxu0 0
        %2869 = vmatpush2.bf16.msra.mxu0 0
        %2870 = vmatprep.subr.bf16.mxu0 0
        %2871 = vmatpush2.bf16.msra.mxu0 0
        %2872 = vmatprep.subr.bf16.mxu0 0
        %2873 = vmatpush2.bf16.msra.mxu0 0
        %2874 = vmatprep.subr.bf16.mxu0 0
        %2875 = vmatpush2.bf16.msra.mxu0 0
        %2876 = vmatprep.subr.bf16.mxu0 0
        %2877 = vmatpush2.bf16.msra.mxu0 0
        %2878 = vmatprep.subr.bf16.mxu0 0
        %2879 = vmatpush2.bf16.msra.mxu0 0
        %2880 = vmatprep.subr.bf16.mxu0 0
        %2881 = vmatpush2.bf16.msra.mxu0 0
        %2882 = vmatprep.subr.bf16.mxu0 0
        %2883 = vmatpush2.bf16.msra.mxu0 0
        %2884 = vmatprep.mubr.bf16.mxu0 0
        %2885 = vmatmul.mubr.bf16.gmra.mxu0 %v2784
        %v2886 = vpop.f32.mrf.mxu0
        %v2887 = vadd.f32 0.0, %v2886
        %v2888 = vpop.f32.mrf.mxu0
        %v2889 = vpop.f32.mrf.mxu0
        %v2890 = vadd.f32 0.0, %v2889
        %v2891 = vpop.f32.mrf.mxu0
        %2892 = vmatprep.mubr.bf16.mxu0 0
        %2893 = vmatmul.mubr.bf16.gmra.mxu0 %v2785
        %v2894 = vpop.f32.mrf.mxu0
        %v2895 = vadd.f32 0.0, %v2894
        %v2896 = vpop.f32.mrf.mxu0
        %v2897 = vpop.f32.mrf.mxu0
        %v2898 = vadd.f32 0.0, %v2897
        %v2899 = vpop.f32.mrf.mxu0
        %2900 = vmatprep.mubr.bf16.mxu0 0
        %2901 = vmatmul.mubr.bf16.gmra.mxu0 %v2786
        %v2902 = vpop.f32.mrf.mxu0
        %v2903 = vadd.f32 0.0, %v2902
        %v2904 = vpop.f32.mrf.mxu0
        %v2905 = vpop.f32.mrf.mxu0
        %v2906 = vpop.f32.mrf.mxu0
        %2907 = vdwg.mxu0
        %v2908 = vadd.f32 %v2778, %v2887
        %v2909 = vadd.f32 %v2778, %v2890
        %v2910 = vadd.f32 %v2778, %v2895
        %v2911 = vadd.f32 %v2778, %v2898
        %v2912 = vadd.f32 %v2778, %v2903
        %v2913 = vld [vmem:[#allocation3 + $0x1] sm:$0xff]
        %v2914 = vld [vmem:[#allocation3 + $0x9] sm:$0xff]
        %v2915 = vld [vmem:[#allocation3 + $0x11] sm:$0xff]
        %v2916 = vld [vmem:[#allocation3 + $0x19] sm:$0xff]
        %v2917 = vld [vmem:[#allocation3 + $0x21] sm:$0x1]
        %v2918 = vpack.c.bf16 %v2914, %v2913
        %v2919 = vpack.c.bf16 %v2916, %v2915
        %v2920 = vpack.c.bf16 %v2917, %v2917
        %s2921 = scalar_lea.vmem [#allocation11], 640
        %v2922 = vld [vmem:[%s2921] sm:$0xf]
        %v2923 = vld [vmem:[%s2921 + $0x4] sm:$0xf]
        %v2924 = vld [vmem:[%s2921 + $0x8] sm:$0xf]
        %v2925 = vld [vmem:[%s2921 + $0xc] sm:$0xf]
        %v2926 = vld [vmem:[%s2921 + $0x10] sm:$0xf]
        %v2927 = vld [vmem:[%s2921 + $0x14] sm:$0xf]
        %v2928 = vld [vmem:[%s2921 + $0x18] sm:$0xf]
        %v2929 = vld [vmem:[%s2921 + $0x1c] sm:$0xf]
        %v2930 = vld [vmem:[%s2921 + $0x20] sm:$0xf]
        %v2931 = vld [vmem:[%s2921 + $0x24] sm:$0xf]
        %v2932 = vld [vmem:[%s2921 + $0x28] sm:$0xf]
        %v2933 = vld [vmem:[%s2921 + $0x2c] sm:$0xf]
        %v2934 = vld [vmem:[%s2921 + $0x30] sm:$0xf]
        %v2935 = vld [vmem:[%s2921 + $0x34] sm:$0xf]
        %v2936 = vld [vmem:[%s2921 + $0x38] sm:$0xf]
        %v2937 = vld [vmem:[%s2921 + $0x3c] sm:$0xf]
        %v2954 = vunpack.c.l.b16 %v2922
        %v2955 = vunpack.c.l.b16 %v2923
        %v2956 = vunpack.c.l.b16 %v2924
        %v2957 = vunpack.c.l.b16 %v2925
        %v2958 = vunpack.c.l.b16 %v2926
        %v2959 = vunpack.c.l.b16 %v2927
        %v2960 = vunpack.c.l.b16 %v2928
        %v2961 = vunpack.c.l.b16 %v2929
        %v2962 = vunpack.c.l.b16 %v2930
        %v2963 = vunpack.c.l.b16 %v2931
        %v2964 = vunpack.c.l.b16 %v2932
        %v2965 = vunpack.c.l.b16 %v2933
        %v2966 = vunpack.c.l.b16 %v2934
        %v2967 = vunpack.c.l.b16 %v2935
        %v2968 = vunpack.c.l.b16 %v2936
        %v2969 = vunpack.c.l.b16 %v2937
        %v2970 = vpack.c.b16 %v2955, %v2954
        %v2971 = vpack.c.b16 %v2957, %v2956
        %v2972 = vpack.c.b16 %v2959, %v2958
        %v2973 = vpack.c.b16 %v2961, %v2960
        %v2974 = vpack.c.b16 %v2963, %v2962
        %v2975 = vpack.c.b16 %v2965, %v2964
        %v2976 = vpack.c.b16 %v2967, %v2966
        %v2977 = vpack.c.b16 %v2969, %v2968
        %2986 = vmatprep.subr.bf16.mxu0 0
        %2987 = vmatpush1.bf16.msra.mxu0 %v2977
        %2988 = vmatprep.subr.bf16.mxu0 0
        %2989 = vmatpush1.bf16.msra.mxu0 %v2976
        %2990 = vmatprep.subr.bf16.mxu0 0
        %2991 = vmatpush1.bf16.msra.mxu0 %v2975
        %2992 = vmatprep.subr.bf16.mxu0 0
        %2993 = vmatpush1.bf16.msra.mxu0 %v2974
        %2994 = vmatprep.subr.bf16.mxu0 0
        %2995 = vmatpush1.bf16.msra.mxu0 %v2973
        %2996 = vmatprep.subr.bf16.mxu0 0
        %2997 = vmatpush1.bf16.msra.mxu0 %v2972
        %2998 = vmatprep.subr.bf16.mxu0 0
        %2999 = vmatpush1.bf16.msra.mxu0 %v2971
        %3000 = vmatprep.subr.bf16.mxu0 0
        %3001 = vmatpush1.bf16.msra.mxu0 %v2970
        %3002 = vmatprep.subr.bf16.mxu0 0
        %3003 = vmatpush2.bf16.msra.mxu0 0
        %3004 = vmatprep.subr.bf16.mxu0 0
        %3005 = vmatpush2.bf16.msra.mxu0 0
        %3006 = vmatprep.subr.bf16.mxu0 0
        %3007 = vmatpush2.bf16.msra.mxu0 0
        %3008 = vmatprep.subr.bf16.mxu0 0
        %3009 = vmatpush2.bf16.msra.mxu0 0
        %3010 = vmatprep.subr.bf16.mxu0 0
        %3011 = vmatpush2.bf16.msra.mxu0 0
        %3012 = vmatprep.subr.bf16.mxu0 0
        %3013 = vmatpush2.bf16.msra.mxu0 0
        %3014 = vmatprep.subr.bf16.mxu0 0
        %3015 = vmatpush2.bf16.msra.mxu0 0
        %3016 = vmatprep.subr.bf16.mxu0 0
        %3017 = vmatpush2.bf16.msra.mxu0 0
        %3018 = vmatprep.mubr.bf16.mxu0 0
        %3019 = vmatmul.mubr.bf16.gmra.mxu0 %v2918
        %v3020 = vpop.f32.mrf.mxu0
        %v3021 = vadd.f32 0.0, %v3020
        %v3022 = vpop.f32.mrf.mxu0
        %v3023 = vpop.f32.mrf.mxu0
        %v3024 = vadd.f32 0.0, %v3023
        %v3025 = vpop.f32.mrf.mxu0
        %3026 = vmatprep.mubr.bf16.mxu0 0
        %3027 = vmatmul.mubr.bf16.gmra.mxu0 %v2919
        %v3028 = vpop.f32.mrf.mxu0
        %v3029 = vadd.f32 0.0, %v3028
        %v3030 = vpop.f32.mrf.mxu0
        %v3031 = vpop.f32.mrf.mxu0
        %v3032 = vadd.f32 0.0, %v3031
        %v3033 = vpop.f32.mrf.mxu0
        %3034 = vmatprep.mubr.bf16.mxu0 0
        %3035 = vmatmul.mubr.bf16.gmra.mxu0 %v2920
        %v3036 = vpop.f32.mrf.mxu0
        %v3037 = vadd.f32 0.0, %v3036
        %v3038 = vpop.f32.mrf.mxu0
        %v3039 = vpop.f32.mrf.mxu0
        %v3040 = vpop.f32.mrf.mxu0
        %3041 = vdwg.mxu0
        %v3042 = vadd.f32 %v2908, %v3021
        %v3043 = vadd.f32 %v2909, %v3024
        %v3044 = vadd.f32 %v2910, %v3029
        %v3045 = vadd.f32 %v2911, %v3032
        %v3046 = vadd.f32 %v2912, %v3037
        %v3047 = vld [vmem:[#allocation3 + $0x2] sm:$0xff]
        %v3048 = vld [vmem:[#allocation3 + $0xa] sm:$0xff]
        %v3049 = vld [vmem:[#allocation3 + $0x12] sm:$0xff]
        %v3050 = vld [vmem:[#allocation3 + $0x1a] sm:$0xff]
        %v3051 = vld [vmem:[#allocation3 + $0x22] sm:$0x1]
        %v3052 = vpack.c.bf16 %v3048, %v3047
        %v3053 = vpack.c.bf16 %v3050, %v3049
        %v3054 = vpack.c.bf16 %v3051, %v3051
        %s3055 = scalar_lea.vmem [#allocation11], 704
        %v3056 = vld [vmem:[%s3055] sm:$0xf]
        %v3057 = vld [vmem:[%s3055 + $0x4] sm:$0xf]
        %v3058 = vld [vmem:[%s3055 + $0x8] sm:$0xf]
        %v3059 = vld [vmem:[%s3055 + $0xc] sm:$0xf]
        %v3060 = vld [vmem:[%s3055 + $0x10] sm:$0xf]
        %v3061 = vld [vmem:[%s3055 + $0x14] sm:$0xf]
        %v3062 = vld [vmem:[%s3055 + $0x18] sm:$0xf]
        %v3063 = vld [vmem:[%s3055 + $0x1c] sm:$0xf]
        %v3064 = vld [vmem:[%s3055 + $0x20] sm:$0xf]
        %v3065 = vld [vmem:[%s3055 + $0x24] sm:$0xf]
        %v3066 = vld [vmem:[%s3055 + $0x28] sm:$0xf]
        %v3067 = vld [vmem:[%s3055 + $0x2c] sm:$0xf]
        %v3068 = vld [vmem:[%s3055 + $0x30] sm:$0xf]
        %v3069 = vld [vmem:[%s3055 + $0x34] sm:$0xf]
        %v3070 = vld [vmem:[%s3055 + $0x38] sm:$0xf]
        %v3071 = vld [vmem:[%s3055 + $0x3c] sm:$0xf]
        %v3088 = vunpack.c.l.b16 %v3056
        %v3089 = vunpack.c.l.b16 %v3057
        %v3090 = vunpack.c.l.b16 %v3058
        %v3091 = vunpack.c.l.b16 %v3059
        %v3092 = vunpack.c.l.b16 %v3060
        %v3093 = vunpack.c.l.b16 %v3061
        %v3094 = vunpack.c.l.b16 %v3062
        %v3095 = vunpack.c.l.b16 %v3063
        %v3096 = vunpack.c.l.b16 %v3064
        %v3097 = vunpack.c.l.b16 %v3065
        %v3098 = vunpack.c.l.b16 %v3066
        %v3099 = vunpack.c.l.b16 %v3067
        %v3100 = vunpack.c.l.b16 %v3068
        %v3101 = vunpack.c.l.b16 %v3069
        %v3102 = vunpack.c.l.b16 %v3070
        %v3103 = vunpack.c.l.b16 %v3071
        %v3104 = vpack.c.b16 %v3089, %v3088
        %v3105 = vpack.c.b16 %v3091, %v3090
        %v3106 = vpack.c.b16 %v3093, %v3092
        %v3107 = vpack.c.b16 %v3095, %v3094
        %v3108 = vpack.c.b16 %v3097, %v3096
        %v3109 = vpack.c.b16 %v3099, %v3098
        %v3110 = vpack.c.b16 %v3101, %v3100
        %v3111 = vpack.c.b16 %v3103, %v3102
        %3120 = vmatprep.subr.bf16.mxu0 0
        %3121 = vmatpush1.bf16.msra.mxu0 %v3111
        %3122 = vmatprep.subr.bf16.mxu0 0
        %3123 = vmatpush1.bf16.msra.mxu0 %v3110
        %3124 = vmatprep.subr.bf16.mxu0 0
        %3125 = vmatpush1.bf16.msra.mxu0 %v3109
        %3126 = vmatprep.subr.bf16.mxu0 0
        %3127 = vmatpush1.bf16.msra.mxu0 %v3108
        %3128 = vmatprep.subr.bf16.mxu0 0
        %3129 = vmatpush1.bf16.msra.mxu0 %v3107
        %3130 = vmatprep.subr.bf16.mxu0 0
        %3131 = vmatpush1.bf16.msra.mxu0 %v3106
        %3132 = vmatprep.subr.bf16.mxu0 0
        %3133 = vmatpush1.bf16.msra.mxu0 %v3105
        %3134 = vmatprep.subr.bf16.mxu0 0
        %3135 = vmatpush1.bf16.msra.mxu0 %v3104
        %3136 = vmatprep.subr.bf16.mxu0 0
        %3137 = vmatpush2.bf16.msra.mxu0 0
        %3138 = vmatprep.subr.bf16.mxu0 0
        %3139 = vmatpush2.bf16.msra.mxu0 0
        %3140 = vmatprep.subr.bf16.mxu0 0
        %3141 = vmatpush2.bf16.msra.mxu0 0
        %3142 = vmatprep.subr.bf16.mxu0 0
        %3143 = vmatpush2.bf16.msra.mxu0 0
        %3144 = vmatprep.subr.bf16.mxu0 0
        %3145 = vmatpush2.bf16.msra.mxu0 0
        %3146 = vmatprep.subr.bf16.mxu0 0
        %3147 = vmatpush2.bf16.msra.mxu0 0
        %3148 = vmatprep.subr.bf16.mxu0 0
        %3149 = vmatpush2.bf16.msra.mxu0 0
        %3150 = vmatprep.subr.bf16.mxu0 0
        %3151 = vmatpush2.bf16.msra.mxu0 0
        %3152 = vmatprep.mubr.bf16.mxu0 0
        %3153 = vmatmul.mubr.bf16.gmra.mxu0 %v3052
        %v3154 = vpop.f32.mrf.mxu0
        %v3155 = vadd.f32 0.0, %v3154
        %v3156 = vpop.f32.mrf.mxu0
        %v3157 = vpop.f32.mrf.mxu0
        %v3158 = vadd.f32 0.0, %v3157
        %v3159 = vpop.f32.mrf.mxu0
        %3160 = vmatprep.mubr.bf16.mxu0 0
        %3161 = vmatmul.mubr.bf16.gmra.mxu0 %v3053
        %v3162 = vpop.f32.mrf.mxu0
        %v3163 = vadd.f32 0.0, %v3162
        %v3164 = vpop.f32.mrf.mxu0
        %v3165 = vpop.f32.mrf.mxu0
        %v3166 = vadd.f32 0.0, %v3165
        %v3167 = vpop.f32.mrf.mxu0
        %3168 = vmatprep.mubr.bf16.mxu0 0
        %3169 = vmatmul.mubr.bf16.gmra.mxu0 %v3054
        %v3170 = vpop.f32.mrf.mxu0
        %v3171 = vadd.f32 0.0, %v3170
        %v3172 = vpop.f32.mrf.mxu0
        %v3173 = vpop.f32.mrf.mxu0
        %v3174 = vpop.f32.mrf.mxu0
        %3175 = vdwg.mxu0
        %v3176 = vadd.f32 %v3042, %v3155
        %v3177 = vadd.f32 %v3043, %v3158
        %v3178 = vadd.f32 %v3044, %v3163
        %v3179 = vadd.f32 %v3045, %v3166
        %v3180 = vadd.f32 %v3046, %v3171
        %v3181 = vld [vmem:[#allocation3 + $0x7] sm:$0xff]
        %v3182 = vld [vmem:[#allocation3 + $0xf] sm:$0xff]
        %v3183 = vld [vmem:[#allocation3 + $0x17] sm:$0xff]
        %v3184 = vld [vmem:[#allocation3 + $0x1f] sm:$0xff]
        %v3185 = vld [vmem:[#allocation3 + $0x27] sm:$0x1]
        %v3186 = vpack.c.bf16 %v3182, %v3181
        %v3187 = vpack.c.bf16 %v3184, %v3183
        %v3188 = vpack.c.bf16 %v3185, %v3185
        %s3189 = scalar_lea.vmem [#allocation11], 768
        %v3190 = vld [vmem:[%s3189] sm:$0xf]
        %v3191 = vld [vmem:[%s3189 + $0x4] sm:$0xf]
        %v3192 = vld [vmem:[%s3189 + $0x8] sm:$0xf]
        %v3193 = vld [vmem:[%s3189 + $0xc] sm:$0xf]
        %v3194 = vld [vmem:[%s3189 + $0x10] sm:$0xf]
        %v3195 = vld [vmem:[%s3189 + $0x14] sm:$0xf]
        %v3196 = vld [vmem:[%s3189 + $0x18] sm:$0xf]
        %v3197 = vld [vmem:[%s3189 + $0x1c] sm:$0xf]
        %v3198 = vld [vmem:[%s3189 + $0x20] sm:$0xf]
        %v3199 = vld [vmem:[%s3189 + $0x24] sm:$0xf]
        %v3200 = vld [vmem:[%s3189 + $0x28] sm:$0xf]
        %v3201 = vld [vmem:[%s3189 + $0x2c] sm:$0xf]
        %v3202 = vld [vmem:[%s3189 + $0x30] sm:$0xf]
        %v3203 = vld [vmem:[%s3189 + $0x34] sm:$0xf]
        %v3204 = vld [vmem:[%s3189 + $0x38] sm:$0xf]
        %v3205 = vld [vmem:[%s3189 + $0x3c] sm:$0xf]
        %v3222 = vunpack.c.l.b16 %v3190
        %v3223 = vunpack.c.l.b16 %v3191
        %v3224 = vunpack.c.l.b16 %v3192
        %v3225 = vunpack.c.l.b16 %v3193
        %v3226 = vunpack.c.l.b16 %v3194
        %v3227 = vunpack.c.l.b16 %v3195
        %v3228 = vunpack.c.l.b16 %v3196
        %v3229 = vunpack.c.l.b16 %v3197
        %v3230 = vunpack.c.l.b16 %v3198
        %v3231 = vunpack.c.l.b16 %v3199
        %v3232 = vunpack.c.l.b16 %v3200
        %v3233 = vunpack.c.l.b16 %v3201
        %v3234 = vunpack.c.l.b16 %v3202
        %v3235 = vunpack.c.l.b16 %v3203
        %v3236 = vunpack.c.l.b16 %v3204
        %v3237 = vunpack.c.l.b16 %v3205
        %v3238 = vpack.c.b16 %v3223, %v3222
        %v3239 = vpack.c.b16 %v3225, %v3224
        %v3240 = vpack.c.b16 %v3227, %v3226
        %v3241 = vpack.c.b16 %v3229, %v3228
        %v3242 = vpack.c.b16 %v3231, %v3230
        %v3243 = vpack.c.b16 %v3233, %v3232
        %v3244 = vpack.c.b16 %v3235, %v3234
        %v3245 = vpack.c.b16 %v3237, %v3236
        %3254 = vmatprep.subr.bf16.mxu0 0
        %3255 = vmatpush1.bf16.msra.mxu0 %v3245
        %3256 = vmatprep.subr.bf16.mxu0 0
        %3257 = vmatpush1.bf16.msra.mxu0 %v3244
        %3258 = vmatprep.subr.bf16.mxu0 0
        %3259 = vmatpush1.bf16.msra.mxu0 %v3243
        %3260 = vmatprep.subr.bf16.mxu0 0
        %3261 = vmatpush1.bf16.msra.mxu0 %v3242
        %3262 = vmatprep.subr.bf16.mxu0 0
        %3263 = vmatpush1.bf16.msra.mxu0 %v3241
        %3264 = vmatprep.subr.bf16.mxu0 0
        %3265 = vmatpush1.bf16.msra.mxu0 %v3240
        %3266 = vmatprep.subr.bf16.mxu0 0
        %3267 = vmatpush1.bf16.msra.mxu0 %v3239
        %3268 = vmatprep.subr.bf16.mxu0 0
        %3269 = vmatpush1.bf16.msra.mxu0 %v3238
        %3270 = vmatprep.subr.bf16.mxu0 0
        %3271 = vmatpush2.bf16.msra.mxu0 0
        %3272 = vmatprep.subr.bf16.mxu0 0
        %3273 = vmatpush2.bf16.msra.mxu0 0
        %3274 = vmatprep.subr.bf16.mxu0 0
        %3275 = vmatpush2.bf16.msra.mxu0 0
        %3276 = vmatprep.subr.bf16.mxu0 0
        %3277 = vmatpush2.bf16.msra.mxu0 0
        %3278 = vmatprep.subr.bf16.mxu0 0
        %3279 = vmatpush2.bf16.msra.mxu0 0
        %3280 = vmatprep.subr.bf16.mxu0 0
        %3281 = vmatpush2.bf16.msra.mxu0 0
        %3282 = vmatprep.subr.bf16.mxu0 0
        %3283 = vmatpush2.bf16.msra.mxu0 0
        %3284 = vmatprep.subr.bf16.mxu0 0
        %3285 = vmatpush2.bf16.msra.mxu0 0
        %3286 = vmatprep.mubr.bf16.mxu0 0
        %3287 = vmatmul.mubr.bf16.gmra.mxu0 %v3186
        %v3288 = vpop.f32.mrf.mxu0
        %v3289 = vadd.f32 0.0, %v3288
        %v3290 = vpop.f32.mrf.mxu0
        %v3291 = vpop.f32.mrf.mxu0
        %v3292 = vadd.f32 0.0, %v3291
        %v3293 = vpop.f32.mrf.mxu0
        %3294 = vmatprep.mubr.bf16.mxu0 0
        %3295 = vmatmul.mubr.bf16.gmra.mxu0 %v3187
        %v3296 = vpop.f32.mrf.mxu0
        %v3297 = vadd.f32 0.0, %v3296
        %v3298 = vpop.f32.mrf.mxu0
        %v3299 = vpop.f32.mrf.mxu0
        %v3300 = vadd.f32 0.0, %v3299
        %v3301 = vpop.f32.mrf.mxu0
        %3302 = vmatprep.mubr.bf16.mxu0 0
        %3303 = vmatmul.mubr.bf16.gmra.mxu0 %v3188
        %v3304 = vpop.f32.mrf.mxu0
        %v3305 = vadd.f32 0.0, %v3304
        %v3306 = vpop.f32.mrf.mxu0
        %v3307 = vpop.f32.mrf.mxu0
        %v3308 = vpop.f32.mrf.mxu0
        %3309 = vdwg.mxu0
        %v3310 = vadd.f32 %v3176, %v3289
        %v3311 = vadd.f32 %v3177, %v3292
        %v3312 = vadd.f32 %v3178, %v3297
        %v3313 = vadd.f32 %v3179, %v3300
        %v3314 = vadd.f32 %v3180, %v3305
        %v3315 = vld [vmem:[#allocation3 + $0x8] sm:$0xff]
        %v3316 = vld [vmem:[#allocation3 + $0x10] sm:$0xff]
        %v3317 = vld [vmem:[#allocation3 + $0x18] sm:$0xff]
        %v3318 = vld [vmem:[#allocation3 + $0x20] sm:$0xff]
        %v3319 = vld [vmem:[#allocation3 + $0x28] sm:$0x1]
        %v3320 = vpack.c.bf16 %v3316, %v3315
        %v3321 = vpack.c.bf16 %v3318, %v3317
        %v3322 = vpack.c.bf16 %v3319, %v3319
        %s3323 = scalar_lea.vmem [#allocation11], 832
        %v3324 = vld [vmem:[%s3323] sm:$0xf]
        %v3325 = vld [vmem:[%s3323 + $0x4] sm:$0xf]
        %v3326 = vld [vmem:[%s3323 + $0x8] sm:$0xf]
        %v3327 = vld [vmem:[%s3323 + $0xc] sm:$0xf]
        %v3328 = vld [vmem:[%s3323 + $0x10] sm:$0xf]
        %v3329 = vld [vmem:[%s3323 + $0x14] sm:$0xf]
        %v3330 = vld [vmem:[%s3323 + $0x18] sm:$0xf]
        %v3331 = vld [vmem:[%s3323 + $0x1c] sm:$0xf]
        %v3332 = vld [vmem:[%s3323 + $0x20] sm:$0xf]
        %v3333 = vld [vmem:[%s3323 + $0x24] sm:$0xf]
        %v3334 = vld [vmem:[%s3323 + $0x28] sm:$0xf]
        %v3335 = vld [vmem:[%s3323 + $0x2c] sm:$0xf]
        %v3336 = vld [vmem:[%s3323 + $0x30] sm:$0xf]
        %v3337 = vld [vmem:[%s3323 + $0x34] sm:$0xf]
        %v3338 = vld [vmem:[%s3323 + $0x38] sm:$0xf]
        %v3339 = vld [vmem:[%s3323 + $0x3c] sm:$0xf]
        %v3356 = vunpack.c.l.b16 %v3324
        %v3357 = vunpack.c.l.b16 %v3325
        %v3358 = vunpack.c.l.b16 %v3326
        %v3359 = vunpack.c.l.b16 %v3327
        %v3360 = vunpack.c.l.b16 %v3328
        %v3361 = vunpack.c.l.b16 %v3329
        %v3362 = vunpack.c.l.b16 %v3330
        %v3363 = vunpack.c.l.b16 %v3331
        %v3364 = vunpack.c.l.b16 %v3332
        %v3365 = vunpack.c.l.b16 %v3333
        %v3366 = vunpack.c.l.b16 %v3334
        %v3367 = vunpack.c.l.b16 %v3335
        %v3368 = vunpack.c.l.b16 %v3336
        %v3369 = vunpack.c.l.b16 %v3337
        %v3370 = vunpack.c.l.b16 %v3338
        %v3371 = vunpack.c.l.b16 %v3339
        %v3372 = vpack.c.b16 %v3357, %v3356
        %v3373 = vpack.c.b16 %v3359, %v3358
        %v3374 = vpack.c.b16 %v3361, %v3360
        %v3375 = vpack.c.b16 %v3363, %v3362
        %v3376 = vpack.c.b16 %v3365, %v3364
        %v3377 = vpack.c.b16 %v3367, %v3366
        %v3378 = vpack.c.b16 %v3369, %v3368
        %v3379 = vpack.c.b16 %v3371, %v3370
        %3388 = vmatprep.subr.bf16.mxu0 0
        %3389 = vmatpush1.bf16.msra.mxu0 %v3379
        %3390 = vmatprep.subr.bf16.mxu0 0
        %3391 = vmatpush1.bf16.msra.mxu0 %v3378
        %3392 = vmatprep.subr.bf16.mxu0 0
        %3393 = vmatpush1.bf16.msra.mxu0 %v3377
        %3394 = vmatprep.subr.bf16.mxu0 0
        %3395 = vmatpush1.bf16.msra.mxu0 %v3376
        %3396 = vmatprep.subr.bf16.mxu0 0
        %3397 = vmatpush1.bf16.msra.mxu0 %v3375
        %3398 = vmatprep.subr.bf16.mxu0 0
        %3399 = vmatpush1.bf16.msra.mxu0 %v3374
        %3400 = vmatprep.subr.bf16.mxu0 0
        %3401 = vmatpush1.bf16.msra.mxu0 %v3373
        %3402 = vmatprep.subr.bf16.mxu0 0
        %3403 = vmatpush1.bf16.msra.mxu0 %v3372
        %3404 = vmatprep.subr.bf16.mxu0 0
        %3405 = vmatpush2.bf16.msra.mxu0 0
        %3406 = vmatprep.subr.bf16.mxu0 0
        %3407 = vmatpush2.bf16.msra.mxu0 0
        %3408 = vmatprep.subr.bf16.mxu0 0
        %3409 = vmatpush2.bf16.msra.mxu0 0
        %3410 = vmatprep.subr.bf16.mxu0 0
        %3411 = vmatpush2.bf16.msra.mxu0 0
        %3412 = vmatprep.subr.bf16.mxu0 0
        %3413 = vmatpush2.bf16.msra.mxu0 0
        %3414 = vmatprep.subr.bf16.mxu0 0
        %3415 = vmatpush2.bf16.msra.mxu0 0
        %3416 = vmatprep.subr.bf16.mxu0 0
        %3417 = vmatpush2.bf16.msra.mxu0 0
        %3418 = vmatprep.subr.bf16.mxu0 0
        %3419 = vmatpush2.bf16.msra.mxu0 0
        %3420 = vmatprep.mubr.bf16.mxu0 0
        %3421 = vmatmul.mubr.bf16.gmra.mxu0 %v3320
        %v3422 = vpop.f32.mrf.mxu0
        %v3423 = vadd.f32 0.0, %v3422
        %v3424 = vpop.f32.mrf.mxu0
        %v3425 = vpop.f32.mrf.mxu0
        %v3426 = vadd.f32 0.0, %v3425
        %v3427 = vpop.f32.mrf.mxu0
        %3428 = vmatprep.mubr.bf16.mxu0 0
        %3429 = vmatmul.mubr.bf16.gmra.mxu0 %v3321
        %v3430 = vpop.f32.mrf.mxu0
        %v3431 = vadd.f32 0.0, %v3430
        %v3432 = vpop.f32.mrf.mxu0
        %v3433 = vpop.f32.mrf.mxu0
        %v3434 = vadd.f32 0.0, %v3433
        %v3435 = vpop.f32.mrf.mxu0
        %3436 = vmatprep.mubr.bf16.mxu0 0
        %3437 = vmatmul.mubr.bf16.gmra.mxu0 %v3322
        %v3438 = vpop.f32.mrf.mxu0
        %v3439 = vadd.f32 0.0, %v3438
        %v3440 = vpop.f32.mrf.mxu0
        %v3441 = vpop.f32.mrf.mxu0
        %v3442 = vpop.f32.mrf.mxu0
        %3443 = vdwg.mxu0
        %v3444 = vadd.f32 %v3310, %v3423
        %v3445 = vadd.f32 %v3311, %v3426
        %v3446 = vadd.f32 %v3312, %v3431
        %v3447 = vadd.f32 %v3313, %v3434
        %v3448 = vadd.f32 %v3314, %v3439
        %v3449 = vld [vmem:[#allocation3 + $0x9] sm:$0xff]
        %v3450 = vld [vmem:[#allocation3 + $0x11] sm:$0xff]
        %v3451 = vld [vmem:[#allocation3 + $0x19] sm:$0xff]
        %v3452 = vld [vmem:[#allocation3 + $0x21] sm:$0xff]
        %v3453 = vld [vmem:[#allocation3 + $0x29] sm:$0x1]
        %v3454 = vpack.c.bf16 %v3450, %v3449
        %v3455 = vpack.c.bf16 %v3452, %v3451
        %v3456 = vpack.c.bf16 %v3453, %v3453
        %s3457 = scalar_lea.vmem [#allocation11], 896
        %v3458 = vld [vmem:[%s3457] sm:$0xf]
        %v3459 = vld [vmem:[%s3457 + $0x4] sm:$0xf]
        %v3460 = vld [vmem:[%s3457 + $0x8] sm:$0xf]
        %v3461 = vld [vmem:[%s3457 + $0xc] sm:$0xf]
        %v3462 = vld [vmem:[%s3457 + $0x10] sm:$0xf]
        %v3463 = vld [vmem:[%s3457 + $0x14] sm:$0xf]
        %v3464 = vld [vmem:[%s3457 + $0x18] sm:$0xf]
        %v3465 = vld [vmem:[%s3457 + $0x1c] sm:$0xf]
        %v3466 = vld [vmem:[%s3457 + $0x20] sm:$0xf]
        %v3467 = vld [vmem:[%s3457 + $0x24] sm:$0xf]
        %v3468 = vld [vmem:[%s3457 + $0x28] sm:$0xf]
        %v3469 = vld [vmem:[%s3457 + $0x2c] sm:$0xf]
        %v3470 = vld [vmem:[%s3457 + $0x30] sm:$0xf]
        %v3471 = vld [vmem:[%s3457 + $0x34] sm:$0xf]
        %v3472 = vld [vmem:[%s3457 + $0x38] sm:$0xf]
        %v3473 = vld [vmem:[%s3457 + $0x3c] sm:$0xf]
        %v3490 = vunpack.c.l.b16 %v3458
        %v3491 = vunpack.c.l.b16 %v3459
        %v3492 = vunpack.c.l.b16 %v3460
        %v3493 = vunpack.c.l.b16 %v3461
        %v3494 = vunpack.c.l.b16 %v3462
        %v3495 = vunpack.c.l.b16 %v3463
        %v3496 = vunpack.c.l.b16 %v3464
        %v3497 = vunpack.c.l.b16 %v3465
        %v3498 = vunpack.c.l.b16 %v3466
        %v3499 = vunpack.c.l.b16 %v3467
        %v3500 = vunpack.c.l.b16 %v3468
        %v3501 = vunpack.c.l.b16 %v3469
        %v3502 = vunpack.c.l.b16 %v3470
        %v3503 = vunpack.c.l.b16 %v3471
        %v3504 = vunpack.c.l.b16 %v3472
        %v3505 = vunpack.c.l.b16 %v3473
        %v3506 = vpack.c.b16 %v3491, %v3490
        %v3507 = vpack.c.b16 %v3493, %v3492
        %v3508 = vpack.c.b16 %v3495, %v3494
        %v3509 = vpack.c.b16 %v3497, %v3496
        %v3510 = vpack.c.b16 %v3499, %v3498
        %v3511 = vpack.c.b16 %v3501, %v3500
        %v3512 = vpack.c.b16 %v3503, %v3502
        %v3513 = vpack.c.b16 %v3505, %v3504
        %3522 = vmatprep.subr.bf16.mxu0 0
        %3523 = vmatpush1.bf16.msra.mxu0 %v3513
        %3524 = vmatprep.subr.bf16.mxu0 0
        %3525 = vmatpush1.bf16.msra.mxu0 %v3512
        %3526 = vmatprep.subr.bf16.mxu0 0
        %3527 = vmatpush1.bf16.msra.mxu0 %v3511
        %3528 = vmatprep.subr.bf16.mxu0 0
        %3529 = vmatpush1.bf16.msra.mxu0 %v3510
        %3530 = vmatprep.subr.bf16.mxu0 0
        %3531 = vmatpush1.bf16.msra.mxu0 %v3509
        %3532 = vmatprep.subr.bf16.mxu0 0
        %3533 = vmatpush1.bf16.msra.mxu0 %v3508
        %3534 = vmatprep.subr.bf16.mxu0 0
        %3535 = vmatpush1.bf16.msra.mxu0 %v3507
        %3536 = vmatprep.subr.bf16.mxu0 0
        %3537 = vmatpush1.bf16.msra.mxu0 %v3506
        %3538 = vmatprep.subr.bf16.mxu0 0
        %3539 = vmatpush2.bf16.msra.mxu0 0
        %3540 = vmatprep.subr.bf16.mxu0 0
        %3541 = vmatpush2.bf16.msra.mxu0 0
        %3542 = vmatprep.subr.bf16.mxu0 0
        %3543 = vmatpush2.bf16.msra.mxu0 0
        %3544 = vmatprep.subr.bf16.mxu0 0
        %3545 = vmatpush2.bf16.msra.mxu0 0
        %3546 = vmatprep.subr.bf16.mxu0 0
        %3547 = vmatpush2.bf16.msra.mxu0 0
        %3548 = vmatprep.subr.bf16.mxu0 0
        %3549 = vmatpush2.bf16.msra.mxu0 0
        %3550 = vmatprep.subr.bf16.mxu0 0
        %3551 = vmatpush2.bf16.msra.mxu0 0
        %3552 = vmatprep.subr.bf16.mxu0 0
        %3553 = vmatpush2.bf16.msra.mxu0 0
        %3554 = vmatprep.mubr.bf16.mxu0 0
        %3555 = vmatmul.mubr.bf16.gmra.mxu0 %v3454
        %v3556 = vpop.f32.mrf.mxu0
        %v3557 = vadd.f32 0.0, %v3556
        %v3558 = vpop.f32.mrf.mxu0
        %v3559 = vpop.f32.mrf.mxu0
        %v3560 = vadd.f32 0.0, %v3559
        %v3561 = vpop.f32.mrf.mxu0
        %3562 = vmatprep.mubr.bf16.mxu0 0
        %3563 = vmatmul.mubr.bf16.gmra.mxu0 %v3455
        %v3564 = vpop.f32.mrf.mxu0
        %v3565 = vadd.f32 0.0, %v3564
        %v3566 = vpop.f32.mrf.mxu0
        %v3567 = vpop.f32.mrf.mxu0
        %v3568 = vadd.f32 0.0, %v3567
        %v3569 = vpop.f32.mrf.mxu0
        %3570 = vmatprep.mubr.bf16.mxu0 0
        %3571 = vmatmul.mubr.bf16.gmra.mxu0 %v3456
        %v3572 = vpop.f32.mrf.mxu0
        %v3573 = vadd.f32 0.0, %v3572
        %v3574 = vpop.f32.mrf.mxu0
        %v3575 = vpop.f32.mrf.mxu0
        %v3576 = vpop.f32.mrf.mxu0
        %3577 = vdwg.mxu0
        %v3578 = vadd.f32 %v3444, %v3557
        %v3579 = vadd.f32 %v3445, %v3560
        %v3580 = vadd.f32 %v3446, %v3565
        %v3581 = vadd.f32 %v3447, %v3568
        %v3582 = vadd.f32 %v3448, %v3573
        %v3583 = vld [vmem:[#allocation3 + $0xe] sm:$0xff]
        %v3584 = vld [vmem:[#allocation3 + $0x16] sm:$0xff]
        %v3585 = vld [vmem:[#allocation3 + $0x1e] sm:$0xff]
        %v3586 = vld [vmem:[#allocation3 + $0x26] sm:$0xff]
        %v3587 = vld [vmem:[#allocation3 + $0x2e] sm:$0x1]
        %v3588 = vpack.c.bf16 %v3584, %v3583
        %v3589 = vpack.c.bf16 %v3586, %v3585
        %v3590 = vpack.c.bf16 %v3587, %v3587
        %s3591 = scalar_lea.vmem [#allocation11], 960
        %v3592 = vld [vmem:[%s3591] sm:$0xf]
        %v3593 = vld [vmem:[%s3591 + $0x4] sm:$0xf]
        %v3594 = vld [vmem:[%s3591 + $0x8] sm:$0xf]
        %v3595 = vld [vmem:[%s3591 + $0xc] sm:$0xf]
        %v3596 = vld [vmem:[%s3591 + $0x10] sm:$0xf]
        %v3597 = vld [vmem:[%s3591 + $0x14] sm:$0xf]
        %v3598 = vld [vmem:[%s3591 + $0x18] sm:$0xf]
        %v3599 = vld [vmem:[%s3591 + $0x1c] sm:$0xf]
        %v3600 = vld [vmem:[%s3591 + $0x20] sm:$0xf]
        %v3601 = vld [vmem:[%s3591 + $0x24] sm:$0xf]
        %v3602 = vld [vmem:[%s3591 + $0x28] sm:$0xf]
        %v3603 = vld [vmem:[%s3591 + $0x2c] sm:$0xf]
        %v3604 = vld [vmem:[%s3591 + $0x30] sm:$0xf]
        %v3605 = vld [vmem:[%s3591 + $0x34] sm:$0xf]
        %v3606 = vld [vmem:[%s3591 + $0x38] sm:$0xf]
        %v3607 = vld [vmem:[%s3591 + $0x3c] sm:$0xf]
        %v3624 = vunpack.c.l.b16 %v3592
        %v3625 = vunpack.c.l.b16 %v3593
        %v3626 = vunpack.c.l.b16 %v3594
        %v3627 = vunpack.c.l.b16 %v3595
        %v3628 = vunpack.c.l.b16 %v3596
        %v3629 = vunpack.c.l.b16 %v3597
        %v3630 = vunpack.c.l.b16 %v3598
        %v3631 = vunpack.c.l.b16 %v3599
        %v3632 = vunpack.c.l.b16 %v3600
        %v3633 = vunpack.c.l.b16 %v3601
        %v3634 = vunpack.c.l.b16 %v3602
        %v3635 = vunpack.c.l.b16 %v3603
        %v3636 = vunpack.c.l.b16 %v3604
        %v3637 = vunpack.c.l.b16 %v3605
        %v3638 = vunpack.c.l.b16 %v3606
        %v3639 = vunpack.c.l.b16 %v3607
        %v3640 = vpack.c.b16 %v3625, %v3624
        %v3641 = vpack.c.b16 %v3627, %v3626
        %v3642 = vpack.c.b16 %v3629, %v3628
        %v3643 = vpack.c.b16 %v3631, %v3630
        %v3644 = vpack.c.b16 %v3633, %v3632
        %v3645 = vpack.c.b16 %v3635, %v3634
        %v3646 = vpack.c.b16 %v3637, %v3636
        %v3647 = vpack.c.b16 %v3639, %v3638
        %3656 = vmatprep.subr.bf16.mxu0 0
        %3657 = vmatpush1.bf16.msra.mxu0 %v3647
        %3658 = vmatprep.subr.bf16.mxu0 0
        %3659 = vmatpush1.bf16.msra.mxu0 %v3646
        %3660 = vmatprep.subr.bf16.mxu0 0
        %3661 = vmatpush1.bf16.msra.mxu0 %v3645
        %3662 = vmatprep.subr.bf16.mxu0 0
        %3663 = vmatpush1.bf16.msra.mxu0 %v3644
        %3664 = vmatprep.subr.bf16.mxu0 0
        %3665 = vmatpush1.bf16.msra.mxu0 %v3643
        %3666 = vmatprep.subr.bf16.mxu0 0
        %3667 = vmatpush1.bf16.msra.mxu0 %v3642
        %3668 = vmatprep.subr.bf16.mxu0 0
        %3669 = vmatpush1.bf16.msra.mxu0 %v3641
        %3670 = vmatprep.subr.bf16.mxu0 0
        %3671 = vmatpush1.bf16.msra.mxu0 %v3640
        %3672 = vmatprep.subr.bf16.mxu0 0
        %3673 = vmatpush2.bf16.msra.mxu0 0
        %3674 = vmatprep.subr.bf16.mxu0 0
        %3675 = vmatpush2.bf16.msra.mxu0 0
        %3676 = vmatprep.subr.bf16.mxu0 0
        %3677 = vmatpush2.bf16.msra.mxu0 0
        %3678 = vmatprep.subr.bf16.mxu0 0
        %3679 = vmatpush2.bf16.msra.mxu0 0
        %3680 = vmatprep.subr.bf16.mxu0 0
        %3681 = vmatpush2.bf16.msra.mxu0 0
        %3682 = vmatprep.subr.bf16.mxu0 0
        %3683 = vmatpush2.bf16.msra.mxu0 0
        %3684 = vmatprep.subr.bf16.mxu0 0
        %3685 = vmatpush2.bf16.msra.mxu0 0
        %3686 = vmatprep.subr.bf16.mxu0 0
        %3687 = vmatpush2.bf16.msra.mxu0 0
        %3688 = vmatprep.mubr.bf16.mxu0 0
        %3689 = vmatmul.mubr.bf16.gmra.mxu0 %v3588
        %v3690 = vpop.f32.mrf.mxu0
        %v3691 = vadd.f32 0.0, %v3690
        %v3692 = vpop.f32.mrf.mxu0
        %v3693 = vpop.f32.mrf.mxu0
        %v3694 = vadd.f32 0.0, %v3693
        %v3695 = vpop.f32.mrf.mxu0
        %3696 = vmatprep.mubr.bf16.mxu0 0
        %3697 = vmatmul.mubr.bf16.gmra.mxu0 %v3589
        %v3698 = vpop.f32.mrf.mxu0
        %v3699 = vadd.f32 0.0, %v3698
        %v3700 = vpop.f32.mrf.mxu0
        %v3701 = vpop.f32.mrf.mxu0
        %v3702 = vadd.f32 0.0, %v3701
        %v3703 = vpop.f32.mrf.mxu0
        %3704 = vmatprep.mubr.bf16.mxu0 0
        %3705 = vmatmul.mubr.bf16.gmra.mxu0 %v3590
        %v3706 = vpop.f32.mrf.mxu0
        %v3707 = vadd.f32 0.0, %v3706
        %v3708 = vpop.f32.mrf.mxu0
        %v3709 = vpop.f32.mrf.mxu0
        %v3710 = vpop.f32.mrf.mxu0
        %3711 = vdwg.mxu0
        %v3712 = vadd.f32 %v3578, %v3691
        %v3713 = vadd.f32 %v3579, %v3694
        %v3714 = vadd.f32 %v3580, %v3699
        %v3715 = vadd.f32 %v3581, %v3702
        %v3716 = vadd.f32 %v3582, %v3707
        %v3717 = vld [vmem:[#allocation3 + $0xf] sm:$0xff]
        %v3718 = vld [vmem:[#allocation3 + $0x17] sm:$0xff]
        %v3719 = vld [vmem:[#allocation3 + $0x1f] sm:$0xff]
        %v3720 = vld [vmem:[#allocation3 + $0x27] sm:$0xff]
        %v3721 = vld [vmem:[#allocation3 + $0x2f] sm:$0x1]
        %v3722 = vpack.c.bf16 %v3718, %v3717
        %v3723 = vpack.c.bf16 %v3720, %v3719
        %v3724 = vpack.c.bf16 %v3721, %v3721
        %s3725 = scalar_lea.vmem [#allocation11], 1024
        %v3726 = vld [vmem:[%s3725] sm:$0xf]
        %v3727 = vld [vmem:[%s3725 + $0x4] sm:$0xf]
        %v3728 = vld [vmem:[%s3725 + $0x8] sm:$0xf]
        %v3729 = vld [vmem:[%s3725 + $0xc] sm:$0xf]
        %v3730 = vld [vmem:[%s3725 + $0x10] sm:$0xf]
        %v3731 = vld [vmem:[%s3725 + $0x14] sm:$0xf]
        %v3732 = vld [vmem:[%s3725 + $0x18] sm:$0xf]
        %v3733 = vld [vmem:[%s3725 + $0x1c] sm:$0xf]
        %v3734 = vld [vmem:[%s3725 + $0x20] sm:$0xf]
        %v3735 = vld [vmem:[%s3725 + $0x24] sm:$0xf]
        %v3736 = vld [vmem:[%s3725 + $0x28] sm:$0xf]
        %v3737 = vld [vmem:[%s3725 + $0x2c] sm:$0xf]
        %v3738 = vld [vmem:[%s3725 + $0x30] sm:$0xf]
        %v3739 = vld [vmem:[%s3725 + $0x34] sm:$0xf]
        %v3740 = vld [vmem:[%s3725 + $0x38] sm:$0xf]
        %v3741 = vld [vmem:[%s3725 + $0x3c] sm:$0xf]
        %v3758 = vunpack.c.l.b16 %v3726
        %v3759 = vunpack.c.l.b16 %v3727
        %v3760 = vunpack.c.l.b16 %v3728
        %v3761 = vunpack.c.l.b16 %v3729
        %v3762 = vunpack.c.l.b16 %v3730
        %v3763 = vunpack.c.l.b16 %v3731
        %v3764 = vunpack.c.l.b16 %v3732
        %v3765 = vunpack.c.l.b16 %v3733
        %v3766 = vunpack.c.l.b16 %v3734
        %v3767 = vunpack.c.l.b16 %v3735
        %v3768 = vunpack.c.l.b16 %v3736
        %v3769 = vunpack.c.l.b16 %v3737
        %v3770 = vunpack.c.l.b16 %v3738
        %v3771 = vunpack.c.l.b16 %v3739
        %v3772 = vunpack.c.l.b16 %v3740
        %v3773 = vunpack.c.l.b16 %v3741
        %v3774 = vpack.c.b16 %v3759, %v3758
        %v3775 = vpack.c.b16 %v3761, %v3760
        %v3776 = vpack.c.b16 %v3763, %v3762
        %v3777 = vpack.c.b16 %v3765, %v3764
        %v3778 = vpack.c.b16 %v3767, %v3766
        %v3779 = vpack.c.b16 %v3769, %v3768
        %v3780 = vpack.c.b16 %v3771, %v3770
        %v3781 = vpack.c.b16 %v3773, %v3772
        %3790 = vmatprep.subr.bf16.mxu0 0
        %3791 = vmatpush1.bf16.msra.mxu0 %v3781
        %3792 = vmatprep.subr.bf16.mxu0 0
        %3793 = vmatpush1.bf16.msra.mxu0 %v3780
        %3794 = vmatprep.subr.bf16.mxu0 0
        %3795 = vmatpush1.bf16.msra.mxu0 %v3779
        %3796 = vmatprep.subr.bf16.mxu0 0
        %3797 = vmatpush1.bf16.msra.mxu0 %v3778
        %3798 = vmatprep.subr.bf16.mxu0 0
        %3799 = vmatpush1.bf16.msra.mxu0 %v3777
        %3800 = vmatprep.subr.bf16.mxu0 0
        %3801 = vmatpush1.bf16.msra.mxu0 %v3776
        %3802 = vmatprep.subr.bf16.mxu0 0
        %3803 = vmatpush1.bf16.msra.mxu0 %v3775
        %3804 = vmatprep.subr.bf16.mxu0 0
        %3805 = vmatpush1.bf16.msra.mxu0 %v3774
        %3806 = vmatprep.subr.bf16.mxu0 0
        %3807 = vmatpush2.bf16.msra.mxu0 0
        %3808 = vmatprep.subr.bf16.mxu0 0
        %3809 = vmatpush2.bf16.msra.mxu0 0
        %3810 = vmatprep.subr.bf16.mxu0 0
        %3811 = vmatpush2.bf16.msra.mxu0 0
        %3812 = vmatprep.subr.bf16.mxu0 0
        %3813 = vmatpush2.bf16.msra.mxu0 0
        %3814 = vmatprep.subr.bf16.mxu0 0
        %3815 = vmatpush2.bf16.msra.mxu0 0
        %3816 = vmatprep.subr.bf16.mxu0 0
        %3817 = vmatpush2.bf16.msra.mxu0 0
        %3818 = vmatprep.subr.bf16.mxu0 0
        %3819 = vmatpush2.bf16.msra.mxu0 0
        %3820 = vmatprep.subr.bf16.mxu0 0
        %3821 = vmatpush2.bf16.msra.mxu0 0
        %3822 = vmatprep.mubr.bf16.mxu0 0
        %3823 = vmatmul.mubr.bf16.gmra.mxu0 %v3722
        %v3824 = vpop.f32.mrf.mxu0
        %v3825 = vadd.f32 0.0, %v3824
        %v3826 = vpop.f32.mrf.mxu0
        %v3827 = vpop.f32.mrf.mxu0
        %v3828 = vadd.f32 0.0, %v3827
        %v3829 = vpop.f32.mrf.mxu0
        %3830 = vmatprep.mubr.bf16.mxu0 0
        %3831 = vmatmul.mubr.bf16.gmra.mxu0 %v3723
        %v3832 = vpop.f32.mrf.mxu0
        %v3833 = vadd.f32 0.0, %v3832
        %v3834 = vpop.f32.mrf.mxu0
        %v3835 = vpop.f32.mrf.mxu0
        %v3836 = vadd.f32 0.0, %v3835
        %v3837 = vpop.f32.mrf.mxu0
        %3838 = vmatprep.mubr.bf16.mxu0 0
        %3839 = vmatmul.mubr.bf16.gmra.mxu0 %v3724
        %v3840 = vpop.f32.mrf.mxu0
        %v3841 = vadd.f32 0.0, %v3840
        %v3842 = vpop.f32.mrf.mxu0
        %v3843 = vpop.f32.mrf.mxu0
        %v3844 = vpop.f32.mrf.mxu0
        %3845 = vdwg.mxu0
        %v3846 = vadd.f32 %v3712, %v3825
        %v3847 = vadd.f32 %v3713, %v3828
        %v3848 = vadd.f32 %v3714, %v3833
        %v3849 = vadd.f32 %v3715, %v3836
        %v3850 = vadd.f32 %v3716, %v3841
        %v3851 = vld [vmem:[#allocation3 + $0x10] sm:$0xff]
        %v3852 = vld [vmem:[#allocation3 + $0x18] sm:$0xff]
        %v3853 = vld [vmem:[#allocation3 + $0x20] sm:$0xff]
        %v3854 = vld [vmem:[#allocation3 + $0x28] sm:$0xff]
        %v3855 = vld [vmem:[#allocation3 + $0x30] sm:$0x1]
        %v3856 = vpack.c.bf16 %v3852, %v3851
        %v3857 = vpack.c.bf16 %v3854, %v3853
        %v3858 = vpack.c.bf16 %v3855, %v3855
        %s3859 = scalar_lea.vmem [#allocation11], 1088
        %v3860 = vld [vmem:[%s3859] sm:$0xf]
        %v3861 = vld [vmem:[%s3859 + $0x4] sm:$0xf]
        %v3862 = vld [vmem:[%s3859 + $0x8] sm:$0xf]
        %v3863 = vld [vmem:[%s3859 + $0xc] sm:$0xf]
        %v3864 = vld [vmem:[%s3859 + $0x10] sm:$0xf]
        %v3865 = vld [vmem:[%s3859 + $0x14] sm:$0xf]
        %v3866 = vld [vmem:[%s3859 + $0x18] sm:$0xf]
        %v3867 = vld [vmem:[%s3859 + $0x1c] sm:$0xf]
        %v3868 = vld [vmem:[%s3859 + $0x20] sm:$0xf]
        %v3869 = vld [vmem:[%s3859 + $0x24] sm:$0xf]
        %v3870 = vld [vmem:[%s3859 + $0x28] sm:$0xf]
        %v3871 = vld [vmem:[%s3859 + $0x2c] sm:$0xf]
        %v3872 = vld [vmem:[%s3859 + $0x30] sm:$0xf]
        %v3873 = vld [vmem:[%s3859 + $0x34] sm:$0xf]
        %v3874 = vld [vmem:[%s3859 + $0x38] sm:$0xf]
        %v3875 = vld [vmem:[%s3859 + $0x3c] sm:$0xf]
        %v3892 = vunpack.c.l.b16 %v3860
        %v3893 = vunpack.c.l.b16 %v3861
        %v3894 = vunpack.c.l.b16 %v3862
        %v3895 = vunpack.c.l.b16 %v3863
        %v3896 = vunpack.c.l.b16 %v3864
        %v3897 = vunpack.c.l.b16 %v3865
        %v3898 = vunpack.c.l.b16 %v3866
        %v3899 = vunpack.c.l.b16 %v3867
        %v3900 = vunpack.c.l.b16 %v3868
        %v3901 = vunpack.c.l.b16 %v3869
        %v3902 = vunpack.c.l.b16 %v3870
        %v3903 = vunpack.c.l.b16 %v3871
        %v3904 = vunpack.c.l.b16 %v3872
        %v3905 = vunpack.c.l.b16 %v3873
        %v3906 = vunpack.c.l.b16 %v3874
        %v3907 = vunpack.c.l.b16 %v3875
        %v3908 = vpack.c.b16 %v3893, %v3892
        %v3909 = vpack.c.b16 %v3895, %v3894
        %v3910 = vpack.c.b16 %v3897, %v3896
        %v3911 = vpack.c.b16 %v3899, %v3898
        %v3912 = vpack.c.b16 %v3901, %v3900
        %v3913 = vpack.c.b16 %v3903, %v3902
        %v3914 = vpack.c.b16 %v3905, %v3904
        %v3915 = vpack.c.b16 %v3907, %v3906
        %3924 = vmatprep.subr.bf16.mxu0 0
        %3925 = vmatpush1.bf16.msra.mxu0 %v3915
        %3926 = vmatprep.subr.bf16.mxu0 0
        %3927 = vmatpush1.bf16.msra.mxu0 %v3914
        %3928 = vmatprep.subr.bf16.mxu0 0
        %3929 = vmatpush1.bf16.msra.mxu0 %v3913
        %3930 = vmatprep.subr.bf16.mxu0 0
        %3931 = vmatpush1.bf16.msra.mxu0 %v3912
        %3932 = vmatprep.subr.bf16.mxu0 0
        %3933 = vmatpush1.bf16.msra.mxu0 %v3911
        %3934 = vmatprep.subr.bf16.mxu0 0
        %3935 = vmatpush1.bf16.msra.mxu0 %v3910
        %3936 = vmatprep.subr.bf16.mxu0 0
        %3937 = vmatpush1.bf16.msra.mxu0 %v3909
        %3938 = vmatprep.subr.bf16.mxu0 0
        %3939 = vmatpush1.bf16.msra.mxu0 %v3908
        %3940 = vmatprep.subr.bf16.mxu0 0
        %3941 = vmatpush2.bf16.msra.mxu0 0
        %3942 = vmatprep.subr.bf16.mxu0 0
        %3943 = vmatpush2.bf16.msra.mxu0 0
        %3944 = vmatprep.subr.bf16.mxu0 0
        %3945 = vmatpush2.bf16.msra.mxu0 0
        %3946 = vmatprep.subr.bf16.mxu0 0
        %3947 = vmatpush2.bf16.msra.mxu0 0
        %3948 = vmatprep.subr.bf16.mxu0 0
        %3949 = vmatpush2.bf16.msra.mxu0 0
        %3950 = vmatprep.subr.bf16.mxu0 0
        %3951 = vmatpush2.bf16.msra.mxu0 0
        %3952 = vmatprep.subr.bf16.mxu0 0
        %3953 = vmatpush2.bf16.msra.mxu0 0
        %3954 = vmatprep.subr.bf16.mxu0 0
        %3955 = vmatpush2.bf16.msra.mxu0 0
        %3956 = vmatprep.mubr.bf16.mxu0 0
        %3957 = vmatmul.mubr.bf16.gmra.mxu0 %v3856
        %v3958 = vpop.f32.mrf.mxu0
        %v3959 = vadd.f32 0.0, %v3958
        %v3960 = vpop.f32.mrf.mxu0
        %v3961 = vpop.f32.mrf.mxu0
        %v3962 = vadd.f32 0.0, %v3961
        %v3963 = vpop.f32.mrf.mxu0
        %3964 = vmatprep.mubr.bf16.mxu0 0
        %3965 = vmatmul.mubr.bf16.gmra.mxu0 %v3857
        %v3966 = vpop.f32.mrf.mxu0
        %v3967 = vadd.f32 0.0, %v3966
        %v3968 = vpop.f32.mrf.mxu0
        %v3969 = vpop.f32.mrf.mxu0
        %v3970 = vadd.f32 0.0, %v3969
        %v3971 = vpop.f32.mrf.mxu0
        %3972 = vmatprep.mubr.bf16.mxu0 0
        %3973 = vmatmul.mubr.bf16.gmra.mxu0 %v3858
        %v3974 = vpop.f32.mrf.mxu0
        %v3975 = vadd.f32 0.0, %v3974
        %v3976 = vpop.f32.mrf.mxu0
        %v3977 = vpop.f32.mrf.mxu0
        %v3978 = vpop.f32.mrf.mxu0
        %3979 = vdwg.mxu0
        %v3980 = vadd.f32 %v3846, %v3959
        %v3981 = vadd.f32 %v3847, %v3962
        %v3982 = vadd.f32 %v3848, %v3967
        %v3983 = vadd.f32 %v3849, %v3970
        %v3984 = vadd.f32 %v3850, %v3975
        %vm3985 = vcmp.ge.f32.partialorder %v3980, 0.0
        %vm3986 = vcmp.ge.f32.partialorder %v3981, 0.0
        %vm3987 = vcmp.ge.f32.partialorder %v3982, 0.0
        %vm3988 = vcmp.ge.f32.partialorder %v3983, 0.0
        %vm3989 = vcmp.ge.f32.partialorder %v3984, 0.0
        %v3990 = vmul.f32 %v3980, 0.01
        %v3991 = vmul.f32 %v3981, 0.01
        %v3992 = vmul.f32 %v3982, 0.01
        %v3993 = vmul.f32 %v3983, 0.01
        %v3994 = vmul.f32 %v3984, 0.01
        %v3995 = vsel %vm3985, %v3980, %v3990
        %v3996 = vsel %vm3986, %v3981, %v3991
        %v3997 = vsel %vm3987, %v3982, %v3992
        %v3998 = vsel %vm3988, %v3983, %v3993
        %v3999 = vsel %vm3989, %v3984, %v3994
        %4000 = vst [vmem:[#allocation4] sm:$0xff] %v3995
        %4001 = vst [vmem:[#allocation4 + $0x8] sm:$0xff] %v3996
        %4002 = vst [vmem:[#allocation4 + $0x10] sm:$0xff] %v3997
        %4003 = vst [vmem:[#allocation4 + $0x18] sm:$0xff] %v3998
        %4004 = vst [vmem:[#allocation4 + $0x20] sm:$0x1] %v3999
        %v4005 = vld [vmem:[#allocation13 + $0x2] sm:$0x1]
        %v4006 = vlaneseq
        %v4007 = vshrl.u32 %v4006, 7
        %v4008 = vsub.s32 0, %v4007
        %v4009 = vrot.slane %v4005, %v4008
        %v4010 = vld [vmem:[#allocation4] sm:$0xff]
        %v4011 = vld [vmem:[#allocation4 + $0x8] sm:$0xff]
        %v4012 = vld [vmem:[#allocation4 + $0x10] sm:$0xff]
        %v4013 = vpack.c.bf16 %v4011, %v4010
        %v4014 = vpack.c.bf16 %v4012, %v4012
        %s4015 = scalar_lea.vmem [#allocation11], 1152
        %v4016 = vld [vmem:[%s4015] sm:$0xf]
        %v4017 = vld [vmem:[%s4015 + $0x4] sm:$0xf]
        %v4018 = vld [vmem:[%s4015 + $0x8] sm:$0xf]
        %v4019 = vld [vmem:[%s4015 + $0xc] sm:$0xf]
        %v4020 = vld [vmem:[%s4015 + $0x10] sm:$0xf]
        %v4021 = vld [vmem:[%s4015 + $0x14] sm:$0xf]
        %v4022 = vld [vmem:[%s4015 + $0x18] sm:$0xf]
        %v4023 = vld [vmem:[%s4015 + $0x1c] sm:$0xf]
        %v4024 = vld [vmem:[%s4015 + $0x20] sm:$0xf]
        %v4025 = vld [vmem:[%s4015 + $0x24] sm:$0xf]
        %v4026 = vld [vmem:[%s4015 + $0x28] sm:$0xf]
        %v4027 = vld [vmem:[%s4015 + $0x2c] sm:$0xf]
        %v4028 = vld [vmem:[%s4015 + $0x30] sm:$0xf]
        %v4029 = vld [vmem:[%s4015 + $0x34] sm:$0xf]
        %v4030 = vld [vmem:[%s4015 + $0x38] sm:$0xf]
        %v4031 = vld [vmem:[%s4015 + $0x3c] sm:$0xf]
        %v4048 = vunpack.c.l.b16 %v4016
        %v4049 = vunpack.c.l.b16 %v4017
        %v4050 = vunpack.c.l.b16 %v4018
        %v4051 = vunpack.c.l.b16 %v4019
        %v4052 = vunpack.c.l.b16 %v4020
        %v4053 = vunpack.c.l.b16 %v4021
        %v4054 = vunpack.c.l.b16 %v4022
        %v4055 = vunpack.c.l.b16 %v4023
        %v4056 = vunpack.c.l.b16 %v4024
        %v4057 = vunpack.c.l.b16 %v4025
        %v4058 = vunpack.c.l.b16 %v4026
        %v4059 = vunpack.c.l.b16 %v4027
        %v4060 = vunpack.c.l.b16 %v4028
        %v4061 = vunpack.c.l.b16 %v4029
        %v4062 = vunpack.c.l.b16 %v4030
        %v4063 = vunpack.c.l.b16 %v4031
        %v4064 = vpack.c.b16 %v4049, %v4048
        %v4065 = vpack.c.b16 %v4051, %v4050
        %v4066 = vpack.c.b16 %v4053, %v4052
        %v4067 = vpack.c.b16 %v4055, %v4054
        %v4068 = vpack.c.b16 %v4057, %v4056
        %v4069 = vpack.c.b16 %v4059, %v4058
        %v4070 = vpack.c.b16 %v4061, %v4060
        %v4071 = vpack.c.b16 %v4063, %v4062
        %4080 = vmatprep.subr.bf16.mxu0 0
        %4081 = vmatpush1.bf16.msra.mxu0 %v4071
        %4082 = vmatprep.subr.bf16.mxu0 0
        %4083 = vmatpush1.bf16.msra.mxu0 %v4070
        %4084 = vmatprep.subr.bf16.mxu0 0
        %4085 = vmatpush1.bf16.msra.mxu0 %v4069
        %4086 = vmatprep.subr.bf16.mxu0 0
        %4087 = vmatpush1.bf16.msra.mxu0 %v4068
        %4088 = vmatprep.subr.bf16.mxu0 0
        %4089 = vmatpush1.bf16.msra.mxu0 %v4067
        %4090 = vmatprep.subr.bf16.mxu0 0
        %4091 = vmatpush1.bf16.msra.mxu0 %v4066
        %4092 = vmatprep.subr.bf16.mxu0 0
        %4093 = vmatpush1.bf16.msra.mxu0 %v4065
        %4094 = vmatprep.subr.bf16.mxu0 0
        %4095 = vmatpush1.bf16.msra.mxu0 %v4064
        %4096 = vmatprep.subr.bf16.mxu0 0
        %4097 = vmatpush2.bf16.msra.mxu0 0
        %4098 = vmatprep.subr.bf16.mxu0 0
        %4099 = vmatpush2.bf16.msra.mxu0 0
        %4100 = vmatprep.subr.bf16.mxu0 0
        %4101 = vmatpush2.bf16.msra.mxu0 0
        %4102 = vmatprep.subr.bf16.mxu0 0
        %4103 = vmatpush2.bf16.msra.mxu0 0
        %4104 = vmatprep.subr.bf16.mxu0 0
        %4105 = vmatpush2.bf16.msra.mxu0 0
        %4106 = vmatprep.subr.bf16.mxu0 0
        %4107 = vmatpush2.bf16.msra.mxu0 0
        %4108 = vmatprep.subr.bf16.mxu0 0
        %4109 = vmatpush2.bf16.msra.mxu0 0
        %4110 = vmatprep.subr.bf16.mxu0 0
        %4111 = vmatpush2.bf16.msra.mxu0 0
        %4112 = vmatprep.mubr.bf16.mxu0 0
        %4113 = vmatmul.mubr.bf16.gmra.mxu0 %v4013
        %v4114 = vpop.f32.mrf.mxu0
        %v4115 = vadd.f32 0.0, %v4114
        %v4116 = vpop.f32.mrf.mxu0
        %v4117 = vpop.f32.mrf.mxu0
        %v4118 = vadd.f32 0.0, %v4117
        %v4119 = vpop.f32.mrf.mxu0
        %4120 = vmatprep.mubr.bf16.mxu0 0
        %4121 = vmatmul.mubr.bf16.gmra.mxu0 %v4014
        %v4122 = vpop.f32.mrf.mxu0
        %v4123 = vadd.f32 0.0, %v4122
        %v4124 = vpop.f32.mrf.mxu0
        %v4125 = vpop.f32.mrf.mxu0
        %v4126 = vpop.f32.mrf.mxu0
        %4127 = vdwg.mxu0
        %v4128 = vadd.f32 %v4009, %v4115
        %v4129 = vadd.f32 %v4009, %v4118
        %v4130 = vadd.f32 %v4009, %v4123
        %v4131 = vld [vmem:[#allocation4 + $0x1] sm:$0xff]
        %v4132 = vld [vmem:[#allocation4 + $0x9] sm:$0xff]
        %v4133 = vld [vmem:[#allocation4 + $0x11] sm:$0xff]
        %v4134 = vpack.c.bf16 %v4132, %v4131
        %v4135 = vpack.c.bf16 %v4133, %v4133
        %s4136 = scalar_lea.vmem [#allocation11], 1216
        %v4137 = vld [vmem:[%s4136] sm:$0xf]
        %v4138 = vld [vmem:[%s4136 + $0x4] sm:$0xf]
        %v4139 = vld [vmem:[%s4136 + $0x8] sm:$0xf]
        %v4140 = vld [vmem:[%s4136 + $0xc] sm:$0xf]
        %v4141 = vld [vmem:[%s4136 + $0x10] sm:$0xf]
        %v4142 = vld [vmem:[%s4136 + $0x14] sm:$0xf]
        %v4143 = vld [vmem:[%s4136 + $0x18] sm:$0xf]
        %v4144 = vld [vmem:[%s4136 + $0x1c] sm:$0xf]
        %v4145 = vld [vmem:[%s4136 + $0x20] sm:$0xf]
        %v4146 = vld [vmem:[%s4136 + $0x24] sm:$0xf]
        %v4147 = vld [vmem:[%s4136 + $0x28] sm:$0xf]
        %v4148 = vld [vmem:[%s4136 + $0x2c] sm:$0xf]
        %v4149 = vld [vmem:[%s4136 + $0x30] sm:$0xf]
        %v4150 = vld [vmem:[%s4136 + $0x34] sm:$0xf]
        %v4151 = vld [vmem:[%s4136 + $0x38] sm:$0xf]
        %v4152 = vld [vmem:[%s4136 + $0x3c] sm:$0xf]
        %v4169 = vunpack.c.l.b16 %v4137
        %v4170 = vunpack.c.l.b16 %v4138
        %v4171 = vunpack.c.l.b16 %v4139
        %v4172 = vunpack.c.l.b16 %v4140
        %v4173 = vunpack.c.l.b16 %v4141
        %v4174 = vunpack.c.l.b16 %v4142
        %v4175 = vunpack.c.l.b16 %v4143
        %v4176 = vunpack.c.l.b16 %v4144
        %v4177 = vunpack.c.l.b16 %v4145
        %v4178 = vunpack.c.l.b16 %v4146
        %v4179 = vunpack.c.l.b16 %v4147
        %v4180 = vunpack.c.l.b16 %v4148
        %v4181 = vunpack.c.l.b16 %v4149
        %v4182 = vunpack.c.l.b16 %v4150
        %v4183 = vunpack.c.l.b16 %v4151
        %v4184 = vunpack.c.l.b16 %v4152
        %v4185 = vpack.c.b16 %v4170, %v4169
        %v4186 = vpack.c.b16 %v4172, %v4171
        %v4187 = vpack.c.b16 %v4174, %v4173
        %v4188 = vpack.c.b16 %v4176, %v4175
        %v4189 = vpack.c.b16 %v4178, %v4177
        %v4190 = vpack.c.b16 %v4180, %v4179
        %v4191 = vpack.c.b16 %v4182, %v4181
        %v4192 = vpack.c.b16 %v4184, %v4183
        %4201 = vmatprep.subr.bf16.mxu0 0
        %4202 = vmatpush1.bf16.msra.mxu0 %v4192
        %4203 = vmatprep.subr.bf16.mxu0 0
        %4204 = vmatpush1.bf16.msra.mxu0 %v4191
        %4205 = vmatprep.subr.bf16.mxu0 0
        %4206 = vmatpush1.bf16.msra.mxu0 %v4190
        %4207 = vmatprep.subr.bf16.mxu0 0
        %4208 = vmatpush1.bf16.msra.mxu0 %v4189
        %4209 = vmatprep.subr.bf16.mxu0 0
        %4210 = vmatpush1.bf16.msra.mxu0 %v4188
        %4211 = vmatprep.subr.bf16.mxu0 0
        %4212 = vmatpush1.bf16.msra.mxu0 %v4187
        %4213 = vmatprep.subr.bf16.mxu0 0
        %4214 = vmatpush1.bf16.msra.mxu0 %v4186
        %4215 = vmatprep.subr.bf16.mxu0 0
        %4216 = vmatpush1.bf16.msra.mxu0 %v4185
        %4217 = vmatprep.subr.bf16.mxu0 0
        %4218 = vmatpush2.bf16.msra.mxu0 0
        %4219 = vmatprep.subr.bf16.mxu0 0
        %4220 = vmatpush2.bf16.msra.mxu0 0
        %4221 = vmatprep.subr.bf16.mxu0 0
        %4222 = vmatpush2.bf16.msra.mxu0 0
        %4223 = vmatprep.subr.bf16.mxu0 0
        %4224 = vmatpush2.bf16.msra.mxu0 0
        %4225 = vmatprep.subr.bf16.mxu0 0
        %4226 = vmatpush2.bf16.msra.mxu0 0
        %4227 = vmatprep.subr.bf16.mxu0 0
        %4228 = vmatpush2.bf16.msra.mxu0 0
        %4229 = vmatprep.subr.bf16.mxu0 0
        %4230 = vmatpush2.bf16.msra.mxu0 0
        %4231 = vmatprep.subr.bf16.mxu0 0
        %4232 = vmatpush2.bf16.msra.mxu0 0
        %4233 = vmatprep.mubr.bf16.mxu0 0
        %4234 = vmatmul.mubr.bf16.gmra.mxu0 %v4134
        %v4235 = vpop.f32.mrf.mxu0
        %v4236 = vadd.f32 0.0, %v4235
        %v4237 = vpop.f32.mrf.mxu0
        %v4238 = vpop.f32.mrf.mxu0
        %v4239 = vadd.f32 0.0, %v4238
        %v4240 = vpop.f32.mrf.mxu0
        %4241 = vmatprep.mubr.bf16.mxu0 0
        %4242 = vmatmul.mubr.bf16.gmra.mxu0 %v4135
        %v4243 = vpop.f32.mrf.mxu0
        %v4244 = vadd.f32 0.0, %v4243
        %v4245 = vpop.f32.mrf.mxu0
        %v4246 = vpop.f32.mrf.mxu0
        %v4247 = vpop.f32.mrf.mxu0
        %4248 = vdwg.mxu0
        %v4249 = vadd.f32 %v4128, %v4236
        %v4250 = vadd.f32 %v4129, %v4239
        %v4251 = vadd.f32 %v4130, %v4244
        %v4252 = vld [vmem:[#allocation4 + $0x7] sm:$0xff]
        %v4253 = vld [vmem:[#allocation4 + $0xf] sm:$0xff]
        %v4254 = vld [vmem:[#allocation4 + $0x17] sm:$0xff]
        %v4255 = vpack.c.bf16 %v4253, %v4252
        %v4256 = vpack.c.bf16 %v4254, %v4254
        %s4257 = scalar_lea.vmem [#allocation11], 1280
        %v4258 = vld [vmem:[%s4257] sm:$0xf]
        %v4259 = vld [vmem:[%s4257 + $0x4] sm:$0xf]
        %v4260 = vld [vmem:[%s4257 + $0x8] sm:$0xf]
        %v4261 = vld [vmem:[%s4257 + $0xc] sm:$0xf]
        %v4262 = vld [vmem:[%s4257 + $0x10] sm:$0xf]
        %v4263 = vld [vmem:[%s4257 + $0x14] sm:$0xf]
        %v4264 = vld [vmem:[%s4257 + $0x18] sm:$0xf]
        %v4265 = vld [vmem:[%s4257 + $0x1c] sm:$0xf]
        %v4266 = vld [vmem:[%s4257 + $0x20] sm:$0xf]
        %v4267 = vld [vmem:[%s4257 + $0x24] sm:$0xf]
        %v4268 = vld [vmem:[%s4257 + $0x28] sm:$0xf]
        %v4269 = vld [vmem:[%s4257 + $0x2c] sm:$0xf]
        %v4270 = vld [vmem:[%s4257 + $0x30] sm:$0xf]
        %v4271 = vld [vmem:[%s4257 + $0x34] sm:$0xf]
        %v4272 = vld [vmem:[%s4257 + $0x38] sm:$0xf]
        %v4273 = vld [vmem:[%s4257 + $0x3c] sm:$0xf]
        %v4290 = vunpack.c.l.b16 %v4258
        %v4291 = vunpack.c.l.b16 %v4259
        %v4292 = vunpack.c.l.b16 %v4260
        %v4293 = vunpack.c.l.b16 %v4261
        %v4294 = vunpack.c.l.b16 %v4262
        %v4295 = vunpack.c.l.b16 %v4263
        %v4296 = vunpack.c.l.b16 %v4264
        %v4297 = vunpack.c.l.b16 %v4265
        %v4298 = vunpack.c.l.b16 %v4266
        %v4299 = vunpack.c.l.b16 %v4267
        %v4300 = vunpack.c.l.b16 %v4268
        %v4301 = vunpack.c.l.b16 %v4269
        %v4302 = vunpack.c.l.b16 %v4270
        %v4303 = vunpack.c.l.b16 %v4271
        %v4304 = vunpack.c.l.b16 %v4272
        %v4305 = vunpack.c.l.b16 %v4273
        %v4306 = vpack.c.b16 %v4291, %v4290
        %v4307 = vpack.c.b16 %v4293, %v4292
        %v4308 = vpack.c.b16 %v4295, %v4294
        %v4309 = vpack.c.b16 %v4297, %v4296
        %v4310 = vpack.c.b16 %v4299, %v4298
        %v4311 = vpack.c.b16 %v4301, %v4300
        %v4312 = vpack.c.b16 %v4303, %v4302
        %v4313 = vpack.c.b16 %v4305, %v4304
        %4322 = vmatprep.subr.bf16.mxu0 0
        %4323 = vmatpush1.bf16.msra.mxu0 %v4313
        %4324 = vmatprep.subr.bf16.mxu0 0
        %4325 = vmatpush1.bf16.msra.mxu0 %v4312
        %4326 = vmatprep.subr.bf16.mxu0 0
        %4327 = vmatpush1.bf16.msra.mxu0 %v4311
        %4328 = vmatprep.subr.bf16.mxu0 0
        %4329 = vmatpush1.bf16.msra.mxu0 %v4310
        %4330 = vmatprep.subr.bf16.mxu0 0
        %4331 = vmatpush1.bf16.msra.mxu0 %v4309
        %4332 = vmatprep.subr.bf16.mxu0 0
        %4333 = vmatpush1.bf16.msra.mxu0 %v4308
        %4334 = vmatprep.subr.bf16.mxu0 0
        %4335 = vmatpush1.bf16.msra.mxu0 %v4307
        %4336 = vmatprep.subr.bf16.mxu0 0
        %4337 = vmatpush1.bf16.msra.mxu0 %v4306
        %4338 = vmatprep.subr.bf16.mxu0 0
        %4339 = vmatpush2.bf16.msra.mxu0 0
        %4340 = vmatprep.subr.bf16.mxu0 0
        %4341 = vmatpush2.bf16.msra.mxu0 0
        %4342 = vmatprep.subr.bf16.mxu0 0
        %4343 = vmatpush2.bf16.msra.mxu0 0
        %4344 = vmatprep.subr.bf16.mxu0 0
        %4345 = vmatpush2.bf16.msra.mxu0 0
        %4346 = vmatprep.subr.bf16.mxu0 0
        %4347 = vmatpush2.bf16.msra.mxu0 0
        %4348 = vmatprep.subr.bf16.mxu0 0
        %4349 = vmatpush2.bf16.msra.mxu0 0
        %4350 = vmatprep.subr.bf16.mxu0 0
        %4351 = vmatpush2.bf16.msra.mxu0 0
        %4352 = vmatprep.subr.bf16.mxu0 0
        %4353 = vmatpush2.bf16.msra.mxu0 0
        %4354 = vmatprep.mubr.bf16.mxu0 0
        %4355 = vmatmul.mubr.bf16.gmra.mxu0 %v4255
        %v4356 = vpop.f32.mrf.mxu0
        %v4357 = vadd.f32 0.0, %v4356
        %v4358 = vpop.f32.mrf.mxu0
        %v4359 = vpop.f32.mrf.mxu0
        %v4360 = vadd.f32 0.0, %v4359
        %v4361 = vpop.f32.mrf.mxu0
        %4362 = vmatprep.mubr.bf16.mxu0 0
        %4363 = vmatmul.mubr.bf16.gmra.mxu0 %v4256
        %v4364 = vpop.f32.mrf.mxu0
        %v4365 = vadd.f32 0.0, %v4364
        %v4366 = vpop.f32.mrf.mxu0
        %v4367 = vpop.f32.mrf.mxu0
        %v4368 = vpop.f32.mrf.mxu0
        %4369 = vdwg.mxu0
        %v4370 = vadd.f32 %v4249, %v4357
        %v4371 = vadd.f32 %v4250, %v4360
        %v4372 = vadd.f32 %v4251, %v4365
        %v4373 = vld [vmem:[#allocation4 + $0x8] sm:$0xff]
        %v4374 = vld [vmem:[#allocation4 + $0x10] sm:$0xff]
        %v4375 = vld [vmem:[#allocation4 + $0x18] sm:$0xff]
        %v4376 = vpack.c.bf16 %v4374, %v4373
        %v4377 = vpack.c.bf16 %v4375, %v4375
        %s4378 = scalar_lea.vmem [#allocation11], 1344
        %v4379 = vld [vmem:[%s4378] sm:$0xf]
        %v4380 = vld [vmem:[%s4378 + $0x4] sm:$0xf]
        %v4381 = vld [vmem:[%s4378 + $0x8] sm:$0xf]
        %v4382 = vld [vmem:[%s4378 + $0xc] sm:$0xf]
        %v4383 = vld [vmem:[%s4378 + $0x10] sm:$0xf]
        %v4384 = vld [vmem:[%s4378 + $0x14] sm:$0xf]
        %v4385 = vld [vmem:[%s4378 + $0x18] sm:$0xf]
        %v4386 = vld [vmem:[%s4378 + $0x1c] sm:$0xf]
        %v4387 = vld [vmem:[%s4378 + $0x20] sm:$0xf]
        %v4388 = vld [vmem:[%s4378 + $0x24] sm:$0xf]
        %v4389 = vld [vmem:[%s4378 + $0x28] sm:$0xf]
        %v4390 = vld [vmem:[%s4378 + $0x2c] sm:$0xf]
        %v4391 = vld [vmem:[%s4378 + $0x30] sm:$0xf]
        %v4392 = vld [vmem:[%s4378 + $0x34] sm:$0xf]
        %v4393 = vld [vmem:[%s4378 + $0x38] sm:$0xf]
        %v4394 = vld [vmem:[%s4378 + $0x3c] sm:$0xf]
        %v4411 = vunpack.c.l.b16 %v4379
        %v4412 = vunpack.c.l.b16 %v4380
        %v4413 = vunpack.c.l.b16 %v4381
        %v4414 = vunpack.c.l.b16 %v4382
        %v4415 = vunpack.c.l.b16 %v4383
        %v4416 = vunpack.c.l.b16 %v4384
        %v4417 = vunpack.c.l.b16 %v4385
        %v4418 = vunpack.c.l.b16 %v4386
        %v4419 = vunpack.c.l.b16 %v4387
        %v4420 = vunpack.c.l.b16 %v4388
        %v4421 = vunpack.c.l.b16 %v4389
        %v4422 = vunpack.c.l.b16 %v4390
        %v4423 = vunpack.c.l.b16 %v4391
        %v4424 = vunpack.c.l.b16 %v4392
        %v4425 = vunpack.c.l.b16 %v4393
        %v4426 = vunpack.c.l.b16 %v4394
        %v4427 = vpack.c.b16 %v4412, %v4411
        %v4428 = vpack.c.b16 %v4414, %v4413
        %v4429 = vpack.c.b16 %v4416, %v4415
        %v4430 = vpack.c.b16 %v4418, %v4417
        %v4431 = vpack.c.b16 %v4420, %v4419
        %v4432 = vpack.c.b16 %v4422, %v4421
        %v4433 = vpack.c.b16 %v4424, %v4423
        %v4434 = vpack.c.b16 %v4426, %v4425
        %4443 = vmatprep.subr.bf16.mxu0 0
        %4444 = vmatpush1.bf16.msra.mxu0 %v4434
        %4445 = vmatprep.subr.bf16.mxu0 0
        %4446 = vmatpush1.bf16.msra.mxu0 %v4433
        %4447 = vmatprep.subr.bf16.mxu0 0
        %4448 = vmatpush1.bf16.msra.mxu0 %v4432
        %4449 = vmatprep.subr.bf16.mxu0 0
        %4450 = vmatpush1.bf16.msra.mxu0 %v4431
        %4451 = vmatprep.subr.bf16.mxu0 0
        %4452 = vmatpush1.bf16.msra.mxu0 %v4430
        %4453 = vmatprep.subr.bf16.mxu0 0
        %4454 = vmatpush1.bf16.msra.mxu0 %v4429
        %4455 = vmatprep.subr.bf16.mxu0 0
        %4456 = vmatpush1.bf16.msra.mxu0 %v4428
        %4457 = vmatprep.subr.bf16.mxu0 0
        %4458 = vmatpush1.bf16.msra.mxu0 %v4427
        %4459 = vmatprep.subr.bf16.mxu0 0
        %4460 = vmatpush2.bf16.msra.mxu0 0
        %4461 = vmatprep.subr.bf16.mxu0 0
        %4462 = vmatpush2.bf16.msra.mxu0 0
        %4463 = vmatprep.subr.bf16.mxu0 0
        %4464 = vmatpush2.bf16.msra.mxu0 0
        %4465 = vmatprep.subr.bf16.mxu0 0
        %4466 = vmatpush2.bf16.msra.mxu0 0
        %4467 = vmatprep.subr.bf16.mxu0 0
        %4468 = vmatpush2.bf16.msra.mxu0 0
        %4469 = vmatprep.subr.bf16.mxu0 0
        %4470 = vmatpush2.bf16.msra.mxu0 0
        %4471 = vmatprep.subr.bf16.mxu0 0
        %4472 = vmatpush2.bf16.msra.mxu0 0
        %4473 = vmatprep.subr.bf16.mxu0 0
        %4474 = vmatpush2.bf16.msra.mxu0 0
        %4475 = vmatprep.mubr.bf16.mxu0 0
        %4476 = vmatmul.mubr.bf16.gmra.mxu0 %v4376
        %v4477 = vpop.f32.mrf.mxu0
        %v4478 = vadd.f32 0.0, %v4477
        %v4479 = vpop.f32.mrf.mxu0
        %v4480 = vpop.f32.mrf.mxu0
        %v4481 = vadd.f32 0.0, %v4480
        %v4482 = vpop.f32.mrf.mxu0
        %4483 = vmatprep.mubr.bf16.mxu0 0
        %4484 = vmatmul.mubr.bf16.gmra.mxu0 %v4377
        %v4485 = vpop.f32.mrf.mxu0
        %v4486 = vadd.f32 0.0, %v4485
        %v4487 = vpop.f32.mrf.mxu0
        %v4488 = vpop.f32.mrf.mxu0
        %v4489 = vpop.f32.mrf.mxu0
        %4490 = vdwg.mxu0
        %v4491 = vadd.f32 %v4370, %v4478
        %v4492 = vadd.f32 %v4371, %v4481
        %v4493 = vadd.f32 %v4372, %v4486
        %vm4494 = vcmp.ge.f32.partialorder %v4491, 0.0
        %vm4495 = vcmp.ge.f32.partialorder %v4492, 0.0
        %vm4496 = vcmp.ge.f32.partialorder %v4493, 0.0
        %v4497 = vmul.f32 %v4491, 0.01
        %v4498 = vmul.f32 %v4492, 0.01
        %v4499 = vmul.f32 %v4493, 0.01
        %v4500 = vsel %vm4494, %v4491, %v4497
        %v4501 = vsel %vm4495, %v4492, %v4498
        %v4502 = vsel %vm4496, %v4493, %v4499
        %4503 = vst [vmem:[#allocation5] sm:$0xff] %v4500
        %4504 = vst [vmem:[#allocation5 + $0x8] sm:$0xff] %v4501
        %4505 = vst [vmem:[#allocation5 + $0x10] sm:$0xff] %v4502
        %v4506 = vld [vmem:[#allocation13 + $0x3] sm:$0x1]
        %v4507 = vlaneseq
        %v4508 = vshrl.u32 %v4507, 7
        %v4509 = vsub.s32 0, %v4508
        %v4510 = vrot.slane %v4506, %v4509
        %v4511 = vld [vmem:[#allocation5] sm:$0xff]
        %v4512 = vpack.c.bf16 %v4511, %v4511
        %s4513 = scalar_lea.vmem [#allocation11], 1408
        %v4514 = vld [vmem:[%s4513] sm:$0xf]
        %v4515 = vld [vmem:[%s4513 + $0x4] sm:$0xf]
        %v4516 = vld [vmem:[%s4513 + $0x8] sm:$0xf]
        %v4517 = vld [vmem:[%s4513 + $0xc] sm:$0xf]
        %v4518 = vld [vmem:[%s4513 + $0x10] sm:$0xf]
        %v4519 = vld [vmem:[%s4513 + $0x14] sm:$0xf]
        %v4520 = vld [vmem:[%s4513 + $0x18] sm:$0xf]
        %v4521 = vld [vmem:[%s4513 + $0x1c] sm:$0xf]
        %v4522 = vld [vmem:[%s4513 + $0x20] sm:$0xf]
        %v4523 = vld [vmem:[%s4513 + $0x24] sm:$0xf]
        %v4524 = vld [vmem:[%s4513 + $0x28] sm:$0xf]
        %v4525 = vld [vmem:[%s4513 + $0x2c] sm:$0xf]
        %v4526 = vld [vmem:[%s4513 + $0x30] sm:$0xf]
        %v4527 = vld [vmem:[%s4513 + $0x34] sm:$0xf]
        %v4528 = vld [vmem:[%s4513 + $0x38] sm:$0xf]
        %v4529 = vld [vmem:[%s4513 + $0x3c] sm:$0xf]
        %v4546 = vunpack.c.l.b16 %v4514
        %v4547 = vunpack.c.l.b16 %v4515
        %v4548 = vunpack.c.l.b16 %v4516
        %v4549 = vunpack.c.l.b16 %v4517
        %v4550 = vunpack.c.l.b16 %v4518
        %v4551 = vunpack.c.l.b16 %v4519
        %v4552 = vunpack.c.l.b16 %v4520
        %v4553 = vunpack.c.l.b16 %v4521
        %v4554 = vunpack.c.l.b16 %v4522
        %v4555 = vunpack.c.l.b16 %v4523
        %v4556 = vunpack.c.l.b16 %v4524
        %v4557 = vunpack.c.l.b16 %v4525
        %v4558 = vunpack.c.l.b16 %v4526
        %v4559 = vunpack.c.l.b16 %v4527
        %v4560 = vunpack.c.l.b16 %v4528
        %v4561 = vunpack.c.l.b16 %v4529
        %v4562 = vpack.c.b16 %v4547, %v4546
        %v4563 = vpack.c.b16 %v4549, %v4548
        %v4564 = vpack.c.b16 %v4551, %v4550
        %v4565 = vpack.c.b16 %v4553, %v4552
        %v4566 = vpack.c.b16 %v4555, %v4554
        %v4567 = vpack.c.b16 %v4557, %v4556
        %v4568 = vpack.c.b16 %v4559, %v4558
        %v4569 = vpack.c.b16 %v4561, %v4560
        %4578 = vmatprep.subr.bf16.mxu0 0
        %4579 = vmatpush1.bf16.msra.mxu0 %v4569
        %4580 = vmatprep.subr.bf16.mxu0 0
        %4581 = vmatpush1.bf16.msra.mxu0 %v4568
        %4582 = vmatprep.subr.bf16.mxu0 0
        %4583 = vmatpush1.bf16.msra.mxu0 %v4567
        %4584 = vmatprep.subr.bf16.mxu0 0
        %4585 = vmatpush1.bf16.msra.mxu0 %v4566
        %4586 = vmatprep.subr.bf16.mxu0 0
        %4587 = vmatpush1.bf16.msra.mxu0 %v4565
        %4588 = vmatprep.subr.bf16.mxu0 0
        %4589 = vmatpush1.bf16.msra.mxu0 %v4564
        %4590 = vmatprep.subr.bf16.mxu0 0
        %4591 = vmatpush1.bf16.msra.mxu0 %v4563
        %4592 = vmatprep.subr.bf16.mxu0 0
        %4593 = vmatpush1.bf16.msra.mxu0 %v4562
        %4594 = vmatprep.subr.bf16.mxu0 0
        %4595 = vmatpush2.bf16.msra.mxu0 0
        %4596 = vmatprep.subr.bf16.mxu0 0
        %4597 = vmatpush2.bf16.msra.mxu0 0
        %4598 = vmatprep.subr.bf16.mxu0 0
        %4599 = vmatpush2.bf16.msra.mxu0 0
        %4600 = vmatprep.subr.bf16.mxu0 0
        %4601 = vmatpush2.bf16.msra.mxu0 0
        %4602 = vmatprep.subr.bf16.mxu0 0
        %4603 = vmatpush2.bf16.msra.mxu0 0
        %4604 = vmatprep.subr.bf16.mxu0 0
        %4605 = vmatpush2.bf16.msra.mxu0 0
        %4606 = vmatprep.subr.bf16.mxu0 0
        %4607 = vmatpush2.bf16.msra.mxu0 0
        %4608 = vmatprep.subr.bf16.mxu0 0
        %4609 = vmatpush2.bf16.msra.mxu0 0
        %4610 = vmatprep.mubr.bf16.mxu0 0
        %4611 = vmatmul.mubr.bf16.gmra.mxu0 %v4512
        %v4612 = vpop.f32.mrf.mxu0
        %v4613 = vadd.f32 0.0, %v4612
        %v4614 = vpop.f32.mrf.mxu0
        %v4615 = vpop.f32.mrf.mxu0
        %v4616 = vpop.f32.mrf.mxu0
        %4617 = vdwg.mxu0
        %v4618 = vadd.f32 %v4510, %v4613
        %v4619 = vld [vmem:[#allocation5 + $0x2] sm:$0xff]
        %v4620 = vpack.c.bf16 %v4619, %v4619
        %s4621 = scalar_lea.vmem [#allocation11], 1472
        %v4622 = vld [vmem:[%s4621] sm:$0xf]
        %v4623 = vld [vmem:[%s4621 + $0x4] sm:$0xf]
        %v4624 = vld [vmem:[%s4621 + $0x8] sm:$0xf]
        %v4625 = vld [vmem:[%s4621 + $0xc] sm:$0xf]
        %v4626 = vld [vmem:[%s4621 + $0x10] sm:$0xf]
        %v4627 = vld [vmem:[%s4621 + $0x14] sm:$0xf]
        %v4628 = vld [vmem:[%s4621 + $0x18] sm:$0xf]
        %v4629 = vld [vmem:[%s4621 + $0x1c] sm:$0xf]
        %v4630 = vld [vmem:[%s4621 + $0x20] sm:$0xf]
        %v4631 = vld [vmem:[%s4621 + $0x24] sm:$0xf]
        %v4632 = vld [vmem:[%s4621 + $0x28] sm:$0xf]
        %v4633 = vld [vmem:[%s4621 + $0x2c] sm:$0xf]
        %v4634 = vld [vmem:[%s4621 + $0x30] sm:$0xf]
        %v4635 = vld [vmem:[%s4621 + $0x34] sm:$0xf]
        %v4636 = vld [vmem:[%s4621 + $0x38] sm:$0xf]
        %v4637 = vld [vmem:[%s4621 + $0x3c] sm:$0xf]
        %v4654 = vunpack.c.l.b16 %v4622
        %v4655 = vunpack.c.l.b16 %v4623
        %v4656 = vunpack.c.l.b16 %v4624
        %v4657 = vunpack.c.l.b16 %v4625
        %v4658 = vunpack.c.l.b16 %v4626
        %v4659 = vunpack.c.l.b16 %v4627
        %v4660 = vunpack.c.l.b16 %v4628
        %v4661 = vunpack.c.l.b16 %v4629
        %v4662 = vunpack.c.l.b16 %v4630
        %v4663 = vunpack.c.l.b16 %v4631
        %v4664 = vunpack.c.l.b16 %v4632
        %v4665 = vunpack.c.l.b16 %v4633
        %v4666 = vunpack.c.l.b16 %v4634
        %v4667 = vunpack.c.l.b16 %v4635
        %v4668 = vunpack.c.l.b16 %v4636
        %v4669 = vunpack.c.l.b16 %v4637
        %v4670 = vpack.c.b16 %v4655, %v4654
        %v4671 = vpack.c.b16 %v4657, %v4656
        %v4672 = vpack.c.b16 %v4659, %v4658
        %v4673 = vpack.c.b16 %v4661, %v4660
        %v4674 = vpack.c.b16 %v4663, %v4662
        %v4675 = vpack.c.b16 %v4665, %v4664
        %v4676 = vpack.c.b16 %v4667, %v4666
        %v4677 = vpack.c.b16 %v4669, %v4668
        %4686 = vmatprep.subr.bf16.mxu0 0
        %4687 = vmatpush1.bf16.msra.mxu0 %v4677
        %4688 = vmatprep.subr.bf16.mxu0 0
        %4689 = vmatpush1.bf16.msra.mxu0 %v4676
        %4690 = vmatprep.subr.bf16.mxu0 0
        %4691 = vmatpush1.bf16.msra.mxu0 %v4675
        %4692 = vmatprep.subr.bf16.mxu0 0
        %4693 = vmatpush1.bf16.msra.mxu0 %v4674
        %4694 = vmatprep.subr.bf16.mxu0 0
        %4695 = vmatpush1.bf16.msra.mxu0 %v4673
        %4696 = vmatprep.subr.bf16.mxu0 0
        %4697 = vmatpush1.bf16.msra.mxu0 %v4672
        %4698 = vmatprep.subr.bf16.mxu0 0
        %4699 = vmatpush1.bf16.msra.mxu0 %v4671
        %4700 = vmatprep.subr.bf16.mxu0 0
        %4701 = vmatpush1.bf16.msra.mxu0 %v4670
        %4702 = vmatprep.subr.bf16.mxu0 0
        %4703 = vmatpush2.bf16.msra.mxu0 0
        %4704 = vmatprep.subr.bf16.mxu0 0
        %4705 = vmatpush2.bf16.msra.mxu0 0
        %4706 = vmatprep.subr.bf16.mxu0 0
        %4707 = vmatpush2.bf16.msra.mxu0 0
        %4708 = vmatprep.subr.bf16.mxu0 0
        %4709 = vmatpush2.bf16.msra.mxu0 0
        %4710 = vmatprep.subr.bf16.mxu0 0
        %4711 = vmatpush2.bf16.msra.mxu0 0
        %4712 = vmatprep.subr.bf16.mxu0 0
        %4713 = vmatpush2.bf16.msra.mxu0 0
        %4714 = vmatprep.subr.bf16.mxu0 0
        %4715 = vmatpush2.bf16.msra.mxu0 0
        %4716 = vmatprep.subr.bf16.mxu0 0
        %4717 = vmatpush2.bf16.msra.mxu0 0
        %4718 = vmatprep.mubr.bf16.mxu0 0
        %4719 = vmatmul.mubr.bf16.gmra.mxu0 %v4620
        %v4720 = vpop.f32.mrf.mxu0
        %v4721 = vadd.f32 0.0, %v4720
        %v4722 = vpop.f32.mrf.mxu0
        %v4723 = vpop.f32.mrf.mxu0
        %v4724 = vpop.f32.mrf.mxu0
        %4725 = vdwg.mxu0
        %v4726 = vadd.f32 %v4618, %v4721
        %v4727 = vld [vmem:[#allocation5 + $0xe] sm:$0xff]
        %v4728 = vpack.c.bf16 %v4727, %v4727
        %s4729 = scalar_lea.vmem [#allocation11], 1536
        %v4730 = vld [vmem:[%s4729] sm:$0xf]
        %v4731 = vld [vmem:[%s4729 + $0x4] sm:$0xf]
        %v4732 = vld [vmem:[%s4729 + $0x8] sm:$0xf]
        %v4733 = vld [vmem:[%s4729 + $0xc] sm:$0xf]
        %v4734 = vld [vmem:[%s4729 + $0x10] sm:$0xf]
        %v4735 = vld [vmem:[%s4729 + $0x14] sm:$0xf]
        %v4736 = vld [vmem:[%s4729 + $0x18] sm:$0xf]
        %v4737 = vld [vmem:[%s4729 + $0x1c] sm:$0xf]
        %v4738 = vld [vmem:[%s4729 + $0x20] sm:$0xf]
        %v4739 = vld [vmem:[%s4729 + $0x24] sm:$0xf]
        %v4740 = vld [vmem:[%s4729 + $0x28] sm:$0xf]
        %v4741 = vld [vmem:[%s4729 + $0x2c] sm:$0xf]
        %v4742 = vld [vmem:[%s4729 + $0x30] sm:$0xf]
        %v4743 = vld [vmem:[%s4729 + $0x34] sm:$0xf]
        %v4744 = vld [vmem:[%s4729 + $0x38] sm:$0xf]
        %v4745 = vld [vmem:[%s4729 + $0x3c] sm:$0xf]
        %v4762 = vunpack.c.l.b16 %v4730
        %v4763 = vunpack.c.l.b16 %v4731
        %v4764 = vunpack.c.l.b16 %v4732
        %v4765 = vunpack.c.l.b16 %v4733
        %v4766 = vunpack.c.l.b16 %v4734
        %v4767 = vunpack.c.l.b16 %v4735
        %v4768 = vunpack.c.l.b16 %v4736
        %v4769 = vunpack.c.l.b16 %v4737
        %v4770 = vunpack.c.l.b16 %v4738
        %v4771 = vunpack.c.l.b16 %v4739
        %v4772 = vunpack.c.l.b16 %v4740
        %v4773 = vunpack.c.l.b16 %v4741
        %v4774 = vunpack.c.l.b16 %v4742
        %v4775 = vunpack.c.l.b16 %v4743
        %v4776 = vunpack.c.l.b16 %v4744
        %v4777 = vunpack.c.l.b16 %v4745
        %v4778 = vpack.c.b16 %v4763, %v4762
        %v4779 = vpack.c.b16 %v4765, %v4764
        %v4780 = vpack.c.b16 %v4767, %v4766
        %v4781 = vpack.c.b16 %v4769, %v4768
        %v4782 = vpack.c.b16 %v4771, %v4770
        %v4783 = vpack.c.b16 %v4773, %v4772
        %v4784 = vpack.c.b16 %v4775, %v4774
        %v4785 = vpack.c.b16 %v4777, %v4776
        %4794 = vmatprep.subr.bf16.mxu0 0
        %4795 = vmatpush1.bf16.msra.mxu0 %v4785
        %4796 = vmatprep.subr.bf16.mxu0 0
        %4797 = vmatpush1.bf16.msra.mxu0 %v4784
        %4798 = vmatprep.subr.bf16.mxu0 0
        %4799 = vmatpush1.bf16.msra.mxu0 %v4783
        %4800 = vmatprep.subr.bf16.mxu0 0
        %4801 = vmatpush1.bf16.msra.mxu0 %v4782
        %4802 = vmatprep.subr.bf16.mxu0 0
        %4803 = vmatpush1.bf16.msra.mxu0 %v4781
        %4804 = vmatprep.subr.bf16.mxu0 0
        %4805 = vmatpush1.bf16.msra.mxu0 %v4780
        %4806 = vmatprep.subr.bf16.mxu0 0
        %4807 = vmatpush1.bf16.msra.mxu0 %v4779
        %4808 = vmatprep.subr.bf16.mxu0 0
        %4809 = vmatpush1.bf16.msra.mxu0 %v4778
        %4810 = vmatprep.subr.bf16.mxu0 0
        %4811 = vmatpush2.bf16.msra.mxu0 0
        %4812 = vmatprep.subr.bf16.mxu0 0
        %4813 = vmatpush2.bf16.msra.mxu0 0
        %4814 = vmatprep.subr.bf16.mxu0 0
        %4815 = vmatpush2.bf16.msra.mxu0 0
        %4816 = vmatprep.subr.bf16.mxu0 0
        %4817 = vmatpush2.bf16.msra.mxu0 0
        %4818 = vmatprep.subr.bf16.mxu0 0
        %4819 = vmatpush2.bf16.msra.mxu0 0
        %4820 = vmatprep.subr.bf16.mxu0 0
        %4821 = vmatpush2.bf16.msra.mxu0 0
        %4822 = vmatprep.subr.bf16.mxu0 0
        %4823 = vmatpush2.bf16.msra.mxu0 0
        %4824 = vmatprep.subr.bf16.mxu0 0
        %4825 = vmatpush2.bf16.msra.mxu0 0
        %4826 = vmatprep.mubr.bf16.mxu0 0
        %4827 = vmatmul.mubr.bf16.gmra.mxu0 %v4728
        %v4828 = vpop.f32.mrf.mxu0
        %v4829 = vadd.f32 0.0, %v4828
        %v4830 = vpop.f32.mrf.mxu0
        %v4831 = vpop.f32.mrf.mxu0
        %v4832 = vpop.f32.mrf.mxu0
        %4833 = vdwg.mxu0
        %v4834 = vadd.f32 %v4726, %v4829
        %v4835 = vld [vmem:[#allocation5 + $0x10] sm:$0xff]
        %v4836 = vpack.c.bf16 %v4835, %v4835
        %s4837 = scalar_lea.vmem [#allocation11], 1600
        %v4838 = vld [vmem:[%s4837] sm:$0xf]
        %v4839 = vld [vmem:[%s4837 + $0x4] sm:$0xf]
        %v4840 = vld [vmem:[%s4837 + $0x8] sm:$0xf]
        %v4841 = vld [vmem:[%s4837 + $0xc] sm:$0xf]
        %v4842 = vld [vmem:[%s4837 + $0x10] sm:$0xf]
        %v4843 = vld [vmem:[%s4837 + $0x14] sm:$0xf]
        %v4844 = vld [vmem:[%s4837 + $0x18] sm:$0xf]
        %v4845 = vld [vmem:[%s4837 + $0x1c] sm:$0xf]
        %v4846 = vld [vmem:[%s4837 + $0x20] sm:$0xf]
        %v4847 = vld [vmem:[%s4837 + $0x24] sm:$0xf]
        %v4848 = vld [vmem:[%s4837 + $0x28] sm:$0xf]
        %v4849 = vld [vmem:[%s4837 + $0x2c] sm:$0xf]
        %v4850 = vld [vmem:[%s4837 + $0x30] sm:$0xf]
        %v4851 = vld [vmem:[%s4837 + $0x34] sm:$0xf]
        %v4852 = vld [vmem:[%s4837 + $0x38] sm:$0xf]
        %v4853 = vld [vmem:[%s4837 + $0x3c] sm:$0xf]
        %v4870 = vunpack.c.l.b16 %v4838
        %v4871 = vunpack.c.l.b16 %v4839
        %v4872 = vunpack.c.l.b16 %v4840
        %v4873 = vunpack.c.l.b16 %v4841
        %v4874 = vunpack.c.l.b16 %v4842
        %v4875 = vunpack.c.l.b16 %v4843
        %v4876 = vunpack.c.l.b16 %v4844
        %v4877 = vunpack.c.l.b16 %v4845
        %v4878 = vunpack.c.l.b16 %v4846
        %v4879 = vunpack.c.l.b16 %v4847
        %v4880 = vunpack.c.l.b16 %v4848
        %v4881 = vunpack.c.l.b16 %v4849
        %v4882 = vunpack.c.l.b16 %v4850
        %v4883 = vunpack.c.l.b16 %v4851
        %v4884 = vunpack.c.l.b16 %v4852
        %v4885 = vunpack.c.l.b16 %v4853
        %v4886 = vpack.c.b16 %v4871, %v4870
        %v4887 = vpack.c.b16 %v4873, %v4872
        %v4888 = vpack.c.b16 %v4875, %v4874
        %v4889 = vpack.c.b16 %v4877, %v4876
        %v4890 = vpack.c.b16 %v4879, %v4878
        %v4891 = vpack.c.b16 %v4881, %v4880
        %v4892 = vpack.c.b16 %v4883, %v4882
        %v4893 = vpack.c.b16 %v4885, %v4884
        %4902 = vmatprep.subr.bf16.mxu0 0
        %4903 = vmatpush1.bf16.msra.mxu0 %v4893
        %4904 = vmatprep.subr.bf16.mxu0 0
        %4905 = vmatpush1.bf16.msra.mxu0 %v4892
        %4906 = vmatprep.subr.bf16.mxu0 0
        %4907 = vmatpush1.bf16.msra.mxu0 %v4891
        %4908 = vmatprep.subr.bf16.mxu0 0
        %4909 = vmatpush1.bf16.msra.mxu0 %v4890
        %4910 = vmatprep.subr.bf16.mxu0 0
        %4911 = vmatpush1.bf16.msra.mxu0 %v4889
        %4912 = vmatprep.subr.bf16.mxu0 0
        %4913 = vmatpush1.bf16.msra.mxu0 %v4888
        %4914 = vmatprep.subr.bf16.mxu0 0
        %4915 = vmatpush1.bf16.msra.mxu0 %v4887
        %4916 = vmatprep.subr.bf16.mxu0 0
        %4917 = vmatpush1.bf16.msra.mxu0 %v4886
        %4918 = vmatprep.subr.bf16.mxu0 0
        %4919 = vmatpush2.bf16.msra.mxu0 0
        %4920 = vmatprep.subr.bf16.mxu0 0
        %4921 = vmatpush2.bf16.msra.mxu0 0
        %4922 = vmatprep.subr.bf16.mxu0 0
        %4923 = vmatpush2.bf16.msra.mxu0 0
        %4924 = vmatprep.subr.bf16.mxu0 0
        %4925 = vmatpush2.bf16.msra.mxu0 0
        %4926 = vmatprep.subr.bf16.mxu0 0
        %4927 = vmatpush2.bf16.msra.mxu0 0
        %4928 = vmatprep.subr.bf16.mxu0 0
        %4929 = vmatpush2.bf16.msra.mxu0 0
        %4930 = vmatprep.subr.bf16.mxu0 0
        %4931 = vmatpush2.bf16.msra.mxu0 0
        %4932 = vmatprep.subr.bf16.mxu0 0
        %4933 = vmatpush2.bf16.msra.mxu0 0
        %4934 = vmatprep.mubr.bf16.mxu0 0
        %4935 = vmatmul.mubr.bf16.gmra.mxu0 %v4836
        %v4936 = vpop.f32.mrf.mxu0
        %v4937 = vadd.f32 0.0, %v4936
        %v4938 = vpop.f32.mrf.mxu0
        %v4939 = vpop.f32.mrf.mxu0
        %v4940 = vpop.f32.mrf.mxu0
        %4941 = vdwg.mxu0
        %v4942 = vadd.f32 %v4834, %v4937
        %v4943 = vlaneseq
        %v4944 = vand.u32 %v4943, 127
        %v4945 = vmul.f32 %v4942, 1.442695
        %v4946 = vpow.pop %v4945
        %vm4947 = vcmp.lt.s32.totalorder %v4944, 16
        %v4948 = vsel %vm4947, %v4942, 0.0
        %v4949 = vld [vmem:[%s236] sm:$0x1]
        %v4950 = vmul.f32 %v4946, %v4949
        %v4951 = vadd.f32 %v4948, %v4950
        %v4952 = vsub.f32 0.0, %v4942
        %v4953 = vmul.f32 %v4952, %v4942
        %vm4954 = vcmp.lt.s32.totalorder %v4944, 32
        %v4955 = vadd.f32 %v4942, 1.0
        %v4956 = vsub.f32 %v4955, %v4946
        %v4957 = vsel %vm4954, %v4956, 0.0
        %v4958 = vsel %vm4947, %v4953, %v4957
        %vm4959 = vcmask 1040384
        %v4960 = vsel %vm4959, %v4958, 0.0
        %4961 = vadd.xlane.f32.xlu0 %v4960
        %v4962 = vpop.xlane.xlu0 %4961
        %v4963 = vmul.f32 %v4962, -0.5
        %4964 = vst [vmem:[#allocation6] sm:$0xff] 0.0
        %4965 = vst [vmem:[#allocation6 + $0x8] sm:$0xff] 0.0
        %4966 = vst [vmem:[#allocation6 + $0x10] sm:$0xff] 0.0
        %4967 = vst [vmem:[#allocation6 + $0x18] sm:$0xff] 0.0
        %v4968 = vlaneseq
        %v4969 = vshrl.u32 %v4968, 7
        %v4970 = vsub.s32 0, %v4969
        %v4971 = vrot.slane %v4951, %v4970
        %v4972 = vpack.c.bf16 %v4971, %v4971
        %s4973 = scalar_lea.vmem [#allocation11], 1664
        %v4974 = vld [vmem:[%s4973] sm:$0xf]
        %v4975 = vld [vmem:[%s4973 + $0x4] sm:$0xf]
        %v4976 = vld [vmem:[%s4973 + $0x8] sm:$0xf]
        %v4977 = vld [vmem:[%s4973 + $0xc] sm:$0xf]
        %v4978 = vld [vmem:[%s4973 + $0x10] sm:$0xf]
        %v4979 = vld [vmem:[%s4973 + $0x14] sm:$0xf]
        %v4980 = vld [vmem:[%s4973 + $0x18] sm:$0xf]
        %v4981 = vld [vmem:[%s4973 + $0x1c] sm:$0xf]
        %v4982 = vld [vmem:[%s4973 + $0x20] sm:$0xf]
        %v4983 = vld [vmem:[%s4973 + $0x24] sm:$0xf]
        %v4984 = vld [vmem:[%s4973 + $0x28] sm:$0xf]
        %v4985 = vld [vmem:[%s4973 + $0x2c] sm:$0xf]
        %v4986 = vld [vmem:[%s4973 + $0x30] sm:$0xf]
        %v4987 = vld [vmem:[%s4973 + $0x34] sm:$0xf]
        %v4988 = vld [vmem:[%s4973 + $0x38] sm:$0xf]
        %v4989 = vld [vmem:[%s4973 + $0x3c] sm:$0xf]
        %v5006 = vunpack.c.l.b16 %v4974
        %v5007 = vunpack.c.l.b16 %v4975
        %v5008 = vunpack.c.l.b16 %v4976
        %v5009 = vunpack.c.l.b16 %v4977
        %v5010 = vunpack.c.l.b16 %v4978
        %v5011 = vunpack.c.l.b16 %v4979
        %v5012 = vunpack.c.l.b16 %v4980
        %v5013 = vunpack.c.l.b16 %v4981
        %v5014 = vunpack.c.l.b16 %v4982
        %v5015 = vunpack.c.l.b16 %v4983
        %v5016 = vunpack.c.l.b16 %v4984
        %v5017 = vunpack.c.l.b16 %v4985
        %v5018 = vunpack.c.l.b16 %v4986
        %v5019 = vunpack.c.l.b16 %v4987
        %v5020 = vunpack.c.l.b16 %v4988
        %v5021 = vunpack.c.l.b16 %v4989
        %v5022 = vpack.c.b16 %v5007, %v5006
        %v5023 = vpack.c.b16 %v5009, %v5008
        %v5024 = vpack.c.b16 %v5011, %v5010
        %v5025 = vpack.c.b16 %v5013, %v5012
        %v5026 = vpack.c.b16 %v5015, %v5014
        %v5027 = vpack.c.b16 %v5017, %v5016
        %v5028 = vpack.c.b16 %v5019, %v5018
        %v5029 = vpack.c.b16 %v5021, %v5020
        %5038 = vmatprep.subr.bf16.mxu0 0
        %5039 = vmatpush1.bf16.msra.mxu0 %v5029
        %5040 = vmatprep.subr.bf16.mxu0 0
        %5041 = vmatpush1.bf16.msra.mxu0 %v5028
        %5042 = vmatprep.subr.bf16.mxu0 0
        %5043 = vmatpush1.bf16.msra.mxu0 %v5027
        %5044 = vmatprep.subr.bf16.mxu0 0
        %5045 = vmatpush1.bf16.msra.mxu0 %v5026
        %5046 = vmatprep.subr.bf16.mxu0 0
        %5047 = vmatpush1.bf16.msra.mxu0 %v5025
        %5048 = vmatprep.subr.bf16.mxu0 0
        %5049 = vmatpush1.bf16.msra.mxu0 %v5024
        %5050 = vmatprep.subr.bf16.mxu0 0
        %5051 = vmatpush1.bf16.msra.mxu0 %v5023
        %5052 = vmatprep.subr.bf16.mxu0 0
        %5053 = vmatpush1.bf16.msra.mxu0 %v5022
        %5054 = vmatprep.subr.bf16.mxu0 0
        %5055 = vmatpush2.bf16.msra.mxu0 0
        %5056 = vmatprep.subr.bf16.mxu0 0
        %5057 = vmatpush2.bf16.msra.mxu0 0
        %5058 = vmatprep.subr.bf16.mxu0 0
        %5059 = vmatpush2.bf16.msra.mxu0 0
        %5060 = vmatprep.subr.bf16.mxu0 0
        %5061 = vmatpush2.bf16.msra.mxu0 0
        %5062 = vmatprep.subr.bf16.mxu0 0
        %5063 = vmatpush2.bf16.msra.mxu0 0
        %5064 = vmatprep.subr.bf16.mxu0 0
        %5065 = vmatpush2.bf16.msra.mxu0 0
        %5066 = vmatprep.subr.bf16.mxu0 0
        %5067 = vmatpush2.bf16.msra.mxu0 0
        %5068 = vmatprep.subr.bf16.mxu0 0
        %5069 = vmatpush2.bf16.msra.mxu0 0
        %5070 = vmatprep.mubr.bf16.mxu0 0
        %5071 = vmatmul.mubr.bf16.gmra.mxu0 %v4972
        %v5072 = vpop.f32.mrf.mxu0
        %v5073 = vadd.f32 0.0, %v5072
        %v5074 = vpop.f32.mrf.mxu0
        %v5075 = vpop.f32.mrf.mxu0
        %v5076 = vpop.f32.mrf.mxu0
        %5077 = vdwg.mxu0
        %v5078 = vld [vmem:[#allocation13 + $0x4] sm:$0x1]
        %v5079 = vadd.f32 %v5073, %v5078
        %vm5080 = vcmp.ge.f32.partialorder %v5079, 0.0
        %v5081 = vmul.f32 %v5079, 0.01
        %v5082 = vsel %vm5080, %v5079, %v5081
        %5083 = vst [vmem:[#allocation6 + $0x6] sm:$0x1] %v5082
        %s5084 = scalar_lea.vmem [#allocation11], 1728
        %v5085 = vld [vmem:[%s5084] sm:$0xf]
        %v5086 = vld [vmem:[%s5084 + $0x4] sm:$0xf]
        %v5087 = vld [vmem:[%s5084 + $0x8] sm:$0xf]
        %v5088 = vld [vmem:[%s5084 + $0xc] sm:$0xf]
        %v5089 = vld [vmem:[%s5084 + $0x10] sm:$0xf]
        %v5090 = vld [vmem:[%s5084 + $0x14] sm:$0xf]
        %v5091 = vld [vmem:[%s5084 + $0x18] sm:$0xf]
        %v5092 = vld [vmem:[%s5084 + $0x1c] sm:$0xf]
        %v5093 = vld [vmem:[%s5084 + $0x20] sm:$0xf]
        %v5094 = vld [vmem:[%s5084 + $0x24] sm:$0xf]
        %v5095 = vld [vmem:[%s5084 + $0x28] sm:$0xf]
        %v5096 = vld [vmem:[%s5084 + $0x2c] sm:$0xf]
        %v5097 = vld [vmem:[%s5084 + $0x30] sm:$0xf]
        %v5098 = vld [vmem:[%s5084 + $0x34] sm:$0xf]
        %v5099 = vld [vmem:[%s5084 + $0x38] sm:$0xf]
        %v5100 = vld [vmem:[%s5084 + $0x3c] sm:$0xf]
        %v5117 = vunpack.c.l.b16 %v5085
        %v5118 = vunpack.c.l.b16 %v5086
        %v5119 = vunpack.c.l.b16 %v5087
        %v5120 = vunpack.c.l.b16 %v5088
        %v5121 = vunpack.c.l.b16 %v5089
        %v5122 = vunpack.c.l.b16 %v5090
        %v5123 = vunpack.c.l.b16 %v5091
        %v5124 = vunpack.c.l.b16 %v5092
        %v5125 = vunpack.c.l.b16 %v5093
        %v5126 = vunpack.c.l.b16 %v5094
        %v5127 = vunpack.c.l.b16 %v5095
        %v5128 = vunpack.c.l.b16 %v5096
        %v5129 = vunpack.c.l.b16 %v5097
        %v5130 = vunpack.c.l.b16 %v5098
        %v5131 = vunpack.c.l.b16 %v5099
        %v5132 = vunpack.c.l.b16 %v5100
        %v5133 = vpack.c.b16 %v5118, %v5117
        %v5134 = vpack.c.b16 %v5120, %v5119
        %v5135 = vpack.c.b16 %v5122, %v5121
        %v5136 = vpack.c.b16 %v5124, %v5123
        %v5137 = vpack.c.b16 %v5126, %v5125
        %v5138 = vpack.c.b16 %v5128, %v5127
        %v5139 = vpack.c.b16 %v5130, %v5129
        %v5140 = vpack.c.b16 %v5132, %v5131
        %5149 = vmatprep.subr.bf16.mxu0 0
        %5150 = vmatpush1.bf16.msra.mxu0 %v5140
        %5151 = vmatprep.subr.bf16.mxu0 0
        %5152 = vmatpush1.bf16.msra.mxu0 %v5139
        %5153 = vmatprep.subr.bf16.mxu0 0
        %5154 = vmatpush1.bf16.msra.mxu0 %v5138
        %5155 = vmatprep.subr.bf16.mxu0 0
        %5156 = vmatpush1.bf16.msra.mxu0 %v5137
        %5157 = vmatprep.subr.bf16.mxu0 0
        %5158 = vmatpush1.bf16.msra.mxu0 %v5136
        %5159 = vmatprep.subr.bf16.mxu0 0
        %5160 = vmatpush1.bf16.msra.mxu0 %v5135
        %5161 = vmatprep.subr.bf16.mxu0 0
        %5162 = vmatpush1.bf16.msra.mxu0 %v5134
        %5163 = vmatprep.subr.bf16.mxu0 0
        %5164 = vmatpush1.bf16.msra.mxu0 %v5133
        %5165 = vmatprep.subr.bf16.mxu0 0
        %5166 = vmatpush2.bf16.msra.mxu0 0
        %5167 = vmatprep.subr.bf16.mxu0 0
        %5168 = vmatpush2.bf16.msra.mxu0 0
        %5169 = vmatprep.subr.bf16.mxu0 0
        %5170 = vmatpush2.bf16.msra.mxu0 0
        %5171 = vmatprep.subr.bf16.mxu0 0
        %5172 = vmatpush2.bf16.msra.mxu0 0
        %5173 = vmatprep.subr.bf16.mxu0 0
        %5174 = vmatpush2.bf16.msra.mxu0 0
        %5175 = vmatprep.subr.bf16.mxu0 0
        %5176 = vmatpush2.bf16.msra.mxu0 0
        %5177 = vmatprep.subr.bf16.mxu0 0
        %5178 = vmatpush2.bf16.msra.mxu0 0
        %5179 = vmatprep.subr.bf16.mxu0 0
        %5180 = vmatpush2.bf16.msra.mxu0 0
        %5181 = vmatprep.mubr.bf16.mxu0 0
        %5182 = vmatmul.mubr.bf16.gmra.mxu0 %v4972
        %v5183 = vpop.f32.mrf.mxu0
        %v5184 = vadd.f32 0.0, %v5183
        %v5185 = vpop.f32.mrf.mxu0
        %v5186 = vpop.f32.mrf.mxu0
        %v5187 = vpop.f32.mrf.mxu0
        %5188 = vdwg.mxu0
        %v5189 = vld [vmem:[#allocation13 + $0x5] sm:$0x1]
        %v5190 = vadd.f32 %v5184, %v5189
        %vm5191 = vcmp.ge.f32.partialorder %v5190, 0.0
        %v5192 = vmul.f32 %v5190, 0.01
        %v5193 = vsel %vm5191, %v5190, %v5192
        %5194 = vst [vmem:[#allocation6 + $0x8] sm:$0x1] %v5193
        %s5195 = scalar_lea.vmem [#allocation11], 1792
        %v5196 = vld [vmem:[%s5195] sm:$0xf]
        %v5197 = vld [vmem:[%s5195 + $0x4] sm:$0xf]
        %v5198 = vld [vmem:[%s5195 + $0x8] sm:$0xf]
        %v5199 = vld [vmem:[%s5195 + $0xc] sm:$0xf]
        %v5200 = vld [vmem:[%s5195 + $0x10] sm:$0xf]
        %v5201 = vld [vmem:[%s5195 + $0x14] sm:$0xf]
        %v5202 = vld [vmem:[%s5195 + $0x18] sm:$0xf]
        %v5203 = vld [vmem:[%s5195 + $0x1c] sm:$0xf]
        %v5204 = vld [vmem:[%s5195 + $0x20] sm:$0xf]
        %v5205 = vld [vmem:[%s5195 + $0x24] sm:$0xf]
        %v5206 = vld [vmem:[%s5195 + $0x28] sm:$0xf]
        %v5207 = vld [vmem:[%s5195 + $0x2c] sm:$0xf]
        %v5208 = vld [vmem:[%s5195 + $0x30] sm:$0xf]
        %v5209 = vld [vmem:[%s5195 + $0x34] sm:$0xf]
        %v5210 = vld [vmem:[%s5195 + $0x38] sm:$0xf]
        %v5211 = vld [vmem:[%s5195 + $0x3c] sm:$0xf]
        %v5228 = vunpack.c.l.b16 %v5196
        %v5229 = vunpack.c.l.b16 %v5197
        %v5230 = vunpack.c.l.b16 %v5198
        %v5231 = vunpack.c.l.b16 %v5199
        %v5232 = vunpack.c.l.b16 %v5200
        %v5233 = vunpack.c.l.b16 %v5201
        %v5234 = vunpack.c.l.b16 %v5202
        %v5235 = vunpack.c.l.b16 %v5203
        %v5236 = vunpack.c.l.b16 %v5204
        %v5237 = vunpack.c.l.b16 %v5205
        %v5238 = vunpack.c.l.b16 %v5206
        %v5239 = vunpack.c.l.b16 %v5207
        %v5240 = vunpack.c.l.b16 %v5208
        %v5241 = vunpack.c.l.b16 %v5209
        %v5242 = vunpack.c.l.b16 %v5210
        %v5243 = vunpack.c.l.b16 %v5211
        %v5244 = vpack.c.b16 %v5229, %v5228
        %v5245 = vpack.c.b16 %v5231, %v5230
        %v5246 = vpack.c.b16 %v5233, %v5232
        %v5247 = vpack.c.b16 %v5235, %v5234
        %v5248 = vpack.c.b16 %v5237, %v5236
        %v5249 = vpack.c.b16 %v5239, %v5238
        %v5250 = vpack.c.b16 %v5241, %v5240
        %v5251 = vpack.c.b16 %v5243, %v5242
        %5260 = vmatprep.subr.bf16.mxu0 0
        %5261 = vmatpush1.bf16.msra.mxu0 %v5251
        %5262 = vmatprep.subr.bf16.mxu0 0
        %5263 = vmatpush1.bf16.msra.mxu0 %v5250
        %5264 = vmatprep.subr.bf16.mxu0 0
        %5265 = vmatpush1.bf16.msra.mxu0 %v5249
        %5266 = vmatprep.subr.bf16.mxu0 0
        %5267 = vmatpush1.bf16.msra.mxu0 %v5248
        %5268 = vmatprep.subr.bf16.mxu0 0
        %5269 = vmatpush1.bf16.msra.mxu0 %v5247
        %5270 = vmatprep.subr.bf16.mxu0 0
        %5271 = vmatpush1.bf16.msra.mxu0 %v5246
        %5272 = vmatprep.subr.bf16.mxu0 0
        %5273 = vmatpush1.bf16.msra.mxu0 %v5245
        %5274 = vmatprep.subr.bf16.mxu0 0
        %5275 = vmatpush1.bf16.msra.mxu0 %v5244
        %5276 = vmatprep.subr.bf16.mxu0 0
        %5277 = vmatpush2.bf16.msra.mxu0 0
        %5278 = vmatprep.subr.bf16.mxu0 0
        %5279 = vmatpush2.bf16.msra.mxu0 0
        %5280 = vmatprep.subr.bf16.mxu0 0
        %5281 = vmatpush2.bf16.msra.mxu0 0
        %5282 = vmatprep.subr.bf16.mxu0 0
        %5283 = vmatpush2.bf16.msra.mxu0 0
        %5284 = vmatprep.subr.bf16.mxu0 0
        %5285 = vmatpush2.bf16.msra.mxu0 0
        %5286 = vmatprep.subr.bf16.mxu0 0
        %5287 = vmatpush2.bf16.msra.mxu0 0
        %5288 = vmatprep.subr.bf16.mxu0 0
        %5289 = vmatpush2.bf16.msra.mxu0 0
        %5290 = vmatprep.subr.bf16.mxu0 0
        %5291 = vmatpush2.bf16.msra.mxu0 0
        %5292 = vmatprep.mubr.bf16.mxu0 0
        %5293 = vmatmul.mubr.bf16.gmra.mxu0 %v4972
        %v5294 = vpop.f32.mrf.mxu0
        %v5295 = vadd.f32 0.0, %v5294
        %v5296 = vpop.f32.mrf.mxu0
        %v5297 = vpop.f32.mrf.mxu0
        %v5298 = vpop.f32.mrf.mxu0
        %5299 = vdwg.mxu0
        %v5300 = vld [vmem:[#allocation13 + $0x6] sm:$0x1]
        %v5301 = vadd.f32 %v5295, %v5300
        %vm5302 = vcmp.ge.f32.partialorder %v5301, 0.0
        %v5303 = vmul.f32 %v5301, 0.01
        %v5304 = vsel %vm5302, %v5301, %v5303
        %5305 = vst [vmem:[#allocation6 + $0x10] sm:$0x1] %v5304
        %s5306 = scalar_lea.vmem [#allocation11], 1856
        %v5307 = vld [vmem:[%s5306] sm:$0xf]
        %v5308 = vld [vmem:[%s5306 + $0x4] sm:$0xf]
        %v5309 = vld [vmem:[%s5306 + $0x8] sm:$0xf]
        %v5310 = vld [vmem:[%s5306 + $0xc] sm:$0xf]
        %v5311 = vld [vmem:[%s5306 + $0x10] sm:$0xf]
        %v5312 = vld [vmem:[%s5306 + $0x14] sm:$0xf]
        %v5313 = vld [vmem:[%s5306 + $0x18] sm:$0xf]
        %v5314 = vld [vmem:[%s5306 + $0x1c] sm:$0xf]
        %v5315 = vld [vmem:[%s5306 + $0x20] sm:$0xf]
        %v5316 = vld [vmem:[%s5306 + $0x24] sm:$0xf]
        %v5317 = vld [vmem:[%s5306 + $0x28] sm:$0xf]
        %v5318 = vld [vmem:[%s5306 + $0x2c] sm:$0xf]
        %v5319 = vld [vmem:[%s5306 + $0x30] sm:$0xf]
        %v5320 = vld [vmem:[%s5306 + $0x34] sm:$0xf]
        %v5321 = vld [vmem:[%s5306 + $0x38] sm:$0xf]
        %v5322 = vld [vmem:[%s5306 + $0x3c] sm:$0xf]
        %v5339 = vunpack.c.l.b16 %v5307
        %v5340 = vunpack.c.l.b16 %v5308
        %v5341 = vunpack.c.l.b16 %v5309
        %v5342 = vunpack.c.l.b16 %v5310
        %v5343 = vunpack.c.l.b16 %v5311
        %v5344 = vunpack.c.l.b16 %v5312
        %v5345 = vunpack.c.l.b16 %v5313
        %v5346 = vunpack.c.l.b16 %v5314
        %v5347 = vunpack.c.l.b16 %v5315
        %v5348 = vunpack.c.l.b16 %v5316
        %v5349 = vunpack.c.l.b16 %v5317
        %v5350 = vunpack.c.l.b16 %v5318
        %v5351 = vunpack.c.l.b16 %v5319
        %v5352 = vunpack.c.l.b16 %v5320
        %v5353 = vunpack.c.l.b16 %v5321
        %v5354 = vunpack.c.l.b16 %v5322
        %v5355 = vpack.c.b16 %v5340, %v5339
        %v5356 = vpack.c.b16 %v5342, %v5341
        %v5357 = vpack.c.b16 %v5344, %v5343
        %v5358 = vpack.c.b16 %v5346, %v5345
        %v5359 = vpack.c.b16 %v5348, %v5347
        %v5360 = vpack.c.b16 %v5350, %v5349
        %v5361 = vpack.c.b16 %v5352, %v5351
        %v5362 = vpack.c.b16 %v5354, %v5353
        %5371 = vmatprep.subr.bf16.mxu0 0
        %5372 = vmatpush1.bf16.msra.mxu0 %v5362
        %5373 = vmatprep.subr.bf16.mxu0 0
        %5374 = vmatpush1.bf16.msra.mxu0 %v5361
        %5375 = vmatprep.subr.bf16.mxu0 0
        %5376 = vmatpush1.bf16.msra.mxu0 %v5360
        %5377 = vmatprep.subr.bf16.mxu0 0
        %5378 = vmatpush1.bf16.msra.mxu0 %v5359
        %5379 = vmatprep.subr.bf16.mxu0 0
        %5380 = vmatpush1.bf16.msra.mxu0 %v5358
        %5381 = vmatprep.subr.bf16.mxu0 0
        %5382 = vmatpush1.bf16.msra.mxu0 %v5357
        %5383 = vmatprep.subr.bf16.mxu0 0
        %5384 = vmatpush1.bf16.msra.mxu0 %v5356
        %5385 = vmatprep.subr.bf16.mxu0 0
        %5386 = vmatpush1.bf16.msra.mxu0 %v5355
        %5387 = vmatprep.subr.bf16.mxu0 0
        %5388 = vmatpush2.bf16.msra.mxu0 0
        %5389 = vmatprep.subr.bf16.mxu0 0
        %5390 = vmatpush2.bf16.msra.mxu0 0
        %5391 = vmatprep.subr.bf16.mxu0 0
        %5392 = vmatpush2.bf16.msra.mxu0 0
        %5393 = vmatprep.subr.bf16.mxu0 0
        %5394 = vmatpush2.bf16.msra.mxu0 0
        %5395 = vmatprep.subr.bf16.mxu0 0
        %5396 = vmatpush2.bf16.msra.mxu0 0
        %5397 = vmatprep.subr.bf16.mxu0 0
        %5398 = vmatpush2.bf16.msra.mxu0 0
        %5399 = vmatprep.subr.bf16.mxu0 0
        %5400 = vmatpush2.bf16.msra.mxu0 0
        %5401 = vmatprep.subr.bf16.mxu0 0
        %5402 = vmatpush2.bf16.msra.mxu0 0
        %5403 = vmatprep.mubr.bf16.mxu0 0
        %5404 = vmatmul.mubr.bf16.gmra.mxu0 %v4972
        %v5405 = vpop.f32.mrf.mxu0
        %v5406 = vadd.f32 0.0, %v5405
        %v5407 = vpop.f32.mrf.mxu0
        %v5408 = vpop.f32.mrf.mxu0
        %v5409 = vpop.f32.mrf.mxu0
        %5410 = vdwg.mxu0
        %v5411 = vld [vmem:[#allocation13 + $0x7] sm:$0x1]
        %v5412 = vadd.f32 %v5406, %v5411
        %vm5413 = vcmp.ge.f32.partialorder %v5412, 0.0
        %v5414 = vmul.f32 %v5412, 0.01
        %v5415 = vsel %vm5413, %v5412, %v5414
        %5416 = vst [vmem:[#allocation6 + $0x12] sm:$0x1] %v5415
        %v5417 = vld [vmem:[#allocation13 + $0x8] sm:$0x1]
        %v5418 = vlaneseq
        %v5419 = vshrl.u32 %v5418, 7
        %v5420 = vsub.s32 0, %v5419
        %v5421 = vrot.slane %v5417, %v5420
        %v5422 = vld [vmem:[#allocation6] sm:$0xff]
        %v5423 = vld [vmem:[#allocation6 + $0x8] sm:$0xff]
        %v5424 = vld [vmem:[#allocation6 + $0x10] sm:$0xff]
        %v5425 = vpack.c.bf16 %v5423, %v5422
        %v5426 = vpack.c.bf16 %v5424, %v5424
        %s5427 = scalar_lea.vmem [#allocation11], 1920
        %v5428 = vld [vmem:[%s5427] sm:$0xf]
        %v5429 = vld [vmem:[%s5427 + $0x4] sm:$0xf]
        %v5430 = vld [vmem:[%s5427 + $0x8] sm:$0xf]
        %v5431 = vld [vmem:[%s5427 + $0xc] sm:$0xf]
        %v5432 = vld [vmem:[%s5427 + $0x10] sm:$0xf]
        %v5433 = vld [vmem:[%s5427 + $0x14] sm:$0xf]
        %v5434 = vld [vmem:[%s5427 + $0x18] sm:$0xf]
        %v5435 = vld [vmem:[%s5427 + $0x1c] sm:$0xf]
        %v5436 = vld [vmem:[%s5427 + $0x20] sm:$0xf]
        %v5437 = vld [vmem:[%s5427 + $0x24] sm:$0xf]
        %v5438 = vld [vmem:[%s5427 + $0x28] sm:$0xf]
        %v5439 = vld [vmem:[%s5427 + $0x2c] sm:$0xf]
        %v5440 = vld [vmem:[%s5427 + $0x30] sm:$0xf]
        %v5441 = vld [vmem:[%s5427 + $0x34] sm:$0xf]
        %v5442 = vld [vmem:[%s5427 + $0x38] sm:$0xf]
        %v5443 = vld [vmem:[%s5427 + $0x3c] sm:$0xf]
        %v5460 = vunpack.c.l.b16 %v5428
        %v5461 = vunpack.c.l.b16 %v5429
        %v5462 = vunpack.c.l.b16 %v5430
        %v5463 = vunpack.c.l.b16 %v5431
        %v5464 = vunpack.c.l.b16 %v5432
        %v5465 = vunpack.c.l.b16 %v5433
        %v5466 = vunpack.c.l.b16 %v5434
        %v5467 = vunpack.c.l.b16 %v5435
        %v5468 = vunpack.c.l.b16 %v5436
        %v5469 = vunpack.c.l.b16 %v5437
        %v5470 = vunpack.c.l.b16 %v5438
        %v5471 = vunpack.c.l.b16 %v5439
        %v5472 = vunpack.c.l.b16 %v5440
        %v5473 = vunpack.c.l.b16 %v5441
        %v5474 = vunpack.c.l.b16 %v5442
        %v5475 = vunpack.c.l.b16 %v5443
        %v5476 = vpack.c.b16 %v5461, %v5460
        %v5477 = vpack.c.b16 %v5463, %v5462
        %v5478 = vpack.c.b16 %v5465, %v5464
        %v5479 = vpack.c.b16 %v5467, %v5466
        %v5480 = vpack.c.b16 %v5469, %v5468
        %v5481 = vpack.c.b16 %v5471, %v5470
        %v5482 = vpack.c.b16 %v5473, %v5472
        %v5483 = vpack.c.b16 %v5475, %v5474
        %5492 = vmatprep.subr.bf16.mxu0 0
        %5493 = vmatpush1.bf16.msra.mxu0 %v5483
        %5494 = vmatprep.subr.bf16.mxu0 0
        %5495 = vmatpush1.bf16.msra.mxu0 %v5482
        %5496 = vmatprep.subr.bf16.mxu0 0
        %5497 = vmatpush1.bf16.msra.mxu0 %v5481
        %5498 = vmatprep.subr.bf16.mxu0 0
        %5499 = vmatpush1.bf16.msra.mxu0 %v5480
        %5500 = vmatprep.subr.bf16.mxu0 0
        %5501 = vmatpush1.bf16.msra.mxu0 %v5479
        %5502 = vmatprep.subr.bf16.mxu0 0
        %5503 = vmatpush1.bf16.msra.mxu0 %v5478
        %5504 = vmatprep.subr.bf16.mxu0 0
        %5505 = vmatpush1.bf16.msra.mxu0 %v5477
        %5506 = vmatprep.subr.bf16.mxu0 0
        %5507 = vmatpush1.bf16.msra.mxu0 %v5476
        %5508 = vmatprep.subr.bf16.mxu0 0
        %5509 = vmatpush2.bf16.msra.mxu0 0
        %5510 = vmatprep.subr.bf16.mxu0 0
        %5511 = vmatpush2.bf16.msra.mxu0 0
        %5512 = vmatprep.subr.bf16.mxu0 0
        %5513 = vmatpush2.bf16.msra.mxu0 0
        %5514 = vmatprep.subr.bf16.mxu0 0
        %5515 = vmatpush2.bf16.msra.mxu0 0
        %5516 = vmatprep.subr.bf16.mxu0 0
        %5517 = vmatpush2.bf16.msra.mxu0 0
        %5518 = vmatprep.subr.bf16.mxu0 0
        %5519 = vmatpush2.bf16.msra.mxu0 0
        %5520 = vmatprep.subr.bf16.mxu0 0
        %5521 = vmatpush2.bf16.msra.mxu0 0
        %5522 = vmatprep.subr.bf16.mxu0 0
        %5523 = vmatpush2.bf16.msra.mxu0 0
        %5524 = vmatprep.mubr.bf16.mxu0 0
        %5525 = vmatmul.mubr.bf16.gmra.mxu0 %v5425
        %v5526 = vpop.f32.mrf.mxu0
        %v5527 = vadd.f32 0.0, %v5526
        %v5528 = vpop.f32.mrf.mxu0
        %v5529 = vpop.f32.mrf.mxu0
        %v5530 = vadd.f32 0.0, %v5529
        %v5531 = vpop.f32.mrf.mxu0
        %5532 = vmatprep.mubr.bf16.mxu0 0
        %5533 = vmatmul.mubr.bf16.gmra.mxu0 %v5426
        %v5534 = vpop.f32.mrf.mxu0
        %v5535 = vadd.f32 0.0, %v5534
        %v5536 = vpop.f32.mrf.mxu0
        %v5537 = vpop.f32.mrf.mxu0
        %v5538 = vpop.f32.mrf.mxu0
        %5539 = vdwg.mxu0
        %v5540 = vadd.f32 %v5421, %v5527
        %v5541 = vadd.f32 %v5421, %v5530
        %v5542 = vadd.f32 %v5421, %v5535
        %v5543 = vld [vmem:[#allocation6 + $0x1] sm:$0xff]
        %v5544 = vld [vmem:[#allocation6 + $0x9] sm:$0xff]
        %v5545 = vld [vmem:[#allocation6 + $0x11] sm:$0xff]
        %v5546 = vpack.c.bf16 %v5544, %v5543
        %v5547 = vpack.c.bf16 %v5545, %v5545
        %s5548 = scalar_lea.vmem [#allocation11], 1984
        %v5549 = vld [vmem:[%s5548] sm:$0xf]
        %v5550 = vld [vmem:[%s5548 + $0x4] sm:$0xf]
        %v5551 = vld [vmem:[%s5548 + $0x8] sm:$0xf]
        %v5552 = vld [vmem:[%s5548 + $0xc] sm:$0xf]
        %v5553 = vld [vmem:[%s5548 + $0x10] sm:$0xf]
        %v5554 = vld [vmem:[%s5548 + $0x14] sm:$0xf]
        %v5555 = vld [vmem:[%s5548 + $0x18] sm:$0xf]
        %v5556 = vld [vmem:[%s5548 + $0x1c] sm:$0xf]
        %v5557 = vld [vmem:[%s5548 + $0x20] sm:$0xf]
        %v5558 = vld [vmem:[%s5548 + $0x24] sm:$0xf]
        %v5559 = vld [vmem:[%s5548 + $0x28] sm:$0xf]
        %v5560 = vld [vmem:[%s5548 + $0x2c] sm:$0xf]
        %v5561 = vld [vmem:[%s5548 + $0x30] sm:$0xf]
        %v5562 = vld [vmem:[%s5548 + $0x34] sm:$0xf]
        %v5563 = vld [vmem:[%s5548 + $0x38] sm:$0xf]
        %v5564 = vld [vmem:[%s5548 + $0x3c] sm:$0xf]
        %v5581 = vunpack.c.l.b16 %v5549
        %v5582 = vunpack.c.l.b16 %v5550
        %v5583 = vunpack.c.l.b16 %v5551
        %v5584 = vunpack.c.l.b16 %v5552
        %v5585 = vunpack.c.l.b16 %v5553
        %v5586 = vunpack.c.l.b16 %v5554
        %v5587 = vunpack.c.l.b16 %v5555
        %v5588 = vunpack.c.l.b16 %v5556
        %v5589 = vunpack.c.l.b16 %v5557
        %v5590 = vunpack.c.l.b16 %v5558
        %v5591 = vunpack.c.l.b16 %v5559
        %v5592 = vunpack.c.l.b16 %v5560
        %v5593 = vunpack.c.l.b16 %v5561
        %v5594 = vunpack.c.l.b16 %v5562
        %v5595 = vunpack.c.l.b16 %v5563
        %v5596 = vunpack.c.l.b16 %v5564
        %v5597 = vpack.c.b16 %v5582, %v5581
        %v5598 = vpack.c.b16 %v5584, %v5583
        %v5599 = vpack.c.b16 %v5586, %v5585
        %v5600 = vpack.c.b16 %v5588, %v5587
        %v5601 = vpack.c.b16 %v5590, %v5589
        %v5602 = vpack.c.b16 %v5592, %v5591
        %v5603 = vpack.c.b16 %v5594, %v5593
        %v5604 = vpack.c.b16 %v5596, %v5595
        %5613 = vmatprep.subr.bf16.mxu0 0
        %5614 = vmatpush1.bf16.msra.mxu0 %v5604
        %5615 = vmatprep.subr.bf16.mxu0 0
        %5616 = vmatpush1.bf16.msra.mxu0 %v5603
        %5617 = vmatprep.subr.bf16.mxu0 0
        %5618 = vmatpush1.bf16.msra.mxu0 %v5602
        %5619 = vmatprep.subr.bf16.mxu0 0
        %5620 = vmatpush1.bf16.msra.mxu0 %v5601
        %5621 = vmatprep.subr.bf16.mxu0 0
        %5622 = vmatpush1.bf16.msra.mxu0 %v5600
        %5623 = vmatprep.subr.bf16.mxu0 0
        %5624 = vmatpush1.bf16.msra.mxu0 %v5599
        %5625 = vmatprep.subr.bf16.mxu0 0
        %5626 = vmatpush1.bf16.msra.mxu0 %v5598
        %5627 = vmatprep.subr.bf16.mxu0 0
        %5628 = vmatpush1.bf16.msra.mxu0 %v5597
        %5629 = vmatprep.subr.bf16.mxu0 0
        %5630 = vmatpush2.bf16.msra.mxu0 0
        %5631 = vmatprep.subr.bf16.mxu0 0
        %5632 = vmatpush2.bf16.msra.mxu0 0
        %5633 = vmatprep.subr.bf16.mxu0 0
        %5634 = vmatpush2.bf16.msra.mxu0 0
        %5635 = vmatprep.subr.bf16.mxu0 0
        %5636 = vmatpush2.bf16.msra.mxu0 0
        %5637 = vmatprep.subr.bf16.mxu0 0
        %5638 = vmatpush2.bf16.msra.mxu0 0
        %5639 = vmatprep.subr.bf16.mxu0 0
        %5640 = vmatpush2.bf16.msra.mxu0 0
        %5641 = vmatprep.subr.bf16.mxu0 0
        %5642 = vmatpush2.bf16.msra.mxu0 0
        %5643 = vmatprep.subr.bf16.mxu0 0
        %5644 = vmatpush2.bf16.msra.mxu0 0
        %5645 = vmatprep.mubr.bf16.mxu0 0
        %5646 = vmatmul.mubr.bf16.gmra.mxu0 %v5546
        %v5647 = vpop.f32.mrf.mxu0
        %v5648 = vadd.f32 0.0, %v5647
        %v5649 = vpop.f32.mrf.mxu0
        %v5650 = vpop.f32.mrf.mxu0
        %v5651 = vadd.f32 0.0, %v5650
        %v5652 = vpop.f32.mrf.mxu0
        %5653 = vmatprep.mubr.bf16.mxu0 0
        %5654 = vmatmul.mubr.bf16.gmra.mxu0 %v5547
        %v5655 = vpop.f32.mrf.mxu0
        %v5656 = vadd.f32 0.0, %v5655
        %v5657 = vpop.f32.mrf.mxu0
        %v5658 = vpop.f32.mrf.mxu0
        %v5659 = vpop.f32.mrf.mxu0
        %5660 = vdwg.mxu0
        %v5661 = vadd.f32 %v5540, %v5648
        %v5662 = vadd.f32 %v5541, %v5651
        %v5663 = vadd.f32 %v5542, %v5656
        %v5664 = vld [vmem:[#allocation6 + $0x5] sm:$0xff]
        %v5665 = vld [vmem:[#allocation6 + $0xd] sm:$0xff]
        %v5666 = vld [vmem:[#allocation6 + $0x15] sm:$0xff]
        %v5667 = vpack.c.bf16 %v5665, %v5664
        %v5668 = vpack.c.bf16 %v5666, %v5666
        %s5669 = scalar_lea.vmem [#allocation11], 2048
        %v5670 = vld [vmem:[%s5669] sm:$0xf]
        %v5671 = vld [vmem:[%s5669 + $0x4] sm:$0xf]
        %v5672 = vld [vmem:[%s5669 + $0x8] sm:$0xf]
        %v5673 = vld [vmem:[%s5669 + $0xc] sm:$0xf]
        %v5674 = vld [vmem:[%s5669 + $0x10] sm:$0xf]
        %v5675 = vld [vmem:[%s5669 + $0x14] sm:$0xf]
        %v5676 = vld [vmem:[%s5669 + $0x18] sm:$0xf]
        %v5677 = vld [vmem:[%s5669 + $0x1c] sm:$0xf]
        %v5678 = vld [vmem:[%s5669 + $0x20] sm:$0xf]
        %v5679 = vld [vmem:[%s5669 + $0x24] sm:$0xf]
        %v5680 = vld [vmem:[%s5669 + $0x28] sm:$0xf]
        %v5681 = vld [vmem:[%s5669 + $0x2c] sm:$0xf]
        %v5682 = vld [vmem:[%s5669 + $0x30] sm:$0xf]
        %v5683 = vld [vmem:[%s5669 + $0x34] sm:$0xf]
        %v5684 = vld [vmem:[%s5669 + $0x38] sm:$0xf]
        %v5685 = vld [vmem:[%s5669 + $0x3c] sm:$0xf]
        %v5702 = vunpack.c.l.b16 %v5670
        %v5703 = vunpack.c.l.b16 %v5671
        %v5704 = vunpack.c.l.b16 %v5672
        %v5705 = vunpack.c.l.b16 %v5673
        %v5706 = vunpack.c.l.b16 %v5674
        %v5707 = vunpack.c.l.b16 %v5675
        %v5708 = vunpack.c.l.b16 %v5676
        %v5709 = vunpack.c.l.b16 %v5677
        %v5710 = vunpack.c.l.b16 %v5678
        %v5711 = vunpack.c.l.b16 %v5679
        %v5712 = vunpack.c.l.b16 %v5680
        %v5713 = vunpack.c.l.b16 %v5681
        %v5714 = vunpack.c.l.b16 %v5682
        %v5715 = vunpack.c.l.b16 %v5683
        %v5716 = vunpack.c.l.b16 %v5684
        %v5717 = vunpack.c.l.b16 %v5685
        %v5718 = vpack.c.b16 %v5703, %v5702
        %v5719 = vpack.c.b16 %v5705, %v5704
        %v5720 = vpack.c.b16 %v5707, %v5706
        %v5721 = vpack.c.b16 %v5709, %v5708
        %v5722 = vpack.c.b16 %v5711, %v5710
        %v5723 = vpack.c.b16 %v5713, %v5712
        %v5724 = vpack.c.b16 %v5715, %v5714
        %v5725 = vpack.c.b16 %v5717, %v5716
        %5734 = vmatprep.subr.bf16.mxu0 0
        %5735 = vmatpush1.bf16.msra.mxu0 %v5725
        %5736 = vmatprep.subr.bf16.mxu0 0
        %5737 = vmatpush1.bf16.msra.mxu0 %v5724
        %5738 = vmatprep.subr.bf16.mxu0 0
        %5739 = vmatpush1.bf16.msra.mxu0 %v5723
        %5740 = vmatprep.subr.bf16.mxu0 0
        %5741 = vmatpush1.bf16.msra.mxu0 %v5722
        %5742 = vmatprep.subr.bf16.mxu0 0
        %5743 = vmatpush1.bf16.msra.mxu0 %v5721
        %5744 = vmatprep.subr.bf16.mxu0 0
        %5745 = vmatpush1.bf16.msra.mxu0 %v5720
        %5746 = vmatprep.subr.bf16.mxu0 0
        %5747 = vmatpush1.bf16.msra.mxu0 %v5719
        %5748 = vmatprep.subr.bf16.mxu0 0
        %5749 = vmatpush1.bf16.msra.mxu0 %v5718
        %5750 = vmatprep.subr.bf16.mxu0 0
        %5751 = vmatpush2.bf16.msra.mxu0 0
        %5752 = vmatprep.subr.bf16.mxu0 0
        %5753 = vmatpush2.bf16.msra.mxu0 0
        %5754 = vmatprep.subr.bf16.mxu0 0
        %5755 = vmatpush2.bf16.msra.mxu0 0
        %5756 = vmatprep.subr.bf16.mxu0 0
        %5757 = vmatpush2.bf16.msra.mxu0 0
        %5758 = vmatprep.subr.bf16.mxu0 0
        %5759 = vmatpush2.bf16.msra.mxu0 0
        %5760 = vmatprep.subr.bf16.mxu0 0
        %5761 = vmatpush2.bf16.msra.mxu0 0
        %5762 = vmatprep.subr.bf16.mxu0 0
        %5763 = vmatpush2.bf16.msra.mxu0 0
        %5764 = vmatprep.subr.bf16.mxu0 0
        %5765 = vmatpush2.bf16.msra.mxu0 0
        %5766 = vmatprep.mubr.bf16.mxu0 0
        %5767 = vmatmul.mubr.bf16.gmra.mxu0 %v5667
        %v5768 = vpop.f32.mrf.mxu0
        %v5769 = vadd.f32 0.0, %v5768
        %v5770 = vpop.f32.mrf.mxu0
        %v5771 = vpop.f32.mrf.mxu0
        %v5772 = vadd.f32 0.0, %v5771
        %v5773 = vpop.f32.mrf.mxu0
        %5774 = vmatprep.mubr.bf16.mxu0 0
        %5775 = vmatmul.mubr.bf16.gmra.mxu0 %v5668
        %v5776 = vpop.f32.mrf.mxu0
        %v5777 = vadd.f32 0.0, %v5776
        %v5778 = vpop.f32.mrf.mxu0
        %v5779 = vpop.f32.mrf.mxu0
        %v5780 = vpop.f32.mrf.mxu0
        %5781 = vdwg.mxu0
        %v5782 = vadd.f32 %v5661, %v5769
        %v5783 = vadd.f32 %v5662, %v5772
        %v5784 = vadd.f32 %v5663, %v5777
        %v5785 = vld [vmem:[#allocation6 + $0x6] sm:$0xff]
        %v5786 = vld [vmem:[#allocation6 + $0xe] sm:$0xff]
        %v5787 = vld [vmem:[#allocation6 + $0x16] sm:$0xff]
        %v5788 = vpack.c.bf16 %v5786, %v5785
        %v5789 = vpack.c.bf16 %v5787, %v5787
        %s5790 = scalar_lea.vmem [#allocation11], 2112
        %v5791 = vld [vmem:[%s5790] sm:$0xf]
        %v5792 = vld [vmem:[%s5790 + $0x4] sm:$0xf]
        %v5793 = vld [vmem:[%s5790 + $0x8] sm:$0xf]
        %v5794 = vld [vmem:[%s5790 + $0xc] sm:$0xf]
        %v5795 = vld [vmem:[%s5790 + $0x10] sm:$0xf]
        %v5796 = vld [vmem:[%s5790 + $0x14] sm:$0xf]
        %v5797 = vld [vmem:[%s5790 + $0x18] sm:$0xf]
        %v5798 = vld [vmem:[%s5790 + $0x1c] sm:$0xf]
        %v5799 = vld [vmem:[%s5790 + $0x20] sm:$0xf]
        %v5800 = vld [vmem:[%s5790 + $0x24] sm:$0xf]
        %v5801 = vld [vmem:[%s5790 + $0x28] sm:$0xf]
        %v5802 = vld [vmem:[%s5790 + $0x2c] sm:$0xf]
        %v5803 = vld [vmem:[%s5790 + $0x30] sm:$0xf]
        %v5804 = vld [vmem:[%s5790 + $0x34] sm:$0xf]
        %v5805 = vld [vmem:[%s5790 + $0x38] sm:$0xf]
        %v5806 = vld [vmem:[%s5790 + $0x3c] sm:$0xf]
        %v5823 = vunpack.c.l.b16 %v5791
        %v5824 = vunpack.c.l.b16 %v5792
        %v5825 = vunpack.c.l.b16 %v5793
        %v5826 = vunpack.c.l.b16 %v5794
        %v5827 = vunpack.c.l.b16 %v5795
        %v5828 = vunpack.c.l.b16 %v5796
        %v5829 = vunpack.c.l.b16 %v5797
        %v5830 = vunpack.c.l.b16 %v5798
        %v5831 = vunpack.c.l.b16 %v5799
        %v5832 = vunpack.c.l.b16 %v5800
        %v5833 = vunpack.c.l.b16 %v5801
        %v5834 = vunpack.c.l.b16 %v5802
        %v5835 = vunpack.c.l.b16 %v5803
        %v5836 = vunpack.c.l.b16 %v5804
        %v5837 = vunpack.c.l.b16 %v5805
        %v5838 = vunpack.c.l.b16 %v5806
        %v5839 = vpack.c.b16 %v5824, %v5823
        %v5840 = vpack.c.b16 %v5826, %v5825
        %v5841 = vpack.c.b16 %v5828, %v5827
        %v5842 = vpack.c.b16 %v5830, %v5829
        %v5843 = vpack.c.b16 %v5832, %v5831
        %v5844 = vpack.c.b16 %v5834, %v5833
        %v5845 = vpack.c.b16 %v5836, %v5835
        %v5846 = vpack.c.b16 %v5838, %v5837
        %5855 = vmatprep.subr.bf16.mxu0 0
        %5856 = vmatpush1.bf16.msra.mxu0 %v5846
        %5857 = vmatprep.subr.bf16.mxu0 0
        %5858 = vmatpush1.bf16.msra.mxu0 %v5845
        %5859 = vmatprep.subr.bf16.mxu0 0
        %5860 = vmatpush1.bf16.msra.mxu0 %v5844
        %5861 = vmatprep.subr.bf16.mxu0 0
        %5862 = vmatpush1.bf16.msra.mxu0 %v5843
        %5863 = vmatprep.subr.bf16.mxu0 0
        %5864 = vmatpush1.bf16.msra.mxu0 %v5842
        %5865 = vmatprep.subr.bf16.mxu0 0
        %5866 = vmatpush1.bf16.msra.mxu0 %v5841
        %5867 = vmatprep.subr.bf16.mxu0 0
        %5868 = vmatpush1.bf16.msra.mxu0 %v5840
        %5869 = vmatprep.subr.bf16.mxu0 0
        %5870 = vmatpush1.bf16.msra.mxu0 %v5839
        %5871 = vmatprep.subr.bf16.mxu0 0
        %5872 = vmatpush2.bf16.msra.mxu0 0
        %5873 = vmatprep.subr.bf16.mxu0 0
        %5874 = vmatpush2.bf16.msra.mxu0 0
        %5875 = vmatprep.subr.bf16.mxu0 0
        %5876 = vmatpush2.bf16.msra.mxu0 0
        %5877 = vmatprep.subr.bf16.mxu0 0
        %5878 = vmatpush2.bf16.msra.mxu0 0
        %5879 = vmatprep.subr.bf16.mxu0 0
        %5880 = vmatpush2.bf16.msra.mxu0 0
        %5881 = vmatprep.subr.bf16.mxu0 0
        %5882 = vmatpush2.bf16.msra.mxu0 0
        %5883 = vmatprep.subr.bf16.mxu0 0
        %5884 = vmatpush2.bf16.msra.mxu0 0
        %5885 = vmatprep.subr.bf16.mxu0 0
        %5886 = vmatpush2.bf16.msra.mxu0 0
        %5887 = vmatprep.mubr.bf16.mxu0 0
        %5888 = vmatmul.mubr.bf16.gmra.mxu0 %v5788
        %v5889 = vpop.f32.mrf.mxu0
        %v5890 = vadd.f32 0.0, %v5889
        %v5891 = vpop.f32.mrf.mxu0
        %v5892 = vpop.f32.mrf.mxu0
        %v5893 = vadd.f32 0.0, %v5892
        %v5894 = vpop.f32.mrf.mxu0
        %5895 = vmatprep.mubr.bf16.mxu0 0
        %5896 = vmatmul.mubr.bf16.gmra.mxu0 %v5789
        %v5897 = vpop.f32.mrf.mxu0
        %v5898 = vadd.f32 0.0, %v5897
        %v5899 = vpop.f32.mrf.mxu0
        %v5900 = vpop.f32.mrf.mxu0
        %v5901 = vpop.f32.mrf.mxu0
        %5902 = vdwg.mxu0
        %v5903 = vadd.f32 %v5782, %v5890
        %v5904 = vadd.f32 %v5783, %v5893
        %v5905 = vadd.f32 %v5784, %v5898
        %vm5906 = vcmp.ge.f32.partialorder %v5903, 0.0
        %vm5907 = vcmp.ge.f32.partialorder %v5904, 0.0
        %vm5908 = vcmp.ge.f32.partialorder %v5905, 0.0
        %v5909 = vmul.f32 %v5903, 0.01
        %v5910 = vmul.f32 %v5904, 0.01
        %v5911 = vmul.f32 %v5905, 0.01
        %v5912 = vsel %vm5906, %v5903, %v5909
        %v5913 = vsel %vm5907, %v5904, %v5910
        %v5914 = vsel %vm5908, %v5905, %v5911
        %5915 = vst [vmem:[#allocation7] sm:$0xff] %v5912
        %5916 = vst [vmem:[#allocation7 + $0x8] sm:$0xff] %v5913
        %5917 = vst [vmem:[#allocation7 + $0x10] sm:$0xff] %v5914
        %5918 = vst [vmem:[#allocation8] sm:$0xff] 0.0
        %5919 = vst [vmem:[#allocation8 + $0x8] sm:$0xff] 0.0
        %5920 = vst [vmem:[#allocation8 + $0x10] sm:$0xff] 0.0
        %5921 = vst [vmem:[#allocation8 + $0x18] sm:$0xff] 0.0
        %5922 = vst [vmem:[#allocation8 + $0x20] sm:$0xff] 0.0
        %5923 = vst [vmem:[#allocation8 + $0x28] sm:$0xff] 0.0
        %5924 = vst [vmem:[#allocation8 + $0x30] sm:$0xff] 0.0
        %5925 = vst [vmem:[#allocation8 + $0x38] sm:$0xff] 0.0
        %5926 = vst [vmem:[#allocation8 + $0x40] sm:$0xff] 0.0
        %v5927 = vld [vmem:[#allocation7] sm:$0xf]
        %5928 = vst [vmem:[#allocation8 + $0x12] sm:$0xf] %v5927
        %v5929 = vld [vmem:[#allocation7 + $0x5] sm:$0xf]
        %5930 = vst [vmem:[#allocation8 + $0x1a] sm:$0xf] %v5929
        %v5931 = vld [vmem:[#allocation7 + $0xa] sm:$0xf]
        %5932 = vst [vmem:[#allocation8 + $0x22] sm:$0xf] %v5931
        %v5933 = vld [vmem:[#allocation7 + $0xf] sm:$0xf]
        %5934 = vst [vmem:[#allocation8 + $0x2a] sm:$0xf] %v5933
        %v5935 = vld [vmem:[#allocation13 + $0x9] sm:$0x1]
        %v5936 = vlaneseq
        %v5937 = vshrl.u32 %v5936, 7
        %v5938 = vsub.s32 0, %v5937
        %v5939 = vrot.slane %v5935, %v5938
        %v5940 = vld [vmem:[#allocation8] sm:$0xff]
        %v5941 = vld [vmem:[#allocation8 + $0x8] sm:$0xff]
        %v5942 = vld [vmem:[#allocation8 + $0x10] sm:$0xff]
        %v5943 = vld [vmem:[#allocation8 + $0x18] sm:$0xff]
        %v5944 = vld [vmem:[#allocation8 + $0x20] sm:$0xff]
        %v5945 = vld [vmem:[#allocation8 + $0x28] sm:$0xff]
        %v5946 = vpack.c.bf16 %v5941, %v5940
        %v5947 = vpack.c.bf16 %v5943, %v5942
        %v5948 = vpack.c.bf16 %v5945, %v5944
        %s5949 = scalar_lea.vmem [#allocation11], 2176
        %v5950 = vld [vmem:[%s5949] sm:$0xf]
        %v5951 = vld [vmem:[%s5949 + $0x4] sm:$0xf]
        %v5952 = vld [vmem:[%s5949 + $0x8] sm:$0xf]
        %v5953 = vld [vmem:[%s5949 + $0xc] sm:$0xf]
        %v5954 = vld [vmem:[%s5949 + $0x10] sm:$0xf]
        %v5955 = vld [vmem:[%s5949 + $0x14] sm:$0xf]
        %v5956 = vld [vmem:[%s5949 + $0x18] sm:$0xf]
        %v5957 = vld [vmem:[%s5949 + $0x1c] sm:$0xf]
        %v5958 = vld [vmem:[%s5949 + $0x20] sm:$0xf]
        %v5959 = vld [vmem:[%s5949 + $0x24] sm:$0xf]
        %v5960 = vld [vmem:[%s5949 + $0x28] sm:$0xf]
        %v5961 = vld [vmem:[%s5949 + $0x2c] sm:$0xf]
        %v5962 = vld [vmem:[%s5949 + $0x30] sm:$0xf]
        %v5963 = vld [vmem:[%s5949 + $0x34] sm:$0xf]
        %v5964 = vld [vmem:[%s5949 + $0x38] sm:$0xf]
        %v5965 = vld [vmem:[%s5949 + $0x3c] sm:$0xf]
        %v5982 = vunpack.c.l.b16 %v5950
        %v5983 = vunpack.c.l.b16 %v5951
        %v5984 = vunpack.c.l.b16 %v5952
        %v5985 = vunpack.c.l.b16 %v5953
        %v5986 = vunpack.c.l.b16 %v5954
        %v5987 = vunpack.c.l.b16 %v5955
        %v5988 = vunpack.c.l.b16 %v5956
        %v5989 = vunpack.c.l.b16 %v5957
        %v5990 = vunpack.c.l.b16 %v5958
        %v5991 = vunpack.c.l.b16 %v5959
        %v5992 = vunpack.c.l.b16 %v5960
        %v5993 = vunpack.c.l.b16 %v5961
        %v5994 = vunpack.c.l.b16 %v5962
        %v5995 = vunpack.c.l.b16 %v5963
        %v5996 = vunpack.c.l.b16 %v5964
        %v5997 = vunpack.c.l.b16 %v5965
        %v5998 = vpack.c.b16 %v5983, %v5982
        %v5999 = vpack.c.b16 %v5985, %v5984
        %v6000 = vpack.c.b16 %v5987, %v5986
        %v6001 = vpack.c.b16 %v5989, %v5988
        %v6002 = vpack.c.b16 %v5991, %v5990
        %v6003 = vpack.c.b16 %v5993, %v5992
        %v6004 = vpack.c.b16 %v5995, %v5994
        %v6005 = vpack.c.b16 %v5997, %v5996
        %6014 = vmatprep.subr.bf16.mxu0 0
        %6015 = vmatpush1.bf16.msra.mxu0 %v6005
        %6016 = vmatprep.subr.bf16.mxu0 0
        %6017 = vmatpush1.bf16.msra.mxu0 %v6004
        %6018 = vmatprep.subr.bf16.mxu0 0
        %6019 = vmatpush1.bf16.msra.mxu0 %v6003
        %6020 = vmatprep.subr.bf16.mxu0 0
        %6021 = vmatpush1.bf16.msra.mxu0 %v6002
        %6022 = vmatprep.subr.bf16.mxu0 0
        %6023 = vmatpush1.bf16.msra.mxu0 %v6001
        %6024 = vmatprep.subr.bf16.mxu0 0
        %6025 = vmatpush1.bf16.msra.mxu0 %v6000
        %6026 = vmatprep.subr.bf16.mxu0 0
        %6027 = vmatpush1.bf16.msra.mxu0 %v5999
        %6028 = vmatprep.subr.bf16.mxu0 0
        %6029 = vmatpush1.bf16.msra.mxu0 %v5998
        %6030 = vmatprep.subr.bf16.mxu0 0
        %6031 = vmatpush2.bf16.msra.mxu0 0
        %6032 = vmatprep.subr.bf16.mxu0 0
        %6033 = vmatpush2.bf16.msra.mxu0 0
        %6034 = vmatprep.subr.bf16.mxu0 0
        %6035 = vmatpush2.bf16.msra.mxu0 0
        %6036 = vmatprep.subr.bf16.mxu0 0
        %6037 = vmatpush2.bf16.msra.mxu0 0
        %6038 = vmatprep.subr.bf16.mxu0 0
        %6039 = vmatpush2.bf16.msra.mxu0 0
        %6040 = vmatprep.subr.bf16.mxu0 0
        %6041 = vmatpush2.bf16.msra.mxu0 0
        %6042 = vmatprep.subr.bf16.mxu0 0
        %6043 = vmatpush2.bf16.msra.mxu0 0
        %6044 = vmatprep.subr.bf16.mxu0 0
        %6045 = vmatpush2.bf16.msra.mxu0 0
        %6046 = vmatprep.mubr.bf16.mxu0 0
        %6047 = vmatmul.mubr.bf16.gmra.mxu0 %v5946
        %v6048 = vpop.f32.mrf.mxu0
        %v6049 = vadd.f32 0.0, %v6048
        %v6050 = vpop.f32.mrf.mxu0
        %v6051 = vpop.f32.mrf.mxu0
        %v6052 = vadd.f32 0.0, %v6051
        %v6053 = vpop.f32.mrf.mxu0
        %6054 = vmatprep.mubr.bf16.mxu0 0
        %6055 = vmatmul.mubr.bf16.gmra.mxu0 %v5947
        %v6056 = vpop.f32.mrf.mxu0
        %v6057 = vadd.f32 0.0, %v6056
        %v6058 = vpop.f32.mrf.mxu0
        %v6059 = vpop.f32.mrf.mxu0
        %v6060 = vadd.f32 0.0, %v6059
        %v6061 = vpop.f32.mrf.mxu0
        %6062 = vmatprep.mubr.bf16.mxu0 0
        %6063 = vmatmul.mubr.bf16.gmra.mxu0 %v5948
        %v6064 = vpop.f32.mrf.mxu0
        %v6065 = vadd.f32 0.0, %v6064
        %v6066 = vpop.f32.mrf.mxu0
        %v6067 = vpop.f32.mrf.mxu0
        %v6068 = vadd.f32 0.0, %v6067
        %v6069 = vpop.f32.mrf.mxu0
        %6070 = vdwg.mxu0
        %v6071 = vadd.f32 %v5939, %v6049
        %v6072 = vadd.f32 %v5939, %v6052
        %v6073 = vadd.f32 %v5939, %v6057
        %v6074 = vadd.f32 %v5939, %v6060
        %v6075 = vadd.f32 %v5939, %v6065
        %v6076 = vadd.f32 %v5939, %v6068
        %v6077 = vld [vmem:[#allocation8 + $0x1] sm:$0xff]
        %v6078 = vld [vmem:[#allocation8 + $0x9] sm:$0xff]
        %v6079 = vld [vmem:[#allocation8 + $0x11] sm:$0xff]
        %v6080 = vld [vmem:[#allocation8 + $0x19] sm:$0xff]
        %v6081 = vld [vmem:[#allocation8 + $0x21] sm:$0xff]
        %v6082 = vld [vmem:[#allocation8 + $0x29] sm:$0xff]
        %v6083 = vpack.c.bf16 %v6078, %v6077
        %v6084 = vpack.c.bf16 %v6080, %v6079
        %v6085 = vpack.c.bf16 %v6082, %v6081
        %s6086 = scalar_lea.vmem [#allocation11], 2240
        %v6087 = vld [vmem:[%s6086] sm:$0xf]
        %v6088 = vld [vmem:[%s6086 + $0x4] sm:$0xf]
        %v6089 = vld [vmem:[%s6086 + $0x8] sm:$0xf]
        %v6090 = vld [vmem:[%s6086 + $0xc] sm:$0xf]
        %v6091 = vld [vmem:[%s6086 + $0x10] sm:$0xf]
        %v6092 = vld [vmem:[%s6086 + $0x14] sm:$0xf]
        %v6093 = vld [vmem:[%s6086 + $0x18] sm:$0xf]
        %v6094 = vld [vmem:[%s6086 + $0x1c] sm:$0xf]
        %v6095 = vld [vmem:[%s6086 + $0x20] sm:$0xf]
        %v6096 = vld [vmem:[%s6086 + $0x24] sm:$0xf]
        %v6097 = vld [vmem:[%s6086 + $0x28] sm:$0xf]
        %v6098 = vld [vmem:[%s6086 + $0x2c] sm:$0xf]
        %v6099 = vld [vmem:[%s6086 + $0x30] sm:$0xf]
        %v6100 = vld [vmem:[%s6086 + $0x34] sm:$0xf]
        %v6101 = vld [vmem:[%s6086 + $0x38] sm:$0xf]
        %v6102 = vld [vmem:[%s6086 + $0x3c] sm:$0xf]
        %v6119 = vunpack.c.l.b16 %v6087
        %v6120 = vunpack.c.l.b16 %v6088
        %v6121 = vunpack.c.l.b16 %v6089
        %v6122 = vunpack.c.l.b16 %v6090
        %v6123 = vunpack.c.l.b16 %v6091
        %v6124 = vunpack.c.l.b16 %v6092
        %v6125 = vunpack.c.l.b16 %v6093
        %v6126 = vunpack.c.l.b16 %v6094
        %v6127 = vunpack.c.l.b16 %v6095
        %v6128 = vunpack.c.l.b16 %v6096
        %v6129 = vunpack.c.l.b16 %v6097
        %v6130 = vunpack.c.l.b16 %v6098
        %v6131 = vunpack.c.l.b16 %v6099
        %v6132 = vunpack.c.l.b16 %v6100
        %v6133 = vunpack.c.l.b16 %v6101
        %v6134 = vunpack.c.l.b16 %v6102
        %v6135 = vpack.c.b16 %v6120, %v6119
        %v6136 = vpack.c.b16 %v6122, %v6121
        %v6137 = vpack.c.b16 %v6124, %v6123
        %v6138 = vpack.c.b16 %v6126, %v6125
        %v6139 = vpack.c.b16 %v6128, %v6127
        %v6140 = vpack.c.b16 %v6130, %v6129
        %v6141 = vpack.c.b16 %v6132, %v6131
        %v6142 = vpack.c.b16 %v6134, %v6133
        %6151 = vmatprep.subr.bf16.mxu0 0
        %6152 = vmatpush1.bf16.msra.mxu0 %v6142
        %6153 = vmatprep.subr.bf16.mxu0 0
        %6154 = vmatpush1.bf16.msra.mxu0 %v6141
        %6155 = vmatprep.subr.bf16.mxu0 0
        %6156 = vmatpush1.bf16.msra.mxu0 %v6140
        %6157 = vmatprep.subr.bf16.mxu0 0
        %6158 = vmatpush1.bf16.msra.mxu0 %v6139
        %6159 = vmatprep.subr.bf16.mxu0 0
        %6160 = vmatpush1.bf16.msra.mxu0 %v6138
        %6161 = vmatprep.subr.bf16.mxu0 0
        %6162 = vmatpush1.bf16.msra.mxu0 %v6137
        %6163 = vmatprep.subr.bf16.mxu0 0
        %6164 = vmatpush1.bf16.msra.mxu0 %v6136
        %6165 = vmatprep.subr.bf16.mxu0 0
        %6166 = vmatpush1.bf16.msra.mxu0 %v6135
        %6167 = vmatprep.subr.bf16.mxu0 0
        %6168 = vmatpush2.bf16.msra.mxu0 0
        %6169 = vmatprep.subr.bf16.mxu0 0
        %6170 = vmatpush2.bf16.msra.mxu0 0
        %6171 = vmatprep.subr.bf16.mxu0 0
        %6172 = vmatpush2.bf16.msra.mxu0 0
        %6173 = vmatprep.subr.bf16.mxu0 0
        %6174 = vmatpush2.bf16.msra.mxu0 0
        %6175 = vmatprep.subr.bf16.mxu0 0
        %6176 = vmatpush2.bf16.msra.mxu0 0
        %6177 = vmatprep.subr.bf16.mxu0 0
        %6178 = vmatpush2.bf16.msra.mxu0 0
        %6179 = vmatprep.subr.bf16.mxu0 0
        %6180 = vmatpush2.bf16.msra.mxu0 0
        %6181 = vmatprep.subr.bf16.mxu0 0
        %6182 = vmatpush2.bf16.msra.mxu0 0
        %6183 = vmatprep.mubr.bf16.mxu0 0
        %6184 = vmatmul.mubr.bf16.gmra.mxu0 %v6083
        %v6185 = vpop.f32.mrf.mxu0
        %v6186 = vadd.f32 0.0, %v6185
        %v6187 = vpop.f32.mrf.mxu0
        %v6188 = vpop.f32.mrf.mxu0
        %v6189 = vadd.f32 0.0, %v6188
        %v6190 = vpop.f32.mrf.mxu0
        %6191 = vmatprep.mubr.bf16.mxu0 0
        %6192 = vmatmul.mubr.bf16.gmra.mxu0 %v6084
        %v6193 = vpop.f32.mrf.mxu0
        %v6194 = vadd.f32 0.0, %v6193
        %v6195 = vpop.f32.mrf.mxu0
        %v6196 = vpop.f32.mrf.mxu0
        %v6197 = vadd.f32 0.0, %v6196
        %v6198 = vpop.f32.mrf.mxu0
        %6199 = vmatprep.mubr.bf16.mxu0 0
        %6200 = vmatmul.mubr.bf16.gmra.mxu0 %v6085
        %v6201 = vpop.f32.mrf.mxu0
        %v6202 = vadd.f32 0.0, %v6201
        %v6203 = vpop.f32.mrf.mxu0
        %v6204 = vpop.f32.mrf.mxu0
        %v6205 = vadd.f32 0.0, %v6204
        %v6206 = vpop.f32.mrf.mxu0
        %6207 = vdwg.mxu0
        %v6208 = vadd.f32 %v6071, %v6186
        %v6209 = vadd.f32 %v6072, %v6189
        %v6210 = vadd.f32 %v6073, %v6194
        %v6211 = vadd.f32 %v6074, %v6197
        %v6212 = vadd.f32 %v6075, %v6202
        %v6213 = vadd.f32 %v6076, %v6205
        %v6214 = vld [vmem:[#allocation8 + $0x2] sm:$0xff]
        %v6215 = vld [vmem:[#allocation8 + $0xa] sm:$0xff]
        %v6216 = vld [vmem:[#allocation8 + $0x12] sm:$0xff]
        %v6217 = vld [vmem:[#allocation8 + $0x1a] sm:$0xff]
        %v6218 = vld [vmem:[#allocation8 + $0x22] sm:$0xff]
        %v6219 = vld [vmem:[#allocation8 + $0x2a] sm:$0xff]
        %v6220 = vpack.c.bf16 %v6215, %v6214
        %v6221 = vpack.c.bf16 %v6217, %v6216
        %v6222 = vpack.c.bf16 %v6219, %v6218
        %s6223 = scalar_lea.vmem [#allocation11], 2304
        %v6224 = vld [vmem:[%s6223] sm:$0xf]
        %v6225 = vld [vmem:[%s6223 + $0x4] sm:$0xf]
        %v6226 = vld [vmem:[%s6223 + $0x8] sm:$0xf]
        %v6227 = vld [vmem:[%s6223 + $0xc] sm:$0xf]
        %v6228 = vld [vmem:[%s6223 + $0x10] sm:$0xf]
        %v6229 = vld [vmem:[%s6223 + $0x14] sm:$0xf]
        %v6230 = vld [vmem:[%s6223 + $0x18] sm:$0xf]
        %v6231 = vld [vmem:[%s6223 + $0x1c] sm:$0xf]
        %v6232 = vld [vmem:[%s6223 + $0x20] sm:$0xf]
        %v6233 = vld [vmem:[%s6223 + $0x24] sm:$0xf]
        %v6234 = vld [vmem:[%s6223 + $0x28] sm:$0xf]
        %v6235 = vld [vmem:[%s6223 + $0x2c] sm:$0xf]
        %v6236 = vld [vmem:[%s6223 + $0x30] sm:$0xf]
        %v6237 = vld [vmem:[%s6223 + $0x34] sm:$0xf]
        %v6238 = vld [vmem:[%s6223 + $0x38] sm:$0xf]
        %v6239 = vld [vmem:[%s6223 + $0x3c] sm:$0xf]
        %v6256 = vunpack.c.l.b16 %v6224
        %v6257 = vunpack.c.l.b16 %v6225
        %v6258 = vunpack.c.l.b16 %v6226
        %v6259 = vunpack.c.l.b16 %v6227
        %v6260 = vunpack.c.l.b16 %v6228
        %v6261 = vunpack.c.l.b16 %v6229
        %v6262 = vunpack.c.l.b16 %v6230
        %v6263 = vunpack.c.l.b16 %v6231
        %v6264 = vunpack.c.l.b16 %v6232
        %v6265 = vunpack.c.l.b16 %v6233
        %v6266 = vunpack.c.l.b16 %v6234
        %v6267 = vunpack.c.l.b16 %v6235
        %v6268 = vunpack.c.l.b16 %v6236
        %v6269 = vunpack.c.l.b16 %v6237
        %v6270 = vunpack.c.l.b16 %v6238
        %v6271 = vunpack.c.l.b16 %v6239
        %v6272 = vpack.c.b16 %v6257, %v6256
        %v6273 = vpack.c.b16 %v6259, %v6258
        %v6274 = vpack.c.b16 %v6261, %v6260
        %v6275 = vpack.c.b16 %v6263, %v6262
        %v6276 = vpack.c.b16 %v6265, %v6264
        %v6277 = vpack.c.b16 %v6267, %v6266
        %v6278 = vpack.c.b16 %v6269, %v6268
        %v6279 = vpack.c.b16 %v6271, %v6270
        %6288 = vmatprep.subr.bf16.mxu0 0
        %6289 = vmatpush1.bf16.msra.mxu0 %v6279
        %6290 = vmatprep.subr.bf16.mxu0 0
        %6291 = vmatpush1.bf16.msra.mxu0 %v6278
        %6292 = vmatprep.subr.bf16.mxu0 0
        %6293 = vmatpush1.bf16.msra.mxu0 %v6277
        %6294 = vmatprep.subr.bf16.mxu0 0
        %6295 = vmatpush1.bf16.msra.mxu0 %v6276
        %6296 = vmatprep.subr.bf16.mxu0 0
        %6297 = vmatpush1.bf16.msra.mxu0 %v6275
        %6298 = vmatprep.subr.bf16.mxu0 0
        %6299 = vmatpush1.bf16.msra.mxu0 %v6274
        %6300 = vmatprep.subr.bf16.mxu0 0
        %6301 = vmatpush1.bf16.msra.mxu0 %v6273
        %6302 = vmatprep.subr.bf16.mxu0 0
        %6303 = vmatpush1.bf16.msra.mxu0 %v6272
        %6304 = vmatprep.subr.bf16.mxu0 0
        %6305 = vmatpush2.bf16.msra.mxu0 0
        %6306 = vmatprep.subr.bf16.mxu0 0
        %6307 = vmatpush2.bf16.msra.mxu0 0
        %6308 = vmatprep.subr.bf16.mxu0 0
        %6309 = vmatpush2.bf16.msra.mxu0 0
        %6310 = vmatprep.subr.bf16.mxu0 0
        %6311 = vmatpush2.bf16.msra.mxu0 0
        %6312 = vmatprep.subr.bf16.mxu0 0
        %6313 = vmatpush2.bf16.msra.mxu0 0
        %6314 = vmatprep.subr.bf16.mxu0 0
        %6315 = vmatpush2.bf16.msra.mxu0 0
        %6316 = vmatprep.subr.bf16.mxu0 0
        %6317 = vmatpush2.bf16.msra.mxu0 0
        %6318 = vmatprep.subr.bf16.mxu0 0
        %6319 = vmatpush2.bf16.msra.mxu0 0
        %6320 = vmatprep.mubr.bf16.mxu0 0
        %6321 = vmatmul.mubr.bf16.gmra.mxu0 %v6220
        %v6322 = vpop.f32.mrf.mxu0
        %v6323 = vadd.f32 0.0, %v6322
        %v6324 = vpop.f32.mrf.mxu0
        %v6325 = vpop.f32.mrf.mxu0
        %v6326 = vadd.f32 0.0, %v6325
        %v6327 = vpop.f32.mrf.mxu0
        %6328 = vmatprep.mubr.bf16.mxu0 0
        %6329 = vmatmul.mubr.bf16.gmra.mxu0 %v6221
        %v6330 = vpop.f32.mrf.mxu0
        %v6331 = vadd.f32 0.0, %v6330
        %v6332 = vpop.f32.mrf.mxu0
        %v6333 = vpop.f32.mrf.mxu0
        %v6334 = vadd.f32 0.0, %v6333
        %v6335 = vpop.f32.mrf.mxu0
        %6336 = vmatprep.mubr.bf16.mxu0 0
        %6337 = vmatmul.mubr.bf16.gmra.mxu0 %v6222
        %v6338 = vpop.f32.mrf.mxu0
        %v6339 = vadd.f32 0.0, %v6338
        %v6340 = vpop.f32.mrf.mxu0
        %v6341 = vpop.f32.mrf.mxu0
        %v6342 = vadd.f32 0.0, %v6341
        %v6343 = vpop.f32.mrf.mxu0
        %6344 = vdwg.mxu0
        %v6345 = vadd.f32 %v6208, %v6323
        %v6346 = vadd.f32 %v6209, %v6326
        %v6347 = vadd.f32 %v6210, %v6331
        %v6348 = vadd.f32 %v6211, %v6334
        %v6349 = vadd.f32 %v6212, %v6339
        %v6350 = vadd.f32 %v6213, %v6342
        %v6351 = vld [vmem:[#allocation8 + $0x8] sm:$0xff]
        %v6352 = vld [vmem:[#allocation8 + $0x10] sm:$0xff]
        %v6353 = vld [vmem:[#allocation8 + $0x18] sm:$0xff]
        %v6354 = vld [vmem:[#allocation8 + $0x20] sm:$0xff]
        %v6355 = vld [vmem:[#allocation8 + $0x28] sm:$0xff]
        %v6356 = vld [vmem:[#allocation8 + $0x30] sm:$0xff]
        %v6357 = vpack.c.bf16 %v6352, %v6351
        %v6358 = vpack.c.bf16 %v6354, %v6353
        %v6359 = vpack.c.bf16 %v6356, %v6355
        %s6360 = scalar_lea.vmem [#allocation11], 2368
        %v6361 = vld [vmem:[%s6360] sm:$0xf]
        %v6362 = vld [vmem:[%s6360 + $0x4] sm:$0xf]
        %v6363 = vld [vmem:[%s6360 + $0x8] sm:$0xf]
        %v6364 = vld [vmem:[%s6360 + $0xc] sm:$0xf]
        %v6365 = vld [vmem:[%s6360 + $0x10] sm:$0xf]
        %v6366 = vld [vmem:[%s6360 + $0x14] sm:$0xf]
        %v6367 = vld [vmem:[%s6360 + $0x18] sm:$0xf]
        %v6368 = vld [vmem:[%s6360 + $0x1c] sm:$0xf]
        %v6369 = vld [vmem:[%s6360 + $0x20] sm:$0xf]
        %v6370 = vld [vmem:[%s6360 + $0x24] sm:$0xf]
        %v6371 = vld [vmem:[%s6360 + $0x28] sm:$0xf]
        %v6372 = vld [vmem:[%s6360 + $0x2c] sm:$0xf]
        %v6373 = vld [vmem:[%s6360 + $0x30] sm:$0xf]
        %v6374 = vld [vmem:[%s6360 + $0x34] sm:$0xf]
        %v6375 = vld [vmem:[%s6360 + $0x38] sm:$0xf]
        %v6376 = vld [vmem:[%s6360 + $0x3c] sm:$0xf]
        %v6393 = vunpack.c.l.b16 %v6361
        %v6394 = vunpack.c.l.b16 %v6362
        %v6395 = vunpack.c.l.b16 %v6363
        %v6396 = vunpack.c.l.b16 %v6364
        %v6397 = vunpack.c.l.b16 %v6365
        %v6398 = vunpack.c.l.b16 %v6366
        %v6399 = vunpack.c.l.b16 %v6367
        %v6400 = vunpack.c.l.b16 %v6368
        %v6401 = vunpack.c.l.b16 %v6369
        %v6402 = vunpack.c.l.b16 %v6370
        %v6403 = vunpack.c.l.b16 %v6371
        %v6404 = vunpack.c.l.b16 %v6372
        %v6405 = vunpack.c.l.b16 %v6373
        %v6406 = vunpack.c.l.b16 %v6374
        %v6407 = vunpack.c.l.b16 %v6375
        %v6408 = vunpack.c.l.b16 %v6376
        %v6409 = vpack.c.b16 %v6394, %v6393
        %v6410 = vpack.c.b16 %v6396, %v6395
        %v6411 = vpack.c.b16 %v6398, %v6397
        %v6412 = vpack.c.b16 %v6400, %v6399
        %v6413 = vpack.c.b16 %v6402, %v6401
        %v6414 = vpack.c.b16 %v6404, %v6403
        %v6415 = vpack.c.b16 %v6406, %v6405
        %v6416 = vpack.c.b16 %v6408, %v6407
        %6425 = vmatprep.subr.bf16.mxu0 0
        %6426 = vmatpush1.bf16.msra.mxu0 %v6416
        %6427 = vmatprep.subr.bf16.mxu0 0
        %6428 = vmatpush1.bf16.msra.mxu0 %v6415
        %6429 = vmatprep.subr.bf16.mxu0 0
        %6430 = vmatpush1.bf16.msra.mxu0 %v6414
        %6431 = vmatprep.subr.bf16.mxu0 0
        %6432 = vmatpush1.bf16.msra.mxu0 %v6413
        %6433 = vmatprep.subr.bf16.mxu0 0
        %6434 = vmatpush1.bf16.msra.mxu0 %v6412
        %6435 = vmatprep.subr.bf16.mxu0 0
        %6436 = vmatpush1.bf16.msra.mxu0 %v6411
        %6437 = vmatprep.subr.bf16.mxu0 0
        %6438 = vmatpush1.bf16.msra.mxu0 %v6410
        %6439 = vmatprep.subr.bf16.mxu0 0
        %6440 = vmatpush1.bf16.msra.mxu0 %v6409
        %6441 = vmatprep.subr.bf16.mxu0 0
        %6442 = vmatpush2.bf16.msra.mxu0 0
        %6443 = vmatprep.subr.bf16.mxu0 0
        %6444 = vmatpush2.bf16.msra.mxu0 0
        %6445 = vmatprep.subr.bf16.mxu0 0
        %6446 = vmatpush2.bf16.msra.mxu0 0
        %6447 = vmatprep.subr.bf16.mxu0 0
        %6448 = vmatpush2.bf16.msra.mxu0 0
        %6449 = vmatprep.subr.bf16.mxu0 0
        %6450 = vmatpush2.bf16.msra.mxu0 0
        %6451 = vmatprep.subr.bf16.mxu0 0
        %6452 = vmatpush2.bf16.msra.mxu0 0
        %6453 = vmatprep.subr.bf16.mxu0 0
        %6454 = vmatpush2.bf16.msra.mxu0 0
        %6455 = vmatprep.subr.bf16.mxu0 0
        %6456 = vmatpush2.bf16.msra.mxu0 0
        %6457 = vmatprep.mubr.bf16.mxu0 0
        %6458 = vmatmul.mubr.bf16.gmra.mxu0 %v6357
        %v6459 = vpop.f32.mrf.mxu0
        %v6460 = vadd.f32 0.0, %v6459
        %v6461 = vpop.f32.mrf.mxu0
        %v6462 = vpop.f32.mrf.mxu0
        %v6463 = vadd.f32 0.0, %v6462
        %v6464 = vpop.f32.mrf.mxu0
        %6465 = vmatprep.mubr.bf16.mxu0 0
        %6466 = vmatmul.mubr.bf16.gmra.mxu0 %v6358
        %v6467 = vpop.f32.mrf.mxu0
        %v6468 = vadd.f32 0.0, %v6467
        %v6469 = vpop.f32.mrf.mxu0
        %v6470 = vpop.f32.mrf.mxu0
        %v6471 = vadd.f32 0.0, %v6470
        %v6472 = vpop.f32.mrf.mxu0
        %6473 = vmatprep.mubr.bf16.mxu0 0
        %6474 = vmatmul.mubr.bf16.gmra.mxu0 %v6359
        %v6475 = vpop.f32.mrf.mxu0
        %v6476 = vadd.f32 0.0, %v6475
        %v6477 = vpop.f32.mrf.mxu0
        %v6478 = vpop.f32.mrf.mxu0
        %v6479 = vadd.f32 0.0, %v6478
        %v6480 = vpop.f32.mrf.mxu0
        %6481 = vdwg.mxu0
        %v6482 = vadd.f32 %v6345, %v6460
        %v6483 = vadd.f32 %v6346, %v6463
        %v6484 = vadd.f32 %v6347, %v6468
        %v6485 = vadd.f32 %v6348, %v6471
        %v6486 = vadd.f32 %v6349, %v6476
        %v6487 = vadd.f32 %v6350, %v6479
        %v6488 = vld [vmem:[#allocation8 + $0x9] sm:$0xff]
        %v6489 = vld [vmem:[#allocation8 + $0x11] sm:$0xff]
        %v6490 = vld [vmem:[#allocation8 + $0x19] sm:$0xff]
        %v6491 = vld [vmem:[#allocation8 + $0x21] sm:$0xff]
        %v6492 = vld [vmem:[#allocation8 + $0x29] sm:$0xff]
        %v6493 = vld [vmem:[#allocation8 + $0x31] sm:$0xff]
        %v6494 = vpack.c.bf16 %v6489, %v6488
        %v6495 = vpack.c.bf16 %v6491, %v6490
        %v6496 = vpack.c.bf16 %v6493, %v6492
        %s6497 = scalar_lea.vmem [#allocation11], 2432
        %v6498 = vld [vmem:[%s6497] sm:$0xf]
        %v6499 = vld [vmem:[%s6497 + $0x4] sm:$0xf]
        %v6500 = vld [vmem:[%s6497 + $0x8] sm:$0xf]
        %v6501 = vld [vmem:[%s6497 + $0xc] sm:$0xf]
        %v6502 = vld [vmem:[%s6497 + $0x10] sm:$0xf]
        %v6503 = vld [vmem:[%s6497 + $0x14] sm:$0xf]
        %v6504 = vld [vmem:[%s6497 + $0x18] sm:$0xf]
        %v6505 = vld [vmem:[%s6497 + $0x1c] sm:$0xf]
        %v6506 = vld [vmem:[%s6497 + $0x20] sm:$0xf]
        %v6507 = vld [vmem:[%s6497 + $0x24] sm:$0xf]
        %v6508 = vld [vmem:[%s6497 + $0x28] sm:$0xf]
        %v6509 = vld [vmem:[%s6497 + $0x2c] sm:$0xf]
        %v6510 = vld [vmem:[%s6497 + $0x30] sm:$0xf]
        %v6511 = vld [vmem:[%s6497 + $0x34] sm:$0xf]
        %v6512 = vld [vmem:[%s6497 + $0x38] sm:$0xf]
        %v6513 = vld [vmem:[%s6497 + $0x3c] sm:$0xf]
        %v6530 = vunpack.c.l.b16 %v6498
        %v6531 = vunpack.c.l.b16 %v6499
        %v6532 = vunpack.c.l.b16 %v6500
        %v6533 = vunpack.c.l.b16 %v6501
        %v6534 = vunpack.c.l.b16 %v6502
        %v6535 = vunpack.c.l.b16 %v6503
        %v6536 = vunpack.c.l.b16 %v6504
        %v6537 = vunpack.c.l.b16 %v6505
        %v6538 = vunpack.c.l.b16 %v6506
        %v6539 = vunpack.c.l.b16 %v6507
        %v6540 = vunpack.c.l.b16 %v6508
        %v6541 = vunpack.c.l.b16 %v6509
        %v6542 = vunpack.c.l.b16 %v6510
        %v6543 = vunpack.c.l.b16 %v6511
        %v6544 = vunpack.c.l.b16 %v6512
        %v6545 = vunpack.c.l.b16 %v6513
        %v6546 = vpack.c.b16 %v6531, %v6530
        %v6547 = vpack.c.b16 %v6533, %v6532
        %v6548 = vpack.c.b16 %v6535, %v6534
        %v6549 = vpack.c.b16 %v6537, %v6536
        %v6550 = vpack.c.b16 %v6539, %v6538
        %v6551 = vpack.c.b16 %v6541, %v6540
        %v6552 = vpack.c.b16 %v6543, %v6542
        %v6553 = vpack.c.b16 %v6545, %v6544
        %6562 = vmatprep.subr.bf16.mxu0 0
        %6563 = vmatpush1.bf16.msra.mxu0 %v6553
        %6564 = vmatprep.subr.bf16.mxu0 0
        %6565 = vmatpush1.bf16.msra.mxu0 %v6552
        %6566 = vmatprep.subr.bf16.mxu0 0
        %6567 = vmatpush1.bf16.msra.mxu0 %v6551
        %6568 = vmatprep.subr.bf16.mxu0 0
        %6569 = vmatpush1.bf16.msra.mxu0 %v6550
        %6570 = vmatprep.subr.bf16.mxu0 0
        %6571 = vmatpush1.bf16.msra.mxu0 %v6549
        %6572 = vmatprep.subr.bf16.mxu0 0
        %6573 = vmatpush1.bf16.msra.mxu0 %v6548
        %6574 = vmatprep.subr.bf16.mxu0 0
        %6575 = vmatpush1.bf16.msra.mxu0 %v6547
        %6576 = vmatprep.subr.bf16.mxu0 0
        %6577 = vmatpush1.bf16.msra.mxu0 %v6546
        %6578 = vmatprep.subr.bf16.mxu0 0
        %6579 = vmatpush2.bf16.msra.mxu0 0
        %6580 = vmatprep.subr.bf16.mxu0 0
        %6581 = vmatpush2.bf16.msra.mxu0 0
        %6582 = vmatprep.subr.bf16.mxu0 0
        %6583 = vmatpush2.bf16.msra.mxu0 0
        %6584 = vmatprep.subr.bf16.mxu0 0
        %6585 = vmatpush2.bf16.msra.mxu0 0
        %6586 = vmatprep.subr.bf16.mxu0 0
        %6587 = vmatpush2.bf16.msra.mxu0 0
        %6588 = vmatprep.subr.bf16.mxu0 0
        %6589 = vmatpush2.bf16.msra.mxu0 0
        %6590 = vmatprep.subr.bf16.mxu0 0
        %6591 = vmatpush2.bf16.msra.mxu0 0
        %6592 = vmatprep.subr.bf16.mxu0 0
        %6593 = vmatpush2.bf16.msra.mxu0 0
        %6594 = vmatprep.mubr.bf16.mxu0 0
        %6595 = vmatmul.mubr.bf16.gmra.mxu0 %v6494
        %v6596 = vpop.f32.mrf.mxu0
        %v6597 = vadd.f32 0.0, %v6596
        %v6598 = vpop.f32.mrf.mxu0
        %v6599 = vpop.f32.mrf.mxu0
        %v6600 = vadd.f32 0.0, %v6599
        %v6601 = vpop.f32.mrf.mxu0
        %6602 = vmatprep.mubr.bf16.mxu0 0
        %6603 = vmatmul.mubr.bf16.gmra.mxu0 %v6495
        %v6604 = vpop.f32.mrf.mxu0
        %v6605 = vadd.f32 0.0, %v6604
        %v6606 = vpop.f32.mrf.mxu0
        %v6607 = vpop.f32.mrf.mxu0
        %v6608 = vadd.f32 0.0, %v6607
        %v6609 = vpop.f32.mrf.mxu0
        %6610 = vmatprep.mubr.bf16.mxu0 0
        %6611 = vmatmul.mubr.bf16.gmra.mxu0 %v6496
        %v6612 = vpop.f32.mrf.mxu0
        %v6613 = vadd.f32 0.0, %v6612
        %v6614 = vpop.f32.mrf.mxu0
        %v6615 = vpop.f32.mrf.mxu0
        %v6616 = vadd.f32 0.0, %v6615
        %v6617 = vpop.f32.mrf.mxu0
        %6618 = vdwg.mxu0
        %v6619 = vadd.f32 %v6482, %v6597
        %v6620 = vadd.f32 %v6483, %v6600
        %v6621 = vadd.f32 %v6484, %v6605
        %v6622 = vadd.f32 %v6485, %v6608
        %v6623 = vadd.f32 %v6486, %v6613
        %v6624 = vadd.f32 %v6487, %v6616
        %v6625 = vld [vmem:[#allocation8 + $0xa] sm:$0xff]
        %v6626 = vld [vmem:[#allocation8 + $0x12] sm:$0xff]
        %v6627 = vld [vmem:[#allocation8 + $0x1a] sm:$0xff]
        %v6628 = vld [vmem:[#allocation8 + $0x22] sm:$0xff]
        %v6629 = vld [vmem:[#allocation8 + $0x2a] sm:$0xff]
        %v6630 = vld [vmem:[#allocation8 + $0x32] sm:$0xff]
        %v6631 = vpack.c.bf16 %v6626, %v6625
        %v6632 = vpack.c.bf16 %v6628, %v6627
        %v6633 = vpack.c.bf16 %v6630, %v6629
        %s6634 = scalar_lea.vmem [#allocation11], 2496
        %v6635 = vld [vmem:[%s6634] sm:$0xf]
        %v6636 = vld [vmem:[%s6634 + $0x4] sm:$0xf]
        %v6637 = vld [vmem:[%s6634 + $0x8] sm:$0xf]
        %v6638 = vld [vmem:[%s6634 + $0xc] sm:$0xf]
        %v6639 = vld [vmem:[%s6634 + $0x10] sm:$0xf]
        %v6640 = vld [vmem:[%s6634 + $0x14] sm:$0xf]
        %v6641 = vld [vmem:[%s6634 + $0x18] sm:$0xf]
        %v6642 = vld [vmem:[%s6634 + $0x1c] sm:$0xf]
        %v6643 = vld [vmem:[%s6634 + $0x20] sm:$0xf]
        %v6644 = vld [vmem:[%s6634 + $0x24] sm:$0xf]
        %v6645 = vld [vmem:[%s6634 + $0x28] sm:$0xf]
        %v6646 = vld [vmem:[%s6634 + $0x2c] sm:$0xf]
        %v6647 = vld [vmem:[%s6634 + $0x30] sm:$0xf]
        %v6648 = vld [vmem:[%s6634 + $0x34] sm:$0xf]
        %v6649 = vld [vmem:[%s6634 + $0x38] sm:$0xf]
        %v6650 = vld [vmem:[%s6634 + $0x3c] sm:$0xf]
        %v6667 = vunpack.c.l.b16 %v6635
        %v6668 = vunpack.c.l.b16 %v6636
        %v6669 = vunpack.c.l.b16 %v6637
        %v6670 = vunpack.c.l.b16 %v6638
        %v6671 = vunpack.c.l.b16 %v6639
        %v6672 = vunpack.c.l.b16 %v6640
        %v6673 = vunpack.c.l.b16 %v6641
        %v6674 = vunpack.c.l.b16 %v6642
        %v6675 = vunpack.c.l.b16 %v6643
        %v6676 = vunpack.c.l.b16 %v6644
        %v6677 = vunpack.c.l.b16 %v6645
        %v6678 = vunpack.c.l.b16 %v6646
        %v6679 = vunpack.c.l.b16 %v6647
        %v6680 = vunpack.c.l.b16 %v6648
        %v6681 = vunpack.c.l.b16 %v6649
        %v6682 = vunpack.c.l.b16 %v6650
        %v6683 = vpack.c.b16 %v6668, %v6667
        %v6684 = vpack.c.b16 %v6670, %v6669
        %v6685 = vpack.c.b16 %v6672, %v6671
        %v6686 = vpack.c.b16 %v6674, %v6673
        %v6687 = vpack.c.b16 %v6676, %v6675
        %v6688 = vpack.c.b16 %v6678, %v6677
        %v6689 = vpack.c.b16 %v6680, %v6679
        %v6690 = vpack.c.b16 %v6682, %v6681
        %6699 = vmatprep.subr.bf16.mxu0 0
        %6700 = vmatpush1.bf16.msra.mxu0 %v6690
        %6701 = vmatprep.subr.bf16.mxu0 0
        %6702 = vmatpush1.bf16.msra.mxu0 %v6689
        %6703 = vmatprep.subr.bf16.mxu0 0
        %6704 = vmatpush1.bf16.msra.mxu0 %v6688
        %6705 = vmatprep.subr.bf16.mxu0 0
        %6706 = vmatpush1.bf16.msra.mxu0 %v6687
        %6707 = vmatprep.subr.bf16.mxu0 0
        %6708 = vmatpush1.bf16.msra.mxu0 %v6686
        %6709 = vmatprep.subr.bf16.mxu0 0
        %6710 = vmatpush1.bf16.msra.mxu0 %v6685
        %6711 = vmatprep.subr.bf16.mxu0 0
        %6712 = vmatpush1.bf16.msra.mxu0 %v6684
        %6713 = vmatprep.subr.bf16.mxu0 0
        %6714 = vmatpush1.bf16.msra.mxu0 %v6683
        %6715 = vmatprep.subr.bf16.mxu0 0
        %6716 = vmatpush2.bf16.msra.mxu0 0
        %6717 = vmatprep.subr.bf16.mxu0 0
        %6718 = vmatpush2.bf16.msra.mxu0 0
        %6719 = vmatprep.subr.bf16.mxu0 0
        %6720 = vmatpush2.bf16.msra.mxu0 0
        %6721 = vmatprep.subr.bf16.mxu0 0
        %6722 = vmatpush2.bf16.msra.mxu0 0
        %6723 = vmatprep.subr.bf16.mxu0 0
        %6724 = vmatpush2.bf16.msra.mxu0 0
        %6725 = vmatprep.subr.bf16.mxu0 0
        %6726 = vmatpush2.bf16.msra.mxu0 0
        %6727 = vmatprep.subr.bf16.mxu0 0
        %6728 = vmatpush2.bf16.msra.mxu0 0
        %6729 = vmatprep.subr.bf16.mxu0 0
        %6730 = vmatpush2.bf16.msra.mxu0 0
        %6731 = vmatprep.mubr.bf16.mxu0 0
        %6732 = vmatmul.mubr.bf16.gmra.mxu0 %v6631
        %v6733 = vpop.f32.mrf.mxu0
        %v6734 = vadd.f32 0.0, %v6733
        %v6735 = vpop.f32.mrf.mxu0
        %v6736 = vpop.f32.mrf.mxu0
        %v6737 = vadd.f32 0.0, %v6736
        %v6738 = vpop.f32.mrf.mxu0
        %6739 = vmatprep.mubr.bf16.mxu0 0
        %6740 = vmatmul.mubr.bf16.gmra.mxu0 %v6632
        %v6741 = vpop.f32.mrf.mxu0
        %v6742 = vadd.f32 0.0, %v6741
        %v6743 = vpop.f32.mrf.mxu0
        %v6744 = vpop.f32.mrf.mxu0
        %v6745 = vadd.f32 0.0, %v6744
        %v6746 = vpop.f32.mrf.mxu0
        %6747 = vmatprep.mubr.bf16.mxu0 0
        %6748 = vmatmul.mubr.bf16.gmra.mxu0 %v6633
        %v6749 = vpop.f32.mrf.mxu0
        %v6750 = vadd.f32 0.0, %v6749
        %v6751 = vpop.f32.mrf.mxu0
        %v6752 = vpop.f32.mrf.mxu0
        %v6753 = vadd.f32 0.0, %v6752
        %v6754 = vpop.f32.mrf.mxu0
        %6755 = vdwg.mxu0
        %v6756 = vadd.f32 %v6619, %v6734
        %v6757 = vadd.f32 %v6620, %v6737
        %v6758 = vadd.f32 %v6621, %v6742
        %v6759 = vadd.f32 %v6622, %v6745
        %v6760 = vadd.f32 %v6623, %v6750
        %v6761 = vadd.f32 %v6624, %v6753
        %v6762 = vld [vmem:[#allocation8 + $0x10] sm:$0xff]
        %v6763 = vld [vmem:[#allocation8 + $0x18] sm:$0xff]
        %v6764 = vld [vmem:[#allocation8 + $0x20] sm:$0xff]
        %v6765 = vld [vmem:[#allocation8 + $0x28] sm:$0xff]
        %v6766 = vld [vmem:[#allocation8 + $0x30] sm:$0xff]
        %v6767 = vld [vmem:[#allocation8 + $0x38] sm:$0xff]
        %v6768 = vpack.c.bf16 %v6763, %v6762
        %v6769 = vpack.c.bf16 %v6765, %v6764
        %v6770 = vpack.c.bf16 %v6767, %v6766
        %s6771 = scalar_lea.vmem [#allocation11], 2560
        %v6772 = vld [vmem:[%s6771] sm:$0xf]
        %v6773 = vld [vmem:[%s6771 + $0x4] sm:$0xf]
        %v6774 = vld [vmem:[%s6771 + $0x8] sm:$0xf]
        %v6775 = vld [vmem:[%s6771 + $0xc] sm:$0xf]
        %v6776 = vld [vmem:[%s6771 + $0x10] sm:$0xf]
        %v6777 = vld [vmem:[%s6771 + $0x14] sm:$0xf]
        %v6778 = vld [vmem:[%s6771 + $0x18] sm:$0xf]
        %v6779 = vld [vmem:[%s6771 + $0x1c] sm:$0xf]
        %v6780 = vld [vmem:[%s6771 + $0x20] sm:$0xf]
        %v6781 = vld [vmem:[%s6771 + $0x24] sm:$0xf]
        %v6782 = vld [vmem:[%s6771 + $0x28] sm:$0xf]
        %v6783 = vld [vmem:[%s6771 + $0x2c] sm:$0xf]
        %v6784 = vld [vmem:[%s6771 + $0x30] sm:$0xf]
        %v6785 = vld [vmem:[%s6771 + $0x34] sm:$0xf]
        %v6786 = vld [vmem:[%s6771 + $0x38] sm:$0xf]
        %v6787 = vld [vmem:[%s6771 + $0x3c] sm:$0xf]
        %v6804 = vunpack.c.l.b16 %v6772
        %v6805 = vunpack.c.l.b16 %v6773
        %v6806 = vunpack.c.l.b16 %v6774
        %v6807 = vunpack.c.l.b16 %v6775
        %v6808 = vunpack.c.l.b16 %v6776
        %v6809 = vunpack.c.l.b16 %v6777
        %v6810 = vunpack.c.l.b16 %v6778
        %v6811 = vunpack.c.l.b16 %v6779
        %v6812 = vunpack.c.l.b16 %v6780
        %v6813 = vunpack.c.l.b16 %v6781
        %v6814 = vunpack.c.l.b16 %v6782
        %v6815 = vunpack.c.l.b16 %v6783
        %v6816 = vunpack.c.l.b16 %v6784
        %v6817 = vunpack.c.l.b16 %v6785
        %v6818 = vunpack.c.l.b16 %v6786
        %v6819 = vunpack.c.l.b16 %v6787
        %v6820 = vpack.c.b16 %v6805, %v6804
        %v6821 = vpack.c.b16 %v6807, %v6806
        %v6822 = vpack.c.b16 %v6809, %v6808
        %v6823 = vpack.c.b16 %v6811, %v6810
        %v6824 = vpack.c.b16 %v6813, %v6812
        %v6825 = vpack.c.b16 %v6815, %v6814
        %v6826 = vpack.c.b16 %v6817, %v6816
        %v6827 = vpack.c.b16 %v6819, %v6818
        %6836 = vmatprep.subr.bf16.mxu0 0
        %6837 = vmatpush1.bf16.msra.mxu0 %v6827
        %6838 = vmatprep.subr.bf16.mxu0 0
        %6839 = vmatpush1.bf16.msra.mxu0 %v6826
        %6840 = vmatprep.subr.bf16.mxu0 0
        %6841 = vmatpush1.bf16.msra.mxu0 %v6825
        %6842 = vmatprep.subr.bf16.mxu0 0
        %6843 = vmatpush1.bf16.msra.mxu0 %v6824
        %6844 = vmatprep.subr.bf16.mxu0 0
        %6845 = vmatpush1.bf16.msra.mxu0 %v6823
        %6846 = vmatprep.subr.bf16.mxu0 0
        %6847 = vmatpush1.bf16.msra.mxu0 %v6822
        %6848 = vmatprep.subr.bf16.mxu0 0
        %6849 = vmatpush1.bf16.msra.mxu0 %v6821
        %6850 = vmatprep.subr.bf16.mxu0 0
        %6851 = vmatpush1.bf16.msra.mxu0 %v6820
        %6852 = vmatprep.subr.bf16.mxu0 0
        %6853 = vmatpush2.bf16.msra.mxu0 0
        %6854 = vmatprep.subr.bf16.mxu0 0
        %6855 = vmatpush2.bf16.msra.mxu0 0
        %6856 = vmatprep.subr.bf16.mxu0 0
        %6857 = vmatpush2.bf16.msra.mxu0 0
        %6858 = vmatprep.subr.bf16.mxu0 0
        %6859 = vmatpush2.bf16.msra.mxu0 0
        %6860 = vmatprep.subr.bf16.mxu0 0
        %6861 = vmatpush2.bf16.msra.mxu0 0
        %6862 = vmatprep.subr.bf16.mxu0 0
        %6863 = vmatpush2.bf16.msra.mxu0 0
        %6864 = vmatprep.subr.bf16.mxu0 0
        %6865 = vmatpush2.bf16.msra.mxu0 0
        %6866 = vmatprep.subr.bf16.mxu0 0
        %6867 = vmatpush2.bf16.msra.mxu0 0
        %6868 = vmatprep.mubr.bf16.mxu0 0
        %6869 = vmatmul.mubr.bf16.gmra.mxu0 %v6768
        %v6870 = vpop.f32.mrf.mxu0
        %v6871 = vadd.f32 0.0, %v6870
        %v6872 = vpop.f32.mrf.mxu0
        %v6873 = vpop.f32.mrf.mxu0
        %v6874 = vadd.f32 0.0, %v6873
        %v6875 = vpop.f32.mrf.mxu0
        %6876 = vmatprep.mubr.bf16.mxu0 0
        %6877 = vmatmul.mubr.bf16.gmra.mxu0 %v6769
        %v6878 = vpop.f32.mrf.mxu0
        %v6879 = vadd.f32 0.0, %v6878
        %v6880 = vpop.f32.mrf.mxu0
        %v6881 = vpop.f32.mrf.mxu0
        %v6882 = vadd.f32 0.0, %v6881
        %v6883 = vpop.f32.mrf.mxu0
        %6884 = vmatprep.mubr.bf16.mxu0 0
        %6885 = vmatmul.mubr.bf16.gmra.mxu0 %v6770
        %v6886 = vpop.f32.mrf.mxu0
        %v6887 = vadd.f32 0.0, %v6886
        %v6888 = vpop.f32.mrf.mxu0
        %v6889 = vpop.f32.mrf.mxu0
        %v6890 = vadd.f32 0.0, %v6889
        %v6891 = vpop.f32.mrf.mxu0
        %6892 = vdwg.mxu0
        %v6893 = vadd.f32 %v6756, %v6871
        %v6894 = vadd.f32 %v6757, %v6874
        %v6895 = vadd.f32 %v6758, %v6879
        %v6896 = vadd.f32 %v6759, %v6882
        %v6897 = vadd.f32 %v6760, %v6887
        %v6898 = vadd.f32 %v6761, %v6890
        %v6899 = vld [vmem:[#allocation8 + $0x11] sm:$0xff]
        %v6900 = vld [vmem:[#allocation8 + $0x19] sm:$0xff]
        %v6901 = vld [vmem:[#allocation8 + $0x21] sm:$0xff]
        %v6902 = vld [vmem:[#allocation8 + $0x29] sm:$0xff]
        %v6903 = vld [vmem:[#allocation8 + $0x31] sm:$0xff]
        %v6904 = vld [vmem:[#allocation8 + $0x39] sm:$0xff]
        %v6905 = vpack.c.bf16 %v6900, %v6899
        %v6906 = vpack.c.bf16 %v6902, %v6901
        %v6907 = vpack.c.bf16 %v6904, %v6903
        %s6908 = scalar_lea.vmem [#allocation11], 2624
        %v6909 = vld [vmem:[%s6908] sm:$0xf]
        %v6910 = vld [vmem:[%s6908 + $0x4] sm:$0xf]
        %v6911 = vld [vmem:[%s6908 + $0x8] sm:$0xf]
        %v6912 = vld [vmem:[%s6908 + $0xc] sm:$0xf]
        %v6913 = vld [vmem:[%s6908 + $0x10] sm:$0xf]
        %v6914 = vld [vmem:[%s6908 + $0x14] sm:$0xf]
        %v6915 = vld [vmem:[%s6908 + $0x18] sm:$0xf]
        %v6916 = vld [vmem:[%s6908 + $0x1c] sm:$0xf]
        %v6917 = vld [vmem:[%s6908 + $0x20] sm:$0xf]
        %v6918 = vld [vmem:[%s6908 + $0x24] sm:$0xf]
        %v6919 = vld [vmem:[%s6908 + $0x28] sm:$0xf]
        %v6920 = vld [vmem:[%s6908 + $0x2c] sm:$0xf]
        %v6921 = vld [vmem:[%s6908 + $0x30] sm:$0xf]
        %v6922 = vld [vmem:[%s6908 + $0x34] sm:$0xf]
        %v6923 = vld [vmem:[%s6908 + $0x38] sm:$0xf]
        %v6924 = vld [vmem:[%s6908 + $0x3c] sm:$0xf]
        %v6941 = vunpack.c.l.b16 %v6909
        %v6942 = vunpack.c.l.b16 %v6910
        %v6943 = vunpack.c.l.b16 %v6911
        %v6944 = vunpack.c.l.b16 %v6912
        %v6945 = vunpack.c.l.b16 %v6913
        %v6946 = vunpack.c.l.b16 %v6914
        %v6947 = vunpack.c.l.b16 %v6915
        %v6948 = vunpack.c.l.b16 %v6916
        %v6949 = vunpack.c.l.b16 %v6917
        %v6950 = vunpack.c.l.b16 %v6918
        %v6951 = vunpack.c.l.b16 %v6919
        %v6952 = vunpack.c.l.b16 %v6920
        %v6953 = vunpack.c.l.b16 %v6921
        %v6954 = vunpack.c.l.b16 %v6922
        %v6955 = vunpack.c.l.b16 %v6923
        %v6956 = vunpack.c.l.b16 %v6924
        %v6957 = vpack.c.b16 %v6942, %v6941
        %v6958 = vpack.c.b16 %v6944, %v6943
        %v6959 = vpack.c.b16 %v6946, %v6945
        %v6960 = vpack.c.b16 %v6948, %v6947
        %v6961 = vpack.c.b16 %v6950, %v6949
        %v6962 = vpack.c.b16 %v6952, %v6951
        %v6963 = vpack.c.b16 %v6954, %v6953
        %v6964 = vpack.c.b16 %v6956, %v6955
        %6973 = vmatprep.subr.bf16.mxu0 0
        %6974 = vmatpush1.bf16.msra.mxu0 %v6964
        %6975 = vmatprep.subr.bf16.mxu0 0
        %6976 = vmatpush1.bf16.msra.mxu0 %v6963
        %6977 = vmatprep.subr.bf16.mxu0 0
        %6978 = vmatpush1.bf16.msra.mxu0 %v6962
        %6979 = vmatprep.subr.bf16.mxu0 0
        %6980 = vmatpush1.bf16.msra.mxu0 %v6961
        %6981 = vmatprep.subr.bf16.mxu0 0
        %6982 = vmatpush1.bf16.msra.mxu0 %v6960
        %6983 = vmatprep.subr.bf16.mxu0 0
        %6984 = vmatpush1.bf16.msra.mxu0 %v6959
        %6985 = vmatprep.subr.bf16.mxu0 0
        %6986 = vmatpush1.bf16.msra.mxu0 %v6958
        %6987 = vmatprep.subr.bf16.mxu0 0
        %6988 = vmatpush1.bf16.msra.mxu0 %v6957
        %6989 = vmatprep.subr.bf16.mxu0 0
        %6990 = vmatpush2.bf16.msra.mxu0 0
        %6991 = vmatprep.subr.bf16.mxu0 0
        %6992 = vmatpush2.bf16.msra.mxu0 0
        %6993 = vmatprep.subr.bf16.mxu0 0
        %6994 = vmatpush2.bf16.msra.mxu0 0
        %6995 = vmatprep.subr.bf16.mxu0 0
        %6996 = vmatpush2.bf16.msra.mxu0 0
        %6997 = vmatprep.subr.bf16.mxu0 0
        %6998 = vmatpush2.bf16.msra.mxu0 0
        %6999 = vmatprep.subr.bf16.mxu0 0
        %7000 = vmatpush2.bf16.msra.mxu0 0
        %7001 = vmatprep.subr.bf16.mxu0 0
        %7002 = vmatpush2.bf16.msra.mxu0 0
        %7003 = vmatprep.subr.bf16.mxu0 0
        %7004 = vmatpush2.bf16.msra.mxu0 0
        %7005 = vmatprep.mubr.bf16.mxu0 0
        %7006 = vmatmul.mubr.bf16.gmra.mxu0 %v6905
        %v7007 = vpop.f32.mrf.mxu0
        %v7008 = vadd.f32 0.0, %v7007
        %v7009 = vpop.f32.mrf.mxu0
        %v7010 = vpop.f32.mrf.mxu0
        %v7011 = vadd.f32 0.0, %v7010
        %v7012 = vpop.f32.mrf.mxu0
        %7013 = vmatprep.mubr.bf16.mxu0 0
        %7014 = vmatmul.mubr.bf16.gmra.mxu0 %v6906
        %v7015 = vpop.f32.mrf.mxu0
        %v7016 = vadd.f32 0.0, %v7015
        %v7017 = vpop.f32.mrf.mxu0
        %v7018 = vpop.f32.mrf.mxu0
        %v7019 = vadd.f32 0.0, %v7018
        %v7020 = vpop.f32.mrf.mxu0
        %7021 = vmatprep.mubr.bf16.mxu0 0
        %7022 = vmatmul.mubr.bf16.gmra.mxu0 %v6907
        %v7023 = vpop.f32.mrf.mxu0
        %v7024 = vadd.f32 0.0, %v7023
        %v7025 = vpop.f32.mrf.mxu0
        %v7026 = vpop.f32.mrf.mxu0
        %v7027 = vadd.f32 0.0, %v7026
        %v7028 = vpop.f32.mrf.mxu0
        %7029 = vdwg.mxu0
        %v7030 = vadd.f32 %v6893, %v7008
        %v7031 = vadd.f32 %v6894, %v7011
        %v7032 = vadd.f32 %v6895, %v7016
        %v7033 = vadd.f32 %v6896, %v7019
        %v7034 = vadd.f32 %v6897, %v7024
        %v7035 = vadd.f32 %v6898, %v7027
        %v7036 = vld [vmem:[#allocation8 + $0x12] sm:$0xff]
        %v7037 = vld [vmem:[#allocation8 + $0x1a] sm:$0xff]
        %v7038 = vld [vmem:[#allocation8 + $0x22] sm:$0xff]
        %v7039 = vld [vmem:[#allocation8 + $0x2a] sm:$0xff]
        %v7040 = vld [vmem:[#allocation8 + $0x32] sm:$0xff]
        %v7041 = vld [vmem:[#allocation8 + $0x3a] sm:$0xff]
        %v7042 = vpack.c.bf16 %v7037, %v7036
        %v7043 = vpack.c.bf16 %v7039, %v7038
        %v7044 = vpack.c.bf16 %v7041, %v7040
        %s7045 = scalar_lea.vmem [#allocation11], 2688
        %v7046 = vld [vmem:[%s7045] sm:$0xf]
        %v7047 = vld [vmem:[%s7045 + $0x4] sm:$0xf]
        %v7048 = vld [vmem:[%s7045 + $0x8] sm:$0xf]
        %v7049 = vld [vmem:[%s7045 + $0xc] sm:$0xf]
        %v7050 = vld [vmem:[%s7045 + $0x10] sm:$0xf]
        %v7051 = vld [vmem:[%s7045 + $0x14] sm:$0xf]
        %v7052 = vld [vmem:[%s7045 + $0x18] sm:$0xf]
        %v7053 = vld [vmem:[%s7045 + $0x1c] sm:$0xf]
        %v7054 = vld [vmem:[%s7045 + $0x20] sm:$0xf]
        %v7055 = vld [vmem:[%s7045 + $0x24] sm:$0xf]
        %v7056 = vld [vmem:[%s7045 + $0x28] sm:$0xf]
        %v7057 = vld [vmem:[%s7045 + $0x2c] sm:$0xf]
        %v7058 = vld [vmem:[%s7045 + $0x30] sm:$0xf]
        %v7059 = vld [vmem:[%s7045 + $0x34] sm:$0xf]
        %v7060 = vld [vmem:[%s7045 + $0x38] sm:$0xf]
        %v7061 = vld [vmem:[%s7045 + $0x3c] sm:$0xf]
        %v7078 = vunpack.c.l.b16 %v7046
        %v7079 = vunpack.c.l.b16 %v7047
        %v7080 = vunpack.c.l.b16 %v7048
        %v7081 = vunpack.c.l.b16 %v7049
        %v7082 = vunpack.c.l.b16 %v7050
        %v7083 = vunpack.c.l.b16 %v7051
        %v7084 = vunpack.c.l.b16 %v7052
        %v7085 = vunpack.c.l.b16 %v7053
        %v7086 = vunpack.c.l.b16 %v7054
        %v7087 = vunpack.c.l.b16 %v7055
        %v7088 = vunpack.c.l.b16 %v7056
        %v7089 = vunpack.c.l.b16 %v7057
        %v7090 = vunpack.c.l.b16 %v7058
        %v7091 = vunpack.c.l.b16 %v7059
        %v7092 = vunpack.c.l.b16 %v7060
        %v7093 = vunpack.c.l.b16 %v7061
        %v7094 = vpack.c.b16 %v7079, %v7078
        %v7095 = vpack.c.b16 %v7081, %v7080
        %v7096 = vpack.c.b16 %v7083, %v7082
        %v7097 = vpack.c.b16 %v7085, %v7084
        %v7098 = vpack.c.b16 %v7087, %v7086
        %v7099 = vpack.c.b16 %v7089, %v7088
        %v7100 = vpack.c.b16 %v7091, %v7090
        %v7101 = vpack.c.b16 %v7093, %v7092
        %7110 = vmatprep.subr.bf16.mxu0 0
        %7111 = vmatpush1.bf16.msra.mxu0 %v7101
        %7112 = vmatprep.subr.bf16.mxu0 0
        %7113 = vmatpush1.bf16.msra.mxu0 %v7100
        %7114 = vmatprep.subr.bf16.mxu0 0
        %7115 = vmatpush1.bf16.msra.mxu0 %v7099
        %7116 = vmatprep.subr.bf16.mxu0 0
        %7117 = vmatpush1.bf16.msra.mxu0 %v7098
        %7118 = vmatprep.subr.bf16.mxu0 0
        %7119 = vmatpush1.bf16.msra.mxu0 %v7097
        %7120 = vmatprep.subr.bf16.mxu0 0
        %7121 = vmatpush1.bf16.msra.mxu0 %v7096
        %7122 = vmatprep.subr.bf16.mxu0 0
        %7123 = vmatpush1.bf16.msra.mxu0 %v7095
        %7124 = vmatprep.subr.bf16.mxu0 0
        %7125 = vmatpush1.bf16.msra.mxu0 %v7094
        %7126 = vmatprep.subr.bf16.mxu0 0
        %7127 = vmatpush2.bf16.msra.mxu0 0
        %7128 = vmatprep.subr.bf16.mxu0 0
        %7129 = vmatpush2.bf16.msra.mxu0 0
        %7130 = vmatprep.subr.bf16.mxu0 0
        %7131 = vmatpush2.bf16.msra.mxu0 0
        %7132 = vmatprep.subr.bf16.mxu0 0
        %7133 = vmatpush2.bf16.msra.mxu0 0
        %7134 = vmatprep.subr.bf16.mxu0 0
        %7135 = vmatpush2.bf16.msra.mxu0 0
        %7136 = vmatprep.subr.bf16.mxu0 0
        %7137 = vmatpush2.bf16.msra.mxu0 0
        %7138 = vmatprep.subr.bf16.mxu0 0
        %7139 = vmatpush2.bf16.msra.mxu0 0
        %7140 = vmatprep.subr.bf16.mxu0 0
        %7141 = vmatpush2.bf16.msra.mxu0 0
        %7142 = vmatprep.mubr.bf16.mxu0 0
        %7143 = vmatmul.mubr.bf16.gmra.mxu0 %v7042
        %v7144 = vpop.f32.mrf.mxu0
        %v7145 = vadd.f32 0.0, %v7144
        %v7146 = vpop.f32.mrf.mxu0
        %v7147 = vpop.f32.mrf.mxu0
        %v7148 = vadd.f32 0.0, %v7147
        %v7149 = vpop.f32.mrf.mxu0
        %7150 = vmatprep.mubr.bf16.mxu0 0
        %7151 = vmatmul.mubr.bf16.gmra.mxu0 %v7043
        %v7152 = vpop.f32.mrf.mxu0
        %v7153 = vadd.f32 0.0, %v7152
        %v7154 = vpop.f32.mrf.mxu0
        %v7155 = vpop.f32.mrf.mxu0
        %v7156 = vadd.f32 0.0, %v7155
        %v7157 = vpop.f32.mrf.mxu0
        %7158 = vmatprep.mubr.bf16.mxu0 0
        %7159 = vmatmul.mubr.bf16.gmra.mxu0 %v7044
        %v7160 = vpop.f32.mrf.mxu0
        %v7161 = vadd.f32 0.0, %v7160
        %v7162 = vpop.f32.mrf.mxu0
        %v7163 = vpop.f32.mrf.mxu0
        %v7164 = vadd.f32 0.0, %v7163
        %v7165 = vpop.f32.mrf.mxu0
        %7166 = vdwg.mxu0
        %v7167 = vadd.f32 %v7030, %v7145
        %v7168 = vadd.f32 %v7031, %v7148
        %v7169 = vadd.f32 %v7032, %v7153
        %v7170 = vadd.f32 %v7033, %v7156
        %v7171 = vadd.f32 %v7034, %v7161
        %v7172 = vadd.f32 %v7035, %v7164
        %vm7173 = vcmp.ge.f32.partialorder %v7167, 0.0
        %vm7174 = vcmp.ge.f32.partialorder %v7168, 0.0
        %vm7175 = vcmp.ge.f32.partialorder %v7169, 0.0
        %vm7176 = vcmp.ge.f32.partialorder %v7170, 0.0
        %vm7177 = vcmp.ge.f32.partialorder %v7171, 0.0
        %vm7178 = vcmp.ge.f32.partialorder %v7172, 0.0
        %v7179 = vmul.f32 %v7167, 0.01
        %v7180 = vmul.f32 %v7168, 0.01
        %v7181 = vmul.f32 %v7169, 0.01
        %v7182 = vmul.f32 %v7170, 0.01
        %v7183 = vmul.f32 %v7171, 0.01
        %v7184 = vmul.f32 %v7172, 0.01
        %v7185 = vsel %vm7173, %v7167, %v7179
        %v7186 = vsel %vm7174, %v7168, %v7180
        %v7187 = vsel %vm7175, %v7169, %v7181
        %v7188 = vsel %vm7176, %v7170, %v7182
        %v7189 = vsel %vm7177, %v7171, %v7183
        %v7190 = vsel %vm7178, %v7172, %v7184
        %7191 = vst [vmem:[#allocation9] sm:$0xff] %v7185
        %7192 = vst [vmem:[#allocation9 + $0x8] sm:$0xff] %v7186
        %7193 = vst [vmem:[#allocation9 + $0x10] sm:$0xff] %v7187
        %7194 = vst [vmem:[#allocation9 + $0x18] sm:$0xff] %v7188
        %7195 = vst [vmem:[#allocation9 + $0x20] sm:$0xff] %v7189
        %7196 = vst [vmem:[#allocation9 + $0x28] sm:$0xff] %v7190
        %7197 = vst [vmem:[#allocation10] sm:$0xff] 0.0
        %7198 = vst [vmem:[#allocation10 + $0x8] sm:$0xff] 0.0
        %7199 = vst [vmem:[#allocation10 + $0x10] sm:$0xff] 0.0
        %7200 = vst [vmem:[#allocation10 + $0x18] sm:$0xff] 0.0
        %7201 = vst [vmem:[#allocation10 + $0x20] sm:$0xff] 0.0
        %7202 = vst [vmem:[#allocation10 + $0x28] sm:$0xff] 0.0
        %7203 = vst [vmem:[#allocation10 + $0x30] sm:$0xff] 0.0
        %7204 = vst [vmem:[#allocation10 + $0x38] sm:$0xff] 0.0
        %7205 = vst [vmem:[#allocation10 + $0x40] sm:$0xff] 0.0
        %7206 = vst [vmem:[#allocation10 + $0x48] sm:$0xff] 0.0
        %7207 = vst [vmem:[#allocation10 + $0x50] sm:$0xff] 0.0
        %7208 = vst [vmem:[#allocation10 + $0x58] sm:$0xff] 0.0
        %7209 = vst [vmem:[#allocation10 + $0x60] sm:$0xff] 0.0
        %7210 = vst [vmem:[#allocation10 + $0x68] sm:$0xff] 0.0
        %7211 = vst [vmem:[#allocation10 + $0x70] sm:$0xff] 0.0
        %7212 = vst [vmem:[#allocation10 + $0x78] sm:$0xff] 0.0
        %7213 = vst [vmem:[#allocation10 + $0x80] sm:$0xff] 0.0
        %7214 = vst [vmem:[#allocation10 + $0x88] sm:$0xff] 0.0
        %7215 = vst [vmem:[#allocation10 + $0x90] sm:$0xff] 0.0
        %7216 = vst [vmem:[#allocation10 + $0x98] sm:$0xff] 0.0
        %7217 = vst [vmem:[#allocation10 + $0xa0] sm:$0xff] 0.0
        %7218 = vst [vmem:[#allocation10 + $0xa8] sm:$0xff] 0.0
        %7219 = vst [vmem:[#allocation10 + $0xb0] sm:$0xff] 0.0
        %7220 = vst [vmem:[#allocation10 + $0xb8] sm:$0xff] 0.0
        %7221 = vst [vmem:[#allocation10 + $0xc0] sm:$0xff] 0.0
        %7222 = vst [vmem:[#allocation10 + $0xc8] sm:$0xff] 0.0
        %7223 = vst [vmem:[#allocation10 + $0xd0] sm:$0xff] 0.0
        %7224 = vst [vmem:[#allocation10 + $0xd8] sm:$0xff] 0.0
        %7225 = vst [vmem:[#allocation10 + $0xe0] sm:$0xff] 0.0
        %v7226 = vld [vmem:[#allocation9] sm:$0x3f]
        %s7227 = scalar_lea.vmem [#allocation10], 32
        %7228 = vst [vmem:[%s7227] ss:$2 sm:$0x3f] %v7226
        %v7229 = vld [vmem:[#allocation9 + $0x8] sm:$0x3f]
        %s7230 = scalar_lea.vmem [#allocation10], 62
        %7231 = vst [vmem:[%s7230] ss:$2 sm:$0x3f] %v7229
        %v7232 = vld [vmem:[#allocation9 + $0x10] sm:$0x3f]
        %s7233 = scalar_lea.vmem [#allocation10], 92
        %7234 = vst [vmem:[%s7233] ss:$2 sm:$0x3f] %v7232
        %v7235 = vld [vmem:[#allocation9 + $0x18] sm:$0x3f]
        %s7236 = scalar_lea.vmem [#allocation10], 122
        %7237 = vst [vmem:[%s7236] ss:$2 sm:$0x3f] %v7235
        %v7238 = vld [vmem:[#allocation9 + $0x20] sm:$0x3f]
        %s7239 = scalar_lea.vmem [#allocation10], 152
        %7240 = vst [vmem:[%s7239] ss:$2 sm:$0x3f] %v7238
        %v7241 = vld [vmem:[#allocation9 + $0x28] sm:$0x3f]
        %s7242 = scalar_lea.vmem [#allocation10], 182
        %7243 = vst [vmem:[%s7242] ss:$2 sm:$0x3f] %v7241
        %v7244 = vld [vmem:[#allocation13 + $0xa] sm:$0x1]
        %v7245 = vlaneseq
        %v7246 = vshrl.u32 %v7245, 7
        %v7247 = vsub.s32 0, %v7246
        %v7248 = vrot.slane %v7244, %v7247
        %v7249 = vld [vmem:[#allocation10] sm:$0xff]
        %v7250 = vld [vmem:[#allocation10 + $0x8] sm:$0xff]
        %v7251 = vld [vmem:[#allocation10 + $0x10] sm:$0xff]
        %v7252 = vld [vmem:[#allocation10 + $0x18] sm:$0xff]
        %v7253 = vld [vmem:[#allocation10 + $0x20] sm:$0xff]
        %v7254 = vld [vmem:[#allocation10 + $0x28] sm:$0xff]
        %v7255 = vld [vmem:[#allocation10 + $0x30] sm:$0xff]
        %v7256 = vld [vmem:[#allocation10 + $0x38] sm:$0xff]
        %v7257 = vld [vmem:[#allocation10 + $0x40] sm:$0xff]
        %v7258 = vld [vmem:[#allocation10 + $0x48] sm:$0xff]
        %v7259 = vld [vmem:[#allocation10 + $0x50] sm:$0xff]
        %v7260 = vld [vmem:[#allocation10 + $0x58] sm:$0xff]
        %v7261 = vld [vmem:[#allocation10 + $0x60] sm:$0xff]
        %v7262 = vld [vmem:[#allocation10 + $0x68] sm:$0xff]
        %v7263 = vld [vmem:[#allocation10 + $0x70] sm:$0xff]
        %v7264 = vld [vmem:[#allocation10 + $0x78] sm:$0xff]
        %v7265 = vld [vmem:[#allocation10 + $0x80] sm:$0xff]
        %v7266 = vld [vmem:[#allocation10 + $0x88] sm:$0xff]
        %v7267 = vld [vmem:[#allocation10 + $0x90] sm:$0xff]
        %v7268 = vld [vmem:[#allocation10 + $0x98] sm:$0xff]
        %v7269 = vld [vmem:[#allocation10 + $0xa0] sm:$0xff]
        %v7270 = vld [vmem:[#allocation10 + $0xa8] sm:$0xff]
        %v7271 = vld [vmem:[#allocation10 + $0xb0] sm:$0xff]
        %v7272 = vld [vmem:[#allocation10 + $0xb8] sm:$0xff]
        %v7273 = vld [vmem:[#allocation10 + $0xc0] sm:$0x7]
        %v7274 = vpack.c.bf16 %v7250, %v7249
        %v7275 = vpack.c.bf16 %v7252, %v7251
        %v7276 = vpack.c.bf16 %v7254, %v7253
        %v7277 = vpack.c.bf16 %v7256, %v7255
        %v7278 = vpack.c.bf16 %v7258, %v7257
        %v7279 = vpack.c.bf16 %v7260, %v7259
        %v7280 = vpack.c.bf16 %v7262, %v7261
        %v7281 = vpack.c.bf16 %v7264, %v7263
        %v7282 = vpack.c.bf16 %v7266, %v7265
        %v7283 = vpack.c.bf16 %v7268, %v7267
        %v7284 = vpack.c.bf16 %v7270, %v7269
        %v7285 = vpack.c.bf16 %v7272, %v7271
        %v7286 = vpack.c.bf16 %v7273, %v7273
        %s7287 = scalar_lea.vmem [#allocation11], 2752
        %v7288 = vld [vmem:[%s7287] sm:$0xf]
        %v7289 = vld [vmem:[%s7287 + $0x4] sm:$0xf]
        %v7290 = vld [vmem:[%s7287 + $0x8] sm:$0xf]
        %v7291 = vld [vmem:[%s7287 + $0xc] sm:$0xf]
        %v7292 = vld [vmem:[%s7287 + $0x10] sm:$0xf]
        %v7293 = vld [vmem:[%s7287 + $0x14] sm:$0xf]
        %v7294 = vld [vmem:[%s7287 + $0x18] sm:$0xf]
        %v7295 = vld [vmem:[%s7287 + $0x1c] sm:$0xf]
        %v7296 = vld [vmem:[%s7287 + $0x20] sm:$0xf]
        %v7297 = vld [vmem:[%s7287 + $0x24] sm:$0xf]
        %v7298 = vld [vmem:[%s7287 + $0x28] sm:$0xf]
        %v7299 = vld [vmem:[%s7287 + $0x2c] sm:$0xf]
        %v7300 = vld [vmem:[%s7287 + $0x30] sm:$0xf]
        %v7301 = vld [vmem:[%s7287 + $0x34] sm:$0xf]
        %v7302 = vld [vmem:[%s7287 + $0x38] sm:$0xf]
        %v7303 = vld [vmem:[%s7287 + $0x3c] sm:$0xf]
        %v7320 = vunpack.c.l.b16 %v7288
        %v7321 = vunpack.c.l.b16 %v7289
        %v7322 = vunpack.c.l.b16 %v7290
        %v7323 = vunpack.c.l.b16 %v7291
        %v7324 = vunpack.c.l.b16 %v7292
        %v7325 = vunpack.c.l.b16 %v7293
        %v7326 = vunpack.c.l.b16 %v7294
        %v7327 = vunpack.c.l.b16 %v7295
        %v7328 = vunpack.c.l.b16 %v7296
        %v7329 = vunpack.c.l.b16 %v7297
        %v7330 = vunpack.c.l.b16 %v7298
        %v7331 = vunpack.c.l.b16 %v7299
        %v7332 = vunpack.c.l.b16 %v7300
        %v7333 = vunpack.c.l.b16 %v7301
        %v7334 = vunpack.c.l.b16 %v7302
        %v7335 = vunpack.c.l.b16 %v7303
        %v7336 = vpack.c.b16 %v7321, %v7320
        %v7337 = vpack.c.b16 %v7323, %v7322
        %v7338 = vpack.c.b16 %v7325, %v7324
        %v7339 = vpack.c.b16 %v7327, %v7326
        %v7340 = vpack.c.b16 %v7329, %v7328
        %v7341 = vpack.c.b16 %v7331, %v7330
        %v7342 = vpack.c.b16 %v7333, %v7332
        %v7343 = vpack.c.b16 %v7335, %v7334
        %7352 = vmatprep.subr.bf16.mxu0 0
        %7353 = vmatpush1.bf16.msra.mxu0 %v7343
        %7354 = vmatprep.subr.bf16.mxu0 0
        %7355 = vmatpush1.bf16.msra.mxu0 %v7342
        %7356 = vmatprep.subr.bf16.mxu0 0
        %7357 = vmatpush1.bf16.msra.mxu0 %v7341
        %7358 = vmatprep.subr.bf16.mxu0 0
        %7359 = vmatpush1.bf16.msra.mxu0 %v7340
        %7360 = vmatprep.subr.bf16.mxu0 0
        %7361 = vmatpush1.bf16.msra.mxu0 %v7339
        %7362 = vmatprep.subr.bf16.mxu0 0
        %7363 = vmatpush1.bf16.msra.mxu0 %v7338
        %7364 = vmatprep.subr.bf16.mxu0 0
        %7365 = vmatpush1.bf16.msra.mxu0 %v7337
        %7366 = vmatprep.subr.bf16.mxu0 0
        %7367 = vmatpush1.bf16.msra.mxu0 %v7336
        %7368 = vmatprep.subr.bf16.mxu0 0
        %7369 = vmatpush2.bf16.msra.mxu0 0
        %7370 = vmatprep.subr.bf16.mxu0 0
        %7371 = vmatpush2.bf16.msra.mxu0 0
        %7372 = vmatprep.subr.bf16.mxu0 0
        %7373 = vmatpush2.bf16.msra.mxu0 0
        %7374 = vmatprep.subr.bf16.mxu0 0
        %7375 = vmatpush2.bf16.msra.mxu0 0
        %7376 = vmatprep.subr.bf16.mxu0 0
        %7377 = vmatpush2.bf16.msra.mxu0 0
        %7378 = vmatprep.subr.bf16.mxu0 0
        %7379 = vmatpush2.bf16.msra.mxu0 0
        %7380 = vmatprep.subr.bf16.mxu0 0
        %7381 = vmatpush2.bf16.msra.mxu0 0
        %7382 = vmatprep.subr.bf16.mxu0 0
        %7383 = vmatpush2.bf16.msra.mxu0 0
        %7384 = vmatprep.mubr.bf16.mxu0 0
        %7385 = vmatmul.mubr.bf16.gmra.mxu0 %v7274
        %v7386 = vpop.f32.mrf.mxu0
        %v7387 = vadd.f32 0.0, %v7386
        %v7388 = vpop.f32.mrf.mxu0
        %v7389 = vpop.f32.mrf.mxu0
        %v7390 = vadd.f32 0.0, %v7389
        %v7391 = vpop.f32.mrf.mxu0
        %7392 = vmatprep.mubr.bf16.mxu0 0
        %7393 = vmatmul.mubr.bf16.gmra.mxu0 %v7275
        %v7394 = vpop.f32.mrf.mxu0
        %v7395 = vadd.f32 0.0, %v7394
        %v7396 = vpop.f32.mrf.mxu0
        %v7397 = vpop.f32.mrf.mxu0
        %v7398 = vadd.f32 0.0, %v7397
        %v7399 = vpop.f32.mrf.mxu0
        %7400 = vmatprep.mubr.bf16.mxu0 0
        %7401 = vmatmul.mubr.bf16.gmra.mxu0 %v7276
        %v7402 = vpop.f32.mrf.mxu0
        %v7403 = vadd.f32 0.0, %v7402
        %v7404 = vpop.f32.mrf.mxu0
        %v7405 = vpop.f32.mrf.mxu0
        %v7406 = vadd.f32 0.0, %v7405
        %v7407 = vpop.f32.mrf.mxu0
        %7408 = vmatprep.mubr.bf16.mxu0 0
        %7409 = vmatmul.mubr.bf16.gmra.mxu0 %v7277
        %v7410 = vpop.f32.mrf.mxu0
        %v7411 = vadd.f32 0.0, %v7410
        %v7412 = vpop.f32.mrf.mxu0
        %v7413 = vpop.f32.mrf.mxu0
        %v7414 = vadd.f32 0.0, %v7413
        %v7415 = vpop.f32.mrf.mxu0
        %7416 = vmatprep.mubr.bf16.mxu0 0
        %7417 = vmatmul.mubr.bf16.gmra.mxu0 %v7278
        %v7418 = vpop.f32.mrf.mxu0
        %v7419 = vadd.f32 0.0, %v7418
        %v7420 = vpop.f32.mrf.mxu0
        %v7421 = vpop.f32.mrf.mxu0
        %v7422 = vadd.f32 0.0, %v7421
        %v7423 = vpop.f32.mrf.mxu0
        %7424 = vmatprep.mubr.bf16.mxu0 0
        %7425 = vmatmul.mubr.bf16.gmra.mxu0 %v7279
        %v7426 = vpop.f32.mrf.mxu0
        %v7427 = vadd.f32 0.0, %v7426
        %v7428 = vpop.f32.mrf.mxu0
        %v7429 = vpop.f32.mrf.mxu0
        %v7430 = vadd.f32 0.0, %v7429
        %v7431 = vpop.f32.mrf.mxu0
        %7432 = vmatprep.mubr.bf16.mxu0 0
        %7433 = vmatmul.mubr.bf16.gmra.mxu0 %v7280
        %v7434 = vpop.f32.mrf.mxu0
        %v7435 = vadd.f32 0.0, %v7434
        %v7436 = vpop.f32.mrf.mxu0
        %v7437 = vpop.f32.mrf.mxu0
        %v7438 = vadd.f32 0.0, %v7437
        %v7439 = vpop.f32.mrf.mxu0
        %7440 = vmatprep.mubr.bf16.mxu0 0
        %7441 = vmatmul.mubr.bf16.gmra.mxu0 %v7281
        %v7442 = vpop.f32.mrf.mxu0
        %v7443 = vadd.f32 0.0, %v7442
        %v7444 = vpop.f32.mrf.mxu0
        %v7445 = vpop.f32.mrf.mxu0
        %v7446 = vadd.f32 0.0, %v7445
        %v7447 = vpop.f32.mrf.mxu0
        %7448 = vmatprep.mubr.bf16.mxu0 0
        %7449 = vmatmul.mubr.bf16.gmra.mxu0 %v7282
        %v7450 = vpop.f32.mrf.mxu0
        %v7451 = vadd.f32 0.0, %v7450
        %v7452 = vpop.f32.mrf.mxu0
        %v7453 = vpop.f32.mrf.mxu0
        %v7454 = vadd.f32 0.0, %v7453
        %v7455 = vpop.f32.mrf.mxu0
        %7456 = vmatprep.mubr.bf16.mxu0 0
        %7457 = vmatmul.mubr.bf16.gmra.mxu0 %v7283
        %v7458 = vpop.f32.mrf.mxu0
        %v7459 = vadd.f32 0.0, %v7458
        %v7460 = vpop.f32.mrf.mxu0
        %v7461 = vpop.f32.mrf.mxu0
        %v7462 = vadd.f32 0.0, %v7461
        %v7463 = vpop.f32.mrf.mxu0
        %7464 = vmatprep.mubr.bf16.mxu0 0
        %7465 = vmatmul.mubr.bf16.gmra.mxu0 %v7284
        %v7466 = vpop.f32.mrf.mxu0
        %v7467 = vadd.f32 0.0, %v7466
        %v7468 = vpop.f32.mrf.mxu0
        %v7469 = vpop.f32.mrf.mxu0
        %v7470 = vadd.f32 0.0, %v7469
        %v7471 = vpop.f32.mrf.mxu0
        %7472 = vmatprep.mubr.bf16.mxu0 0
        %7473 = vmatmul.mubr.bf16.gmra.mxu0 %v7285
        %v7474 = vpop.f32.mrf.mxu0
        %v7475 = vadd.f32 0.0, %v7474
        %v7476 = vpop.f32.mrf.mxu0
        %v7477 = vpop.f32.mrf.mxu0
        %v7478 = vadd.f32 0.0, %v7477
        %v7479 = vpop.f32.mrf.mxu0
        %7480 = vmatprep.mubr.bf16.mxu0 0
        %7481 = vmatmul.mubr.bf16.gmra.mxu0 %v7286
        %v7482 = vpop.f32.mrf.mxu0
        %v7483 = vadd.f32 0.0, %v7482
        %v7484 = vpop.f32.mrf.mxu0
        %v7485 = vpop.f32.mrf.mxu0
        %v7486 = vpop.f32.mrf.mxu0
        %7487 = vdwg.mxu0
        %v7488 = vadd.f32 %v7248, %v7387
        %v7489 = vadd.f32 %v7248, %v7390
        %v7490 = vadd.f32 %v7248, %v7395
        %v7491 = vadd.f32 %v7248, %v7398
        %v7492 = vadd.f32 %v7248, %v7403
        %v7493 = vadd.f32 %v7248, %v7406
        %v7494 = vadd.f32 %v7248, %v7411
        %v7495 = vadd.f32 %v7248, %v7414
        %v7496 = vadd.f32 %v7248, %v7419
        %v7497 = vadd.f32 %v7248, %v7422
        %v7498 = vadd.f32 %v7248, %v7427
        %v7499 = vadd.f32 %v7248, %v7430
        %v7500 = vadd.f32 %v7248, %v7435
        %v7501 = vadd.f32 %v7248, %v7438
        %v7502 = vadd.f32 %v7248, %v7443
        %v7503 = vadd.f32 %v7248, %v7446
        %v7504 = vadd.f32 %v7248, %v7451
        %v7505 = vadd.f32 %v7248, %v7454
        %v7506 = vadd.f32 %v7248, %v7459
        %v7507 = vadd.f32 %v7248, %v7462
        %v7508 = vadd.f32 %v7248, %v7467
        %v7509 = vadd.f32 %v7248, %v7470
        %v7510 = vadd.f32 %v7248, %v7475
        %v7511 = vadd.f32 %v7248, %v7478
        %v7512 = vadd.f32 %v7248, %v7483
        %v7513 = vld [vmem:[#allocation10 + $0x1] sm:$0xff]
        %v7514 = vld [vmem:[#allocation10 + $0x9] sm:$0xff]
        %v7515 = vld [vmem:[#allocation10 + $0x11] sm:$0xff]
        %v7516 = vld [vmem:[#allocation10 + $0x19] sm:$0xff]
        %v7517 = vld [vmem:[#allocation10 + $0x21] sm:$0xff]
        %v7518 = vld [vmem:[#allocation10 + $0x29] sm:$0xff]
        %v7519 = vld [vmem:[#allocation10 + $0x31] sm:$0xff]
        %v7520 = vld [vmem:[#allocation10 + $0x39] sm:$0xff]
        %v7521 = vld [vmem:[#allocation10 + $0x41] sm:$0xff]
        %v7522 = vld [vmem:[#allocation10 + $0x49] sm:$0xff]
        %v7523 = vld [vmem:[#allocation10 + $0x51] sm:$0xff]
        %v7524 = vld [vmem:[#allocation10 + $0x59] sm:$0xff]
        %v7525 = vld [vmem:[#allocation10 + $0x61] sm:$0xff]
        %v7526 = vld [vmem:[#allocation10 + $0x69] sm:$0xff]
        %v7527 = vld [vmem:[#allocation10 + $0x71] sm:$0xff]
        %v7528 = vld [vmem:[#allocation10 + $0x79] sm:$0xff]
        %v7529 = vld [vmem:[#allocation10 + $0x81] sm:$0xff]
        %v7530 = vld [vmem:[#allocation10 + $0x89] sm:$0xff]
        %v7531 = vld [vmem:[#allocation10 + $0x91] sm:$0xff]
        %v7532 = vld [vmem:[#allocation10 + $0x99] sm:$0xff]
        %v7533 = vld [vmem:[#allocation10 + $0xa1] sm:$0xff]
        %v7534 = vld [vmem:[#allocation10 + $0xa9] sm:$0xff]
        %v7535 = vld [vmem:[#allocation10 + $0xb1] sm:$0xff]
        %v7536 = vld [vmem:[#allocation10 + $0xb9] sm:$0xff]
        %v7537 = vld [vmem:[#allocation10 + $0xc1] sm:$0x7]
        %v7538 = vpack.c.bf16 %v7514, %v7513
        %v7539 = vpack.c.bf16 %v7516, %v7515
        %v7540 = vpack.c.bf16 %v7518, %v7517
        %v7541 = vpack.c.bf16 %v7520, %v7519
        %v7542 = vpack.c.bf16 %v7522, %v7521
        %v7543 = vpack.c.bf16 %v7524, %v7523
        %v7544 = vpack.c.bf16 %v7526, %v7525
        %v7545 = vpack.c.bf16 %v7528, %v7527
        %v7546 = vpack.c.bf16 %v7530, %v7529
        %v7547 = vpack.c.bf16 %v7532, %v7531
        %v7548 = vpack.c.bf16 %v7534, %v7533
        %v7549 = vpack.c.bf16 %v7536, %v7535
        %v7550 = vpack.c.bf16 %v7537, %v7537
        %s7551 = scalar_lea.vmem [#allocation11], 2816
        %v7552 = vld [vmem:[%s7551] sm:$0xf]
        %v7553 = vld [vmem:[%s7551 + $0x4] sm:$0xf]
        %v7554 = vld [vmem:[%s7551 + $0x8] sm:$0xf]
        %v7555 = vld [vmem:[%s7551 + $0xc] sm:$0xf]
        %v7556 = vld [vmem:[%s7551 + $0x10] sm:$0xf]
        %v7557 = vld [vmem:[%s7551 + $0x14] sm:$0xf]
        %v7558 = vld [vmem:[%s7551 + $0x18] sm:$0xf]
        %v7559 = vld [vmem:[%s7551 + $0x1c] sm:$0xf]
        %v7560 = vld [vmem:[%s7551 + $0x20] sm:$0xf]
        %v7561 = vld [vmem:[%s7551 + $0x24] sm:$0xf]
        %v7562 = vld [vmem:[%s7551 + $0x28] sm:$0xf]
        %v7563 = vld [vmem:[%s7551 + $0x2c] sm:$0xf]
        %v7564 = vld [vmem:[%s7551 + $0x30] sm:$0xf]
        %v7565 = vld [vmem:[%s7551 + $0x34] sm:$0xf]
        %v7566 = vld [vmem:[%s7551 + $0x38] sm:$0xf]
        %v7567 = vld [vmem:[%s7551 + $0x3c] sm:$0xf]
        %v7584 = vunpack.c.l.b16 %v7552
        %v7585 = vunpack.c.l.b16 %v7553
        %v7586 = vunpack.c.l.b16 %v7554
        %v7587 = vunpack.c.l.b16 %v7555
        %v7588 = vunpack.c.l.b16 %v7556
        %v7589 = vunpack.c.l.b16 %v7557
        %v7590 = vunpack.c.l.b16 %v7558
        %v7591 = vunpack.c.l.b16 %v7559
        %v7592 = vunpack.c.l.b16 %v7560
        %v7593 = vunpack.c.l.b16 %v7561
        %v7594 = vunpack.c.l.b16 %v7562
        %v7595 = vunpack.c.l.b16 %v7563
        %v7596 = vunpack.c.l.b16 %v7564
        %v7597 = vunpack.c.l.b16 %v7565
        %v7598 = vunpack.c.l.b16 %v7566
        %v7599 = vunpack.c.l.b16 %v7567
        %v7600 = vpack.c.b16 %v7585, %v7584
        %v7601 = vpack.c.b16 %v7587, %v7586
        %v7602 = vpack.c.b16 %v7589, %v7588
        %v7603 = vpack.c.b16 %v7591, %v7590
        %v7604 = vpack.c.b16 %v7593, %v7592
        %v7605 = vpack.c.b16 %v7595, %v7594
        %v7606 = vpack.c.b16 %v7597, %v7596
        %v7607 = vpack.c.b16 %v7599, %v7598
        %7616 = vmatprep.subr.bf16.mxu0 0
        %7617 = vmatpush1.bf16.msra.mxu0 %v7607
        %7618 = vmatprep.subr.bf16.mxu0 0
        %7619 = vmatpush1.bf16.msra.mxu0 %v7606
        %7620 = vmatprep.subr.bf16.mxu0 0
        %7621 = vmatpush1.bf16.msra.mxu0 %v7605
        %7622 = vmatprep.subr.bf16.mxu0 0
        %7623 = vmatpush1.bf16.msra.mxu0 %v7604
        %7624 = vmatprep.subr.bf16.mxu0 0
        %7625 = vmatpush1.bf16.msra.mxu0 %v7603
        %7626 = vmatprep.subr.bf16.mxu0 0
        %7627 = vmatpush1.bf16.msra.mxu0 %v7602
        %7628 = vmatprep.subr.bf16.mxu0 0
        %7629 = vmatpush1.bf16.msra.mxu0 %v7601
        %7630 = vmatprep.subr.bf16.mxu0 0
        %7631 = vmatpush1.bf16.msra.mxu0 %v7600
        %7632 = vmatprep.subr.bf16.mxu0 0
        %7633 = vmatpush2.bf16.msra.mxu0 0
        %7634 = vmatprep.subr.bf16.mxu0 0
        %7635 = vmatpush2.bf16.msra.mxu0 0
        %7636 = vmatprep.subr.bf16.mxu0 0
        %7637 = vmatpush2.bf16.msra.mxu0 0
        %7638 = vmatprep.subr.bf16.mxu0 0
        %7639 = vmatpush2.bf16.msra.mxu0 0
        %7640 = vmatprep.subr.bf16.mxu0 0
        %7641 = vmatpush2.bf16.msra.mxu0 0
        %7642 = vmatprep.subr.bf16.mxu0 0
        %7643 = vmatpush2.bf16.msra.mxu0 0
        %7644 = vmatprep.subr.bf16.mxu0 0
        %7645 = vmatpush2.bf16.msra.mxu0 0
        %7646 = vmatprep.subr.bf16.mxu0 0
        %7647 = vmatpush2.bf16.msra.mxu0 0
        %7648 = vmatprep.mubr.bf16.mxu0 0
        %7649 = vmatmul.mubr.bf16.gmra.mxu0 %v7538
        %v7650 = vpop.f32.mrf.mxu0
        %v7651 = vadd.f32 0.0, %v7650
        %v7652 = vpop.f32.mrf.mxu0
        %v7653 = vpop.f32.mrf.mxu0
        %v7654 = vadd.f32 0.0, %v7653
        %v7655 = vpop.f32.mrf.mxu0
        %7656 = vmatprep.mubr.bf16.mxu0 0
        %7657 = vmatmul.mubr.bf16.gmra.mxu0 %v7539
        %v7658 = vpop.f32.mrf.mxu0
        %v7659 = vadd.f32 0.0, %v7658
        %v7660 = vpop.f32.mrf.mxu0
        %v7661 = vpop.f32.mrf.mxu0
        %v7662 = vadd.f32 0.0, %v7661
        %v7663 = vpop.f32.mrf.mxu0
        %7664 = vmatprep.mubr.bf16.mxu0 0
        %7665 = vmatmul.mubr.bf16.gmra.mxu0 %v7540
        %v7666 = vpop.f32.mrf.mxu0
        %v7667 = vadd.f32 0.0, %v7666
        %v7668 = vpop.f32.mrf.mxu0
        %v7669 = vpop.f32.mrf.mxu0
        %v7670 = vadd.f32 0.0, %v7669
        %v7671 = vpop.f32.mrf.mxu0
        %7672 = vmatprep.mubr.bf16.mxu0 0
        %7673 = vmatmul.mubr.bf16.gmra.mxu0 %v7541
        %v7674 = vpop.f32.mrf.mxu0
        %v7675 = vadd.f32 0.0, %v7674
        %v7676 = vpop.f32.mrf.mxu0
        %v7677 = vpop.f32.mrf.mxu0
        %v7678 = vadd.f32 0.0, %v7677
        %v7679 = vpop.f32.mrf.mxu0
        %7680 = vmatprep.mubr.bf16.mxu0 0
        %7681 = vmatmul.mubr.bf16.gmra.mxu0 %v7542
        %v7682 = vpop.f32.mrf.mxu0
        %v7683 = vadd.f32 0.0, %v7682
        %v7684 = vpop.f32.mrf.mxu0
        %v7685 = vpop.f32.mrf.mxu0
        %v7686 = vadd.f32 0.0, %v7685
        %v7687 = vpop.f32.mrf.mxu0
        %7688 = vmatprep.mubr.bf16.mxu0 0
        %7689 = vmatmul.mubr.bf16.gmra.mxu0 %v7543
        %v7690 = vpop.f32.mrf.mxu0
        %v7691 = vadd.f32 0.0, %v7690
        %v7692 = vpop.f32.mrf.mxu0
        %v7693 = vpop.f32.mrf.mxu0
        %v7694 = vadd.f32 0.0, %v7693
        %v7695 = vpop.f32.mrf.mxu0
        %7696 = vmatprep.mubr.bf16.mxu0 0
        %7697 = vmatmul.mubr.bf16.gmra.mxu0 %v7544
        %v7698 = vpop.f32.mrf.mxu0
        %v7699 = vadd.f32 0.0, %v7698
        %v7700 = vpop.f32.mrf.mxu0
        %v7701 = vpop.f32.mrf.mxu0
        %v7702 = vadd.f32 0.0, %v7701
        %v7703 = vpop.f32.mrf.mxu0
        %7704 = vmatprep.mubr.bf16.mxu0 0
        %7705 = vmatmul.mubr.bf16.gmra.mxu0 %v7545
        %v7706 = vpop.f32.mrf.mxu0
        %v7707 = vadd.f32 0.0, %v7706
        %v7708 = vpop.f32.mrf.mxu0
        %v7709 = vpop.f32.mrf.mxu0
        %v7710 = vadd.f32 0.0, %v7709
        %v7711 = vpop.f32.mrf.mxu0
        %7712 = vmatprep.mubr.bf16.mxu0 0
        %7713 = vmatmul.mubr.bf16.gmra.mxu0 %v7546
        %v7714 = vpop.f32.mrf.mxu0
        %v7715 = vadd.f32 0.0, %v7714
        %v7716 = vpop.f32.mrf.mxu0
        %v7717 = vpop.f32.mrf.mxu0
        %v7718 = vadd.f32 0.0, %v7717
        %v7719 = vpop.f32.mrf.mxu0
        %7720 = vmatprep.mubr.bf16.mxu0 0
        %7721 = vmatmul.mubr.bf16.gmra.mxu0 %v7547
        %v7722 = vpop.f32.mrf.mxu0
        %v7723 = vadd.f32 0.0, %v7722
        %v7724 = vpop.f32.mrf.mxu0
        %v7725 = vpop.f32.mrf.mxu0
        %v7726 = vadd.f32 0.0, %v7725
        %v7727 = vpop.f32.mrf.mxu0
        %7728 = vmatprep.mubr.bf16.mxu0 0
        %7729 = vmatmul.mubr.bf16.gmra.mxu0 %v7548
        %v7730 = vpop.f32.mrf.mxu0
        %v7731 = vadd.f32 0.0, %v7730
        %v7732 = vpop.f32.mrf.mxu0
        %v7733 = vpop.f32.mrf.mxu0
        %v7734 = vadd.f32 0.0, %v7733
        %v7735 = vpop.f32.mrf.mxu0
        %7736 = vmatprep.mubr.bf16.mxu0 0
        %7737 = vmatmul.mubr.bf16.gmra.mxu0 %v7549
        %v7738 = vpop.f32.mrf.mxu0
        %v7739 = vadd.f32 0.0, %v7738
        %v7740 = vpop.f32.mrf.mxu0
        %v7741 = vpop.f32.mrf.mxu0
        %v7742 = vadd.f32 0.0, %v7741
        %v7743 = vpop.f32.mrf.mxu0
        %7744 = vmatprep.mubr.bf16.mxu0 0
        %7745 = vmatmul.mubr.bf16.gmra.mxu0 %v7550
        %v7746 = vpop.f32.mrf.mxu0
        %v7747 = vadd.f32 0.0, %v7746
        %v7748 = vpop.f32.mrf.mxu0
        %v7749 = vpop.f32.mrf.mxu0
        %v7750 = vpop.f32.mrf.mxu0
        %7751 = vdwg.mxu0
        %v7752 = vadd.f32 %v7488, %v7651
        %v7753 = vadd.f32 %v7489, %v7654
        %v7754 = vadd.f32 %v7490, %v7659
        %v7755 = vadd.f32 %v7491, %v7662
        %v7756 = vadd.f32 %v7492, %v7667
        %v7757 = vadd.f32 %v7493, %v7670
        %v7758 = vadd.f32 %v7494, %v7675
        %v7759 = vadd.f32 %v7495, %v7678
        %v7760 = vadd.f32 %v7496, %v7683
        %v7761 = vadd.f32 %v7497, %v7686
        %v7762 = vadd.f32 %v7498, %v7691
        %v7763 = vadd.f32 %v7499, %v7694
        %v7764 = vadd.f32 %v7500, %v7699
        %v7765 = vadd.f32 %v7501, %v7702
        %v7766 = vadd.f32 %v7502, %v7707
        %v7767 = vadd.f32 %v7503, %v7710
        %v7768 = vadd.f32 %v7504, %v7715
        %v7769 = vadd.f32 %v7505, %v7718
        %v7770 = vadd.f32 %v7506, %v7723
        %v7771 = vadd.f32 %v7507, %v7726
        %v7772 = vadd.f32 %v7508, %v7731
        %v7773 = vadd.f32 %v7509, %v7734
        %v7774 = vadd.f32 %v7510, %v7739
        %v7775 = vadd.f32 %v7511, %v7742
        %v7776 = vadd.f32 %v7512, %v7747
        %v7777 = vld [vmem:[#allocation10 + $0x2] sm:$0xff]
        %v7778 = vld [vmem:[#allocation10 + $0xa] sm:$0xff]
        %v7779 = vld [vmem:[#allocation10 + $0x12] sm:$0xff]
        %v7780 = vld [vmem:[#allocation10 + $0x1a] sm:$0xff]
        %v7781 = vld [vmem:[#allocation10 + $0x22] sm:$0xff]
        %v7782 = vld [vmem:[#allocation10 + $0x2a] sm:$0xff]
        %v7783 = vld [vmem:[#allocation10 + $0x32] sm:$0xff]
        %v7784 = vld [vmem:[#allocation10 + $0x3a] sm:$0xff]
        %v7785 = vld [vmem:[#allocation10 + $0x42] sm:$0xff]
        %v7786 = vld [vmem:[#allocation10 + $0x4a] sm:$0xff]
        %v7787 = vld [vmem:[#allocation10 + $0x52] sm:$0xff]
        %v7788 = vld [vmem:[#allocation10 + $0x5a] sm:$0xff]
        %v7789 = vld [vmem:[#allocation10 + $0x62] sm:$0xff]
        %v7790 = vld [vmem:[#allocation10 + $0x6a] sm:$0xff]
        %v7791 = vld [vmem:[#allocation10 + $0x72] sm:$0xff]
        %v7792 = vld [vmem:[#allocation10 + $0x7a] sm:$0xff]
        %v7793 = vld [vmem:[#allocation10 + $0x82] sm:$0xff]
        %v7794 = vld [vmem:[#allocation10 + $0x8a] sm:$0xff]
        %v7795 = vld [vmem:[#allocation10 + $0x92] sm:$0xff]
        %v7796 = vld [vmem:[#allocation10 + $0x9a] sm:$0xff]
        %v7797 = vld [vmem:[#allocation10 + $0xa2] sm:$0xff]
        %v7798 = vld [vmem:[#allocation10 + $0xaa] sm:$0xff]
        %v7799 = vld [vmem:[#allocation10 + $0xb2] sm:$0xff]
        %v7800 = vld [vmem:[#allocation10 + $0xba] sm:$0xff]
        %v7801 = vld [vmem:[#allocation10 + $0xc2] sm:$0x7]
        %v7802 = vpack.c.bf16 %v7778, %v7777
        %v7803 = vpack.c.bf16 %v7780, %v7779
        %v7804 = vpack.c.bf16 %v7782, %v7781
        %v7805 = vpack.c.bf16 %v7784, %v7783
        %v7806 = vpack.c.bf16 %v7786, %v7785
        %v7807 = vpack.c.bf16 %v7788, %v7787
        %v7808 = vpack.c.bf16 %v7790, %v7789
        %v7809 = vpack.c.bf16 %v7792, %v7791
        %v7810 = vpack.c.bf16 %v7794, %v7793
        %v7811 = vpack.c.bf16 %v7796, %v7795
        %v7812 = vpack.c.bf16 %v7798, %v7797
        %v7813 = vpack.c.bf16 %v7800, %v7799
        %v7814 = vpack.c.bf16 %v7801, %v7801
        %s7815 = scalar_lea.vmem [#allocation11], 2880
        %v7816 = vld [vmem:[%s7815] sm:$0xf]
        %v7817 = vld [vmem:[%s7815 + $0x4] sm:$0xf]
        %v7818 = vld [vmem:[%s7815 + $0x8] sm:$0xf]
        %v7819 = vld [vmem:[%s7815 + $0xc] sm:$0xf]
        %v7820 = vld [vmem:[%s7815 + $0x10] sm:$0xf]
        %v7821 = vld [vmem:[%s7815 + $0x14] sm:$0xf]
        %v7822 = vld [vmem:[%s7815 + $0x18] sm:$0xf]
        %v7823 = vld [vmem:[%s7815 + $0x1c] sm:$0xf]
        %v7824 = vld [vmem:[%s7815 + $0x20] sm:$0xf]
        %v7825 = vld [vmem:[%s7815 + $0x24] sm:$0xf]
        %v7826 = vld [vmem:[%s7815 + $0x28] sm:$0xf]
        %v7827 = vld [vmem:[%s7815 + $0x2c] sm:$0xf]
        %v7828 = vld [vmem:[%s7815 + $0x30] sm:$0xf]
        %v7829 = vld [vmem:[%s7815 + $0x34] sm:$0xf]
        %v7830 = vld [vmem:[%s7815 + $0x38] sm:$0xf]
        %v7831 = vld [vmem:[%s7815 + $0x3c] sm:$0xf]
        %v7848 = vunpack.c.l.b16 %v7816
        %v7849 = vunpack.c.l.b16 %v7817
        %v7850 = vunpack.c.l.b16 %v7818
        %v7851 = vunpack.c.l.b16 %v7819
        %v7852 = vunpack.c.l.b16 %v7820
        %v7853 = vunpack.c.l.b16 %v7821
        %v7854 = vunpack.c.l.b16 %v7822
        %v7855 = vunpack.c.l.b16 %v7823
        %v7856 = vunpack.c.l.b16 %v7824
        %v7857 = vunpack.c.l.b16 %v7825
        %v7858 = vunpack.c.l.b16 %v7826
        %v7859 = vunpack.c.l.b16 %v7827
        %v7860 = vunpack.c.l.b16 %v7828
        %v7861 = vunpack.c.l.b16 %v7829
        %v7862 = vunpack.c.l.b16 %v7830
        %v7863 = vunpack.c.l.b16 %v7831
        %v7864 = vpack.c.b16 %v7849, %v7848
        %v7865 = vpack.c.b16 %v7851, %v7850
        %v7866 = vpack.c.b16 %v7853, %v7852
        %v7867 = vpack.c.b16 %v7855, %v7854
        %v7868 = vpack.c.b16 %v7857, %v7856
        %v7869 = vpack.c.b16 %v7859, %v7858
        %v7870 = vpack.c.b16 %v7861, %v7860
        %v7871 = vpack.c.b16 %v7863, %v7862
        %7880 = vmatprep.subr.bf16.mxu0 0
        %7881 = vmatpush1.bf16.msra.mxu0 %v7871
        %7882 = vmatprep.subr.bf16.mxu0 0
        %7883 = vmatpush1.bf16.msra.mxu0 %v7870
        %7884 = vmatprep.subr.bf16.mxu0 0
        %7885 = vmatpush1.bf16.msra.mxu0 %v7869
        %7886 = vmatprep.subr.bf16.mxu0 0
        %7887 = vmatpush1.bf16.msra.mxu0 %v7868
        %7888 = vmatprep.subr.bf16.mxu0 0
        %7889 = vmatpush1.bf16.msra.mxu0 %v7867
        %7890 = vmatprep.subr.bf16.mxu0 0
        %7891 = vmatpush1.bf16.msra.mxu0 %v7866
        %7892 = vmatprep.subr.bf16.mxu0 0
        %7893 = vmatpush1.bf16.msra.mxu0 %v7865
        %7894 = vmatprep.subr.bf16.mxu0 0
        %7895 = vmatpush1.bf16.msra.mxu0 %v7864
        %7896 = vmatprep.subr.bf16.mxu0 0
        %7897 = vmatpush2.bf16.msra.mxu0 0
        %7898 = vmatprep.subr.bf16.mxu0 0
        %7899 = vmatpush2.bf16.msra.mxu0 0
        %7900 = vmatprep.subr.bf16.mxu0 0
        %7901 = vmatpush2.bf16.msra.mxu0 0
        %7902 = vmatprep.subr.bf16.mxu0 0
        %7903 = vmatpush2.bf16.msra.mxu0 0
        %7904 = vmatprep.subr.bf16.mxu0 0
        %7905 = vmatpush2.bf16.msra.mxu0 0
        %7906 = vmatprep.subr.bf16.mxu0 0
        %7907 = vmatpush2.bf16.msra.mxu0 0
        %7908 = vmatprep.subr.bf16.mxu0 0
        %7909 = vmatpush2.bf16.msra.mxu0 0
        %7910 = vmatprep.subr.bf16.mxu0 0
        %7911 = vmatpush2.bf16.msra.mxu0 0
        %7912 = vmatprep.mubr.bf16.mxu0 0
        %7913 = vmatmul.mubr.bf16.gmra.mxu0 %v7802
        %v7914 = vpop.f32.mrf.mxu0
        %v7915 = vadd.f32 0.0, %v7914
        %v7916 = vpop.f32.mrf.mxu0
        %v7917 = vpop.f32.mrf.mxu0
        %v7918 = vadd.f32 0.0, %v7917
        %v7919 = vpop.f32.mrf.mxu0
        %7920 = vmatprep.mubr.bf16.mxu0 0
        %7921 = vmatmul.mubr.bf16.gmra.mxu0 %v7803
        %v7922 = vpop.f32.mrf.mxu0
        %v7923 = vadd.f32 0.0, %v7922
        %v7924 = vpop.f32.mrf.mxu0
        %v7925 = vpop.f32.mrf.mxu0
        %v7926 = vadd.f32 0.0, %v7925
        %v7927 = vpop.f32.mrf.mxu0
        %7928 = vmatprep.mubr.bf16.mxu0 0
        %7929 = vmatmul.mubr.bf16.gmra.mxu0 %v7804
        %v7930 = vpop.f32.mrf.mxu0
        %v7931 = vadd.f32 0.0, %v7930
        %v7932 = vpop.f32.mrf.mxu0
        %v7933 = vpop.f32.mrf.mxu0
        %v7934 = vadd.f32 0.0, %v7933
        %v7935 = vpop.f32.mrf.mxu0
        %7936 = vmatprep.mubr.bf16.mxu0 0
        %7937 = vmatmul.mubr.bf16.gmra.mxu0 %v7805
        %v7938 = vpop.f32.mrf.mxu0
        %v7939 = vadd.f32 0.0, %v7938
        %v7940 = vpop.f32.mrf.mxu0
        %v7941 = vpop.f32.mrf.mxu0
        %v7942 = vadd.f32 0.0, %v7941
        %v7943 = vpop.f32.mrf.mxu0
        %7944 = vmatprep.mubr.bf16.mxu0 0
        %7945 = vmatmul.mubr.bf16.gmra.mxu0 %v7806
        %v7946 = vpop.f32.mrf.mxu0
        %v7947 = vadd.f32 0.0, %v7946
        %v7948 = vpop.f32.mrf.mxu0
        %v7949 = vpop.f32.mrf.mxu0
        %v7950 = vadd.f32 0.0, %v7949
        %v7951 = vpop.f32.mrf.mxu0
        %7952 = vmatprep.mubr.bf16.mxu0 0
        %7953 = vmatmul.mubr.bf16.gmra.mxu0 %v7807
        %v7954 = vpop.f32.mrf.mxu0
        %v7955 = vadd.f32 0.0, %v7954
        %v7956 = vpop.f32.mrf.mxu0
        %v7957 = vpop.f32.mrf.mxu0
        %v7958 = vadd.f32 0.0, %v7957
        %v7959 = vpop.f32.mrf.mxu0
        %7960 = vmatprep.mubr.bf16.mxu0 0
        %7961 = vmatmul.mubr.bf16.gmra.mxu0 %v7808
        %v7962 = vpop.f32.mrf.mxu0
        %v7963 = vadd.f32 0.0, %v7962
        %v7964 = vpop.f32.mrf.mxu0
        %v7965 = vpop.f32.mrf.mxu0
        %v7966 = vadd.f32 0.0, %v7965
        %v7967 = vpop.f32.mrf.mxu0
        %7968 = vmatprep.mubr.bf16.mxu0 0
        %7969 = vmatmul.mubr.bf16.gmra.mxu0 %v7809
        %v7970 = vpop.f32.mrf.mxu0
        %v7971 = vadd.f32 0.0, %v7970
        %v7972 = vpop.f32.mrf.mxu0
        %v7973 = vpop.f32.mrf.mxu0
        %v7974 = vadd.f32 0.0, %v7973
        %v7975 = vpop.f32.mrf.mxu0
        %7976 = vmatprep.mubr.bf16.mxu0 0
        %7977 = vmatmul.mubr.bf16.gmra.mxu0 %v7810
        %v7978 = vpop.f32.mrf.mxu0
        %v7979 = vadd.f32 0.0, %v7978
        %v7980 = vpop.f32.mrf.mxu0
        %v7981 = vpop.f32.mrf.mxu0
        %v7982 = vadd.f32 0.0, %v7981
        %v7983 = vpop.f32.mrf.mxu0
        %7984 = vmatprep.mubr.bf16.mxu0 0
        %7985 = vmatmul.mubr.bf16.gmra.mxu0 %v7811
        %v7986 = vpop.f32.mrf.mxu0
        %v7987 = vadd.f32 0.0, %v7986
        %v7988 = vpop.f32.mrf.mxu0
        %v7989 = vpop.f32.mrf.mxu0
        %v7990 = vadd.f32 0.0, %v7989
        %v7991 = vpop.f32.mrf.mxu0
        %7992 = vmatprep.mubr.bf16.mxu0 0
        %7993 = vmatmul.mubr.bf16.gmra.mxu0 %v7812
        %v7994 = vpop.f32.mrf.mxu0
        %v7995 = vadd.f32 0.0, %v7994
        %v7996 = vpop.f32.mrf.mxu0
        %v7997 = vpop.f32.mrf.mxu0
        %v7998 = vadd.f32 0.0, %v7997
        %v7999 = vpop.f32.mrf.mxu0
        %8000 = vmatprep.mubr.bf16.mxu0 0
        %8001 = vmatmul.mubr.bf16.gmra.mxu0 %v7813
        %v8002 = vpop.f32.mrf.mxu0
        %v8003 = vadd.f32 0.0, %v8002
        %v8004 = vpop.f32.mrf.mxu0
        %v8005 = vpop.f32.mrf.mxu0
        %v8006 = vadd.f32 0.0, %v8005
        %v8007 = vpop.f32.mrf.mxu0
        %8008 = vmatprep.mubr.bf16.mxu0 0
        %8009 = vmatmul.mubr.bf16.gmra.mxu0 %v7814
        %v8010 = vpop.f32.mrf.mxu0
        %v8011 = vadd.f32 0.0, %v8010
        %v8012 = vpop.f32.mrf.mxu0
        %v8013 = vpop.f32.mrf.mxu0
        %v8014 = vpop.f32.mrf.mxu0
        %8015 = vdwg.mxu0
        %v8016 = vadd.f32 %v7752, %v7915
        %v8017 = vadd.f32 %v7753, %v7918
        %v8018 = vadd.f32 %v7754, %v7923
        %v8019 = vadd.f32 %v7755, %v7926
        %v8020 = vadd.f32 %v7756, %v7931
        %v8021 = vadd.f32 %v7757, %v7934
        %v8022 = vadd.f32 %v7758, %v7939
        %v8023 = vadd.f32 %v7759, %v7942
        %v8024 = vadd.f32 %v7760, %v7947
        %v8025 = vadd.f32 %v7761, %v7950
        %v8026 = vadd.f32 %v7762, %v7955
        %v8027 = vadd.f32 %v7763, %v7958
        %v8028 = vadd.f32 %v7764, %v7963
        %v8029 = vadd.f32 %v7765, %v7966
        %v8030 = vadd.f32 %v7766, %v7971
        %v8031 = vadd.f32 %v7767, %v7974
        %v8032 = vadd.f32 %v7768, %v7979
        %v8033 = vadd.f32 %v7769, %v7982
        %v8034 = vadd.f32 %v7770, %v7987
        %v8035 = vadd.f32 %v7771, %v7990
        %v8036 = vadd.f32 %v7772, %v7995
        %v8037 = vadd.f32 %v7773, %v7998
        %v8038 = vadd.f32 %v7774, %v8003
        %v8039 = vadd.f32 %v7775, %v8006
        %v8040 = vadd.f32 %v7776, %v8011
        %v8041 = vld [vmem:[#allocation10 + $0xf] sm:$0xff]
        %v8042 = vld [vmem:[#allocation10 + $0x17] sm:$0xff]
        %v8043 = vld [vmem:[#allocation10 + $0x1f] sm:$0xff]
        %v8044 = vld [vmem:[#allocation10 + $0x27] sm:$0xff]
        %v8045 = vld [vmem:[#allocation10 + $0x2f] sm:$0xff]
        %v8046 = vld [vmem:[#allocation10 + $0x37] sm:$0xff]
        %v8047 = vld [vmem:[#allocation10 + $0x3f] sm:$0xff]
        %v8048 = vld [vmem:[#allocation10 + $0x47] sm:$0xff]
        %v8049 = vld [vmem:[#allocation10 + $0x4f] sm:$0xff]
        %v8050 = vld [vmem:[#allocation10 + $0x57] sm:$0xff]
        %v8051 = vld [vmem:[#allocation10 + $0x5f] sm:$0xff]
        %v8052 = vld [vmem:[#allocation10 + $0x67] sm:$0xff]
        %v8053 = vld [vmem:[#allocation10 + $0x6f] sm:$0xff]
        %v8054 = vld [vmem:[#allocation10 + $0x77] sm:$0xff]
        %v8055 = vld [vmem:[#allocation10 + $0x7f] sm:$0xff]
        %v8056 = vld [vmem:[#allocation10 + $0x87] sm:$0xff]
        %v8057 = vld [vmem:[#allocation10 + $0x8f] sm:$0xff]
        %v8058 = vld [vmem:[#allocation10 + $0x97] sm:$0xff]
        %v8059 = vld [vmem:[#allocation10 + $0x9f] sm:$0xff]
        %v8060 = vld [vmem:[#allocation10 + $0xa7] sm:$0xff]
        %v8061 = vld [vmem:[#allocation10 + $0xaf] sm:$0xff]
        %v8062 = vld [vmem:[#allocation10 + $0xb7] sm:$0xff]
        %v8063 = vld [vmem:[#allocation10 + $0xbf] sm:$0xff]
        %v8064 = vld [vmem:[#allocation10 + $0xc7] sm:$0xff]
        %v8065 = vld [vmem:[#allocation10 + $0xcf] sm:$0x7]
        %v8066 = vpack.c.bf16 %v8042, %v8041
        %v8067 = vpack.c.bf16 %v8044, %v8043
        %v8068 = vpack.c.bf16 %v8046, %v8045
        %v8069 = vpack.c.bf16 %v8048, %v8047
        %v8070 = vpack.c.bf16 %v8050, %v8049
        %v8071 = vpack.c.bf16 %v8052, %v8051
        %v8072 = vpack.c.bf16 %v8054, %v8053
        %v8073 = vpack.c.bf16 %v8056, %v8055
        %v8074 = vpack.c.bf16 %v8058, %v8057
        %v8075 = vpack.c.bf16 %v8060, %v8059
        %v8076 = vpack.c.bf16 %v8062, %v8061
        %v8077 = vpack.c.bf16 %v8064, %v8063
        %v8078 = vpack.c.bf16 %v8065, %v8065
        %s8079 = scalar_lea.vmem [#allocation11], 2944
        %v8080 = vld [vmem:[%s8079] sm:$0xf]
        %v8081 = vld [vmem:[%s8079 + $0x4] sm:$0xf]
        %v8082 = vld [vmem:[%s8079 + $0x8] sm:$0xf]
        %v8083 = vld [vmem:[%s8079 + $0xc] sm:$0xf]
        %v8084 = vld [vmem:[%s8079 + $0x10] sm:$0xf]
        %v8085 = vld [vmem:[%s8079 + $0x14] sm:$0xf]
        %v8086 = vld [vmem:[%s8079 + $0x18] sm:$0xf]
        %v8087 = vld [vmem:[%s8079 + $0x1c] sm:$0xf]
        %v8088 = vld [vmem:[%s8079 + $0x20] sm:$0xf]
        %v8089 = vld [vmem:[%s8079 + $0x24] sm:$0xf]
        %v8090 = vld [vmem:[%s8079 + $0x28] sm:$0xf]
        %v8091 = vld [vmem:[%s8079 + $0x2c] sm:$0xf]
        %v8092 = vld [vmem:[%s8079 + $0x30] sm:$0xf]
        %v8093 = vld [vmem:[%s8079 + $0x34] sm:$0xf]
        %v8094 = vld [vmem:[%s8079 + $0x38] sm:$0xf]
        %v8095 = vld [vmem:[%s8079 + $0x3c] sm:$0xf]
        %v8112 = vunpack.c.l.b16 %v8080
        %v8113 = vunpack.c.l.b16 %v8081
        %v8114 = vunpack.c.l.b16 %v8082
        %v8115 = vunpack.c.l.b16 %v8083
        %v8116 = vunpack.c.l.b16 %v8084
        %v8117 = vunpack.c.l.b16 %v8085
        %v8118 = vunpack.c.l.b16 %v8086
        %v8119 = vunpack.c.l.b16 %v8087
        %v8120 = vunpack.c.l.b16 %v8088
        %v8121 = vunpack.c.l.b16 %v8089
        %v8122 = vunpack.c.l.b16 %v8090
        %v8123 = vunpack.c.l.b16 %v8091
        %v8124 = vunpack.c.l.b16 %v8092
        %v8125 = vunpack.c.l.b16 %v8093
        %v8126 = vunpack.c.l.b16 %v8094
        %v8127 = vunpack.c.l.b16 %v8095
        %v8128 = vpack.c.b16 %v8113, %v8112
        %v8129 = vpack.c.b16 %v8115, %v8114
        %v8130 = vpack.c.b16 %v8117, %v8116
        %v8131 = vpack.c.b16 %v8119, %v8118
        %v8132 = vpack.c.b16 %v8121, %v8120
        %v8133 = vpack.c.b16 %v8123, %v8122
        %v8134 = vpack.c.b16 %v8125, %v8124
        %v8135 = vpack.c.b16 %v8127, %v8126
        %8144 = vmatprep.subr.bf16.mxu0 0
        %8145 = vmatpush1.bf16.msra.mxu0 %v8135
        %8146 = vmatprep.subr.bf16.mxu0 0
        %8147 = vmatpush1.bf16.msra.mxu0 %v8134
        %8148 = vmatprep.subr.bf16.mxu0 0
        %8149 = vmatpush1.bf16.msra.mxu0 %v8133
        %8150 = vmatprep.subr.bf16.mxu0 0
        %8151 = vmatpush1.bf16.msra.mxu0 %v8132
        %8152 = vmatprep.subr.bf16.mxu0 0
        %8153 = vmatpush1.bf16.msra.mxu0 %v8131
        %8154 = vmatprep.subr.bf16.mxu0 0
        %8155 = vmatpush1.bf16.msra.mxu0 %v8130
        %8156 = vmatprep.subr.bf16.mxu0 0
        %8157 = vmatpush1.bf16.msra.mxu0 %v8129
        %8158 = vmatprep.subr.bf16.mxu0 0
        %8159 = vmatpush1.bf16.msra.mxu0 %v8128
        %8160 = vmatprep.subr.bf16.mxu0 0
        %8161 = vmatpush2.bf16.msra.mxu0 0
        %8162 = vmatprep.subr.bf16.mxu0 0
        %8163 = vmatpush2.bf16.msra.mxu0 0
        %8164 = vmatprep.subr.bf16.mxu0 0
        %8165 = vmatpush2.bf16.msra.mxu0 0
        %8166 = vmatprep.subr.bf16.mxu0 0
        %8167 = vmatpush2.bf16.msra.mxu0 0
        %8168 = vmatprep.subr.bf16.mxu0 0
        %8169 = vmatpush2.bf16.msra.mxu0 0
        %8170 = vmatprep.subr.bf16.mxu0 0
        %8171 = vmatpush2.bf16.msra.mxu0 0
        %8172 = vmatprep.subr.bf16.mxu0 0
        %8173 = vmatpush2.bf16.msra.mxu0 0
        %8174 = vmatprep.subr.bf16.mxu0 0
        %8175 = vmatpush2.bf16.msra.mxu0 0
        %8176 = vmatprep.mubr.bf16.mxu0 0
        %8177 = vmatmul.mubr.bf16.gmra.mxu0 %v8066
        %v8178 = vpop.f32.mrf.mxu0
        %v8179 = vadd.f32 0.0, %v8178
        %v8180 = vpop.f32.mrf.mxu0
        %v8181 = vpop.f32.mrf.mxu0
        %v8182 = vadd.f32 0.0, %v8181
        %v8183 = vpop.f32.mrf.mxu0
        %8184 = vmatprep.mubr.bf16.mxu0 0
        %8185 = vmatmul.mubr.bf16.gmra.mxu0 %v8067
        %v8186 = vpop.f32.mrf.mxu0
        %v8187 = vadd.f32 0.0, %v8186
        %v8188 = vpop.f32.mrf.mxu0
        %v8189 = vpop.f32.mrf.mxu0
        %v8190 = vadd.f32 0.0, %v8189
        %v8191 = vpop.f32.mrf.mxu0
        %8192 = vmatprep.mubr.bf16.mxu0 0
        %8193 = vmatmul.mubr.bf16.gmra.mxu0 %v8068
        %v8194 = vpop.f32.mrf.mxu0
        %v8195 = vadd.f32 0.0, %v8194
        %v8196 = vpop.f32.mrf.mxu0
        %v8197 = vpop.f32.mrf.mxu0
        %v8198 = vadd.f32 0.0, %v8197
        %v8199 = vpop.f32.mrf.mxu0
        %8200 = vmatprep.mubr.bf16.mxu0 0
        %8201 = vmatmul.mubr.bf16.gmra.mxu0 %v8069
        %v8202 = vpop.f32.mrf.mxu0
        %v8203 = vadd.f32 0.0, %v8202
        %v8204 = vpop.f32.mrf.mxu0
        %v8205 = vpop.f32.mrf.mxu0
        %v8206 = vadd.f32 0.0, %v8205
        %v8207 = vpop.f32.mrf.mxu0
        %8208 = vmatprep.mubr.bf16.mxu0 0
        %8209 = vmatmul.mubr.bf16.gmra.mxu0 %v8070
        %v8210 = vpop.f32.mrf.mxu0
        %v8211 = vadd.f32 0.0, %v8210
        %v8212 = vpop.f32.mrf.mxu0
        %v8213 = vpop.f32.mrf.mxu0
        %v8214 = vadd.f32 0.0, %v8213
        %v8215 = vpop.f32.mrf.mxu0
        %8216 = vmatprep.mubr.bf16.mxu0 0
        %8217 = vmatmul.mubr.bf16.gmra.mxu0 %v8071
        %v8218 = vpop.f32.mrf.mxu0
        %v8219 = vadd.f32 0.0, %v8218
        %v8220 = vpop.f32.mrf.mxu0
        %v8221 = vpop.f32.mrf.mxu0
        %v8222 = vadd.f32 0.0, %v8221
        %v8223 = vpop.f32.mrf.mxu0
        %8224 = vmatprep.mubr.bf16.mxu0 0
        %8225 = vmatmul.mubr.bf16.gmra.mxu0 %v8072
        %v8226 = vpop.f32.mrf.mxu0
        %v8227 = vadd.f32 0.0, %v8226
        %v8228 = vpop.f32.mrf.mxu0
        %v8229 = vpop.f32.mrf.mxu0
        %v8230 = vadd.f32 0.0, %v8229
        %v8231 = vpop.f32.mrf.mxu0
        %8232 = vmatprep.mubr.bf16.mxu0 0
        %8233 = vmatmul.mubr.bf16.gmra.mxu0 %v8073
        %v8234 = vpop.f32.mrf.mxu0
        %v8235 = vadd.f32 0.0, %v8234
        %v8236 = vpop.f32.mrf.mxu0
        %v8237 = vpop.f32.mrf.mxu0
        %v8238 = vadd.f32 0.0, %v8237
        %v8239 = vpop.f32.mrf.mxu0
        %8240 = vmatprep.mubr.bf16.mxu0 0
        %8241 = vmatmul.mubr.bf16.gmra.mxu0 %v8074
        %v8242 = vpop.f32.mrf.mxu0
        %v8243 = vadd.f32 0.0, %v8242
        %v8244 = vpop.f32.mrf.mxu0
        %v8245 = vpop.f32.mrf.mxu0
        %v8246 = vadd.f32 0.0, %v8245
        %v8247 = vpop.f32.mrf.mxu0
        %8248 = vmatprep.mubr.bf16.mxu0 0
        %8249 = vmatmul.mubr.bf16.gmra.mxu0 %v8075
        %v8250 = vpop.f32.mrf.mxu0
        %v8251 = vadd.f32 0.0, %v8250
        %v8252 = vpop.f32.mrf.mxu0
        %v8253 = vpop.f32.mrf.mxu0
        %v8254 = vadd.f32 0.0, %v8253
        %v8255 = vpop.f32.mrf.mxu0
        %8256 = vmatprep.mubr.bf16.mxu0 0
        %8257 = vmatmul.mubr.bf16.gmra.mxu0 %v8076
        %v8258 = vpop.f32.mrf.mxu0
        %v8259 = vadd.f32 0.0, %v8258
        %v8260 = vpop.f32.mrf.mxu0
        %v8261 = vpop.f32.mrf.mxu0
        %v8262 = vadd.f32 0.0, %v8261
        %v8263 = vpop.f32.mrf.mxu0
        %8264 = vmatprep.mubr.bf16.mxu0 0
        %8265 = vmatmul.mubr.bf16.gmra.mxu0 %v8077
        %v8266 = vpop.f32.mrf.mxu0
        %v8267 = vadd.f32 0.0, %v8266
        %v8268 = vpop.f32.mrf.mxu0
        %v8269 = vpop.f32.mrf.mxu0
        %v8270 = vadd.f32 0.0, %v8269
        %v8271 = vpop.f32.mrf.mxu0
        %8272 = vmatprep.mubr.bf16.mxu0 0
        %8273 = vmatmul.mubr.bf16.gmra.mxu0 %v8078
        %v8274 = vpop.f32.mrf.mxu0
        %v8275 = vadd.f32 0.0, %v8274
        %v8276 = vpop.f32.mrf.mxu0
        %v8277 = vpop.f32.mrf.mxu0
        %v8278 = vpop.f32.mrf.mxu0
        %8279 = vdwg.mxu0
        %v8280 = vadd.f32 %v8016, %v8179
        %v8281 = vadd.f32 %v8017, %v8182
        %v8282 = vadd.f32 %v8018, %v8187
        %v8283 = vadd.f32 %v8019, %v8190
        %v8284 = vadd.f32 %v8020, %v8195
        %v8285 = vadd.f32 %v8021, %v8198
        %v8286 = vadd.f32 %v8022, %v8203
        %v8287 = vadd.f32 %v8023, %v8206
        %v8288 = vadd.f32 %v8024, %v8211
        %v8289 = vadd.f32 %v8025, %v8214
        %v8290 = vadd.f32 %v8026, %v8219
        %v8291 = vadd.f32 %v8027, %v8222
        %v8292 = vadd.f32 %v8028, %v8227
        %v8293 = vadd.f32 %v8029, %v8230
        %v8294 = vadd.f32 %v8030, %v8235
        %v8295 = vadd.f32 %v8031, %v8238
        %v8296 = vadd.f32 %v8032, %v8243
        %v8297 = vadd.f32 %v8033, %v8246
        %v8298 = vadd.f32 %v8034, %v8251
        %v8299 = vadd.f32 %v8035, %v8254
        %v8300 = vadd.f32 %v8036, %v8259
        %v8301 = vadd.f32 %v8037, %v8262
        %v8302 = vadd.f32 %v8038, %v8267
        %v8303 = vadd.f32 %v8039, %v8270
        %v8304 = vadd.f32 %v8040, %v8275
        %v8305 = vld [vmem:[#allocation10 + $0x10] sm:$0xff]
        %v8306 = vld [vmem:[#allocation10 + $0x18] sm:$0xff]
        %v8307 = vld [vmem:[#allocation10 + $0x20] sm:$0xff]
        %v8308 = vld [vmem:[#allocation10 + $0x28] sm:$0xff]
        %v8309 = vld [vmem:[#allocation10 + $0x30] sm:$0xff]
        %v8310 = vld [vmem:[#allocation10 + $0x38] sm:$0xff]
        %v8311 = vld [vmem:[#allocation10 + $0x40] sm:$0xff]
        %v8312 = vld [vmem:[#allocation10 + $0x48] sm:$0xff]
        %v8313 = vld [vmem:[#allocation10 + $0x50] sm:$0xff]
        %v8314 = vld [vmem:[#allocation10 + $0x58] sm:$0xff]
        %v8315 = vld [vmem:[#allocation10 + $0x60] sm:$0xff]
        %v8316 = vld [vmem:[#allocation10 + $0x68] sm:$0xff]
        %v8317 = vld [vmem:[#allocation10 + $0x70] sm:$0xff]
        %v8318 = vld [vmem:[#allocation10 + $0x78] sm:$0xff]
        %v8319 = vld [vmem:[#allocation10 + $0x80] sm:$0xff]
        %v8320 = vld [vmem:[#allocation10 + $0x88] sm:$0xff]
        %v8321 = vld [vmem:[#allocation10 + $0x90] sm:$0xff]
        %v8322 = vld [vmem:[#allocation10 + $0x98] sm:$0xff]
        %v8323 = vld [vmem:[#allocation10 + $0xa0] sm:$0xff]
        %v8324 = vld [vmem:[#allocation10 + $0xa8] sm:$0xff]
        %v8325 = vld [vmem:[#allocation10 + $0xb0] sm:$0xff]
        %v8326 = vld [vmem:[#allocation10 + $0xb8] sm:$0xff]
        %v8327 = vld [vmem:[#allocation10 + $0xc0] sm:$0xff]
        %v8328 = vld [vmem:[#allocation10 + $0xc8] sm:$0xff]
        %v8329 = vld [vmem:[#allocation10 + $0xd0] sm:$0x7]
        %v8330 = vpack.c.bf16 %v8306, %v8305
        %v8331 = vpack.c.bf16 %v8308, %v8307
        %v8332 = vpack.c.bf16 %v8310, %v8309
        %v8333 = vpack.c.bf16 %v8312, %v8311
        %v8334 = vpack.c.bf16 %v8314, %v8313
        %v8335 = vpack.c.bf16 %v8316, %v8315
        %v8336 = vpack.c.bf16 %v8318, %v8317
        %v8337 = vpack.c.bf16 %v8320, %v8319
        %v8338 = vpack.c.bf16 %v8322, %v8321
        %v8339 = vpack.c.bf16 %v8324, %v8323
        %v8340 = vpack.c.bf16 %v8326, %v8325
        %v8341 = vpack.c.bf16 %v8328, %v8327
        %v8342 = vpack.c.bf16 %v8329, %v8329
        %s8343 = scalar_lea.vmem [#allocation11], 3008
        %v8344 = vld [vmem:[%s8343] sm:$0xf]
        %v8345 = vld [vmem:[%s8343 + $0x4] sm:$0xf]
        %v8346 = vld [vmem:[%s8343 + $0x8] sm:$0xf]
        %v8347 = vld [vmem:[%s8343 + $0xc] sm:$0xf]
        %v8348 = vld [vmem:[%s8343 + $0x10] sm:$0xf]
        %v8349 = vld [vmem:[%s8343 + $0x14] sm:$0xf]
        %v8350 = vld [vmem:[%s8343 + $0x18] sm:$0xf]
        %v8351 = vld [vmem:[%s8343 + $0x1c] sm:$0xf]
        %v8352 = vld [vmem:[%s8343 + $0x20] sm:$0xf]
        %v8353 = vld [vmem:[%s8343 + $0x24] sm:$0xf]
        %v8354 = vld [vmem:[%s8343 + $0x28] sm:$0xf]
        %v8355 = vld [vmem:[%s8343 + $0x2c] sm:$0xf]
        %v8356 = vld [vmem:[%s8343 + $0x30] sm:$0xf]
        %v8357 = vld [vmem:[%s8343 + $0x34] sm:$0xf]
        %v8358 = vld [vmem:[%s8343 + $0x38] sm:$0xf]
        %v8359 = vld [vmem:[%s8343 + $0x3c] sm:$0xf]
        %v8376 = vunpack.c.l.b16 %v8344
        %v8377 = vunpack.c.l.b16 %v8345
        %v8378 = vunpack.c.l.b16 %v8346
        %v8379 = vunpack.c.l.b16 %v8347
        %v8380 = vunpack.c.l.b16 %v8348
        %v8381 = vunpack.c.l.b16 %v8349
        %v8382 = vunpack.c.l.b16 %v8350
        %v8383 = vunpack.c.l.b16 %v8351
        %v8384 = vunpack.c.l.b16 %v8352
        %v8385 = vunpack.c.l.b16 %v8353
        %v8386 = vunpack.c.l.b16 %v8354
        %v8387 = vunpack.c.l.b16 %v8355
        %v8388 = vunpack.c.l.b16 %v8356
        %v8389 = vunpack.c.l.b16 %v8357
        %v8390 = vunpack.c.l.b16 %v8358
        %v8391 = vunpack.c.l.b16 %v8359
        %v8392 = vpack.c.b16 %v8377, %v8376
        %v8393 = vpack.c.b16 %v8379, %v8378
        %v8394 = vpack.c.b16 %v8381, %v8380
        %v8395 = vpack.c.b16 %v8383, %v8382
        %v8396 = vpack.c.b16 %v8385, %v8384
        %v8397 = vpack.c.b16 %v8387, %v8386
        %v8398 = vpack.c.b16 %v8389, %v8388
        %v8399 = vpack.c.b16 %v8391, %v8390
        %8408 = vmatprep.subr.bf16.mxu0 0
        %8409 = vmatpush1.bf16.msra.mxu0 %v8399
        %8410 = vmatprep.subr.bf16.mxu0 0
        %8411 = vmatpush1.bf16.msra.mxu0 %v8398
        %8412 = vmatprep.subr.bf16.mxu0 0
        %8413 = vmatpush1.bf16.msra.mxu0 %v8397
        %8414 = vmatprep.subr.bf16.mxu0 0
        %8415 = vmatpush1.bf16.msra.mxu0 %v8396
        %8416 = vmatprep.subr.bf16.mxu0 0
        %8417 = vmatpush1.bf16.msra.mxu0 %v8395
        %8418 = vmatprep.subr.bf16.mxu0 0
        %8419 = vmatpush1.bf16.msra.mxu0 %v8394
        %8420 = vmatprep.subr.bf16.mxu0 0
        %8421 = vmatpush1.bf16.msra.mxu0 %v8393
        %8422 = vmatprep.subr.bf16.mxu0 0
        %8423 = vmatpush1.bf16.msra.mxu0 %v8392
        %8424 = vmatprep.subr.bf16.mxu0 0
        %8425 = vmatpush2.bf16.msra.mxu0 0
        %8426 = vmatprep.subr.bf16.mxu0 0
        %8427 = vmatpush2.bf16.msra.mxu0 0
        %8428 = vmatprep.subr.bf16.mxu0 0
        %8429 = vmatpush2.bf16.msra.mxu0 0
        %8430 = vmatprep.subr.bf16.mxu0 0
        %8431 = vmatpush2.bf16.msra.mxu0 0
        %8432 = vmatprep.subr.bf16.mxu0 0
        %8433 = vmatpush2.bf16.msra.mxu0 0
        %8434 = vmatprep.subr.bf16.mxu0 0
        %8435 = vmatpush2.bf16.msra.mxu0 0
        %8436 = vmatprep.subr.bf16.mxu0 0
        %8437 = vmatpush2.bf16.msra.mxu0 0
        %8438 = vmatprep.subr.bf16.mxu0 0
        %8439 = vmatpush2.bf16.msra.mxu0 0
        %8440 = vmatprep.mubr.bf16.mxu0 0
        %8441 = vmatmul.mubr.bf16.gmra.mxu0 %v8330
        %v8442 = vpop.f32.mrf.mxu0
        %v8443 = vadd.f32 0.0, %v8442
        %v8444 = vpop.f32.mrf.mxu0
        %v8445 = vpop.f32.mrf.mxu0
        %v8446 = vadd.f32 0.0, %v8445
        %v8447 = vpop.f32.mrf.mxu0
        %8448 = vmatprep.mubr.bf16.mxu0 0
        %8449 = vmatmul.mubr.bf16.gmra.mxu0 %v8331
        %v8450 = vpop.f32.mrf.mxu0
        %v8451 = vadd.f32 0.0, %v8450
        %v8452 = vpop.f32.mrf.mxu0
        %v8453 = vpop.f32.mrf.mxu0
        %v8454 = vadd.f32 0.0, %v8453
        %v8455 = vpop.f32.mrf.mxu0
        %8456 = vmatprep.mubr.bf16.mxu0 0
        %8457 = vmatmul.mubr.bf16.gmra.mxu0 %v8332
        %v8458 = vpop.f32.mrf.mxu0
        %v8459 = vadd.f32 0.0, %v8458
        %v8460 = vpop.f32.mrf.mxu0
        %v8461 = vpop.f32.mrf.mxu0
        %v8462 = vadd.f32 0.0, %v8461
        %v8463 = vpop.f32.mrf.mxu0
        %8464 = vmatprep.mubr.bf16.mxu0 0
        %8465 = vmatmul.mubr.bf16.gmra.mxu0 %v8333
        %v8466 = vpop.f32.mrf.mxu0
        %v8467 = vadd.f32 0.0, %v8466
        %v8468 = vpop.f32.mrf.mxu0
        %v8469 = vpop.f32.mrf.mxu0
        %v8470 = vadd.f32 0.0, %v8469
        %v8471 = vpop.f32.mrf.mxu0
        %8472 = vmatprep.mubr.bf16.mxu0 0
        %8473 = vmatmul.mubr.bf16.gmra.mxu0 %v8334
        %v8474 = vpop.f32.mrf.mxu0
        %v8475 = vadd.f32 0.0, %v8474
        %v8476 = vpop.f32.mrf.mxu0
        %v8477 = vpop.f32.mrf.mxu0
        %v8478 = vadd.f32 0.0, %v8477
        %v8479 = vpop.f32.mrf.mxu0
        %8480 = vmatprep.mubr.bf16.mxu0 0
        %8481 = vmatmul.mubr.bf16.gmra.mxu0 %v8335
        %v8482 = vpop.f32.mrf.mxu0
        %v8483 = vadd.f32 0.0, %v8482
        %v8484 = vpop.f32.mrf.mxu0
        %v8485 = vpop.f32.mrf.mxu0
        %v8486 = vadd.f32 0.0, %v8485
        %v8487 = vpop.f32.mrf.mxu0
        %8488 = vmatprep.mubr.bf16.mxu0 0
        %8489 = vmatmul.mubr.bf16.gmra.mxu0 %v8336
        %v8490 = vpop.f32.mrf.mxu0
        %v8491 = vadd.f32 0.0, %v8490
        %v8492 = vpop.f32.mrf.mxu0
        %v8493 = vpop.f32.mrf.mxu0
        %v8494 = vadd.f32 0.0, %v8493
        %v8495 = vpop.f32.mrf.mxu0
        %8496 = vmatprep.mubr.bf16.mxu0 0
        %8497 = vmatmul.mubr.bf16.gmra.mxu0 %v8337
        %v8498 = vpop.f32.mrf.mxu0
        %v8499 = vadd.f32 0.0, %v8498
        %v8500 = vpop.f32.mrf.mxu0
        %v8501 = vpop.f32.mrf.mxu0
        %v8502 = vadd.f32 0.0, %v8501
        %v8503 = vpop.f32.mrf.mxu0
        %8504 = vmatprep.mubr.bf16.mxu0 0
        %8505 = vmatmul.mubr.bf16.gmra.mxu0 %v8338
        %v8506 = vpop.f32.mrf.mxu0
        %v8507 = vadd.f32 0.0, %v8506
        %v8508 = vpop.f32.mrf.mxu0
        %v8509 = vpop.f32.mrf.mxu0
        %v8510 = vadd.f32 0.0, %v8509
        %v8511 = vpop.f32.mrf.mxu0
        %8512 = vmatprep.mubr.bf16.mxu0 0
        %8513 = vmatmul.mubr.bf16.gmra.mxu0 %v8339
        %v8514 = vpop.f32.mrf.mxu0
        %v8515 = vadd.f32 0.0, %v8514
        %v8516 = vpop.f32.mrf.mxu0
        %v8517 = vpop.f32.mrf.mxu0
        %v8518 = vadd.f32 0.0, %v8517
        %v8519 = vpop.f32.mrf.mxu0
        %8520 = vmatprep.mubr.bf16.mxu0 0
        %8521 = vmatmul.mubr.bf16.gmra.mxu0 %v8340
        %v8522 = vpop.f32.mrf.mxu0
        %v8523 = vadd.f32 0.0, %v8522
        %v8524 = vpop.f32.mrf.mxu0
        %v8525 = vpop.f32.mrf.mxu0
        %v8526 = vadd.f32 0.0, %v8525
        %v8527 = vpop.f32.mrf.mxu0
        %8528 = vmatprep.mubr.bf16.mxu0 0
        %8529 = vmatmul.mubr.bf16.gmra.mxu0 %v8341
        %v8530 = vpop.f32.mrf.mxu0
        %v8531 = vadd.f32 0.0, %v8530
        %v8532 = vpop.f32.mrf.mxu0
        %v8533 = vpop.f32.mrf.mxu0
        %v8534 = vadd.f32 0.0, %v8533
        %v8535 = vpop.f32.mrf.mxu0
        %8536 = vmatprep.mubr.bf16.mxu0 0
        %8537 = vmatmul.mubr.bf16.gmra.mxu0 %v8342
        %v8538 = vpop.f32.mrf.mxu0
        %v8539 = vadd.f32 0.0, %v8538
        %v8540 = vpop.f32.mrf.mxu0
        %v8541 = vpop.f32.mrf.mxu0
        %v8542 = vpop.f32.mrf.mxu0
        %8543 = vdwg.mxu0
        %v8544 = vadd.f32 %v8280, %v8443
        %v8545 = vadd.f32 %v8281, %v8446
        %v8546 = vadd.f32 %v8282, %v8451
        %v8547 = vadd.f32 %v8283, %v8454
        %v8548 = vadd.f32 %v8284, %v8459
        %v8549 = vadd.f32 %v8285, %v8462
        %v8550 = vadd.f32 %v8286, %v8467
        %v8551 = vadd.f32 %v8287, %v8470
        %v8552 = vadd.f32 %v8288, %v8475
        %v8553 = vadd.f32 %v8289, %v8478
        %v8554 = vadd.f32 %v8290, %v8483
        %v8555 = vadd.f32 %v8291, %v8486
        %v8556 = vadd.f32 %v8292, %v8491
        %v8557 = vadd.f32 %v8293, %v8494
        %v8558 = vadd.f32 %v8294, %v8499
        %v8559 = vadd.f32 %v8295, %v8502
        %v8560 = vadd.f32 %v8296, %v8507
        %v8561 = vadd.f32 %v8297, %v8510
        %v8562 = vadd.f32 %v8298, %v8515
        %v8563 = vadd.f32 %v8299, %v8518
        %v8564 = vadd.f32 %v8300, %v8523
        %v8565 = vadd.f32 %v8301, %v8526
        %v8566 = vadd.f32 %v8302, %v8531
        %v8567 = vadd.f32 %v8303, %v8534
        %v8568 = vadd.f32 %v8304, %v8539
        %v8569 = vld [vmem:[#allocation10 + $0x11] sm:$0xff]
        %v8570 = vld [vmem:[#allocation10 + $0x19] sm:$0xff]
        %v8571 = vld [vmem:[#allocation10 + $0x21] sm:$0xff]
        %v8572 = vld [vmem:[#allocation10 + $0x29] sm:$0xff]
        %v8573 = vld [vmem:[#allocation10 + $0x31] sm:$0xff]
        %v8574 = vld [vmem:[#allocation10 + $0x39] sm:$0xff]
        %v8575 = vld [vmem:[#allocation10 + $0x41] sm:$0xff]
        %v8576 = vld [vmem:[#allocation10 + $0x49] sm:$0xff]
        %v8577 = vld [vmem:[#allocation10 + $0x51] sm:$0xff]
        %v8578 = vld [vmem:[#allocation10 + $0x59] sm:$0xff]
        %v8579 = vld [vmem:[#allocation10 + $0x61] sm:$0xff]
        %v8580 = vld [vmem:[#allocation10 + $0x69] sm:$0xff]
        %v8581 = vld [vmem:[#allocation10 + $0x71] sm:$0xff]
        %v8582 = vld [vmem:[#allocation10 + $0x79] sm:$0xff]
        %v8583 = vld [vmem:[#allocation10 + $0x81] sm:$0xff]
        %v8584 = vld [vmem:[#allocation10 + $0x89] sm:$0xff]
        %v8585 = vld [vmem:[#allocation10 + $0x91] sm:$0xff]
        %v8586 = vld [vmem:[#allocation10 + $0x99] sm:$0xff]
        %v8587 = vld [vmem:[#allocation10 + $0xa1] sm:$0xff]
        %v8588 = vld [vmem:[#allocation10 + $0xa9] sm:$0xff]
        %v8589 = vld [vmem:[#allocation10 + $0xb1] sm:$0xff]
        %v8590 = vld [vmem:[#allocation10 + $0xb9] sm:$0xff]
        %v8591 = vld [vmem:[#allocation10 + $0xc1] sm:$0xff]
        %v8592 = vld [vmem:[#allocation10 + $0xc9] sm:$0xff]
        %v8593 = vld [vmem:[#allocation10 + $0xd1] sm:$0x7]
        %v8594 = vpack.c.bf16 %v8570, %v8569
        %v8595 = vpack.c.bf16 %v8572, %v8571
        %v8596 = vpack.c.bf16 %v8574, %v8573
        %v8597 = vpack.c.bf16 %v8576, %v8575
        %v8598 = vpack.c.bf16 %v8578, %v8577
        %v8599 = vpack.c.bf16 %v8580, %v8579
        %v8600 = vpack.c.bf16 %v8582, %v8581
        %v8601 = vpack.c.bf16 %v8584, %v8583
        %v8602 = vpack.c.bf16 %v8586, %v8585
        %v8603 = vpack.c.bf16 %v8588, %v8587
        %v8604 = vpack.c.bf16 %v8590, %v8589
        %v8605 = vpack.c.bf16 %v8592, %v8591
        %v8606 = vpack.c.bf16 %v8593, %v8593
        %s8607 = scalar_lea.vmem [#allocation11], 3072
        %v8608 = vld [vmem:[%s8607] sm:$0xf]
        %v8609 = vld [vmem:[%s8607 + $0x4] sm:$0xf]
        %v8610 = vld [vmem:[%s8607 + $0x8] sm:$0xf]
        %v8611 = vld [vmem:[%s8607 + $0xc] sm:$0xf]
        %v8612 = vld [vmem:[%s8607 + $0x10] sm:$0xf]
        %v8613 = vld [vmem:[%s8607 + $0x14] sm:$0xf]
        %v8614 = vld [vmem:[%s8607 + $0x18] sm:$0xf]
        %v8615 = vld [vmem:[%s8607 + $0x1c] sm:$0xf]
        %v8616 = vld [vmem:[%s8607 + $0x20] sm:$0xf]
        %v8617 = vld [vmem:[%s8607 + $0x24] sm:$0xf]
        %v8618 = vld [vmem:[%s8607 + $0x28] sm:$0xf]
        %v8619 = vld [vmem:[%s8607 + $0x2c] sm:$0xf]
        %v8620 = vld [vmem:[%s8607 + $0x30] sm:$0xf]
        %v8621 = vld [vmem:[%s8607 + $0x34] sm:$0xf]
        %v8622 = vld [vmem:[%s8607 + $0x38] sm:$0xf]
        %v8623 = vld [vmem:[%s8607 + $0x3c] sm:$0xf]
        %v8640 = vunpack.c.l.b16 %v8608
        %v8641 = vunpack.c.l.b16 %v8609
        %v8642 = vunpack.c.l.b16 %v8610
        %v8643 = vunpack.c.l.b16 %v8611
        %v8644 = vunpack.c.l.b16 %v8612
        %v8645 = vunpack.c.l.b16 %v8613
        %v8646 = vunpack.c.l.b16 %v8614
        %v8647 = vunpack.c.l.b16 %v8615
        %v8648 = vunpack.c.l.b16 %v8616
        %v8649 = vunpack.c.l.b16 %v8617
        %v8650 = vunpack.c.l.b16 %v8618
        %v8651 = vunpack.c.l.b16 %v8619
        %v8652 = vunpack.c.l.b16 %v8620
        %v8653 = vunpack.c.l.b16 %v8621
        %v8654 = vunpack.c.l.b16 %v8622
        %v8655 = vunpack.c.l.b16 %v8623
        %v8656 = vpack.c.b16 %v8641, %v8640
        %v8657 = vpack.c.b16 %v8643, %v8642
        %v8658 = vpack.c.b16 %v8645, %v8644
        %v8659 = vpack.c.b16 %v8647, %v8646
        %v8660 = vpack.c.b16 %v8649, %v8648
        %v8661 = vpack.c.b16 %v8651, %v8650
        %v8662 = vpack.c.b16 %v8653, %v8652
        %v8663 = vpack.c.b16 %v8655, %v8654
        %8672 = vmatprep.subr.bf16.mxu0 0
        %8673 = vmatpush1.bf16.msra.mxu0 %v8663
        %8674 = vmatprep.subr.bf16.mxu0 0
        %8675 = vmatpush1.bf16.msra.mxu0 %v8662
        %8676 = vmatprep.subr.bf16.mxu0 0
        %8677 = vmatpush1.bf16.msra.mxu0 %v8661
        %8678 = vmatprep.subr.bf16.mxu0 0
        %8679 = vmatpush1.bf16.msra.mxu0 %v8660
        %8680 = vmatprep.subr.bf16.mxu0 0
        %8681 = vmatpush1.bf16.msra.mxu0 %v8659
        %8682 = vmatprep.subr.bf16.mxu0 0
        %8683 = vmatpush1.bf16.msra.mxu0 %v8658
        %8684 = vmatprep.subr.bf16.mxu0 0
        %8685 = vmatpush1.bf16.msra.mxu0 %v8657
        %8686 = vmatprep.subr.bf16.mxu0 0
        %8687 = vmatpush1.bf16.msra.mxu0 %v8656
        %8688 = vmatprep.subr.bf16.mxu0 0
        %8689 = vmatpush2.bf16.msra.mxu0 0
        %8690 = vmatprep.subr.bf16.mxu0 0
        %8691 = vmatpush2.bf16.msra.mxu0 0
        %8692 = vmatprep.subr.bf16.mxu0 0
        %8693 = vmatpush2.bf16.msra.mxu0 0
        %8694 = vmatprep.subr.bf16.mxu0 0
        %8695 = vmatpush2.bf16.msra.mxu0 0
        %8696 = vmatprep.subr.bf16.mxu0 0
        %8697 = vmatpush2.bf16.msra.mxu0 0
        %8698 = vmatprep.subr.bf16.mxu0 0
        %8699 = vmatpush2.bf16.msra.mxu0 0
        %8700 = vmatprep.subr.bf16.mxu0 0
        %8701 = vmatpush2.bf16.msra.mxu0 0
        %8702 = vmatprep.subr.bf16.mxu0 0
        %8703 = vmatpush2.bf16.msra.mxu0 0
        %8704 = vmatprep.mubr.bf16.mxu0 0
        %8705 = vmatmul.mubr.bf16.gmra.mxu0 %v8594
        %v8706 = vpop.f32.mrf.mxu0
        %v8707 = vadd.f32 0.0, %v8706
        %v8708 = vpop.f32.mrf.mxu0
        %v8709 = vpop.f32.mrf.mxu0
        %v8710 = vadd.f32 0.0, %v8709
        %v8711 = vpop.f32.mrf.mxu0
        %8712 = vmatprep.mubr.bf16.mxu0 0
        %8713 = vmatmul.mubr.bf16.gmra.mxu0 %v8595
        %v8714 = vpop.f32.mrf.mxu0
        %v8715 = vadd.f32 0.0, %v8714
        %v8716 = vpop.f32.mrf.mxu0
        %v8717 = vpop.f32.mrf.mxu0
        %v8718 = vadd.f32 0.0, %v8717
        %v8719 = vpop.f32.mrf.mxu0
        %8720 = vmatprep.mubr.bf16.mxu0 0
        %8721 = vmatmul.mubr.bf16.gmra.mxu0 %v8596
        %v8722 = vpop.f32.mrf.mxu0
        %v8723 = vadd.f32 0.0, %v8722
        %v8724 = vpop.f32.mrf.mxu0
        %v8725 = vpop.f32.mrf.mxu0
        %v8726 = vadd.f32 0.0, %v8725
        %v8727 = vpop.f32.mrf.mxu0
        %8728 = vmatprep.mubr.bf16.mxu0 0
        %8729 = vmatmul.mubr.bf16.gmra.mxu0 %v8597
        %v8730 = vpop.f32.mrf.mxu0
        %v8731 = vadd.f32 0.0, %v8730
        %v8732 = vpop.f32.mrf.mxu0
        %v8733 = vpop.f32.mrf.mxu0
        %v8734 = vadd.f32 0.0, %v8733
        %v8735 = vpop.f32.mrf.mxu0
        %8736 = vmatprep.mubr.bf16.mxu0 0
        %8737 = vmatmul.mubr.bf16.gmra.mxu0 %v8598
        %v8738 = vpop.f32.mrf.mxu0
        %v8739 = vadd.f32 0.0, %v8738
        %v8740 = vpop.f32.mrf.mxu0
        %v8741 = vpop.f32.mrf.mxu0
        %v8742 = vadd.f32 0.0, %v8741
        %v8743 = vpop.f32.mrf.mxu0
        %8744 = vmatprep.mubr.bf16.mxu0 0
        %8745 = vmatmul.mubr.bf16.gmra.mxu0 %v8599
        %v8746 = vpop.f32.mrf.mxu0
        %v8747 = vadd.f32 0.0, %v8746
        %v8748 = vpop.f32.mrf.mxu0
        %v8749 = vpop.f32.mrf.mxu0
        %v8750 = vadd.f32 0.0, %v8749
        %v8751 = vpop.f32.mrf.mxu0
        %8752 = vmatprep.mubr.bf16.mxu0 0
        %8753 = vmatmul.mubr.bf16.gmra.mxu0 %v8600
        %v8754 = vpop.f32.mrf.mxu0
        %v8755 = vadd.f32 0.0, %v8754
        %v8756 = vpop.f32.mrf.mxu0
        %v8757 = vpop.f32.mrf.mxu0
        %v8758 = vadd.f32 0.0, %v8757
        %v8759 = vpop.f32.mrf.mxu0
        %8760 = vmatprep.mubr.bf16.mxu0 0
        %8761 = vmatmul.mubr.bf16.gmra.mxu0 %v8601
        %v8762 = vpop.f32.mrf.mxu0
        %v8763 = vadd.f32 0.0, %v8762
        %v8764 = vpop.f32.mrf.mxu0
        %v8765 = vpop.f32.mrf.mxu0
        %v8766 = vadd.f32 0.0, %v8765
        %v8767 = vpop.f32.mrf.mxu0
        %8768 = vmatprep.mubr.bf16.mxu0 0
        %8769 = vmatmul.mubr.bf16.gmra.mxu0 %v8602
        %v8770 = vpop.f32.mrf.mxu0
        %v8771 = vadd.f32 0.0, %v8770
        %v8772 = vpop.f32.mrf.mxu0
        %v8773 = vpop.f32.mrf.mxu0
        %v8774 = vadd.f32 0.0, %v8773
        %v8775 = vpop.f32.mrf.mxu0
        %8776 = vmatprep.mubr.bf16.mxu0 0
        %8777 = vmatmul.mubr.bf16.gmra.mxu0 %v8603
        %v8778 = vpop.f32.mrf.mxu0
        %v8779 = vadd.f32 0.0, %v8778
        %v8780 = vpop.f32.mrf.mxu0
        %v8781 = vpop.f32.mrf.mxu0
        %v8782 = vadd.f32 0.0, %v8781
        %v8783 = vpop.f32.mrf.mxu0
        %8784 = vmatprep.mubr.bf16.mxu0 0
        %8785 = vmatmul.mubr.bf16.gmra.mxu0 %v8604
        %v8786 = vpop.f32.mrf.mxu0
        %v8787 = vadd.f32 0.0, %v8786
        %v8788 = vpop.f32.mrf.mxu0
        %v8789 = vpop.f32.mrf.mxu0
        %v8790 = vadd.f32 0.0, %v8789
        %v8791 = vpop.f32.mrf.mxu0
        %8792 = vmatprep.mubr.bf16.mxu0 0
        %8793 = vmatmul.mubr.bf16.gmra.mxu0 %v8605
        %v8794 = vpop.f32.mrf.mxu0
        %v8795 = vadd.f32 0.0, %v8794
        %v8796 = vpop.f32.mrf.mxu0
        %v8797 = vpop.f32.mrf.mxu0
        %v8798 = vadd.f32 0.0, %v8797
        %v8799 = vpop.f32.mrf.mxu0
        %8800 = vmatprep.mubr.bf16.mxu0 0
        %8801 = vmatmul.mubr.bf16.gmra.mxu0 %v8606
        %v8802 = vpop.f32.mrf.mxu0
        %v8803 = vadd.f32 0.0, %v8802
        %v8804 = vpop.f32.mrf.mxu0
        %v8805 = vpop.f32.mrf.mxu0
        %v8806 = vpop.f32.mrf.mxu0
        %8807 = vdwg.mxu0
        %v8808 = vadd.f32 %v8544, %v8707
        %v8809 = vadd.f32 %v8545, %v8710
        %v8810 = vadd.f32 %v8546, %v8715
        %v8811 = vadd.f32 %v8547, %v8718
        %v8812 = vadd.f32 %v8548, %v8723
        %v8813 = vadd.f32 %v8549, %v8726
        %v8814 = vadd.f32 %v8550, %v8731
        %v8815 = vadd.f32 %v8551, %v8734
        %v8816 = vadd.f32 %v8552, %v8739
        %v8817 = vadd.f32 %v8553, %v8742
        %v8818 = vadd.f32 %v8554, %v8747
        %v8819 = vadd.f32 %v8555, %v8750
        %v8820 = vadd.f32 %v8556, %v8755
        %v8821 = vadd.f32 %v8557, %v8758
        %v8822 = vadd.f32 %v8558, %v8763
        %v8823 = vadd.f32 %v8559, %v8766
        %v8824 = vadd.f32 %v8560, %v8771
        %v8825 = vadd.f32 %v8561, %v8774
        %v8826 = vadd.f32 %v8562, %v8779
        %v8827 = vadd.f32 %v8563, %v8782
        %v8828 = vadd.f32 %v8564, %v8787
        %v8829 = vadd.f32 %v8565, %v8790
        %v8830 = vadd.f32 %v8566, %v8795
        %v8831 = vadd.f32 %v8567, %v8798
        %v8832 = vadd.f32 %v8568, %v8803
        %v8833 = vld [vmem:[#allocation10 + $0x1e] sm:$0xff]
        %v8834 = vld [vmem:[#allocation10 + $0x26] sm:$0xff]
        %v8835 = vld [vmem:[#allocation10 + $0x2e] sm:$0xff]
        %v8836 = vld [vmem:[#allocation10 + $0x36] sm:$0xff]
        %v8837 = vld [vmem:[#allocation10 + $0x3e] sm:$0xff]
        %v8838 = vld [vmem:[#allocation10 + $0x46] sm:$0xff]
        %v8839 = vld [vmem:[#allocation10 + $0x4e] sm:$0xff]
        %v8840 = vld [vmem:[#allocation10 + $0x56] sm:$0xff]
        %v8841 = vld [vmem:[#allocation10 + $0x5e] sm:$0xff]
        %v8842 = vld [vmem:[#allocation10 + $0x66] sm:$0xff]
        %v8843 = vld [vmem:[#allocation10 + $0x6e] sm:$0xff]
        %v8844 = vld [vmem:[#allocation10 + $0x76] sm:$0xff]
        %v8845 = vld [vmem:[#allocation10 + $0x7e] sm:$0xff]
        %v8846 = vld [vmem:[#allocation10 + $0x86] sm:$0xff]
        %v8847 = vld [vmem:[#allocation10 + $0x8e] sm:$0xff]
        %v8848 = vld [vmem:[#allocation10 + $0x96] sm:$0xff]
        %v8849 = vld [vmem:[#allocation10 + $0x9e] sm:$0xff]
        %v8850 = vld [vmem:[#allocation10 + $0xa6] sm:$0xff]
        %v8851 = vld [vmem:[#allocation10 + $0xae] sm:$0xff]
        %v8852 = vld [vmem:[#allocation10 + $0xb6] sm:$0xff]
        %v8853 = vld [vmem:[#allocation10 + $0xbe] sm:$0xff]
        %v8854 = vld [vmem:[#allocation10 + $0xc6] sm:$0xff]
        %v8855 = vld [vmem:[#allocation10 + $0xce] sm:$0xff]
        %v8856 = vld [vmem:[#allocation10 + $0xd6] sm:$0xff]
        %v8857 = vld [vmem:[#allocation10 + $0xde] sm:$0x7]
        %v8858 = vpack.c.bf16 %v8834, %v8833
        %v8859 = vpack.c.bf16 %v8836, %v8835
        %v8860 = vpack.c.bf16 %v8838, %v8837
        %v8861 = vpack.c.bf16 %v8840, %v8839
        %v8862 = vpack.c.bf16 %v8842, %v8841
        %v8863 = vpack.c.bf16 %v8844, %v8843
        %v8864 = vpack.c.bf16 %v8846, %v8845
        %v8865 = vpack.c.bf16 %v8848, %v8847
        %v8866 = vpack.c.bf16 %v8850, %v8849
        %v8867 = vpack.c.bf16 %v8852, %v8851
        %v8868 = vpack.c.bf16 %v8854, %v8853
        %v8869 = vpack.c.bf16 %v8856, %v8855
        %v8870 = vpack.c.bf16 %v8857, %v8857
        %s8871 = scalar_lea.vmem [#allocation11], 3136
        %v8872 = vld [vmem:[%s8871] sm:$0xf]
        %v8873 = vld [vmem:[%s8871 + $0x4] sm:$0xf]
        %v8874 = vld [vmem:[%s8871 + $0x8] sm:$0xf]
        %v8875 = vld [vmem:[%s8871 + $0xc] sm:$0xf]
        %v8876 = vld [vmem:[%s8871 + $0x10] sm:$0xf]
        %v8877 = vld [vmem:[%s8871 + $0x14] sm:$0xf]
        %v8878 = vld [vmem:[%s8871 + $0x18] sm:$0xf]
        %v8879 = vld [vmem:[%s8871 + $0x1c] sm:$0xf]
        %v8880 = vld [vmem:[%s8871 + $0x20] sm:$0xf]
        %v8881 = vld [vmem:[%s8871 + $0x24] sm:$0xf]
        %v8882 = vld [vmem:[%s8871 + $0x28] sm:$0xf]
        %v8883 = vld [vmem:[%s8871 + $0x2c] sm:$0xf]
        %v8884 = vld [vmem:[%s8871 + $0x30] sm:$0xf]
        %v8885 = vld [vmem:[%s8871 + $0x34] sm:$0xf]
        %v8886 = vld [vmem:[%s8871 + $0x38] sm:$0xf]
        %v8887 = vld [vmem:[%s8871 + $0x3c] sm:$0xf]
        %v8904 = vunpack.c.l.b16 %v8872
        %v8905 = vunpack.c.l.b16 %v8873
        %v8906 = vunpack.c.l.b16 %v8874
        %v8907 = vunpack.c.l.b16 %v8875
        %v8908 = vunpack.c.l.b16 %v8876
        %v8909 = vunpack.c.l.b16 %v8877
        %v8910 = vunpack.c.l.b16 %v8878
        %v8911 = vunpack.c.l.b16 %v8879
        %v8912 = vunpack.c.l.b16 %v8880
        %v8913 = vunpack.c.l.b16 %v8881
        %v8914 = vunpack.c.l.b16 %v8882
        %v8915 = vunpack.c.l.b16 %v8883
        %v8916 = vunpack.c.l.b16 %v8884
        %v8917 = vunpack.c.l.b16 %v8885
        %v8918 = vunpack.c.l.b16 %v8886
        %v8919 = vunpack.c.l.b16 %v8887
        %v8920 = vpack.c.b16 %v8905, %v8904
        %v8921 = vpack.c.b16 %v8907, %v8906
        %v8922 = vpack.c.b16 %v8909, %v8908
        %v8923 = vpack.c.b16 %v8911, %v8910
        %v8924 = vpack.c.b16 %v8913, %v8912
        %v8925 = vpack.c.b16 %v8915, %v8914
        %v8926 = vpack.c.b16 %v8917, %v8916
        %v8927 = vpack.c.b16 %v8919, %v8918
        %8936 = vmatprep.subr.bf16.mxu0 0
        %8937 = vmatpush1.bf16.msra.mxu0 %v8927
        %8938 = vmatprep.subr.bf16.mxu0 0
        %8939 = vmatpush1.bf16.msra.mxu0 %v8926
        %8940 = vmatprep.subr.bf16.mxu0 0
        %8941 = vmatpush1.bf16.msra.mxu0 %v8925
        %8942 = vmatprep.subr.bf16.mxu0 0
        %8943 = vmatpush1.bf16.msra.mxu0 %v8924
        %8944 = vmatprep.subr.bf16.mxu0 0
        %8945 = vmatpush1.bf16.msra.mxu0 %v8923
        %8946 = vmatprep.subr.bf16.mxu0 0
        %8947 = vmatpush1.bf16.msra.mxu0 %v8922
        %8948 = vmatprep.subr.bf16.mxu0 0
        %8949 = vmatpush1.bf16.msra.mxu0 %v8921
        %8950 = vmatprep.subr.bf16.mxu0 0
        %8951 = vmatpush1.bf16.msra.mxu0 %v8920
        %8952 = vmatprep.subr.bf16.mxu0 0
        %8953 = vmatpush2.bf16.msra.mxu0 0
        %8954 = vmatprep.subr.bf16.mxu0 0
        %8955 = vmatpush2.bf16.msra.mxu0 0
        %8956 = vmatprep.subr.bf16.mxu0 0
        %8957 = vmatpush2.bf16.msra.mxu0 0
        %8958 = vmatprep.subr.bf16.mxu0 0
        %8959 = vmatpush2.bf16.msra.mxu0 0
        %8960 = vmatprep.subr.bf16.mxu0 0
        %8961 = vmatpush2.bf16.msra.mxu0 0
        %8962 = vmatprep.subr.bf16.mxu0 0
        %8963 = vmatpush2.bf16.msra.mxu0 0
        %8964 = vmatprep.subr.bf16.mxu0 0
        %8965 = vmatpush2.bf16.msra.mxu0 0
        %8966 = vmatprep.subr.bf16.mxu0 0
        %8967 = vmatpush2.bf16.msra.mxu0 0
        %8968 = vmatprep.mubr.bf16.mxu0 0
        %8969 = vmatmul.mubr.bf16.gmra.mxu0 %v8858
        %v8970 = vpop.f32.mrf.mxu0
        %v8971 = vadd.f32 0.0, %v8970
        %v8972 = vpop.f32.mrf.mxu0
        %v8973 = vpop.f32.mrf.mxu0
        %v8974 = vadd.f32 0.0, %v8973
        %v8975 = vpop.f32.mrf.mxu0
        %8976 = vmatprep.mubr.bf16.mxu0 0
        %8977 = vmatmul.mubr.bf16.gmra.mxu0 %v8859
        %v8978 = vpop.f32.mrf.mxu0
        %v8979 = vadd.f32 0.0, %v8978
        %v8980 = vpop.f32.mrf.mxu0
        %v8981 = vpop.f32.mrf.mxu0
        %v8982 = vadd.f32 0.0, %v8981
        %v8983 = vpop.f32.mrf.mxu0
        %8984 = vmatprep.mubr.bf16.mxu0 0
        %8985 = vmatmul.mubr.bf16.gmra.mxu0 %v8860
        %v8986 = vpop.f32.mrf.mxu0
        %v8987 = vadd.f32 0.0, %v8986
        %v8988 = vpop.f32.mrf.mxu0
        %v8989 = vpop.f32.mrf.mxu0
        %v8990 = vadd.f32 0.0, %v8989
        %v8991 = vpop.f32.mrf.mxu0
        %8992 = vmatprep.mubr.bf16.mxu0 0
        %8993 = vmatmul.mubr.bf16.gmra.mxu0 %v8861
        %v8994 = vpop.f32.mrf.mxu0
        %v8995 = vadd.f32 0.0, %v8994
        %v8996 = vpop.f32.mrf.mxu0
        %v8997 = vpop.f32.mrf.mxu0
        %v8998 = vadd.f32 0.0, %v8997
        %v8999 = vpop.f32.mrf.mxu0
        %9000 = vmatprep.mubr.bf16.mxu0 0
        %9001 = vmatmul.mubr.bf16.gmra.mxu0 %v8862
        %v9002 = vpop.f32.mrf.mxu0
        %v9003 = vadd.f32 0.0, %v9002
        %v9004 = vpop.f32.mrf.mxu0
        %v9005 = vpop.f32.mrf.mxu0
        %v9006 = vadd.f32 0.0, %v9005
        %v9007 = vpop.f32.mrf.mxu0
        %9008 = vmatprep.mubr.bf16.mxu0 0
        %9009 = vmatmul.mubr.bf16.gmra.mxu0 %v8863
        %v9010 = vpop.f32.mrf.mxu0
        %v9011 = vadd.f32 0.0, %v9010
        %v9012 = vpop.f32.mrf.mxu0
        %v9013 = vpop.f32.mrf.mxu0
        %v9014 = vadd.f32 0.0, %v9013
        %v9015 = vpop.f32.mrf.mxu0
        %9016 = vmatprep.mubr.bf16.mxu0 0
        %9017 = vmatmul.mubr.bf16.gmra.mxu0 %v8864
        %v9018 = vpop.f32.mrf.mxu0
        %v9019 = vadd.f32 0.0, %v9018
        %v9020 = vpop.f32.mrf.mxu0
        %v9021 = vpop.f32.mrf.mxu0
        %v9022 = vadd.f32 0.0, %v9021
        %v9023 = vpop.f32.mrf.mxu0
        %9024 = vmatprep.mubr.bf16.mxu0 0
        %9025 = vmatmul.mubr.bf16.gmra.mxu0 %v8865
        %v9026 = vpop.f32.mrf.mxu0
        %v9027 = vadd.f32 0.0, %v9026
        %v9028 = vpop.f32.mrf.mxu0
        %v9029 = vpop.f32.mrf.mxu0
        %v9030 = vadd.f32 0.0, %v9029
        %v9031 = vpop.f32.mrf.mxu0
        %9032 = vmatprep.mubr.bf16.mxu0 0
        %9033 = vmatmul.mubr.bf16.gmra.mxu0 %v8866
        %v9034 = vpop.f32.mrf.mxu0
        %v9035 = vadd.f32 0.0, %v9034
        %v9036 = vpop.f32.mrf.mxu0
        %v9037 = vpop.f32.mrf.mxu0
        %v9038 = vadd.f32 0.0, %v9037
        %v9039 = vpop.f32.mrf.mxu0
        %9040 = vmatprep.mubr.bf16.mxu0 0
        %9041 = vmatmul.mubr.bf16.gmra.mxu0 %v8867
        %v9042 = vpop.f32.mrf.mxu0
        %v9043 = vadd.f32 0.0, %v9042
        %v9044 = vpop.f32.mrf.mxu0
        %v9045 = vpop.f32.mrf.mxu0
        %v9046 = vadd.f32 0.0, %v9045
        %v9047 = vpop.f32.mrf.mxu0
        %9048 = vmatprep.mubr.bf16.mxu0 0
        %9049 = vmatmul.mubr.bf16.gmra.mxu0 %v8868
        %v9050 = vpop.f32.mrf.mxu0
        %v9051 = vadd.f32 0.0, %v9050
        %v9052 = vpop.f32.mrf.mxu0
        %v9053 = vpop.f32.mrf.mxu0
        %v9054 = vadd.f32 0.0, %v9053
        %v9055 = vpop.f32.mrf.mxu0
        %9056 = vmatprep.mubr.bf16.mxu0 0
        %9057 = vmatmul.mubr.bf16.gmra.mxu0 %v8869
        %v9058 = vpop.f32.mrf.mxu0
        %v9059 = vadd.f32 0.0, %v9058
        %v9060 = vpop.f32.mrf.mxu0
        %v9061 = vpop.f32.mrf.mxu0
        %v9062 = vadd.f32 0.0, %v9061
        %v9063 = vpop.f32.mrf.mxu0
        %9064 = vmatprep.mubr.bf16.mxu0 0
        %9065 = vmatmul.mubr.bf16.gmra.mxu0 %v8870
        %v9066 = vpop.f32.mrf.mxu0
        %v9067 = vadd.f32 0.0, %v9066
        %v9068 = vpop.f32.mrf.mxu0
        %v9069 = vpop.f32.mrf.mxu0
        %v9070 = vpop.f32.mrf.mxu0
        %9071 = vdwg.mxu0
        %v9072 = vadd.f32 %v8808, %v8971
        %v9073 = vadd.f32 %v8809, %v8974
        %v9074 = vadd.f32 %v8810, %v8979
        %v9075 = vadd.f32 %v8811, %v8982
        %v9076 = vadd.f32 %v8812, %v8987
        %v9077 = vadd.f32 %v8813, %v8990
        %v9078 = vadd.f32 %v8814, %v8995
        %v9079 = vadd.f32 %v8815, %v8998
        %v9080 = vadd.f32 %v8816, %v9003
        %v9081 = vadd.f32 %v8817, %v9006
        %v9082 = vadd.f32 %v8818, %v9011
        %v9083 = vadd.f32 %v8819, %v9014
        %v9084 = vadd.f32 %v8820, %v9019
        %v9085 = vadd.f32 %v8821, %v9022
        %v9086 = vadd.f32 %v8822, %v9027
        %v9087 = vadd.f32 %v8823, %v9030
        %v9088 = vadd.f32 %v8824, %v9035
        %v9089 = vadd.f32 %v8825, %v9038
        %v9090 = vadd.f32 %v8826, %v9043
        %v9091 = vadd.f32 %v8827, %v9046
        %v9092 = vadd.f32 %v8828, %v9051
        %v9093 = vadd.f32 %v8829, %v9054
        %v9094 = vadd.f32 %v8830, %v9059
        %v9095 = vadd.f32 %v8831, %v9062
        %v9096 = vadd.f32 %v8832, %v9067
        %v9097 = vld [vmem:[#allocation10 + $0x1f] sm:$0xff]
        %v9098 = vld [vmem:[#allocation10 + $0x27] sm:$0xff]
        %v9099 = vld [vmem:[#allocation10 + $0x2f] sm:$0xff]
        %v9100 = vld [vmem:[#allocation10 + $0x37] sm:$0xff]
        %v9101 = vld [vmem:[#allocation10 + $0x3f] sm:$0xff]
        %v9102 = vld [vmem:[#allocation10 + $0x47] sm:$0xff]
        %v9103 = vld [vmem:[#allocation10 + $0x4f] sm:$0xff]
        %v9104 = vld [vmem:[#allocation10 + $0x57] sm:$0xff]
        %v9105 = vld [vmem:[#allocation10 + $0x5f] sm:$0xff]
        %v9106 = vld [vmem:[#allocation10 + $0x67] sm:$0xff]
        %v9107 = vld [vmem:[#allocation10 + $0x6f] sm:$0xff]
        %v9108 = vld [vmem:[#allocation10 + $0x77] sm:$0xff]
        %v9109 = vld [vmem:[#allocation10 + $0x7f] sm:$0xff]
        %v9110 = vld [vmem:[#allocation10 + $0x87] sm:$0xff]
        %v9111 = vld [vmem:[#allocation10 + $0x8f] sm:$0xff]
        %v9112 = vld [vmem:[#allocation10 + $0x97] sm:$0xff]
        %v9113 = vld [vmem:[#allocation10 + $0x9f] sm:$0xff]
        %v9114 = vld [vmem:[#allocation10 + $0xa7] sm:$0xff]
        %v9115 = vld [vmem:[#allocation10 + $0xaf] sm:$0xff]
        %v9116 = vld [vmem:[#allocation10 + $0xb7] sm:$0xff]
        %v9117 = vld [vmem:[#allocation10 + $0xbf] sm:$0xff]
        %v9118 = vld [vmem:[#allocation10 + $0xc7] sm:$0xff]
        %v9119 = vld [vmem:[#allocation10 + $0xcf] sm:$0xff]
        %v9120 = vld [vmem:[#allocation10 + $0xd7] sm:$0xff]
        %v9121 = vld [vmem:[#allocation10 + $0xdf] sm:$0x7]
        %v9122 = vpack.c.bf16 %v9098, %v9097
        %v9123 = vpack.c.bf16 %v9100, %v9099
        %v9124 = vpack.c.bf16 %v9102, %v9101
        %v9125 = vpack.c.bf16 %v9104, %v9103
        %v9126 = vpack.c.bf16 %v9106, %v9105
        %v9127 = vpack.c.bf16 %v9108, %v9107
        %v9128 = vpack.c.bf16 %v9110, %v9109
        %v9129 = vpack.c.bf16 %v9112, %v9111
        %v9130 = vpack.c.bf16 %v9114, %v9113
        %v9131 = vpack.c.bf16 %v9116, %v9115
        %v9132 = vpack.c.bf16 %v9118, %v9117
        %v9133 = vpack.c.bf16 %v9120, %v9119
        %v9134 = vpack.c.bf16 %v9121, %v9121
        %s9135 = scalar_lea.vmem [#allocation11], 3200
        %v9136 = vld [vmem:[%s9135] sm:$0xf]
        %v9137 = vld [vmem:[%s9135 + $0x4] sm:$0xf]
        %v9138 = vld [vmem:[%s9135 + $0x8] sm:$0xf]
        %v9139 = vld [vmem:[%s9135 + $0xc] sm:$0xf]
        %v9140 = vld [vmem:[%s9135 + $0x10] sm:$0xf]
        %v9141 = vld [vmem:[%s9135 + $0x14] sm:$0xf]
        %v9142 = vld [vmem:[%s9135 + $0x18] sm:$0xf]
        %v9143 = vld [vmem:[%s9135 + $0x1c] sm:$0xf]
        %v9144 = vld [vmem:[%s9135 + $0x20] sm:$0xf]
        %v9145 = vld [vmem:[%s9135 + $0x24] sm:$0xf]
        %v9146 = vld [vmem:[%s9135 + $0x28] sm:$0xf]
        %v9147 = vld [vmem:[%s9135 + $0x2c] sm:$0xf]
        %v9148 = vld [vmem:[%s9135 + $0x30] sm:$0xf]
        %v9149 = vld [vmem:[%s9135 + $0x34] sm:$0xf]
        %v9150 = vld [vmem:[%s9135 + $0x38] sm:$0xf]
        %v9151 = vld [vmem:[%s9135 + $0x3c] sm:$0xf]
        %v9168 = vunpack.c.l.b16 %v9136
        %v9169 = vunpack.c.l.b16 %v9137
        %v9170 = vunpack.c.l.b16 %v9138
        %v9171 = vunpack.c.l.b16 %v9139
        %v9172 = vunpack.c.l.b16 %v9140
        %v9173 = vunpack.c.l.b16 %v9141
        %v9174 = vunpack.c.l.b16 %v9142
        %v9175 = vunpack.c.l.b16 %v9143
        %v9176 = vunpack.c.l.b16 %v9144
        %v9177 = vunpack.c.l.b16 %v9145
        %v9178 = vunpack.c.l.b16 %v9146
        %v9179 = vunpack.c.l.b16 %v9147
        %v9180 = vunpack.c.l.b16 %v9148
        %v9181 = vunpack.c.l.b16 %v9149
        %v9182 = vunpack.c.l.b16 %v9150
        %v9183 = vunpack.c.l.b16 %v9151
        %v9184 = vpack.c.b16 %v9169, %v9168
        %v9185 = vpack.c.b16 %v9171, %v9170
        %v9186 = vpack.c.b16 %v9173, %v9172
        %v9187 = vpack.c.b16 %v9175, %v9174
        %v9188 = vpack.c.b16 %v9177, %v9176
        %v9189 = vpack.c.b16 %v9179, %v9178
        %v9190 = vpack.c.b16 %v9181, %v9180
        %v9191 = vpack.c.b16 %v9183, %v9182
        %9200 = vmatprep.subr.bf16.mxu0 0
        %9201 = vmatpush1.bf16.msra.mxu0 %v9191
        %9202 = vmatprep.subr.bf16.mxu0 0
        %9203 = vmatpush1.bf16.msra.mxu0 %v9190
        %9204 = vmatprep.subr.bf16.mxu0 0
        %9205 = vmatpush1.bf16.msra.mxu0 %v9189
        %9206 = vmatprep.subr.bf16.mxu0 0
        %9207 = vmatpush1.bf16.msra.mxu0 %v9188
        %9208 = vmatprep.subr.bf16.mxu0 0
        %9209 = vmatpush1.bf16.msra.mxu0 %v9187
        %9210 = vmatprep.subr.bf16.mxu0 0
        %9211 = vmatpush1.bf16.msra.mxu0 %v9186
        %9212 = vmatprep.subr.bf16.mxu0 0
        %9213 = vmatpush1.bf16.msra.mxu0 %v9185
        %9214 = vmatprep.subr.bf16.mxu0 0
        %9215 = vmatpush1.bf16.msra.mxu0 %v9184
        %9216 = vmatprep.subr.bf16.mxu0 0
        %9217 = vmatpush2.bf16.msra.mxu0 0
        %9218 = vmatprep.subr.bf16.mxu0 0
        %9219 = vmatpush2.bf16.msra.mxu0 0
        %9220 = vmatprep.subr.bf16.mxu0 0
        %9221 = vmatpush2.bf16.msra.mxu0 0
        %9222 = vmatprep.subr.bf16.mxu0 0
        %9223 = vmatpush2.bf16.msra.mxu0 0
        %9224 = vmatprep.subr.bf16.mxu0 0
        %9225 = vmatpush2.bf16.msra.mxu0 0
        %9226 = vmatprep.subr.bf16.mxu0 0
        %9227 = vmatpush2.bf16.msra.mxu0 0
        %9228 = vmatprep.subr.bf16.mxu0 0
        %9229 = vmatpush2.bf16.msra.mxu0 0
        %9230 = vmatprep.subr.bf16.mxu0 0
        %9231 = vmatpush2.bf16.msra.mxu0 0
        %9232 = vmatprep.mubr.bf16.mxu0 0
        %9233 = vmatmul.mubr.bf16.gmra.mxu0 %v9122
        %v9234 = vpop.f32.mrf.mxu0
        %v9235 = vadd.f32 0.0, %v9234
        %v9236 = vpop.f32.mrf.mxu0
        %v9237 = vpop.f32.mrf.mxu0
        %v9238 = vadd.f32 0.0, %v9237
        %v9239 = vpop.f32.mrf.mxu0
        %9240 = vmatprep.mubr.bf16.mxu0 0
        %9241 = vmatmul.mubr.bf16.gmra.mxu0 %v9123
        %v9242 = vpop.f32.mrf.mxu0
        %v9243 = vadd.f32 0.0, %v9242
        %v9244 = vpop.f32.mrf.mxu0
        %v9245 = vpop.f32.mrf.mxu0
        %v9246 = vadd.f32 0.0, %v9245
        %v9247 = vpop.f32.mrf.mxu0
        %9248 = vmatprep.mubr.bf16.mxu0 0
        %9249 = vmatmul.mubr.bf16.gmra.mxu0 %v9124
        %v9250 = vpop.f32.mrf.mxu0
        %v9251 = vadd.f32 0.0, %v9250
        %v9252 = vpop.f32.mrf.mxu0
        %v9253 = vpop.f32.mrf.mxu0
        %v9254 = vadd.f32 0.0, %v9253
        %v9255 = vpop.f32.mrf.mxu0
        %9256 = vmatprep.mubr.bf16.mxu0 0
        %9257 = vmatmul.mubr.bf16.gmra.mxu0 %v9125
        %v9258 = vpop.f32.mrf.mxu0
        %v9259 = vadd.f32 0.0, %v9258
        %v9260 = vpop.f32.mrf.mxu0
        %v9261 = vpop.f32.mrf.mxu0
        %v9262 = vadd.f32 0.0, %v9261
        %v9263 = vpop.f32.mrf.mxu0
        %9264 = vmatprep.mubr.bf16.mxu0 0
        %9265 = vmatmul.mubr.bf16.gmra.mxu0 %v9126
        %v9266 = vpop.f32.mrf.mxu0
        %v9267 = vadd.f32 0.0, %v9266
        %v9268 = vpop.f32.mrf.mxu0
        %v9269 = vpop.f32.mrf.mxu0
        %v9270 = vadd.f32 0.0, %v9269
        %v9271 = vpop.f32.mrf.mxu0
        %9272 = vmatprep.mubr.bf16.mxu0 0
        %9273 = vmatmul.mubr.bf16.gmra.mxu0 %v9127
        %v9274 = vpop.f32.mrf.mxu0
        %v9275 = vadd.f32 0.0, %v9274
        %v9276 = vpop.f32.mrf.mxu0
        %v9277 = vpop.f32.mrf.mxu0
        %v9278 = vadd.f32 0.0, %v9277
        %v9279 = vpop.f32.mrf.mxu0
        %9280 = vmatprep.mubr.bf16.mxu0 0
        %9281 = vmatmul.mubr.bf16.gmra.mxu0 %v9128
        %v9282 = vpop.f32.mrf.mxu0
        %v9283 = vadd.f32 0.0, %v9282
        %v9284 = vpop.f32.mrf.mxu0
        %v9285 = vpop.f32.mrf.mxu0
        %v9286 = vadd.f32 0.0, %v9285
        %v9287 = vpop.f32.mrf.mxu0
        %9288 = vmatprep.mubr.bf16.mxu0 0
        %9289 = vmatmul.mubr.bf16.gmra.mxu0 %v9129
        %v9290 = vpop.f32.mrf.mxu0
        %v9291 = vadd.f32 0.0, %v9290
        %v9292 = vpop.f32.mrf.mxu0
        %v9293 = vpop.f32.mrf.mxu0
        %v9294 = vadd.f32 0.0, %v9293
        %v9295 = vpop.f32.mrf.mxu0
        %9296 = vmatprep.mubr.bf16.mxu0 0
        %9297 = vmatmul.mubr.bf16.gmra.mxu0 %v9130
        %v9298 = vpop.f32.mrf.mxu0
        %v9299 = vadd.f32 0.0, %v9298
        %v9300 = vpop.f32.mrf.mxu0
        %v9301 = vpop.f32.mrf.mxu0
        %v9302 = vadd.f32 0.0, %v9301
        %v9303 = vpop.f32.mrf.mxu0
        %9304 = vmatprep.mubr.bf16.mxu0 0
        %9305 = vmatmul.mubr.bf16.gmra.mxu0 %v9131
        %v9306 = vpop.f32.mrf.mxu0
        %v9307 = vadd.f32 0.0, %v9306
        %v9308 = vpop.f32.mrf.mxu0
        %v9309 = vpop.f32.mrf.mxu0
        %v9310 = vadd.f32 0.0, %v9309
        %v9311 = vpop.f32.mrf.mxu0
        %9312 = vmatprep.mubr.bf16.mxu0 0
        %9313 = vmatmul.mubr.bf16.gmra.mxu0 %v9132
        %v9314 = vpop.f32.mrf.mxu0
        %v9315 = vadd.f32 0.0, %v9314
        %v9316 = vpop.f32.mrf.mxu0
        %v9317 = vpop.f32.mrf.mxu0
        %v9318 = vadd.f32 0.0, %v9317
        %v9319 = vpop.f32.mrf.mxu0
        %9320 = vmatprep.mubr.bf16.mxu0 0
        %9321 = vmatmul.mubr.bf16.gmra.mxu0 %v9133
        %v9322 = vpop.f32.mrf.mxu0
        %v9323 = vadd.f32 0.0, %v9322
        %v9324 = vpop.f32.mrf.mxu0
        %v9325 = vpop.f32.mrf.mxu0
        %v9326 = vadd.f32 0.0, %v9325
        %v9327 = vpop.f32.mrf.mxu0
        %9328 = vmatprep.mubr.bf16.mxu0 0
        %9329 = vmatmul.mubr.bf16.gmra.mxu0 %v9134
        %v9330 = vpop.f32.mrf.mxu0
        %v9331 = vadd.f32 0.0, %v9330
        %v9332 = vpop.f32.mrf.mxu0
        %v9333 = vpop.f32.mrf.mxu0
        %v9334 = vpop.f32.mrf.mxu0
        %9335 = vdwg.mxu0
        %v9336 = vadd.f32 %v9072, %v9235
        %v9337 = vadd.f32 %v9073, %v9238
        %v9338 = vadd.f32 %v9074, %v9243
        %v9339 = vadd.f32 %v9075, %v9246
        %v9340 = vadd.f32 %v9076, %v9251
        %v9341 = vadd.f32 %v9077, %v9254
        %v9342 = vadd.f32 %v9078, %v9259
        %v9343 = vadd.f32 %v9079, %v9262
        %v9344 = vadd.f32 %v9080, %v9267
        %v9345 = vadd.f32 %v9081, %v9270
        %v9346 = vadd.f32 %v9082, %v9275
        %v9347 = vadd.f32 %v9083, %v9278
        %v9348 = vadd.f32 %v9084, %v9283
        %v9349 = vadd.f32 %v9085, %v9286
        %v9350 = vadd.f32 %v9086, %v9291
        %v9351 = vadd.f32 %v9087, %v9294
        %v9352 = vadd.f32 %v9088, %v9299
        %v9353 = vadd.f32 %v9089, %v9302
        %v9354 = vadd.f32 %v9090, %v9307
        %v9355 = vadd.f32 %v9091, %v9310
        %v9356 = vadd.f32 %v9092, %v9315
        %v9357 = vadd.f32 %v9093, %v9318
        %v9358 = vadd.f32 %v9094, %v9323
        %v9359 = vadd.f32 %v9095, %v9326
        %v9360 = vadd.f32 %v9096, %v9331
        %v9361 = vld [vmem:[#allocation10 + $0x20] sm:$0xff]
        %v9362 = vld [vmem:[#allocation10 + $0x28] sm:$0xff]
        %v9363 = vld [vmem:[#allocation10 + $0x30] sm:$0xff]
        %v9364 = vld [vmem:[#allocation10 + $0x38] sm:$0xff]
        %v9365 = vld [vmem:[#allocation10 + $0x40] sm:$0xff]
        %v9366 = vld [vmem:[#allocation10 + $0x48] sm:$0xff]
        %v9367 = vld [vmem:[#allocation10 + $0x50] sm:$0xff]
        %v9368 = vld [vmem:[#allocation10 + $0x58] sm:$0xff]
        %v9369 = vld [vmem:[#allocation10 + $0x60] sm:$0xff]
        %v9370 = vld [vmem:[#allocation10 + $0x68] sm:$0xff]
        %v9371 = vld [vmem:[#allocation10 + $0x70] sm:$0xff]
        %v9372 = vld [vmem:[#allocation10 + $0x78] sm:$0xff]
        %v9373 = vld [vmem:[#allocation10 + $0x80] sm:$0xff]
        %v9374 = vld [vmem:[#allocation10 + $0x88] sm:$0xff]
        %v9375 = vld [vmem:[#allocation10 + $0x90] sm:$0xff]
        %v9376 = vld [vmem:[#allocation10 + $0x98] sm:$0xff]
        %v9377 = vld [vmem:[#allocation10 + $0xa0] sm:$0xff]
        %v9378 = vld [vmem:[#allocation10 + $0xa8] sm:$0xff]
        %v9379 = vld [vmem:[#allocation10 + $0xb0] sm:$0xff]
        %v9380 = vld [vmem:[#allocation10 + $0xb8] sm:$0xff]
        %v9381 = vld [vmem:[#allocation10 + $0xc0] sm:$0xff]
        %v9382 = vld [vmem:[#allocation10 + $0xc8] sm:$0xff]
        %v9383 = vld [vmem:[#allocation10 + $0xd0] sm:$0xff]
        %v9384 = vld [vmem:[#allocation10 + $0xd8] sm:$0xff]
        %v9385 = vld [vmem:[#allocation10 + $0xe0] sm:$0x7]
        %v9386 = vpack.c.bf16 %v9362, %v9361
        %v9387 = vpack.c.bf16 %v9364, %v9363
        %v9388 = vpack.c.bf16 %v9366, %v9365
        %v9389 = vpack.c.bf16 %v9368, %v9367
        %v9390 = vpack.c.bf16 %v9370, %v9369
        %v9391 = vpack.c.bf16 %v9372, %v9371
        %v9392 = vpack.c.bf16 %v9374, %v9373
        %v9393 = vpack.c.bf16 %v9376, %v9375
        %v9394 = vpack.c.bf16 %v9378, %v9377
        %v9395 = vpack.c.bf16 %v9380, %v9379
        %v9396 = vpack.c.bf16 %v9382, %v9381
        %v9397 = vpack.c.bf16 %v9384, %v9383
        %v9398 = vpack.c.bf16 %v9385, %v9385
        %s9399 = scalar_lea.vmem [#allocation11], 3264
        %v9400 = vld [vmem:[%s9399] sm:$0xf]
        %v9401 = vld [vmem:[%s9399 + $0x4] sm:$0xf]
        %v9402 = vld [vmem:[%s9399 + $0x8] sm:$0xf]
        %v9403 = vld [vmem:[%s9399 + $0xc] sm:$0xf]
        %v9404 = vld [vmem:[%s9399 + $0x10] sm:$0xf]
        %v9405 = vld [vmem:[%s9399 + $0x14] sm:$0xf]
        %v9406 = vld [vmem:[%s9399 + $0x18] sm:$0xf]
        %v9407 = vld [vmem:[%s9399 + $0x1c] sm:$0xf]
        %v9408 = vld [vmem:[%s9399 + $0x20] sm:$0xf]
        %v9409 = vld [vmem:[%s9399 + $0x24] sm:$0xf]
        %v9410 = vld [vmem:[%s9399 + $0x28] sm:$0xf]
        %v9411 = vld [vmem:[%s9399 + $0x2c] sm:$0xf]
        %v9412 = vld [vmem:[%s9399 + $0x30] sm:$0xf]
        %v9413 = vld [vmem:[%s9399 + $0x34] sm:$0xf]
        %v9414 = vld [vmem:[%s9399 + $0x38] sm:$0xf]
        %v9415 = vld [vmem:[%s9399 + $0x3c] sm:$0xf]
        %v9432 = vunpack.c.l.b16 %v9400
        %v9433 = vunpack.c.l.b16 %v9401
        %v9434 = vunpack.c.l.b16 %v9402
        %v9435 = vunpack.c.l.b16 %v9403
        %v9436 = vunpack.c.l.b16 %v9404
        %v9437 = vunpack.c.l.b16 %v9405
        %v9438 = vunpack.c.l.b16 %v9406
        %v9439 = vunpack.c.l.b16 %v9407
        %v9440 = vunpack.c.l.b16 %v9408
        %v9441 = vunpack.c.l.b16 %v9409
        %v9442 = vunpack.c.l.b16 %v9410
        %v9443 = vunpack.c.l.b16 %v9411
        %v9444 = vunpack.c.l.b16 %v9412
        %v9445 = vunpack.c.l.b16 %v9413
        %v9446 = vunpack.c.l.b16 %v9414
        %v9447 = vunpack.c.l.b16 %v9415
        %v9448 = vpack.c.b16 %v9433, %v9432
        %v9449 = vpack.c.b16 %v9435, %v9434
        %v9450 = vpack.c.b16 %v9437, %v9436
        %v9451 = vpack.c.b16 %v9439, %v9438
        %v9452 = vpack.c.b16 %v9441, %v9440
        %v9453 = vpack.c.b16 %v9443, %v9442
        %v9454 = vpack.c.b16 %v9445, %v9444
        %v9455 = vpack.c.b16 %v9447, %v9446
        %9464 = vmatprep.subr.bf16.mxu0 0
        %9465 = vmatpush1.bf16.msra.mxu0 %v9455
        %9466 = vmatprep.subr.bf16.mxu0 0
        %9467 = vmatpush1.bf16.msra.mxu0 %v9454
        %9468 = vmatprep.subr.bf16.mxu0 0
        %9469 = vmatpush1.bf16.msra.mxu0 %v9453
        %9470 = vmatprep.subr.bf16.mxu0 0
        %9471 = vmatpush1.bf16.msra.mxu0 %v9452
        %9472 = vmatprep.subr.bf16.mxu0 0
        %9473 = vmatpush1.bf16.msra.mxu0 %v9451
        %9474 = vmatprep.subr.bf16.mxu0 0
        %9475 = vmatpush1.bf16.msra.mxu0 %v9450
        %9476 = vmatprep.subr.bf16.mxu0 0
        %9477 = vmatpush1.bf16.msra.mxu0 %v9449
        %9478 = vmatprep.subr.bf16.mxu0 0
        %9479 = vmatpush1.bf16.msra.mxu0 %v9448
        %9480 = vmatprep.subr.bf16.mxu0 0
        %9481 = vmatpush2.bf16.msra.mxu0 0
        %9482 = vmatprep.subr.bf16.mxu0 0
        %9483 = vmatpush2.bf16.msra.mxu0 0
        %9484 = vmatprep.subr.bf16.mxu0 0
        %9485 = vmatpush2.bf16.msra.mxu0 0
        %9486 = vmatprep.subr.bf16.mxu0 0
        %9487 = vmatpush2.bf16.msra.mxu0 0
        %9488 = vmatprep.subr.bf16.mxu0 0
        %9489 = vmatpush2.bf16.msra.mxu0 0
        %9490 = vmatprep.subr.bf16.mxu0 0
        %9491 = vmatpush2.bf16.msra.mxu0 0
        %9492 = vmatprep.subr.bf16.mxu0 0
        %9493 = vmatpush2.bf16.msra.mxu0 0
        %9494 = vmatprep.subr.bf16.mxu0 0
        %9495 = vmatpush2.bf16.msra.mxu0 0
        %9496 = vmatprep.mubr.bf16.mxu0 0
        %9497 = vmatmul.mubr.bf16.gmra.mxu0 %v9386
        %v9498 = vpop.f32.mrf.mxu0
        %v9499 = vadd.f32 0.0, %v9498
        %v9500 = vpop.f32.mrf.mxu0
        %v9501 = vpop.f32.mrf.mxu0
        %v9502 = vadd.f32 0.0, %v9501
        %v9503 = vpop.f32.mrf.mxu0
        %9504 = vmatprep.mubr.bf16.mxu0 0
        %9505 = vmatmul.mubr.bf16.gmra.mxu0 %v9387
        %v9506 = vpop.f32.mrf.mxu0
        %v9507 = vadd.f32 0.0, %v9506
        %v9508 = vpop.f32.mrf.mxu0
        %v9509 = vpop.f32.mrf.mxu0
        %v9510 = vadd.f32 0.0, %v9509
        %v9511 = vpop.f32.mrf.mxu0
        %9512 = vmatprep.mubr.bf16.mxu0 0
        %9513 = vmatmul.mubr.bf16.gmra.mxu0 %v9388
        %v9514 = vpop.f32.mrf.mxu0
        %v9515 = vadd.f32 0.0, %v9514
        %v9516 = vpop.f32.mrf.mxu0
        %v9517 = vpop.f32.mrf.mxu0
        %v9518 = vadd.f32 0.0, %v9517
        %v9519 = vpop.f32.mrf.mxu0
        %9520 = vmatprep.mubr.bf16.mxu0 0
        %9521 = vmatmul.mubr.bf16.gmra.mxu0 %v9389
        %v9522 = vpop.f32.mrf.mxu0
        %v9523 = vadd.f32 0.0, %v9522
        %v9524 = vpop.f32.mrf.mxu0
        %v9525 = vpop.f32.mrf.mxu0
        %v9526 = vadd.f32 0.0, %v9525
        %v9527 = vpop.f32.mrf.mxu0
        %9528 = vmatprep.mubr.bf16.mxu0 0
        %9529 = vmatmul.mubr.bf16.gmra.mxu0 %v9390
        %v9530 = vpop.f32.mrf.mxu0
        %v9531 = vadd.f32 0.0, %v9530
        %v9532 = vpop.f32.mrf.mxu0
        %v9533 = vpop.f32.mrf.mxu0
        %v9534 = vadd.f32 0.0, %v9533
        %v9535 = vpop.f32.mrf.mxu0
        %9536 = vmatprep.mubr.bf16.mxu0 0
        %9537 = vmatmul.mubr.bf16.gmra.mxu0 %v9391
        %v9538 = vpop.f32.mrf.mxu0
        %v9539 = vadd.f32 0.0, %v9538
        %v9540 = vpop.f32.mrf.mxu0
        %v9541 = vpop.f32.mrf.mxu0
        %v9542 = vadd.f32 0.0, %v9541
        %v9543 = vpop.f32.mrf.mxu0
        %9544 = vmatprep.mubr.bf16.mxu0 0
        %9545 = vmatmul.mubr.bf16.gmra.mxu0 %v9392
        %v9546 = vpop.f32.mrf.mxu0
        %v9547 = vadd.f32 0.0, %v9546
        %v9548 = vpop.f32.mrf.mxu0
        %v9549 = vpop.f32.mrf.mxu0
        %v9550 = vadd.f32 0.0, %v9549
        %v9551 = vpop.f32.mrf.mxu0
        %9552 = vmatprep.mubr.bf16.mxu0 0
        %9553 = vmatmul.mubr.bf16.gmra.mxu0 %v9393
        %v9554 = vpop.f32.mrf.mxu0
        %v9555 = vadd.f32 0.0, %v9554
        %v9556 = vpop.f32.mrf.mxu0
        %v9557 = vpop.f32.mrf.mxu0
        %v9558 = vadd.f32 0.0, %v9557
        %v9559 = vpop.f32.mrf.mxu0
        %9560 = vmatprep.mubr.bf16.mxu0 0
        %9561 = vmatmul.mubr.bf16.gmra.mxu0 %v9394
        %v9562 = vpop.f32.mrf.mxu0
        %v9563 = vadd.f32 0.0, %v9562
        %v9564 = vpop.f32.mrf.mxu0
        %v9565 = vpop.f32.mrf.mxu0
        %v9566 = vadd.f32 0.0, %v9565
        %v9567 = vpop.f32.mrf.mxu0
        %9568 = vmatprep.mubr.bf16.mxu0 0
        %9569 = vmatmul.mubr.bf16.gmra.mxu0 %v9395
        %v9570 = vpop.f32.mrf.mxu0
        %v9571 = vadd.f32 0.0, %v9570
        %v9572 = vpop.f32.mrf.mxu0
        %v9573 = vpop.f32.mrf.mxu0
        %v9574 = vadd.f32 0.0, %v9573
        %v9575 = vpop.f32.mrf.mxu0
        %9576 = vmatprep.mubr.bf16.mxu0 0
        %9577 = vmatmul.mubr.bf16.gmra.mxu0 %v9396
        %v9578 = vpop.f32.mrf.mxu0
        %v9579 = vadd.f32 0.0, %v9578
        %v9580 = vpop.f32.mrf.mxu0
        %v9581 = vpop.f32.mrf.mxu0
        %v9582 = vadd.f32 0.0, %v9581
        %v9583 = vpop.f32.mrf.mxu0
        %9584 = vmatprep.mubr.bf16.mxu0 0
        %9585 = vmatmul.mubr.bf16.gmra.mxu0 %v9397
        %v9586 = vpop.f32.mrf.mxu0
        %v9587 = vadd.f32 0.0, %v9586
        %v9588 = vpop.f32.mrf.mxu0
        %v9589 = vpop.f32.mrf.mxu0
        %v9590 = vadd.f32 0.0, %v9589
        %v9591 = vpop.f32.mrf.mxu0
        %9592 = vmatprep.mubr.bf16.mxu0 0
        %9593 = vmatmul.mubr.bf16.gmra.mxu0 %v9398
        %v9594 = vpop.f32.mrf.mxu0
        %v9595 = vadd.f32 0.0, %v9594
        %v9596 = vpop.f32.mrf.mxu0
        %v9597 = vpop.f32.mrf.mxu0
        %v9598 = vpop.f32.mrf.mxu0
        %9599 = vdwg.mxu0
        %v9600 = vadd.f32 %v9336, %v9499
        %v9601 = vadd.f32 %v9337, %v9502
        %v9602 = vadd.f32 %v9338, %v9507
        %v9603 = vadd.f32 %v9339, %v9510
        %v9604 = vadd.f32 %v9340, %v9515
        %v9605 = vadd.f32 %v9341, %v9518
        %v9606 = vadd.f32 %v9342, %v9523
        %v9607 = vadd.f32 %v9343, %v9526
        %v9608 = vadd.f32 %v9344, %v9531
        %v9609 = vadd.f32 %v9345, %v9534
        %v9610 = vadd.f32 %v9346, %v9539
        %v9611 = vadd.f32 %v9347, %v9542
        %v9612 = vadd.f32 %v9348, %v9547
        %v9613 = vadd.f32 %v9349, %v9550
        %v9614 = vadd.f32 %v9350, %v9555
        %v9615 = vadd.f32 %v9351, %v9558
        %v9616 = vadd.f32 %v9352, %v9563
        %v9617 = vadd.f32 %v9353, %v9566
        %v9618 = vadd.f32 %v9354, %v9571
        %v9619 = vadd.f32 %v9355, %v9574
        %v9620 = vadd.f32 %v9356, %v9579
        %v9621 = vadd.f32 %v9357, %v9582
        %v9622 = vadd.f32 %v9358, %v9587
        %v9623 = vadd.f32 %v9359, %v9590
        %v9624 = vadd.f32 %v9360, %v9595
        %9625 = vst [vmem:[%s241] sm:$0xff] %v9600
        %9626 = vst [vmem:[%s241 + $0x8] sm:$0xff] %v9601
        %9627 = vst [vmem:[%s241 + $0x10] sm:$0xff] %v9602
        %9628 = vst [vmem:[%s241 + $0x18] sm:$0xff] %v9603
        %9629 = vst [vmem:[%s241 + $0x20] sm:$0xff] %v9604
        %9630 = vst [vmem:[%s241 + $0x28] sm:$0xff] %v9605
        %9631 = vst [vmem:[%s241 + $0x30] sm:$0xff] %v9606
        %9632 = vst [vmem:[%s241 + $0x38] sm:$0xff] %v9607
        %9633 = vst [vmem:[%s241 + $0x40] sm:$0xff] %v9608
        %9634 = vst [vmem:[%s241 + $0x48] sm:$0xff] %v9609
        %9635 = vst [vmem:[%s241 + $0x50] sm:$0xff] %v9610
        %9636 = vst [vmem:[%s241 + $0x58] sm:$0xff] %v9611
        %9637 = vst [vmem:[%s241 + $0x60] sm:$0xff] %v9612
        %9638 = vst [vmem:[%s241 + $0x68] sm:$0xff] %v9613
        %9639 = vst [vmem:[%s241 + $0x70] sm:$0xff] %v9614
        %9640 = vst [vmem:[%s241 + $0x78] sm:$0xff] %v9615
        %9641 = vst [vmem:[%s241 + $0x80] sm:$0xff] %v9616
        %9642 = vst [vmem:[%s241 + $0x88] sm:$0xff] %v9617
        %9643 = vst [vmem:[%s241 + $0x90] sm:$0xff] %v9618
        %9644 = vst [vmem:[%s241 + $0x98] sm:$0xff] %v9619
        %9645 = vst [vmem:[%s241 + $0xa0] sm:$0xff] %v9620
        %9646 = vst [vmem:[%s241 + $0xa8] sm:$0xff] %v9621
        %9647 = vst [vmem:[%s241 + $0xb0] sm:$0xff] %v9622
        %9648 = vst [vmem:[%s241 + $0xb8] sm:$0xff] %v9623
        %9649 = vst [vmem:[%s241 + $0xc0] sm:$0x7] %v9624
        %v9650 = vlaneseq
        %v9651 = vshrl.u32 %v9650, 7
        %v9652 = vsub.s32 0, %v9651
        %v9653 = vrot.slane %v4963, %v9652
        %9654 = vst [vmem:[%s241 + $0xc3] sm:$0x1f] %v9653
        %p9655 = scmp.lt.s32.totalorder %s17, 1
        %s9656 = scalar_select %p9655, %s17, 1
        %s9657 = smul.addr %s9656, 25
        %s9658 = smul.addr %s9657, 8
        %s9659 = scalar_lea.vmem %s4, %s9658
        // Predicated region
        $region45: #{vae_forward.1} parent=35 // pred_check
          %p9660 = pneg %p129
        $region46: #{vae_forward.1} parent=35 // pred_check_branch
          %9662 = sbr.rel (%p9660) target = $region48
        $region47: #{vae_forward.1} parent=35 // pred_region
          _
        $region48: #{vae_forward.1} parent=35 // pred_fallthru
          _
      $region36: #{vae_forward.1} parent=5 // pred_fallthru
        _
      %p9663 = scmp.le.s32.totalorder 2, %s12
      // Predicated region
      $region49: #{vae_forward.1} parent=5 // pred_check
        %p9664 = pneg %p9663
      $region50: #{vae_forward.1} parent=5 // pred_check_branch
        %9666 = sbr.rel (%p9664) target = $region52
      $region51: #{vae_forward.1} parent=5 // pred_region
        %s9667 = ssub.s32 %s12, 2
        // Predicated region
        $region53: #{vae_forward.1} parent=51 // pred_check
          %p9668 = pneg %p135
        $region54: #{vae_forward.1} parent=51 // pred_check_branch
          %9670 = sbr.rel (%p9668) target = $region56
        $region55: #{vae_forward.1} parent=51 // pred_region
          %p9671 = scmp.lt.s32.totalorder %s18, 1
          %s9672 = scalar_select %p9671, %s18, 1
          %s9673 = smul.addr %s9672, 25
          %s9674 = smul.addr %s9673, 8
          %s9675 = scalar_lea.vmem %s4, %s9674
        $region56: #{vae_forward.1} parent=51 // pred_fallthru
          _
      $region52: #{vae_forward.1} parent=5 // pred_fallthru
        _
    $region6: #{vae_forward.1} parent=1 // loop_footer
      %s16 = sadd.s32 1, %s12
    $region7: #{vae_forward.1} parent=1 // loop_footer_branch
      %11 = sbr.rel target = $region3
    $region8: #{vae_forward.1} parent=1 // loop_exit
      _
    %9676 = vsyncpa [#allocation12], 1
    %s9677 = scalar_lea.sflag [#allocation12], 1
    %9678 = vsyncpa %s9677, 1
    %9679 = vsyncpa [#allocation14], 1

</llo_original>
